<compile_context>
chip_gen: v7x
topology: tpu7x:2x2x1
jax: 0.10.0
libtpu: 0.0.40
codegen_flags: <defaults>
</compile_context>

<pallas_src>
import math
import functools

import jax
import jax.numpy as jnp
from jax import lax
from jax.experimental import pallas as pl
from jax.experimental.pallas import tpu as pltpu


# ---------------------------------------------------------------------------
# In-kernel math helpers
# ---------------------------------------------------------------------------
def _mish(v):
    # torch semantics: x * tanh(softplus(x)), softplus threshold = 20.
    # tanh(log1p(e)) == ((1+e)^2 - 1) / ((1+e)^2 + 1)  -> one exp + one rcp.
    e = jnp.exp(jnp.minimum(v, 20.0))
    n = (1.0 + e) * (1.0 + e)
    t = (n - 1.0) * pl.reciprocal(n + 1.0, approx=True)
    return jnp.where(v > 20.0, v, v * t)


def _linear(a, w_ref, b_ref):
    return jnp.dot(a, w_ref[...], preferred_element_type=jnp.float32) + b_ref[...]


def _resblock(x, mt, r):
    # h = mish(x @ W1 + b1); h += mish(t) @ Wt + bt; h = mish(h @ W2 + b2)
    # out = h + (x @ Wr + br  if dim != dim_out  else x)
    h = _mish(_linear(x, r["w1"], r["b1"]))
    h = h + _linear(mt, r["wt"], r["bt"])
    h = _mish(_linear(h, r["w2"], r["b2"]))
    res = _linear(x, r["wr"], r["br"]) if "wr" in r else x
    return h + res


def _concat_cols(x, skip):
    # cat([x, skip], axis=1) via exact identity-embedding matmuls. Avoids an
    # unaligned lane-dim concatenate inside the kernel (widths 4/8/16 << 128);
    # the extra tiny MXU matmuls are free at these shapes.
    dx, ds = x.shape[1], skip.shape[1]
    dt = dx + ds
    r1 = lax.broadcasted_iota(jnp.int32, (dx, dt), 0)
    c1 = lax.broadcasted_iota(jnp.int32, (dx, dt), 1)
    r2 = lax.broadcasted_iota(jnp.int32, (ds, dt), 0)
    c2 = lax.broadcasted_iota(jnp.int32, (ds, dt), 1)
    e_top = (c1 == r1).astype(jnp.float32)
    e_bot = (c2 == r2 + dx).astype(jnp.float32)
    return (jnp.dot(x, e_top, preferred_element_type=jnp.float32)
            + jnp.dot(skip, e_bot, preferred_element_type=jnp.float32))


# ---------------------------------------------------------------------------
# Fused forward-pass kernel
# ---------------------------------------------------------------------------
def _fused_unet_kernel(treedef, n_params, *refs):
    param_refs = refs[:n_params]
    x_ref, temb_ref, beta2_ref = refs[n_params:n_params + 3]
    o_ref = refs[n_params + 3]

    # Rebuild the (static) parameter structure with VMEM refs as leaves; each
    # weight is loaded lazily at its point of use (short live ranges).
    p = jax.tree_util.tree_unflatten(treedef, list(param_refs))

    x0 = x_ref[...]
    temb = temb_ref[...]

    # time MLP: Linear -> Mish -> Linear; hoist Mish(t) once for all blocks.
    t = _mish(_linear(temb, p["mlp_w1"], p["mlp_b1"]))
    t = _linear(t, p["mlp_w2"], p["mlp_b2"])
    mt = _mish(t)

    x = x0
    skips = []
    for down in p["downs"]:
        x = _resblock(x, mt, down["r1"])
        x = _resblock(x, mt, down["r2"])
        skips.append(x)
        if "down_w" in down:
            x = _linear(x, down["down_w"], down["down_b"])

    x = _resblock(x, mt, p["mid1"])
    x = _resblock(x, mt, p["mid2"])

    for up in p["ups"]:
        x = _concat_cols(x, skips.pop())
        x = _resblock(x, mt, up["r1"])
        x = _resblock(x, mt, up["r2"])
        if "up_w" in up:
            x = _linear(x, up["up_w"], up["up_b"])

    # Unet_drift output: x - inputs * beta**2 / 2
    o_ref[...] = (x - x0 * beta2_ref[...]).astype(o_ref.dtype)


# ---------------------------------------------------------------------------
# Glue (plain JAX): sinusoidal time embedding
# TODO(synk): sin/cos + concat of the time embedding stays outside the kernel.
# ---------------------------------------------------------------------------
def sinusoidal_embedding(timesteps, embedding_dim, max_positions=10000):
    assert timesteps.ndim == 1
    half = embedding_dim // 2
    emb = math.log(max_positions) / (half - 1)
    freqs = jnp.exp(jnp.arange(half, dtype=jnp.float32) * -emb)
    emb = timesteps.astype(jnp.float32)[:, None] * freqs[None, :]
    emb = jnp.concatenate([jnp.sin(emb), jnp.cos(emb)], axis=1)
    if embedding_dim % 2 == 1:
        emb = jnp.pad(emb, ((0, 0), (0, 1)))
    return emb


# ---------------------------------------------------------------------------
# Parameter construction (deterministic, PyTorch nn.Linear-style init)
# ---------------------------------------------------------------------------
def init_params(key, input_dim, te_dim=32, num_layers=3):
    keys = iter(jax.random.split(key, 512))

    def lin(din, dout):
        k1, k2 = next(keys), next(keys)
        bound = 1.0 / math.sqrt(din)
        w = jax.random.uniform(k1, (din, dout), jnp.float32, -bound, bound)
        b = jax.random.uniform(k2, (1, dout), jnp.float32, -bound, bound)
        return w, b

    def resnet(din, dout, te):
        p = {}
        p["wt"], p["bt"] = lin(te, dout)       # Sequential(Mish, Linear(te, dout))
        p["w1"], p["b1"] = lin(din, dout)      # block1
        p["w2"], p["b2"] = lin(dout, dout)     # block2
        if din != dout:
            p["wr"], p["br"] = lin(din, dout)  # res_conv
        return p

    params = {}
    params["mlp_w1"], params["mlp_b1"] = lin(te_dim, input_dim * 4)
    params["mlp_w2"], params["mlp_b2"] = lin(input_dim * 4, input_dim)

    dims = []
    d = input_dim
    for _ in range(num_layers):
        dims.append((d, d // 2))
        d //= 2

    downs = []
    for ind, (din, dout) in enumerate(dims):
        is_last = ind == num_layers - 1
        blk = {"r1": resnet(din, dout, input_dim),
               "r2": resnet(dout, dout, input_dim)}
        if not is_last:
            blk["down_w"], blk["down_b"] = lin(dout, dout)
        downs.append(blk)
    params["downs"] = downs

    mid = dims[-1][-1]
    params["mid1"] = resnet(mid, mid, input_dim)
    params["mid2"] = resnet(mid, mid, input_dim)

    ups = []
    for ind, (din, dout) in enumerate(reversed(dims)):
        is_last = ind == num_layers - 1
        blk = {"r1": resnet(dout * 2, din, input_dim),   # dout*2 == din -> no res_conv
               "r2": resnet(din, din, input_dim)}
        if not is_last:
            blk["up_w"], blk["up_b"] = lin(din, din)
        ups.append(blk)
    params["ups"] = ups
    return params


# ---------------------------------------------------------------------------
# Forward pass: one fused pallas_call
# ---------------------------------------------------------------------------
@functools.partial(jax.jit, static_argnames=("te_dim",))
def unet_drift_forward(params, x, time, beta, te_dim=32):
    temb = sinusoidal_embedding(10000.0 * time, te_dim)   # embedding_scale = 10000
    beta2 = (jnp.asarray(beta, jnp.float32) ** 2 / 2.0).reshape(1, 1)

    leaves, treedef = jax.tree_util.tree_flatten(params)
    B, D = x.shape
    kernel = functools.partial(_fused_unet_kernel, treedef, len(leaves))

    return pl.pallas_call(
        kernel,
        out_shape=jax.ShapeDtypeStruct((B, D), jnp.float32),
        compiler_params=pltpu.CompilerParams(vmem_limit_bytes=32 * 1024 * 1024),
    )(*leaves, x, temb, beta2)


# ---------------------------------------------------------------------------
if __name__ == "__main__":
    key = jax.random.PRNGKey(0)
    kp, kx, kt = jax.random.split(key, 3)

    input_dim = 32      # must be divisible by 2**num_layers
    batch = 8
    te_dim = 32
    beta = 0.5

    params = init_params(kp, input_dim, te_dim=te_dim, num_layers=3)
    x = jax.random.normal(kx, (batch, input_dim), jnp.float32)
    time = jax.random.uniform(kt, (batch,), jnp.float32)

    out = unet_drift_forward(params, x, time, beta, te_dim=te_dim)
    out = jax.block_until_ready(out)
    assert out.shape == (batch, input_dim)
    assert bool(jnp.all(jnp.isfinite(out)))
    print("KERNEL_OK")
</pallas_src>

<mosaic_0001>
module attributes {stable_mosaic.version = 11 : i64} {
  func.func @_fused_unet_kernel(%arg0: memref<1x16xf32, #tpu.memory_space<vmem>>, %arg1: memref<16x16xf32, #tpu.memory_space<vmem>>, %arg2: memref<1x16xf32, #tpu.memory_space<vmem>>, %arg3: memref<1x16xf32, #tpu.memory_space<vmem>>, %arg4: memref<1x16xf32, #tpu.memory_space<vmem>>, %arg5: memref<1x16xf32, #tpu.memory_space<vmem>>, %arg6: memref<32x16xf32, #tpu.memory_space<vmem>>, %arg7: memref<16x16xf32, #tpu.memory_space<vmem>>, %arg8: memref<32x16xf32, #tpu.memory_space<vmem>>, %arg9: memref<32x16xf32, #tpu.memory_space<vmem>>, %arg10: memref<1x16xf32, #tpu.memory_space<vmem>>, %arg11: memref<1x16xf32, #tpu.memory_space<vmem>>, %arg12: memref<1x16xf32, #tpu.memory_space<vmem>>, %arg13: memref<16x16xf32, #tpu.memory_space<vmem>>, %arg14: memref<16x16xf32, #tpu.memory_space<vmem>>, %arg15: memref<32x16xf32, #tpu.memory_space<vmem>>, %arg16: memref<1x8xf32, #tpu.memory_space<vmem>>, %arg17: memref<8x8xf32, #tpu.memory_space<vmem>>, %arg18: memref<1x8xf32, #tpu.memory_space<vmem>>, %arg19: memref<1x8xf32, #tpu.memory_space<vmem>>, %arg20: memref<1x8xf32, #tpu.memory_space<vmem>>, %arg21: memref<1x8xf32, #tpu.memory_space<vmem>>, %arg22: memref<16x8xf32, #tpu.memory_space<vmem>>, %arg23: memref<8x8xf32, #tpu.memory_space<vmem>>, %arg24: memref<16x8xf32, #tpu.memory_space<vmem>>, %arg25: memref<32x8xf32, #tpu.memory_space<vmem>>, %arg26: memref<1x8xf32, #tpu.memory_space<vmem>>, %arg27: memref<1x8xf32, #tpu.memory_space<vmem>>, %arg28: memref<1x8xf32, #tpu.memory_space<vmem>>, %arg29: memref<8x8xf32, #tpu.memory_space<vmem>>, %arg30: memref<8x8xf32, #tpu.memory_space<vmem>>, %arg31: memref<32x8xf32, #tpu.memory_space<vmem>>, %arg32: memref<1x4xf32, #tpu.memory_space<vmem>>, %arg33: memref<1x4xf32, #tpu.memory_space<vmem>>, %arg34: memref<1x4xf32, #tpu.memory_space<vmem>>, %arg35: memref<1x4xf32, #tpu.memory_space<vmem>>, %arg36: memref<8x4xf32, #tpu.memory_space<vmem>>, %arg37: memref<4x4xf32, #tpu.memory_space<vmem>>, %arg38: memref<8x4xf32, #tpu.memory_space<vmem>>, %arg39: memref<32x4xf32, #tpu.memory_space<vmem>>, %arg40: memref<1x4xf32, #tpu.memory_space<vmem>>, %arg41: memref<1x4xf32, #tpu.memory_space<vmem>>, %arg42: memref<1x4xf32, #tpu.memory_space<vmem>>, %arg43: memref<4x4xf32, #tpu.memory_space<vmem>>, %arg44: memref<4x4xf32, #tpu.memory_space<vmem>>, %arg45: memref<32x4xf32, #tpu.memory_space<vmem>>, %arg46: memref<1x4xf32, #tpu.memory_space<vmem>>, %arg47: memref<1x4xf32, #tpu.memory_space<vmem>>, %arg48: memref<1x4xf32, #tpu.memory_space<vmem>>, %arg49: memref<4x4xf32, #tpu.memory_space<vmem>>, %arg50: memref<4x4xf32, #tpu.memory_space<vmem>>, %arg51: memref<32x4xf32, #tpu.memory_space<vmem>>, %arg52: memref<1x4xf32, #tpu.memory_space<vmem>>, %arg53: memref<1x4xf32, #tpu.memory_space<vmem>>, %arg54: memref<1x4xf32, #tpu.memory_space<vmem>>, %arg55: memref<4x4xf32, #tpu.memory_space<vmem>>, %arg56: memref<4x4xf32, #tpu.memory_space<vmem>>, %arg57: memref<32x4xf32, #tpu.memory_space<vmem>>, %arg58: memref<1x128xf32, #tpu.memory_space<vmem>>, %arg59: memref<1x32xf32, #tpu.memory_space<vmem>>, %arg60: memref<32x128xf32, #tpu.memory_space<vmem>>, %arg61: memref<128x32xf32, #tpu.memory_space<vmem>>, %arg62: memref<1x8xf32, #tpu.memory_space<vmem>>, %arg63: memref<1x8xf32, #tpu.memory_space<vmem>>, %arg64: memref<1x8xf32, #tpu.memory_space<vmem>>, %arg65: memref<8x8xf32, #tpu.memory_space<vmem>>, %arg66: memref<8x8xf32, #tpu.memory_space<vmem>>, %arg67: memref<32x8xf32, #tpu.memory_space<vmem>>, %arg68: memref<1x8xf32, #tpu.memory_space<vmem>>, %arg69: memref<1x8xf32, #tpu.memory_space<vmem>>, %arg70: memref<1x8xf32, #tpu.memory_space<vmem>>, %arg71: memref<8x8xf32, #tpu.memory_space<vmem>>, %arg72: memref<8x8xf32, #tpu.memory_space<vmem>>, %arg73: memref<32x8xf32, #tpu.memory_space<vmem>>, %arg74: memref<1x8xf32, #tpu.memory_space<vmem>>, %arg75: memref<8x8xf32, #tpu.memory_space<vmem>>, %arg76: memref<1x16xf32, #tpu.memory_space<vmem>>, %arg77: memref<1x16xf32, #tpu.memory_space<vmem>>, %arg78: memref<1x16xf32, #tpu.memory_space<vmem>>, %arg79: memref<16x16xf32, #tpu.memory_space<vmem>>, %arg80: memref<16x16xf32, #tpu.memory_space<vmem>>, %arg81: memref<32x16xf32, #tpu.memory_space<vmem>>, %arg82: memref<1x16xf32, #tpu.memory_space<vmem>>, %arg83: memref<1x16xf32, #tpu.memory_space<vmem>>, %arg84: memref<1x16xf32, #tpu.memory_space<vmem>>, %arg85: memref<16x16xf32, #tpu.memory_space<vmem>>, %arg86: memref<16x16xf32, #tpu.memory_space<vmem>>, %arg87: memref<32x16xf32, #tpu.memory_space<vmem>>, %arg88: memref<1x16xf32, #tpu.memory_space<vmem>>, %arg89: memref<16x16xf32, #tpu.memory_space<vmem>>, %arg90: memref<1x32xf32, #tpu.memory_space<vmem>>, %arg91: memref<1x32xf32, #tpu.memory_space<vmem>>, %arg92: memref<1x32xf32, #tpu.memory_space<vmem>>, %arg93: memref<32x32xf32, #tpu.memory_space<vmem>>, %arg94: memref<32x32xf32, #tpu.memory_space<vmem>>, %arg95: memref<32x32xf32, #tpu.memory_space<vmem>>, %arg96: memref<1x32xf32, #tpu.memory_space<vmem>>, %arg97: memref<1x32xf32, #tpu.memory_space<vmem>>, %arg98: memref<1x32xf32, #tpu.memory_space<vmem>>, %arg99: memref<32x32xf32, #tpu.memory_space<vmem>>, %arg100: memref<32x32xf32, #tpu.memory_space<vmem>>, %arg101: memref<32x32xf32, #tpu.memory_space<vmem>>, %arg102: memref<8x32xf32, #tpu.memory_space<vmem>>, %arg103: memref<8x32xf32, #tpu.memory_space<vmem>>, %arg104: memref<1x1xf32, #tpu.memory_space<vmem>>, %arg105: memref<8x32xf32, #tpu.memory_space<vmem>>) attributes {dimension_semantics = [], scalar_prefetch = 0 : i64, scratch_operands = 0 : i64, tpu.core_type = #tpu.core_type<tc>} {
    %c0 = arith.constant 0 : index
    %c0_0 = arith.constant 0 : index
    %0 = vector.load %arg102[%c0, %c0_0] : memref<8x32xf32, #tpu.memory_space<vmem>>, vector<8x32xf32>
    %c0_1 = arith.constant 0 : index
    %c0_2 = arith.constant 0 : index
    %1 = vector.load %arg103[%c0_1, %c0_2] : memref<8x32xf32, #tpu.memory_space<vmem>>, vector<8x32xf32>
    %c0_3 = arith.constant 0 : index
    %c0_4 = arith.constant 0 : index
    %2 = vector.load %arg60[%c0_3, %c0_4] : memref<32x128xf32, #tpu.memory_space<vmem>>, vector<32x128xf32>
    %cst = arith.constant dense<0.000000e+00> : vector<8x128xf32>
    %3 = tpu.matmul %1, %2, %cst {dimension_numbers = #tpu.dot_dimension_numbers<[1], [0], [0], [1], [0, 0, 1, 1], [], []>} : vector<8x32xf32>, vector<32x128xf32>, vector<8x128xf32> -> vector<8x128xf32>
    %c0_5 = arith.constant 0 : index
    %c0_6 = arith.constant 0 : index
    %4 = vector.load %arg58[%c0_5, %c0_6] : memref<1x128xf32, #tpu.memory_space<vmem>>, vector<1x128xf32>
    %5 = vector.broadcast %4 : vector<1x128xf32> to vector<8x128xf32>
    %6 = arith.addf %3, %5 : vector<8x128xf32>
    %cst_7 = arith.constant 2.000000e+01 : f32
    %7 = vector.broadcast %cst_7 : f32 to vector<8x128xf32>
    %8 = arith.minimumf %6, %7 : vector<8x128xf32>
    %9 = math.exp %8 : vector<8x128xf32>
    %cst_8 = arith.constant 1.000000e+00 : f32
    %10 = vector.broadcast %cst_8 : f32 to vector<8x128xf32>
    %11 = arith.addf %10, %9 : vector<8x128xf32>
    %cst_9 = arith.constant 1.000000e+00 : f32
    %12 = vector.broadcast %cst_9 : f32 to vector<8x128xf32>
    %13 = arith.addf %12, %9 : vector<8x128xf32>
    %14 = arith.mulf %11, %13 : vector<8x128xf32>
    %cst_10 = arith.constant 1.000000e+00 : f32
    %15 = vector.broadcast %cst_10 : f32 to vector<8x128xf32>
    %16 = arith.subf %14, %15 : vector<8x128xf32>
    %cst_11 = arith.constant 1.000000e+00 : f32
    %17 = vector.broadcast %cst_11 : f32 to vector<8x128xf32>
    %18 = arith.addf %14, %17 : vector<8x128xf32>
    %19 = tpu.reciprocal %18 {approx = true} : vector<8x128xf32> -> vector<8x128xf32>
    %20 = arith.mulf %16, %19 : vector<8x128xf32>
    %cst_12 = arith.constant 2.000000e+01 : f32
    %21 = vector.broadcast %cst_12 : f32 to vector<8x128xf32>
    %22 = arith.cmpf ogt, %6, %21 : vector<8x128xf32>
    %23 = arith.mulf %6, %20 : vector<8x128xf32>
    %24 = arith.select %22, %6, %23 : vector<8x128xi1>, vector<8x128xf32>
    %c0_13 = arith.constant 0 : index
    %c0_14 = arith.constant 0 : index
    %25 = vector.load %arg61[%c0_13, %c0_14] : memref<128x32xf32, #tpu.memory_space<vmem>>, vector<128x32xf32>
    %cst_15 = arith.constant dense<0.000000e+00> : vector<8x32xf32>
    %26 = tpu.matmul %24, %25, %cst_15 {dimension_numbers = #tpu.dot_dimension_numbers<[1], [0], [0], [1], [0, 0, 1, 1], [], []>} : vector<8x128xf32>, vector<128x32xf32>, vector<8x32xf32> -> vector<8x32xf32>
    %c0_16 = arith.constant 0 : index
    %c0_17 = arith.constant 0 : index
    %27 = vector.load %arg59[%c0_16, %c0_17] : memref<1x32xf32, #tpu.memory_space<vmem>>, vector<1x32xf32>
    %28 = vector.broadcast %27 : vector<1x32xf32> to vector<8x32xf32>
    %29 = arith.addf %26, %28 : vector<8x32xf32>
    %cst_18 = arith.constant 2.000000e+01 : f32
    %30 = vector.broadcast %cst_18 : f32 to vector<8x32xf32>
    %31 = arith.minimumf %29, %30 : vector<8x32xf32>
    %32 = math.exp %31 : vector<8x32xf32>
    %cst_19 = arith.constant 1.000000e+00 : f32
    %33 = vector.broadcast %cst_19 : f32 to vector<8x32xf32>
    %34 = arith.addf %33, %32 : vector<8x32xf32>
    %cst_20 = arith.constant 1.000000e+00 : f32
    %35 = vector.broadcast %cst_20 : f32 to vector<8x32xf32>
    %36 = arith.addf %35, %32 : vector<8x32xf32>
    %37 = arith.mulf %34, %36 : vector<8x32xf32>
    %cst_21 = arith.constant 1.000000e+00 : f32
    %38 = vector.broadcast %cst_21 : f32 to vector<8x32xf32>
    %39 = arith.subf %37, %38 : vector<8x32xf32>
    %cst_22 = arith.constant 1.000000e+00 : f32
    %40 = vector.broadcast %cst_22 : f32 to vector<8x32xf32>
    %41 = arith.addf %37, %40 : vector<8x32xf32>
    %42 = tpu.reciprocal %41 {approx = true} : vector<8x32xf32> -> vector<8x32xf32>
    %43 = arith.mulf %39, %42 : vector<8x32xf32>
    %cst_23 = arith.constant 2.000000e+01 : f32
    %44 = vector.broadcast %cst_23 : f32 to vector<8x32xf32>
    %45 = arith.cmpf ogt, %29, %44 : vector<8x32xf32>
    %46 = arith.mulf %29, %43 : vector<8x32xf32>
    %47 = arith.select %45, %29, %46 : vector<8x32xi1>, vector<8x32xf32>
    %c0_24 = arith.constant 0 : index
    %c0_25 = arith.constant 0 : index
    %48 = vector.load %arg6[%c0_24, %c0_25] : memref<32x16xf32, #tpu.memory_space<vmem>>, vector<32x16xf32>
    %cst_26 = arith.constant dense<0.000000e+00> : vector<8x16xf32>
    %49 = tpu.matmul %0, %48, %cst_26 {dimension_numbers = #tpu.dot_dimension_numbers<[1], [0], [0], [1], [0, 0, 1, 1], [], []>} : vector<8x32xf32>, vector<32x16xf32>, vector<8x16xf32> -> vector<8x16xf32>
    %c0_27 = arith.constant 0 : index
    %c0_28 = arith.constant 0 : index
    %50 = vector.load %arg2[%c0_27, %c0_28] : memref<1x16xf32, #tpu.memory_space<vmem>>, vector<1x16xf32>
    %51 = vector.broadcast %50 : vector<1x16xf32> to vector<8x16xf32>
    %52 = arith.addf %49, %51 : vector<8x16xf32>
    %cst_29 = arith.constant 2.000000e+01 : f32
    %53 = vector.broadcast %cst_29 : f32 to vector<8x16xf32>
    %54 = arith.minimumf %52, %53 : vector<8x16xf32>
    %55 = math.exp %54 : vector<8x16xf32>
    %cst_30 = arith.constant 1.000000e+00 : f32
    %56 = vector.broadcast %cst_30 : f32 to vector<8x16xf32>
    %57 = arith.addf %56, %55 : vector<8x16xf32>
    %cst_31 = arith.constant 1.000000e+00 : f32
    %58 = vector.broadcast %cst_31 : f32 to vector<8x16xf32>
    %59 = arith.addf %58, %55 : vector<8x16xf32>
    %60 = arith.mulf %57, %59 : vector<8x16xf32>
    %cst_32 = arith.constant 1.000000e+00 : f32
    %61 = vector.broadcast %cst_32 : f32 to vector<8x16xf32>
    %62 = arith.subf %60, %61 : vector<8x16xf32>
    %cst_33 = arith.constant 1.000000e+00 : f32
    %63 = vector.broadcast %cst_33 : f32 to vector<8x16xf32>
    %64 = arith.addf %60, %63 : vector<8x16xf32>
    %65 = tpu.reciprocal %64 {approx = true} : vector<8x16xf32> -> vector<8x16xf32>
    %66 = arith.mulf %62, %65 : vector<8x16xf32>
    %cst_34 = arith.constant 2.000000e+01 : f32
    %67 = vector.broadcast %cst_34 : f32 to vector<8x16xf32>
    %68 = arith.cmpf ogt, %52, %67 : vector<8x16xf32>
    %69 = arith.mulf %52, %66 : vector<8x16xf32>
    %70 = arith.select %68, %52, %69 : vector<8x16xi1>, vector<8x16xf32>
    %c0_35 = arith.constant 0 : index
    %c0_36 = arith.constant 0 : index
    %71 = vector.load %arg9[%c0_35, %c0_36] : memref<32x16xf32, #tpu.memory_space<vmem>>, vector<32x16xf32>
    %cst_37 = arith.constant dense<0.000000e+00> : vector<8x16xf32>
    %72 = tpu.matmul %47, %71, %cst_37 {dimension_numbers = #tpu.dot_dimension_numbers<[1], [0], [0], [1], [0, 0, 1, 1], [], []>} : vector<8x32xf32>, vector<32x16xf32>, vector<8x16xf32> -> vector<8x16xf32>
    %c0_38 = arith.constant 0 : index
    %c0_39 = arith.constant 0 : index
    %73 = vector.load %arg5[%c0_38, %c0_39] : memref<1x16xf32, #tpu.memory_space<vmem>>, vector<1x16xf32>
    %74 = vector.broadcast %73 : vector<1x16xf32> to vector<8x16xf32>
    %75 = arith.addf %72, %74 : vector<8x16xf32>
    %76 = arith.addf %70, %75 : vector<8x16xf32>
    %c0_40 = arith.constant 0 : index
    %c0_41 = arith.constant 0 : index
    %77 = vector.load %arg7[%c0_40, %c0_41] : memref<16x16xf32, #tpu.memory_space<vmem>>, vector<16x16xf32>
    %cst_42 = arith.constant dense<0.000000e+00> : vector<8x16xf32>
    %78 = tpu.matmul %76, %77, %cst_42 {dimension_numbers = #tpu.dot_dimension_numbers<[1], [0], [0], [1], [0, 0, 1, 1], [], []>} : vector<8x16xf32>, vector<16x16xf32>, vector<8x16xf32> -> vector<8x16xf32>
    %c0_43 = arith.constant 0 : index
    %c0_44 = arith.constant 0 : index
    %79 = vector.load %arg3[%c0_43, %c0_44] : memref<1x16xf32, #tpu.memory_space<vmem>>, vector<1x16xf32>
    %80 = vector.broadcast %79 : vector<1x16xf32> to vector<8x16xf32>
    %81 = arith.addf %78, %80 : vector<8x16xf32>
    %cst_45 = arith.constant 2.000000e+01 : f32
    %82 = vector.broadcast %cst_45 : f32 to vector<8x16xf32>
    %83 = arith.minimumf %81, %82 : vector<8x16xf32>
    %84 = math.exp %83 : vector<8x16xf32>
    %cst_46 = arith.constant 1.000000e+00 : f32
    %85 = vector.broadcast %cst_46 : f32 to vector<8x16xf32>
    %86 = arith.addf %85, %84 : vector<8x16xf32>
    %cst_47 = arith.constant 1.000000e+00 : f32
    %87 = vector.broadcast %cst_47 : f32 to vector<8x16xf32>
    %88 = arith.addf %87, %84 : vector<8x16xf32>
    %89 = arith.mulf %86, %88 : vector<8x16xf32>
    %cst_48 = arith.constant 1.000000e+00 : f32
    %90 = vector.broadcast %cst_48 : f32 to vector<8x16xf32>
    %91 = arith.subf %89, %90 : vector<8x16xf32>
    %cst_49 = arith.constant 1.000000e+00 : f32
    %92 = vector.broadcast %cst_49 : f32 to vector<8x16xf32>
    %93 = arith.addf %89, %92 : vector<8x16xf32>
    %94 = tpu.reciprocal %93 {approx = true} : vector<8x16xf32> -> vector<8x16xf32>
    %95 = arith.mulf %91, %94 : vector<8x16xf32>
    %cst_50 = arith.constant 2.000000e+01 : f32
    %96 = vector.broadcast %cst_50 : f32 to vector<8x16xf32>
    %97 = arith.cmpf ogt, %81, %96 : vector<8x16xf32>
    %98 = arith.mulf %81, %95 : vector<8x16xf32>
    %99 = arith.select %97, %81, %98 : vector<8x16xi1>, vector<8x16xf32>
    %c0_51 = arith.constant 0 : index
    %c0_52 = arith.constant 0 : index
    %100 = vector.load %arg8[%c0_51, %c0_52] : memref<32x16xf32, #tpu.memory_space<vmem>>, vector<32x16xf32>
    %cst_53 = arith.constant dense<0.000000e+00> : vector<8x16xf32>
    %101 = tpu.matmul %0, %100, %cst_53 {dimension_numbers = #tpu.dot_dimension_numbers<[1], [0], [0], [1], [0, 0, 1, 1], [], []>} : vector<8x32xf32>, vector<32x16xf32>, vector<8x16xf32> -> vector<8x16xf32>
    %c0_54 = arith.constant 0 : index
    %c0_55 = arith.constant 0 : index
    %102 = vector.load %arg4[%c0_54, %c0_55] : memref<1x16xf32, #tpu.memory_space<vmem>>, vector<1x16xf32>
    %103 = vector.broadcast %102 : vector<1x16xf32> to vector<8x16xf32>
    %104 = arith.addf %101, %103 : vector<8x16xf32>
    %105 = arith.addf %99, %104 : vector<8x16xf32>
    %c0_56 = arith.constant 0 : index
    %c0_57 = arith.constant 0 : index
    %106 = vector.load %arg13[%c0_56, %c0_57] : memref<16x16xf32, #tpu.memory_space<vmem>>, vector<16x16xf32>
    %cst_58 = arith.constant dense<0.000000e+00> : vector<8x16xf32>
    %107 = tpu.matmul %105, %106, %cst_58 {dimension_numbers = #tpu.dot_dimension_numbers<[1], [0], [0], [1], [0, 0, 1, 1], [], []>} : vector<8x16xf32>, vector<16x16xf32>, vector<8x16xf32> -> vector<8x16xf32>
    %c0_59 = arith.constant 0 : index
    %c0_60 = arith.constant 0 : index
    %108 = vector.load %arg10[%c0_59, %c0_60] : memref<1x16xf32, #tpu.memory_space<vmem>>, vector<1x16xf32>
    %109 = vector.broadcast %108 : vector<1x16xf32> to vector<8x16xf32>
    %110 = arith.addf %107, %109 : vector<8x16xf32>
    %cst_61 = arith.constant 2.000000e+01 : f32
    %111 = vector.broadcast %cst_61 : f32 to vector<8x16xf32>
    %112 = arith.minimumf %110, %111 : vector<8x16xf32>
    %113 = math.exp %112 : vector<8x16xf32>
    %cst_62 = arith.constant 1.000000e+00 : f32
    %114 = vector.broadcast %cst_62 : f32 to vector<8x16xf32>
    %115 = arith.addf %114, %113 : vector<8x16xf32>
    %cst_63 = arith.constant 1.000000e+00 : f32
    %116 = vector.broadcast %cst_63 : f32 to vector<8x16xf32>
    %117 = arith.addf %116, %113 : vector<8x16xf32>
    %118 = arith.mulf %115, %117 : vector<8x16xf32>
    %cst_64 = arith.constant 1.000000e+00 : f32
    %119 = vector.broadcast %cst_64 : f32 to vector<8x16xf32>
    %120 = arith.subf %118, %119 : vector<8x16xf32>
    %cst_65 = arith.constant 1.000000e+00 : f32
    %121 = vector.broadcast %cst_65 : f32 to vector<8x16xf32>
    %122 = arith.addf %118, %121 : vector<8x16xf32>
    %123 = tpu.reciprocal %122 {approx = true} : vector<8x16xf32> -> vector<8x16xf32>
    %124 = arith.mulf %120, %123 : vector<8x16xf32>
    %cst_66 = arith.constant 2.000000e+01 : f32
    %125 = vector.broadcast %cst_66 : f32 to vector<8x16xf32>
    %126 = arith.cmpf ogt, %110, %125 : vector<8x16xf32>
    %127 = arith.mulf %110, %124 : vector<8x16xf32>
    %128 = arith.select %126, %110, %127 : vector<8x16xi1>, vector<8x16xf32>
    %c0_67 = arith.constant 0 : index
    %c0_68 = arith.constant 0 : index
    %129 = vector.load %arg15[%c0_67, %c0_68] : memref<32x16xf32, #tpu.memory_space<vmem>>, vector<32x16xf32>
    %cst_69 = arith.constant dense<0.000000e+00> : vector<8x16xf32>
    %130 = tpu.matmul %47, %129, %cst_69 {dimension_numbers = #tpu.dot_dimension_numbers<[1], [0], [0], [1], [0, 0, 1, 1], [], []>} : vector<8x32xf32>, vector<32x16xf32>, vector<8x16xf32> -> vector<8x16xf32>
    %c0_70 = arith.constant 0 : index
    %c0_71 = arith.constant 0 : index
    %131 = vector.load %arg12[%c0_70, %c0_71] : memref<1x16xf32, #tpu.memory_space<vmem>>, vector<1x16xf32>
    %132 = vector.broadcast %131 : vector<1x16xf32> to vector<8x16xf32>
    %133 = arith.addf %130, %132 : vector<8x16xf32>
    %134 = arith.addf %128, %133 : vector<8x16xf32>
    %c0_72 = arith.constant 0 : index
    %c0_73 = arith.constant 0 : index
    %135 = vector.load %arg14[%c0_72, %c0_73] : memref<16x16xf32, #tpu.memory_space<vmem>>, vector<16x16xf32>
    %cst_74 = arith.constant dense<0.000000e+00> : vector<8x16xf32>
    %136 = tpu.matmul %134, %135, %cst_74 {dimension_numbers = #tpu.dot_dimension_numbers<[1], [0], [0], [1], [0, 0, 1, 1], [], []>} : vector<8x16xf32>, vector<16x16xf32>, vector<8x16xf32> -> vector<8x16xf32>
    %c0_75 = arith.constant 0 : index
    %c0_76 = arith.constant 0 : index
    %137 = vector.load %arg11[%c0_75, %c0_76] : memref<1x16xf32, #tpu.memory_space<vmem>>, vector<1x16xf32>
    %138 = vector.broadcast %137 : vector<1x16xf32> to vector<8x16xf32>
    %139 = arith.addf %136, %138 : vector<8x16xf32>
    %cst_77 = arith.constant 2.000000e+01 : f32
    %140 = vector.broadcast %cst_77 : f32 to vector<8x16xf32>
    %141 = arith.minimumf %139, %140 : vector<8x16xf32>
    %142 = math.exp %141 : vector<8x16xf32>
    %cst_78 = arith.constant 1.000000e+00 : f32
    %143 = vector.broadcast %cst_78 : f32 to vector<8x16xf32>
    %144 = arith.addf %143, %142 : vector<8x16xf32>
    %cst_79 = arith.constant 1.000000e+00 : f32
    %145 = vector.broadcast %cst_79 : f32 to vector<8x16xf32>
    %146 = arith.addf %145, %142 : vector<8x16xf32>
    %147 = arith.mulf %144, %146 : vector<8x16xf32>
    %cst_80 = arith.constant 1.000000e+00 : f32
    %148 = vector.broadcast %cst_80 : f32 to vector<8x16xf32>
    %149 = arith.subf %147, %148 : vector<8x16xf32>
    %cst_81 = arith.constant 1.000000e+00 : f32
    %150 = vector.broadcast %cst_81 : f32 to vector<8x16xf32>
    %151 = arith.addf %147, %150 : vector<8x16xf32>
    %152 = tpu.reciprocal %151 {approx = true} : vector<8x16xf32> -> vector<8x16xf32>
    %153 = arith.mulf %149, %152 : vector<8x16xf32>
    %cst_82 = arith.constant 2.000000e+01 : f32
    %154 = vector.broadcast %cst_82 : f32 to vector<8x16xf32>
    %155 = arith.cmpf ogt, %139, %154 : vector<8x16xf32>
    %156 = arith.mulf %139, %153 : vector<8x16xf32>
    %157 = arith.select %155, %139, %156 : vector<8x16xi1>, vector<8x16xf32>
    %158 = arith.addf %157, %105 : vector<8x16xf32>
    %c0_83 = arith.constant 0 : index
    %c0_84 = arith.constant 0 : index
    %159 = vector.load %arg1[%c0_83, %c0_84] : memref<16x16xf32, #tpu.memory_space<vmem>>, vector<16x16xf32>
    %cst_85 = arith.constant dense<0.000000e+00> : vector<8x16xf32>
    %160 = tpu.matmul %158, %159, %cst_85 {dimension_numbers = #tpu.dot_dimension_numbers<[1], [0], [0], [1], [0, 0, 1, 1], [], []>} : vector<8x16xf32>, vector<16x16xf32>, vector<8x16xf32> -> vector<8x16xf32>
    %c0_86 = arith.constant 0 : index
    %c0_87 = arith.constant 0 : index
    %161 = vector.load %arg0[%c0_86, %c0_87] : memref<1x16xf32, #tpu.memory_space<vmem>>, vector<1x16xf32>
    %162 = vector.broadcast %161 : vector<1x16xf32> to vector<8x16xf32>
    %163 = arith.addf %160, %162 : vector<8x16xf32>
    %c0_88 = arith.constant 0 : index
    %c0_89 = arith.constant 0 : index
    %164 = vector.load %arg22[%c0_88, %c0_89] : memref<16x8xf32, #tpu.memory_space<vmem>>, vector<16x8xf32>
    %cst_90 = arith.constant dense<0.000000e+00> : vector<8x8xf32>
    %165 = tpu.matmul %163, %164, %cst_90 {dimension_numbers = #tpu.dot_dimension_numbers<[1], [0], [0], [1], [0, 0, 1, 1], [], []>} : vector<8x16xf32>, vector<16x8xf32>, vector<8x8xf32> -> vector<8x8xf32>
    %c0_91 = arith.constant 0 : index
    %c0_92 = arith.constant 0 : index
    %166 = vector.load %arg18[%c0_91, %c0_92] : memref<1x8xf32, #tpu.memory_space<vmem>>, vector<1x8xf32>
    %167 = vector.broadcast %166 : vector<1x8xf32> to vector<8x8xf32>
    %168 = arith.addf %165, %167 : vector<8x8xf32>
    %cst_93 = arith.constant 2.000000e+01 : f32
    %169 = vector.broadcast %cst_93 : f32 to vector<8x8xf32>
    %170 = arith.minimumf %168, %169 : vector<8x8xf32>
    %171 = math.exp %170 : vector<8x8xf32>
    %cst_94 = arith.constant 1.000000e+00 : f32
    %172 = vector.broadcast %cst_94 : f32 to vector<8x8xf32>
    %173 = arith.addf %172, %171 : vector<8x8xf32>
    %cst_95 = arith.constant 1.000000e+00 : f32
    %174 = vector.broadcast %cst_95 : f32 to vector<8x8xf32>
    %175 = arith.addf %174, %171 : vector<8x8xf32>
    %176 = arith.mulf %173, %175 : vector<8x8xf32>
    %cst_96 = arith.constant 1.000000e+00 : f32
    %177 = vector.broadcast %cst_96 : f32 to vector<8x8xf32>
    %178 = arith.subf %176, %177 : vector<8x8xf32>
    %cst_97 = arith.constant 1.000000e+00 : f32
    %179 = vector.broadcast %cst_97 : f32 to vector<8x8xf32>
    %180 = arith.addf %176, %179 : vector<8x8xf32>
    %181 = tpu.reciprocal %180 {approx = true} : vector<8x8xf32> -> vector<8x8xf32>
    %182 = arith.mulf %178, %181 : vector<8x8xf32>
    %cst_98 = arith.constant 2.000000e+01 : f32
    %183 = vector.broadcast %cst_98 : f32 to vector<8x8xf32>
    %184 = arith.cmpf ogt, %168, %183 : vector<8x8xf32>
    %185 = arith.mulf %168, %182 : vector<8x8xf32>
    %186 = arith.select %184, %168, %185 : vector<8x8xi1>, vector<8x8xf32>
    %c0_99 = arith.constant 0 : index
    %c0_100 = arith.constant 0 : index
    %187 = vector.load %arg25[%c0_99, %c0_100] : memref<32x8xf32, #tpu.memory_space<vmem>>, vector<32x8xf32>
    %cst_101 = arith.constant dense<0.000000e+00> : vector<8x8xf32>
    %188 = tpu.matmul %47, %187, %cst_101 {dimension_numbers = #tpu.dot_dimension_numbers<[1], [0], [0], [1], [0, 0, 1, 1], [], []>} : vector<8x32xf32>, vector<32x8xf32>, vector<8x8xf32> -> vector<8x8xf32>
    %c0_102 = arith.constant 0 : index
    %c0_103 = arith.constant 0 : index
    %189 = vector.load %arg21[%c0_102, %c0_103] : memref<1x8xf32, #tpu.memory_space<vmem>>, vector<1x8xf32>
    %190 = vector.broadcast %189 : vector<1x8xf32> to vector<8x8xf32>
    %191 = arith.addf %188, %190 : vector<8x8xf32>
    %192 = arith.addf %186, %191 : vector<8x8xf32>
    %c0_104 = arith.constant 0 : index
    %c0_105 = arith.constant 0 : index
    %193 = vector.load %arg23[%c0_104, %c0_105] : memref<8x8xf32, #tpu.memory_space<vmem>>, vector<8x8xf32>
    %cst_106 = arith.constant dense<0.000000e+00> : vector<8x8xf32>
    %194 = tpu.matmul %192, %193, %cst_106 {dimension_numbers = #tpu.dot_dimension_numbers<[1], [0], [0], [1], [0, 0, 1, 1], [], []>} : vector<8x8xf32>, vector<8x8xf32>, vector<8x8xf32> -> vector<8x8xf32>
    %c0_107 = arith.constant 0 : index
    %c0_108 = arith.constant 0 : index
    %195 = vector.load %arg19[%c0_107, %c0_108] : memref<1x8xf32, #tpu.memory_space<vmem>>, vector<1x8xf32>
    %196 = vector.broadcast %195 : vector<1x8xf32> to vector<8x8xf32>
    %197 = arith.addf %194, %196 : vector<8x8xf32>
    %cst_109 = arith.constant 2.000000e+01 : f32
    %198 = vector.broadcast %cst_109 : f32 to vector<8x8xf32>
    %199 = arith.minimumf %197, %198 : vector<8x8xf32>
    %200 = math.exp %199 : vector<8x8xf32>
    %cst_110 = arith.constant 1.000000e+00 : f32
    %201 = vector.broadcast %cst_110 : f32 to vector<8x8xf32>
    %202 = arith.addf %201, %200 : vector<8x8xf32>
    %cst_111 = arith.constant 1.000000e+00 : f32
    %203 = vector.broadcast %cst_111 : f32 to vector<8x8xf32>
    %204 = arith.addf %203, %200 : vector<8x8xf32>
    %205 = arith.mulf %202, %204 : vector<8x8xf32>
    %cst_112 = arith.constant 1.000000e+00 : f32
    %206 = vector.broadcast %cst_112 : f32 to vector<8x8xf32>
    %207 = arith.subf %205, %206 : vector<8x8xf32>
    %cst_113 = arith.constant 1.000000e+00 : f32
    %208 = vector.broadcast %cst_113 : f32 to vector<8x8xf32>
    %209 = arith.addf %205, %208 : vector<8x8xf32>
    %210 = tpu.reciprocal %209 {approx = true} : vector<8x8xf32> -> vector<8x8xf32>
    %211 = arith.mulf %207, %210 : vector<8x8xf32>
    %cst_114 = arith.constant 2.000000e+01 : f32
    %212 = vector.broadcast %cst_114 : f32 to vector<8x8xf32>
    %213 = arith.cmpf ogt, %197, %212 : vector<8x8xf32>
    %214 = arith.mulf %197, %211 : vector<8x8xf32>
    %215 = arith.select %213, %197, %214 : vector<8x8xi1>, vector<8x8xf32>
    %c0_115 = arith.constant 0 : index
    %c0_116 = arith.constant 0 : index
    %216 = vector.load %arg24[%c0_115, %c0_116] : memref<16x8xf32, #tpu.memory_space<vmem>>, vector<16x8xf32>
    %cst_117 = arith.constant dense<0.000000e+00> : vector<8x8xf32>
    %217 = tpu.matmul %163, %216, %cst_117 {dimension_numbers = #tpu.dot_dimension_numbers<[1], [0], [0], [1], [0, 0, 1, 1], [], []>} : vector<8x16xf32>, vector<16x8xf32>, vector<8x8xf32> -> vector<8x8xf32>
    %c0_118 = arith.constant 0 : index
    %c0_119 = arith.constant 0 : index
    %218 = vector.load %arg20[%c0_118, %c0_119] : memref<1x8xf32, #tpu.memory_space<vmem>>, vector<1x8xf32>
    %219 = vector.broadcast %218 : vector<1x8xf32> to vector<8x8xf32>
    %220 = arith.addf %217, %219 : vector<8x8xf32>
    %221 = arith.addf %215, %220 : vector<8x8xf32>
    %c0_120 = arith.constant 0 : index
    %c0_121 = arith.constant 0 : index
    %222 = vector.load %arg29[%c0_120, %c0_121] : memref<8x8xf32, #tpu.memory_space<vmem>>, vector<8x8xf32>
    %cst_122 = arith.constant dense<0.000000e+00> : vector<8x8xf32>
    %223 = tpu.matmul %221, %222, %cst_122 {dimension_numbers = #tpu.dot_dimension_numbers<[1], [0], [0], [1], [0, 0, 1, 1], [], []>} : vector<8x8xf32>, vector<8x8xf32>, vector<8x8xf32> -> vector<8x8xf32>
    %c0_123 = arith.constant 0 : index
    %c0_124 = arith.constant 0 : index
    %224 = vector.load %arg26[%c0_123, %c0_124] : memref<1x8xf32, #tpu.memory_space<vmem>>, vector<1x8xf32>
    %225 = vector.broadcast %224 : vector<1x8xf32> to vector<8x8xf32>
    %226 = arith.addf %223, %225 : vector<8x8xf32>
    %cst_125 = arith.constant 2.000000e+01 : f32
    %227 = vector.broadcast %cst_125 : f32 to vector<8x8xf32>
    %228 = arith.minimumf %226, %227 : vector<8x8xf32>
    %229 = math.exp %228 : vector<8x8xf32>
    %cst_126 = arith.constant 1.000000e+00 : f32
    %230 = vector.broadcast %cst_126 : f32 to vector<8x8xf32>
    %231 = arith.addf %230, %229 : vector<8x8xf32>
    %cst_127 = arith.constant 1.000000e+00 : f32
    %232 = vector.broadcast %cst_127 : f32 to vector<8x8xf32>
    %233 = arith.addf %232, %229 : vector<8x8xf32>
    %234 = arith.mulf %231, %233 : vector<8x8xf32>
    %cst_128 = arith.constant 1.000000e+00 : f32
    %235 = vector.broadcast %cst_128 : f32 to vector<8x8xf32>
    %236 = arith.subf %234, %235 : vector<8x8xf32>
    %cst_129 = arith.constant 1.000000e+00 : f32
    %237 = vector.broadcast %cst_129 : f32 to vector<8x8xf32>
    %238 = arith.addf %234, %237 : vector<8x8xf32>
    %239 = tpu.reciprocal %238 {approx = true} : vector<8x8xf32> -> vector<8x8xf32>
    %240 = arith.mulf %236, %239 : vector<8x8xf32>
    %cst_130 = arith.constant 2.000000e+01 : f32
    %241 = vector.broadcast %cst_130 : f32 to vector<8x8xf32>
    %242 = arith.cmpf ogt, %226, %241 : vector<8x8xf32>
    %243 = arith.mulf %226, %240 : vector<8x8xf32>
    %244 = arith.select %242, %226, %243 : vector<8x8xi1>, vector<8x8xf32>
    %c0_131 = arith.constant 0 : index
    %c0_132 = arith.constant 0 : index
    %245 = vector.load %arg31[%c0_131, %c0_132] : memref<32x8xf32, #tpu.memory_space<vmem>>, vector<32x8xf32>
    %cst_133 = arith.constant dense<0.000000e+00> : vector<8x8xf32>
    %246 = tpu.matmul %47, %245, %cst_133 {dimension_numbers = #tpu.dot_dimension_numbers<[1], [0], [0], [1], [0, 0, 1, 1], [], []>} : vector<8x32xf32>, vector<32x8xf32>, vector<8x8xf32> -> vector<8x8xf32>
    %c0_134 = arith.constant 0 : index
    %c0_135 = arith.constant 0 : index
    %247 = vector.load %arg28[%c0_134, %c0_135] : memref<1x8xf32, #tpu.memory_space<vmem>>, vector<1x8xf32>
    %248 = vector.broadcast %247 : vector<1x8xf32> to vector<8x8xf32>
    %249 = arith.addf %246, %248 : vector<8x8xf32>
    %250 = arith.addf %244, %249 : vector<8x8xf32>
    %c0_136 = arith.constant 0 : index
    %c0_137 = arith.constant 0 : index
    %251 = vector.load %arg30[%c0_136, %c0_137] : memref<8x8xf32, #tpu.memory_space<vmem>>, vector<8x8xf32>
    %cst_138 = arith.constant dense<0.000000e+00> : vector<8x8xf32>
    %252 = tpu.matmul %250, %251, %cst_138 {dimension_numbers = #tpu.dot_dimension_numbers<[1], [0], [0], [1], [0, 0, 1, 1], [], []>} : vector<8x8xf32>, vector<8x8xf32>, vector<8x8xf32> -> vector<8x8xf32>
    %c0_139 = arith.constant 0 : index
    %c0_140 = arith.constant 0 : index
    %253 = vector.load %arg27[%c0_139, %c0_140] : memref<1x8xf32, #tpu.memory_space<vmem>>, vector<1x8xf32>
    %254 = vector.broadcast %253 : vector<1x8xf32> to vector<8x8xf32>
    %255 = arith.addf %252, %254 : vector<8x8xf32>
    %cst_141 = arith.constant 2.000000e+01 : f32
    %256 = vector.broadcast %cst_141 : f32 to vector<8x8xf32>
    %257 = arith.minimumf %255, %256 : vector<8x8xf32>
    %258 = math.exp %257 : vector<8x8xf32>
    %cst_142 = arith.constant 1.000000e+00 : f32
    %259 = vector.broadcast %cst_142 : f32 to vector<8x8xf32>
    %260 = arith.addf %259, %258 : vector<8x8xf32>
    %cst_143 = arith.constant 1.000000e+00 : f32
    %261 = vector.broadcast %cst_143 : f32 to vector<8x8xf32>
    %262 = arith.addf %261, %258 : vector<8x8xf32>
    %263 = arith.mulf %260, %262 : vector<8x8xf32>
    %cst_144 = arith.constant 1.000000e+00 : f32
    %264 = vector.broadcast %cst_144 : f32 to vector<8x8xf32>
    %265 = arith.subf %263, %264 : vector<8x8xf32>
    %cst_145 = arith.constant 1.000000e+00 : f32
    %266 = vector.broadcast %cst_145 : f32 to vector<8x8xf32>
    %267 = arith.addf %263, %266 : vector<8x8xf32>
    %268 = tpu.reciprocal %267 {approx = true} : vector<8x8xf32> -> vector<8x8xf32>
    %269 = arith.mulf %265, %268 : vector<8x8xf32>
    %cst_146 = arith.constant 2.000000e+01 : f32
    %270 = vector.broadcast %cst_146 : f32 to vector<8x8xf32>
    %271 = arith.cmpf ogt, %255, %270 : vector<8x8xf32>
    %272 = arith.mulf %255, %269 : vector<8x8xf32>
    %273 = arith.select %271, %255, %272 : vector<8x8xi1>, vector<8x8xf32>
    %274 = arith.addf %273, %221 : vector<8x8xf32>
    %c0_147 = arith.constant 0 : index
    %c0_148 = arith.constant 0 : index
    %275 = vector.load %arg17[%c0_147, %c0_148] : memref<8x8xf32, #tpu.memory_space<vmem>>, vector<8x8xf32>
    %cst_149 = arith.constant dense<0.000000e+00> : vector<8x8xf32>
    %276 = tpu.matmul %274, %275, %cst_149 {dimension_numbers = #tpu.dot_dimension_numbers<[1], [0], [0], [1], [0, 0, 1, 1], [], []>} : vector<8x8xf32>, vector<8x8xf32>, vector<8x8xf32> -> vector<8x8xf32>
    %c0_150 = arith.constant 0 : index
    %c0_151 = arith.constant 0 : index
    %277 = vector.load %arg16[%c0_150, %c0_151] : memref<1x8xf32, #tpu.memory_space<vmem>>, vector<1x8xf32>
    %278 = vector.broadcast %277 : vector<1x8xf32> to vector<8x8xf32>
    %279 = arith.addf %276, %278 : vector<8x8xf32>
    %c0_152 = arith.constant 0 : index
    %c0_153 = arith.constant 0 : index
    %280 = vector.load %arg36[%c0_152, %c0_153] : memref<8x4xf32, #tpu.memory_space<vmem>>, vector<8x4xf32>
    %cst_154 = arith.constant dense<0.000000e+00> : vector<8x4xf32>
    %281 = tpu.matmul %279, %280, %cst_154 {dimension_numbers = #tpu.dot_dimension_numbers<[1], [0], [0], [1], [0, 0, 1, 1], [], []>} : vector<8x8xf32>, vector<8x4xf32>, vector<8x4xf32> -> vector<8x4xf32>
    %c0_155 = arith.constant 0 : index
    %c0_156 = arith.constant 0 : index
    %282 = vector.load %arg32[%c0_155, %c0_156] : memref<1x4xf32, #tpu.memory_space<vmem>>, vector<1x4xf32>
    %283 = vector.broadcast %282 : vector<1x4xf32> to vector<8x4xf32>
    %284 = arith.addf %281, %283 : vector<8x4xf32>
    %cst_157 = arith.constant 2.000000e+01 : f32
    %285 = vector.broadcast %cst_157 : f32 to vector<8x4xf32>
    %286 = arith.minimumf %284, %285 : vector<8x4xf32>
    %287 = math.exp %286 : vector<8x4xf32>
    %cst_158 = arith.constant 1.000000e+00 : f32
    %288 = vector.broadcast %cst_158 : f32 to vector<8x4xf32>
    %289 = arith.addf %288, %287 : vector<8x4xf32>
    %cst_159 = arith.constant 1.000000e+00 : f32
    %290 = vector.broadcast %cst_159 : f32 to vector<8x4xf32>
    %291 = arith.addf %290, %287 : vector<8x4xf32>
    %292 = arith.mulf %289, %291 : vector<8x4xf32>
    %cst_160 = arith.constant 1.000000e+00 : f32
    %293 = vector.broadcast %cst_160 : f32 to vector<8x4xf32>
    %294 = arith.subf %292, %293 : vector<8x4xf32>
    %cst_161 = arith.constant 1.000000e+00 : f32
    %295 = vector.broadcast %cst_161 : f32 to vector<8x4xf32>
    %296 = arith.addf %292, %295 : vector<8x4xf32>
    %297 = tpu.reciprocal %296 {approx = true} : vector<8x4xf32> -> vector<8x4xf32>
    %298 = arith.mulf %294, %297 : vector<8x4xf32>
    %cst_162 = arith.constant 2.000000e+01 : f32
    %299 = vector.broadcast %cst_162 : f32 to vector<8x4xf32>
    %300 = arith.cmpf ogt, %284, %299 : vector<8x4xf32>
    %301 = arith.mulf %284, %298 : vector<8x4xf32>
    %302 = arith.select %300, %284, %301 : vector<8x4xi1>, vector<8x4xf32>
    %c0_163 = arith.constant 0 : index
    %c0_164 = arith.constant 0 : index
    %303 = vector.load %arg39[%c0_163, %c0_164] : memref<32x4xf32, #tpu.memory_space<vmem>>, vector<32x4xf32>
    %cst_165 = arith.constant dense<0.000000e+00> : vector<8x4xf32>
    %304 = tpu.matmul %47, %303, %cst_165 {dimension_numbers = #tpu.dot_dimension_numbers<[1], [0], [0], [1], [0, 0, 1, 1], [], []>} : vector<8x32xf32>, vector<32x4xf32>, vector<8x4xf32> -> vector<8x4xf32>
    %c0_166 = arith.constant 0 : index
    %c0_167 = arith.constant 0 : index
    %305 = vector.load %arg35[%c0_166, %c0_167] : memref<1x4xf32, #tpu.memory_space<vmem>>, vector<1x4xf32>
    %306 = vector.broadcast %305 : vector<1x4xf32> to vector<8x4xf32>
    %307 = arith.addf %304, %306 : vector<8x4xf32>
    %308 = arith.addf %302, %307 : vector<8x4xf32>
    %c0_168 = arith.constant 0 : index
    %c0_169 = arith.constant 0 : index
    %309 = vector.load %arg37[%c0_168, %c0_169] : memref<4x4xf32, #tpu.memory_space<vmem>>, vector<4x4xf32>
    %cst_170 = arith.constant dense<0.000000e+00> : vector<8x4xf32>
    %310 = tpu.matmul %308, %309, %cst_170 {dimension_numbers = #tpu.dot_dimension_numbers<[1], [0], [0], [1], [0, 0, 1, 1], [], []>} : vector<8x4xf32>, vector<4x4xf32>, vector<8x4xf32> -> vector<8x4xf32>
    %c0_171 = arith.constant 0 : index
    %c0_172 = arith.constant 0 : index
    %311 = vector.load %arg33[%c0_171, %c0_172] : memref<1x4xf32, #tpu.memory_space<vmem>>, vector<1x4xf32>
    %312 = vector.broadcast %311 : vector<1x4xf32> to vector<8x4xf32>
    %313 = arith.addf %310, %312 : vector<8x4xf32>
    %cst_173 = arith.constant 2.000000e+01 : f32
    %314 = vector.broadcast %cst_173 : f32 to vector<8x4xf32>
    %315 = arith.minimumf %313, %314 : vector<8x4xf32>
    %316 = math.exp %315 : vector<8x4xf32>
    %cst_174 = arith.constant 1.000000e+00 : f32
    %317 = vector.broadcast %cst_174 : f32 to vector<8x4xf32>
    %318 = arith.addf %317, %316 : vector<8x4xf32>
    %cst_175 = arith.constant 1.000000e+00 : f32
    %319 = vector.broadcast %cst_175 : f32 to vector<8x4xf32>
    %320 = arith.addf %319, %316 : vector<8x4xf32>
    %321 = arith.mulf %318, %320 : vector<8x4xf32>
    %cst_176 = arith.constant 1.000000e+00 : f32
    %322 = vector.broadcast %cst_176 : f32 to vector<8x4xf32>
    %323 = arith.subf %321, %322 : vector<8x4xf32>
    %cst_177 = arith.constant 1.000000e+00 : f32
    %324 = vector.broadcast %cst_177 : f32 to vector<8x4xf32>
    %325 = arith.addf %321, %324 : vector<8x4xf32>
    %326 = tpu.reciprocal %325 {approx = true} : vector<8x4xf32> -> vector<8x4xf32>
    %327 = arith.mulf %323, %326 : vector<8x4xf32>
    %cst_178 = arith.constant 2.000000e+01 : f32
    %328 = vector.broadcast %cst_178 : f32 to vector<8x4xf32>
    %329 = arith.cmpf ogt, %313, %328 : vector<8x4xf32>
    %330 = arith.mulf %313, %327 : vector<8x4xf32>
    %331 = arith.select %329, %313, %330 : vector<8x4xi1>, vector<8x4xf32>
    %c0_179 = arith.constant 0 : index
    %c0_180 = arith.constant 0 : index
    %332 = vector.load %arg38[%c0_179, %c0_180] : memref<8x4xf32, #tpu.memory_space<vmem>>, vector<8x4xf32>
    %cst_181 = arith.constant dense<0.000000e+00> : vector<8x4xf32>
    %333 = tpu.matmul %279, %332, %cst_181 {dimension_numbers = #tpu.dot_dimension_numbers<[1], [0], [0], [1], [0, 0, 1, 1], [], []>} : vector<8x8xf32>, vector<8x4xf32>, vector<8x4xf32> -> vector<8x4xf32>
    %c0_182 = arith.constant 0 : index
    %c0_183 = arith.constant 0 : index
    %334 = vector.load %arg34[%c0_182, %c0_183] : memref<1x4xf32, #tpu.memory_space<vmem>>, vector<1x4xf32>
    %335 = vector.broadcast %334 : vector<1x4xf32> to vector<8x4xf32>
    %336 = arith.addf %333, %335 : vector<8x4xf32>
    %337 = arith.addf %331, %336 : vector<8x4xf32>
    %c0_184 = arith.constant 0 : index
    %c0_185 = arith.constant 0 : index
    %338 = vector.load %arg43[%c0_184, %c0_185] : memref<4x4xf32, #tpu.memory_space<vmem>>, vector<4x4xf32>
    %cst_186 = arith.constant dense<0.000000e+00> : vector<8x4xf32>
    %339 = tpu.matmul %337, %338, %cst_186 {dimension_numbers = #tpu.dot_dimension_numbers<[1], [0], [0], [1], [0, 0, 1, 1], [], []>} : vector<8x4xf32>, vector<4x4xf32>, vector<8x4xf32> -> vector<8x4xf32>
    %c0_187 = arith.constant 0 : index
    %c0_188 = arith.constant 0 : index
    %340 = vector.load %arg40[%c0_187, %c0_188] : memref<1x4xf32, #tpu.memory_space<vmem>>, vector<1x4xf32>
    %341 = vector.broadcast %340 : vector<1x4xf32> to vector<8x4xf32>
    %342 = arith.addf %339, %341 : vector<8x4xf32>
    %cst_189 = arith.constant 2.000000e+01 : f32
    %343 = vector.broadcast %cst_189 : f32 to vector<8x4xf32>
    %344 = arith.minimumf %342, %343 : vector<8x4xf32>
    %345 = math.exp %344 : vector<8x4xf32>
    %cst_190 = arith.constant 1.000000e+00 : f32
    %346 = vector.broadcast %cst_190 : f32 to vector<8x4xf32>
    %347 = arith.addf %346, %345 : vector<8x4xf32>
    %cst_191 = arith.constant 1.000000e+00 : f32
    %348 = vector.broadcast %cst_191 : f32 to vector<8x4xf32>
    %349 = arith.addf %348, %345 : vector<8x4xf32>
    %350 = arith.mulf %347, %349 : vector<8x4xf32>
    %cst_192 = arith.constant 1.000000e+00 : f32
    %351 = vector.broadcast %cst_192 : f32 to vector<8x4xf32>
    %352 = arith.subf %350, %351 : vector<8x4xf32>
    %cst_193 = arith.constant 1.000000e+00 : f32
    %353 = vector.broadcast %cst_193 : f32 to vector<8x4xf32>
    %354 = arith.addf %350, %353 : vector<8x4xf32>
    %355 = tpu.reciprocal %354 {approx = true} : vector<8x4xf32> -> vector<8x4xf32>
    %356 = arith.mulf %352, %355 : vector<8x4xf32>
    %cst_194 = arith.constant 2.000000e+01 : f32
    %357 = vector.broadcast %cst_194 : f32 to vector<8x4xf32>
    %358 = arith.cmpf ogt, %342, %357 : vector<8x4xf32>
    %359 = arith.mulf %342, %356 : vector<8x4xf32>
    %360 = arith.select %358, %342, %359 : vector<8x4xi1>, vector<8x4xf32>
    %c0_195 = arith.constant 0 : index
    %c0_196 = arith.constant 0 : index
    %361 = vector.load %arg45[%c0_195, %c0_196] : memref<32x4xf32, #tpu.memory_space<vmem>>, vector<32x4xf32>
    %cst_197 = arith.constant dense<0.000000e+00> : vector<8x4xf32>
    %362 = tpu.matmul %47, %361, %cst_197 {dimension_numbers = #tpu.dot_dimension_numbers<[1], [0], [0], [1], [0, 0, 1, 1], [], []>} : vector<8x32xf32>, vector<32x4xf32>, vector<8x4xf32> -> vector<8x4xf32>
    %c0_198 = arith.constant 0 : index
    %c0_199 = arith.constant 0 : index
    %363 = vector.load %arg42[%c0_198, %c0_199] : memref<1x4xf32, #tpu.memory_space<vmem>>, vector<1x4xf32>
    %364 = vector.broadcast %363 : vector<1x4xf32> to vector<8x4xf32>
    %365 = arith.addf %362, %364 : vector<8x4xf32>
    %366 = arith.addf %360, %365 : vector<8x4xf32>
    %c0_200 = arith.constant 0 : index
    %c0_201 = arith.constant 0 : index
    %367 = vector.load %arg44[%c0_200, %c0_201] : memref<4x4xf32, #tpu.memory_space<vmem>>, vector<4x4xf32>
    %cst_202 = arith.constant dense<0.000000e+00> : vector<8x4xf32>
    %368 = tpu.matmul %366, %367, %cst_202 {dimension_numbers = #tpu.dot_dimension_numbers<[1], [0], [0], [1], [0, 0, 1, 1], [], []>} : vector<8x4xf32>, vector<4x4xf32>, vector<8x4xf32> -> vector<8x4xf32>
    %c0_203 = arith.constant 0 : index
    %c0_204 = arith.constant 0 : index
    %369 = vector.load %arg41[%c0_203, %c0_204] : memref<1x4xf32, #tpu.memory_space<vmem>>, vector<1x4xf32>
    %370 = vector.broadcast %369 : vector<1x4xf32> to vector<8x4xf32>
    %371 = arith.addf %368, %370 : vector<8x4xf32>
    %cst_205 = arith.constant 2.000000e+01 : f32
    %372 = vector.broadcast %cst_205 : f32 to vector<8x4xf32>
    %373 = arith.minimumf %371, %372 : vector<8x4xf32>
    %374 = math.exp %373 : vector<8x4xf32>
    %cst_206 = arith.constant 1.000000e+00 : f32
    %375 = vector.broadcast %cst_206 : f32 to vector<8x4xf32>
    %376 = arith.addf %375, %374 : vector<8x4xf32>
    %cst_207 = arith.constant 1.000000e+00 : f32
    %377 = vector.broadcast %cst_207 : f32 to vector<8x4xf32>
    %378 = arith.addf %377, %374 : vector<8x4xf32>
    %379 = arith.mulf %376, %378 : vector<8x4xf32>
    %cst_208 = arith.constant 1.000000e+00 : f32
    %380 = vector.broadcast %cst_208 : f32 to vector<8x4xf32>
    %381 = arith.subf %379, %380 : vector<8x4xf32>
    %cst_209 = arith.constant 1.000000e+00 : f32
    %382 = vector.broadcast %cst_209 : f32 to vector<8x4xf32>
    %383 = arith.addf %379, %382 : vector<8x4xf32>
    %384 = tpu.reciprocal %383 {approx = true} : vector<8x4xf32> -> vector<8x4xf32>
    %385 = arith.mulf %381, %384 : vector<8x4xf32>
    %cst_210 = arith.constant 2.000000e+01 : f32
    %386 = vector.broadcast %cst_210 : f32 to vector<8x4xf32>
    %387 = arith.cmpf ogt, %371, %386 : vector<8x4xf32>
    %388 = arith.mulf %371, %385 : vector<8x4xf32>
    %389 = arith.select %387, %371, %388 : vector<8x4xi1>, vector<8x4xf32>
    %390 = arith.addf %389, %337 : vector<8x4xf32>
    %c0_211 = arith.constant 0 : index
    %c0_212 = arith.constant 0 : index
    %391 = vector.load %arg49[%c0_211, %c0_212] : memref<4x4xf32, #tpu.memory_space<vmem>>, vector<4x4xf32>
    %cst_213 = arith.constant dense<0.000000e+00> : vector<8x4xf32>
    %392 = tpu.matmul %390, %391, %cst_213 {dimension_numbers = #tpu.dot_dimension_numbers<[1], [0], [0], [1], [0, 0, 1, 1], [], []>} : vector<8x4xf32>, vector<4x4xf32>, vector<8x4xf32> -> vector<8x4xf32>
    %c0_214 = arith.constant 0 : index
    %c0_215 = arith.constant 0 : index
    %393 = vector.load %arg46[%c0_214, %c0_215] : memref<1x4xf32, #tpu.memory_space<vmem>>, vector<1x4xf32>
    %394 = vector.broadcast %393 : vector<1x4xf32> to vector<8x4xf32>
    %395 = arith.addf %392, %394 : vector<8x4xf32>
    %cst_216 = arith.constant 2.000000e+01 : f32
    %396 = vector.broadcast %cst_216 : f32 to vector<8x4xf32>
    %397 = arith.minimumf %395, %396 : vector<8x4xf32>
    %398 = math.exp %397 : vector<8x4xf32>
    %cst_217 = arith.constant 1.000000e+00 : f32
    %399 = vector.broadcast %cst_217 : f32 to vector<8x4xf32>
    %400 = arith.addf %399, %398 : vector<8x4xf32>
    %cst_218 = arith.constant 1.000000e+00 : f32
    %401 = vector.broadcast %cst_218 : f32 to vector<8x4xf32>
    %402 = arith.addf %401, %398 : vector<8x4xf32>
    %403 = arith.mulf %400, %402 : vector<8x4xf32>
    %cst_219 = arith.constant 1.000000e+00 : f32
    %404 = vector.broadcast %cst_219 : f32 to vector<8x4xf32>
    %405 = arith.subf %403, %404 : vector<8x4xf32>
    %cst_220 = arith.constant 1.000000e+00 : f32
    %406 = vector.broadcast %cst_220 : f32 to vector<8x4xf32>
    %407 = arith.addf %403, %406 : vector<8x4xf32>
    %408 = tpu.reciprocal %407 {approx = true} : vector<8x4xf32> -> vector<8x4xf32>
    %409 = arith.mulf %405, %408 : vector<8x4xf32>
    %cst_221 = arith.constant 2.000000e+01 : f32
    %410 = vector.broadcast %cst_221 : f32 to vector<8x4xf32>
    %411 = arith.cmpf ogt, %395, %410 : vector<8x4xf32>
    %412 = arith.mulf %395, %409 : vector<8x4xf32>
    %413 = arith.select %411, %395, %412 : vector<8x4xi1>, vector<8x4xf32>
    %c0_222 = arith.constant 0 : index
    %c0_223 = arith.constant 0 : index
    %414 = vector.load %arg51[%c0_222, %c0_223] : memref<32x4xf32, #tpu.memory_space<vmem>>, vector<32x4xf32>
    %cst_224 = arith.constant dense<0.000000e+00> : vector<8x4xf32>
    %415 = tpu.matmul %47, %414, %cst_224 {dimension_numbers = #tpu.dot_dimension_numbers<[1], [0], [0], [1], [0, 0, 1, 1], [], []>} : vector<8x32xf32>, vector<32x4xf32>, vector<8x4xf32> -> vector<8x4xf32>
    %c0_225 = arith.constant 0 : index
    %c0_226 = arith.constant 0 : index
    %416 = vector.load %arg48[%c0_225, %c0_226] : memref<1x4xf32, #tpu.memory_space<vmem>>, vector<1x4xf32>
    %417 = vector.broadcast %416 : vector<1x4xf32> to vector<8x4xf32>
    %418 = arith.addf %415, %417 : vector<8x4xf32>
    %419 = arith.addf %413, %418 : vector<8x4xf32>
    %c0_227 = arith.constant 0 : index
    %c0_228 = arith.constant 0 : index
    %420 = vector.load %arg50[%c0_227, %c0_228] : memref<4x4xf32, #tpu.memory_space<vmem>>, vector<4x4xf32>
    %cst_229 = arith.constant dense<0.000000e+00> : vector<8x4xf32>
    %421 = tpu.matmul %419, %420, %cst_229 {dimension_numbers = #tpu.dot_dimension_numbers<[1], [0], [0], [1], [0, 0, 1, 1], [], []>} : vector<8x4xf32>, vector<4x4xf32>, vector<8x4xf32> -> vector<8x4xf32>
    %c0_230 = arith.constant 0 : index
    %c0_231 = arith.constant 0 : index
    %422 = vector.load %arg47[%c0_230, %c0_231] : memref<1x4xf32, #tpu.memory_space<vmem>>, vector<1x4xf32>
    %423 = vector.broadcast %422 : vector<1x4xf32> to vector<8x4xf32>
    %424 = arith.addf %421, %423 : vector<8x4xf32>
    %cst_232 = arith.constant 2.000000e+01 : f32
    %425 = vector.broadcast %cst_232 : f32 to vector<8x4xf32>
    %426 = arith.minimumf %424, %425 : vector<8x4xf32>
    %427 = math.exp %426 : vector<8x4xf32>
    %cst_233 = arith.constant 1.000000e+00 : f32
    %428 = vector.broadcast %cst_233 : f32 to vector<8x4xf32>
    %429 = arith.addf %428, %427 : vector<8x4xf32>
    %cst_234 = arith.constant 1.000000e+00 : f32
    %430 = vector.broadcast %cst_234 : f32 to vector<8x4xf32>
    %431 = arith.addf %430, %427 : vector<8x4xf32>
    %432 = arith.mulf %429, %431 : vector<8x4xf32>
    %cst_235 = arith.constant 1.000000e+00 : f32
    %433 = vector.broadcast %cst_235 : f32 to vector<8x4xf32>
    %434 = arith.subf %432, %433 : vector<8x4xf32>
    %cst_236 = arith.constant 1.000000e+00 : f32
    %435 = vector.broadcast %cst_236 : f32 to vector<8x4xf32>
    %436 = arith.addf %432, %435 : vector<8x4xf32>
    %437 = tpu.reciprocal %436 {approx = true} : vector<8x4xf32> -> vector<8x4xf32>
    %438 = arith.mulf %434, %437 : vector<8x4xf32>
    %cst_237 = arith.constant 2.000000e+01 : f32
    %439 = vector.broadcast %cst_237 : f32 to vector<8x4xf32>
    %440 = arith.cmpf ogt, %424, %439 : vector<8x4xf32>
    %441 = arith.mulf %424, %438 : vector<8x4xf32>
    %442 = arith.select %440, %424, %441 : vector<8x4xi1>, vector<8x4xf32>
    %443 = arith.addf %442, %390 : vector<8x4xf32>
    %c0_238 = arith.constant 0 : index
    %c0_239 = arith.constant 0 : index
    %444 = vector.load %arg55[%c0_238, %c0_239] : memref<4x4xf32, #tpu.memory_space<vmem>>, vector<4x4xf32>
    %cst_240 = arith.constant dense<0.000000e+00> : vector<8x4xf32>
    %445 = tpu.matmul %443, %444, %cst_240 {dimension_numbers = #tpu.dot_dimension_numbers<[1], [0], [0], [1], [0, 0, 1, 1], [], []>} : vector<8x4xf32>, vector<4x4xf32>, vector<8x4xf32> -> vector<8x4xf32>
    %c0_241 = arith.constant 0 : index
    %c0_242 = arith.constant 0 : index
    %446 = vector.load %arg52[%c0_241, %c0_242] : memref<1x4xf32, #tpu.memory_space<vmem>>, vector<1x4xf32>
    %447 = vector.broadcast %446 : vector<1x4xf32> to vector<8x4xf32>
    %448 = arith.addf %445, %447 : vector<8x4xf32>
    %cst_243 = arith.constant 2.000000e+01 : f32
    %449 = vector.broadcast %cst_243 : f32 to vector<8x4xf32>
    %450 = arith.minimumf %448, %449 : vector<8x4xf32>
    %451 = math.exp %450 : vector<8x4xf32>
    %cst_244 = arith.constant 1.000000e+00 : f32
    %452 = vector.broadcast %cst_244 : f32 to vector<8x4xf32>
    %453 = arith.addf %452, %451 : vector<8x4xf32>
    %cst_245 = arith.constant 1.000000e+00 : f32
    %454 = vector.broadcast %cst_245 : f32 to vector<8x4xf32>
    %455 = arith.addf %454, %451 : vector<8x4xf32>
    %456 = arith.mulf %453, %455 : vector<8x4xf32>
    %cst_246 = arith.constant 1.000000e+00 : f32
    %457 = vector.broadcast %cst_246 : f32 to vector<8x4xf32>
    %458 = arith.subf %456, %457 : vector<8x4xf32>
    %cst_247 = arith.constant 1.000000e+00 : f32
    %459 = vector.broadcast %cst_247 : f32 to vector<8x4xf32>
    %460 = arith.addf %456, %459 : vector<8x4xf32>
    %461 = tpu.reciprocal %460 {approx = true} : vector<8x4xf32> -> vector<8x4xf32>
    %462 = arith.mulf %458, %461 : vector<8x4xf32>
    %cst_248 = arith.constant 2.000000e+01 : f32
    %463 = vector.broadcast %cst_248 : f32 to vector<8x4xf32>
    %464 = arith.cmpf ogt, %448, %463 : vector<8x4xf32>
    %465 = arith.mulf %448, %462 : vector<8x4xf32>
    %466 = arith.select %464, %448, %465 : vector<8x4xi1>, vector<8x4xf32>
    %c0_249 = arith.constant 0 : index
    %c0_250 = arith.constant 0 : index
    %467 = vector.load %arg57[%c0_249, %c0_250] : memref<32x4xf32, #tpu.memory_space<vmem>>, vector<32x4xf32>
    %cst_251 = arith.constant dense<0.000000e+00> : vector<8x4xf32>
    %468 = tpu.matmul %47, %467, %cst_251 {dimension_numbers = #tpu.dot_dimension_numbers<[1], [0], [0], [1], [0, 0, 1, 1], [], []>} : vector<8x32xf32>, vector<32x4xf32>, vector<8x4xf32> -> vector<8x4xf32>
    %c0_252 = arith.constant 0 : index
    %c0_253 = arith.constant 0 : index
    %469 = vector.load %arg54[%c0_252, %c0_253] : memref<1x4xf32, #tpu.memory_space<vmem>>, vector<1x4xf32>
    %470 = vector.broadcast %469 : vector<1x4xf32> to vector<8x4xf32>
    %471 = arith.addf %468, %470 : vector<8x4xf32>
    %472 = arith.addf %466, %471 : vector<8x4xf32>
    %c0_254 = arith.constant 0 : index
    %c0_255 = arith.constant 0 : index
    %473 = vector.load %arg56[%c0_254, %c0_255] : memref<4x4xf32, #tpu.memory_space<vmem>>, vector<4x4xf32>
    %cst_256 = arith.constant dense<0.000000e+00> : vector<8x4xf32>
    %474 = tpu.matmul %472, %473, %cst_256 {dimension_numbers = #tpu.dot_dimension_numbers<[1], [0], [0], [1], [0, 0, 1, 1], [], []>} : vector<8x4xf32>, vector<4x4xf32>, vector<8x4xf32> -> vector<8x4xf32>
    %c0_257 = arith.constant 0 : index
    %c0_258 = arith.constant 0 : index
    %475 = vector.load %arg53[%c0_257, %c0_258] : memref<1x4xf32, #tpu.memory_space<vmem>>, vector<1x4xf32>
    %476 = vector.broadcast %475 : vector<1x4xf32> to vector<8x4xf32>
    %477 = arith.addf %474, %476 : vector<8x4xf32>
    %cst_259 = arith.constant 2.000000e+01 : f32
    %478 = vector.broadcast %cst_259 : f32 to vector<8x4xf32>
    %479 = arith.minimumf %477, %478 : vector<8x4xf32>
    %480 = math.exp %479 : vector<8x4xf32>
    %cst_260 = arith.constant 1.000000e+00 : f32
    %481 = vector.broadcast %cst_260 : f32 to vector<8x4xf32>
    %482 = arith.addf %481, %480 : vector<8x4xf32>
    %cst_261 = arith.constant 1.000000e+00 : f32
    %483 = vector.broadcast %cst_261 : f32 to vector<8x4xf32>
    %484 = arith.addf %483, %480 : vector<8x4xf32>
    %485 = arith.mulf %482, %484 : vector<8x4xf32>
    %cst_262 = arith.constant 1.000000e+00 : f32
    %486 = vector.broadcast %cst_262 : f32 to vector<8x4xf32>
    %487 = arith.subf %485, %486 : vector<8x4xf32>
    %cst_263 = arith.constant 1.000000e+00 : f32
    %488 = vector.broadcast %cst_263 : f32 to vector<8x4xf32>
    %489 = arith.addf %485, %488 : vector<8x4xf32>
    %490 = tpu.reciprocal %489 {approx = true} : vector<8x4xf32> -> vector<8x4xf32>
    %491 = arith.mulf %487, %490 : vector<8x4xf32>
    %cst_264 = arith.constant 2.000000e+01 : f32
    %492 = vector.broadcast %cst_264 : f32 to vector<8x4xf32>
    %493 = arith.cmpf ogt, %477, %492 : vector<8x4xf32>
    %494 = arith.mulf %477, %491 : vector<8x4xf32>
    %495 = arith.select %493, %477, %494 : vector<8x4xi1>, vector<8x4xf32>
    %496 = arith.addf %495, %443 : vector<8x4xf32>
    %497 = tpu.iota {dimensions = array<i32: 0>} : vector<4x8xi32>
    %498 = tpu.iota {dimensions = array<i32: 1>} : vector<4x8xi32>
    %499 = tpu.iota {dimensions = array<i32: 0>} : vector<4x8xi32>
    %500 = tpu.iota {dimensions = array<i32: 1>} : vector<4x8xi32>
    %501 = arith.cmpi eq, %498, %497 : vector<4x8xi32>
    %502 = arith.extui %501 : vector<4x8xi1> to vector<4x8xi32>
    %503 = arith.sitofp %502 : vector<4x8xi32> to vector<4x8xf32>
    %c4_i32 = arith.constant 4 : i32
    %504 = vector.broadcast %c4_i32 : i32 to vector<4x8xi32>
    %505 = arith.addi %499, %504 : vector<4x8xi32>
    %506 = arith.cmpi eq, %500, %505 : vector<4x8xi32>
    %507 = arith.extui %506 : vector<4x8xi1> to vector<4x8xi32>
    %508 = arith.sitofp %507 : vector<4x8xi32> to vector<4x8xf32>
    %cst_265 = arith.constant dense<0.000000e+00> : vector<8x8xf32>
    %509 = tpu.matmul %496, %503, %cst_265 {dimension_numbers = #tpu.dot_dimension_numbers<[1], [0], [0], [1], [0, 0, 1, 1], [], []>} : vector<8x4xf32>, vector<4x8xf32>, vector<8x8xf32> -> vector<8x8xf32>
    %cst_266 = arith.constant dense<0.000000e+00> : vector<8x8xf32>
    %510 = tpu.matmul %390, %508, %cst_266 {dimension_numbers = #tpu.dot_dimension_numbers<[1], [0], [0], [1], [0, 0, 1, 1], [], []>} : vector<8x4xf32>, vector<4x8xf32>, vector<8x8xf32> -> vector<8x8xf32>
    %511 = arith.addf %509, %510 : vector<8x8xf32>
    %c0_267 = arith.constant 0 : index
    %c0_268 = arith.constant 0 : index
    %512 = vector.load %arg65[%c0_267, %c0_268] : memref<8x8xf32, #tpu.memory_space<vmem>>, vector<8x8xf32>
    %cst_269 = arith.constant dense<0.000000e+00> : vector<8x8xf32>
    %513 = tpu.matmul %511, %512, %cst_269 {dimension_numbers = #tpu.dot_dimension_numbers<[1], [0], [0], [1], [0, 0, 1, 1], [], []>} : vector<8x8xf32>, vector<8x8xf32>, vector<8x8xf32> -> vector<8x8xf32>
    %c0_270 = arith.constant 0 : index
    %c0_271 = arith.constant 0 : index
    %514 = vector.load %arg62[%c0_270, %c0_271] : memref<1x8xf32, #tpu.memory_space<vmem>>, vector<1x8xf32>
    %515 = vector.broadcast %514 : vector<1x8xf32> to vector<8x8xf32>
    %516 = arith.addf %513, %515 : vector<8x8xf32>
    %cst_272 = arith.constant 2.000000e+01 : f32
    %517 = vector.broadcast %cst_272 : f32 to vector<8x8xf32>
    %518 = arith.minimumf %516, %517 : vector<8x8xf32>
    %519 = math.exp %518 : vector<8x8xf32>
    %cst_273 = arith.constant 1.000000e+00 : f32
    %520 = vector.broadcast %cst_273 : f32 to vector<8x8xf32>
    %521 = arith.addf %520, %519 : vector<8x8xf32>
    %cst_274 = arith.constant 1.000000e+00 : f32
    %522 = vector.broadcast %cst_274 : f32 to vector<8x8xf32>
    %523 = arith.addf %522, %519 : vector<8x8xf32>
    %524 = arith.mulf %521, %523 : vector<8x8xf32>
    %cst_275 = arith.constant 1.000000e+00 : f32
    %525 = vector.broadcast %cst_275 : f32 to vector<8x8xf32>
    %526 = arith.subf %524, %525 : vector<8x8xf32>
    %cst_276 = arith.constant 1.000000e+00 : f32
    %527 = vector.broadcast %cst_276 : f32 to vector<8x8xf32>
    %528 = arith.addf %524, %527 : vector<8x8xf32>
    %529 = tpu.reciprocal %528 {approx = true} : vector<8x8xf32> -> vector<8x8xf32>
    %530 = arith.mulf %526, %529 : vector<8x8xf32>
    %cst_277 = arith.constant 2.000000e+01 : f32
    %531 = vector.broadcast %cst_277 : f32 to vector<8x8xf32>
    %532 = arith.cmpf ogt, %516, %531 : vector<8x8xf32>
    %533 = arith.mulf %516, %530 : vector<8x8xf32>
    %534 = arith.select %532, %516, %533 : vector<8x8xi1>, vector<8x8xf32>
    %c0_278 = arith.constant 0 : index
    %c0_279 = arith.constant 0 : index
    %535 = vector.load %arg67[%c0_278, %c0_279] : memref<32x8xf32, #tpu.memory_space<vmem>>, vector<32x8xf32>
    %cst_280 = arith.constant dense<0.000000e+00> : vector<8x8xf32>
    %536 = tpu.matmul %47, %535, %cst_280 {dimension_numbers = #tpu.dot_dimension_numbers<[1], [0], [0], [1], [0, 0, 1, 1], [], []>} : vector<8x32xf32>, vector<32x8xf32>, vector<8x8xf32> -> vector<8x8xf32>
    %c0_281 = arith.constant 0 : index
    %c0_282 = arith.constant 0 : index
    %537 = vector.load %arg64[%c0_281, %c0_282] : memref<1x8xf32, #tpu.memory_space<vmem>>, vector<1x8xf32>
    %538 = vector.broadcast %537 : vector<1x8xf32> to vector<8x8xf32>
    %539 = arith.addf %536, %538 : vector<8x8xf32>
    %540 = arith.addf %534, %539 : vector<8x8xf32>
    %c0_283 = arith.constant 0 : index
    %c0_284 = arith.constant 0 : index
    %541 = vector.load %arg66[%c0_283, %c0_284] : memref<8x8xf32, #tpu.memory_space<vmem>>, vector<8x8xf32>
    %cst_285 = arith.constant dense<0.000000e+00> : vector<8x8xf32>
    %542 = tpu.matmul %540, %541, %cst_285 {dimension_numbers = #tpu.dot_dimension_numbers<[1], [0], [0], [1], [0, 0, 1, 1], [], []>} : vector<8x8xf32>, vector<8x8xf32>, vector<8x8xf32> -> vector<8x8xf32>
    %c0_286 = arith.constant 0 : index
    %c0_287 = arith.constant 0 : index
    %543 = vector.load %arg63[%c0_286, %c0_287] : memref<1x8xf32, #tpu.memory_space<vmem>>, vector<1x8xf32>
    %544 = vector.broadcast %543 : vector<1x8xf32> to vector<8x8xf32>
    %545 = arith.addf %542, %544 : vector<8x8xf32>
    %cst_288 = arith.constant 2.000000e+01 : f32
    %546 = vector.broadcast %cst_288 : f32 to vector<8x8xf32>
    %547 = arith.minimumf %545, %546 : vector<8x8xf32>
    %548 = math.exp %547 : vector<8x8xf32>
    %cst_289 = arith.constant 1.000000e+00 : f32
    %549 = vector.broadcast %cst_289 : f32 to vector<8x8xf32>
    %550 = arith.addf %549, %548 : vector<8x8xf32>
    %cst_290 = arith.constant 1.000000e+00 : f32
    %551 = vector.broadcast %cst_290 : f32 to vector<8x8xf32>
    %552 = arith.addf %551, %548 : vector<8x8xf32>
    %553 = arith.mulf %550, %552 : vector<8x8xf32>
    %cst_291 = arith.constant 1.000000e+00 : f32
    %554 = vector.broadcast %cst_291 : f32 to vector<8x8xf32>
    %555 = arith.subf %553, %554 : vector<8x8xf32>
    %cst_292 = arith.constant 1.000000e+00 : f32
    %556 = vector.broadcast %cst_292 : f32 to vector<8x8xf32>
    %557 = arith.addf %553, %556 : vector<8x8xf32>
    %558 = tpu.reciprocal %557 {approx = true} : vector<8x8xf32> -> vector<8x8xf32>
    %559 = arith.mulf %555, %558 : vector<8x8xf32>
    %cst_293 = arith.constant 2.000000e+01 : f32
    %560 = vector.broadcast %cst_293 : f32 to vector<8x8xf32>
    %561 = arith.cmpf ogt, %545, %560 : vector<8x8xf32>
    %562 = arith.mulf %545, %559 : vector<8x8xf32>
    %563 = arith.select %561, %545, %562 : vector<8x8xi1>, vector<8x8xf32>
    %564 = arith.addf %563, %511 : vector<8x8xf32>
    %c0_294 = arith.constant 0 : index
    %c0_295 = arith.constant 0 : index
    %565 = vector.load %arg71[%c0_294, %c0_295] : memref<8x8xf32, #tpu.memory_space<vmem>>, vector<8x8xf32>
    %cst_296 = arith.constant dense<0.000000e+00> : vector<8x8xf32>
    %566 = tpu.matmul %564, %565, %cst_296 {dimension_numbers = #tpu.dot_dimension_numbers<[1], [0], [0], [1], [0, 0, 1, 1], [], []>} : vector<8x8xf32>, vector<8x8xf32>, vector<8x8xf32> -> vector<8x8xf32>
    %c0_297 = arith.constant 0 : index
    %c0_298 = arith.constant 0 : index
    %567 = vector.load %arg68[%c0_297, %c0_298] : memref<1x8xf32, #tpu.memory_space<vmem>>, vector<1x8xf32>
    %568 = vector.broadcast %567 : vector<1x8xf32> to vector<8x8xf32>
    %569 = arith.addf %566, %568 : vector<8x8xf32>
    %cst_299 = arith.constant 2.000000e+01 : f32
    %570 = vector.broadcast %cst_299 : f32 to vector<8x8xf32>
    %571 = arith.minimumf %569, %570 : vector<8x8xf32>
    %572 = math.exp %571 : vector<8x8xf32>
    %cst_300 = arith.constant 1.000000e+00 : f32
    %573 = vector.broadcast %cst_300 : f32 to vector<8x8xf32>
    %574 = arith.addf %573, %572 : vector<8x8xf32>
    %cst_301 = arith.constant 1.000000e+00 : f32
    %575 = vector.broadcast %cst_301 : f32 to vector<8x8xf32>
    %576 = arith.addf %575, %572 : vector<8x8xf32>
    %577 = arith.mulf %574, %576 : vector<8x8xf32>
    %cst_302 = arith.constant 1.000000e+00 : f32
    %578 = vector.broadcast %cst_302 : f32 to vector<8x8xf32>
    %579 = arith.subf %577, %578 : vector<8x8xf32>
    %cst_303 = arith.constant 1.000000e+00 : f32
    %580 = vector.broadcast %cst_303 : f32 to vector<8x8xf32>
    %581 = arith.addf %577, %580 : vector<8x8xf32>
    %582 = tpu.reciprocal %581 {approx = true} : vector<8x8xf32> -> vector<8x8xf32>
    %583 = arith.mulf %579, %582 : vector<8x8xf32>
    %cst_304 = arith.constant 2.000000e+01 : f32
    %584 = vector.broadcast %cst_304 : f32 to vector<8x8xf32>
    %585 = arith.cmpf ogt, %569, %584 : vector<8x8xf32>
    %586 = arith.mulf %569, %583 : vector<8x8xf32>
    %587 = arith.select %585, %569, %586 : vector<8x8xi1>, vector<8x8xf32>
    %c0_305 = arith.constant 0 : index
    %c0_306 = arith.constant 0 : index
    %588 = vector.load %arg73[%c0_305, %c0_306] : memref<32x8xf32, #tpu.memory_space<vmem>>, vector<32x8xf32>
    %cst_307 = arith.constant dense<0.000000e+00> : vector<8x8xf32>
    %589 = tpu.matmul %47, %588, %cst_307 {dimension_numbers = #tpu.dot_dimension_numbers<[1], [0], [0], [1], [0, 0, 1, 1], [], []>} : vector<8x32xf32>, vector<32x8xf32>, vector<8x8xf32> -> vector<8x8xf32>
    %c0_308 = arith.constant 0 : index
    %c0_309 = arith.constant 0 : index
    %590 = vector.load %arg70[%c0_308, %c0_309] : memref<1x8xf32, #tpu.memory_space<vmem>>, vector<1x8xf32>
    %591 = vector.broadcast %590 : vector<1x8xf32> to vector<8x8xf32>
    %592 = arith.addf %589, %591 : vector<8x8xf32>
    %593 = arith.addf %587, %592 : vector<8x8xf32>
    %c0_310 = arith.constant 0 : index
    %c0_311 = arith.constant 0 : index
    %594 = vector.load %arg72[%c0_310, %c0_311] : memref<8x8xf32, #tpu.memory_space<vmem>>, vector<8x8xf32>
    %cst_312 = arith.constant dense<0.000000e+00> : vector<8x8xf32>
    %595 = tpu.matmul %593, %594, %cst_312 {dimension_numbers = #tpu.dot_dimension_numbers<[1], [0], [0], [1], [0, 0, 1, 1], [], []>} : vector<8x8xf32>, vector<8x8xf32>, vector<8x8xf32> -> vector<8x8xf32>
    %c0_313 = arith.constant 0 : index
    %c0_314 = arith.constant 0 : index
    %596 = vector.load %arg69[%c0_313, %c0_314] : memref<1x8xf32, #tpu.memory_space<vmem>>, vector<1x8xf32>
    %597 = vector.broadcast %596 : vector<1x8xf32> to vector<8x8xf32>
    %598 = arith.addf %595, %597 : vector<8x8xf32>
    %cst_315 = arith.constant 2.000000e+01 : f32
    %599 = vector.broadcast %cst_315 : f32 to vector<8x8xf32>
    %600 = arith.minimumf %598, %599 : vector<8x8xf32>
    %601 = math.exp %600 : vector<8x8xf32>
    %cst_316 = arith.constant 1.000000e+00 : f32
    %602 = vector.broadcast %cst_316 : f32 to vector<8x8xf32>
    %603 = arith.addf %602, %601 : vector<8x8xf32>
    %cst_317 = arith.constant 1.000000e+00 : f32
    %604 = vector.broadcast %cst_317 : f32 to vector<8x8xf32>
    %605 = arith.addf %604, %601 : vector<8x8xf32>
    %606 = arith.mulf %603, %605 : vector<8x8xf32>
    %cst_318 = arith.constant 1.000000e+00 : f32
    %607 = vector.broadcast %cst_318 : f32 to vector<8x8xf32>
    %608 = arith.subf %606, %607 : vector<8x8xf32>
    %cst_319 = arith.constant 1.000000e+00 : f32
    %609 = vector.broadcast %cst_319 : f32 to vector<8x8xf32>
    %610 = arith.addf %606, %609 : vector<8x8xf32>
    %611 = tpu.reciprocal %610 {approx = true} : vector<8x8xf32> -> vector<8x8xf32>
    %612 = arith.mulf %608, %611 : vector<8x8xf32>
    %cst_320 = arith.constant 2.000000e+01 : f32
    %613 = vector.broadcast %cst_320 : f32 to vector<8x8xf32>
    %614 = arith.cmpf ogt, %598, %613 : vector<8x8xf32>
    %615 = arith.mulf %598, %612 : vector<8x8xf32>
    %616 = arith.select %614, %598, %615 : vector<8x8xi1>, vector<8x8xf32>
    %617 = arith.addf %616, %564 : vector<8x8xf32>
    %c0_321 = arith.constant 0 : index
    %c0_322 = arith.constant 0 : index
    %618 = vector.load %arg75[%c0_321, %c0_322] : memref<8x8xf32, #tpu.memory_space<vmem>>, vector<8x8xf32>
    %cst_323 = arith.constant dense<0.000000e+00> : vector<8x8xf32>
    %619 = tpu.matmul %617, %618, %cst_323 {dimension_numbers = #tpu.dot_dimension_numbers<[1], [0], [0], [1], [0, 0, 1, 1], [], []>} : vector<8x8xf32>, vector<8x8xf32>, vector<8x8xf32> -> vector<8x8xf32>
    %c0_324 = arith.constant 0 : index
    %c0_325 = arith.constant 0 : index
    %620 = vector.load %arg74[%c0_324, %c0_325] : memref<1x8xf32, #tpu.memory_space<vmem>>, vector<1x8xf32>
    %621 = vector.broadcast %620 : vector<1x8xf32> to vector<8x8xf32>
    %622 = arith.addf %619, %621 : vector<8x8xf32>
    %623 = tpu.iota {dimensions = array<i32: 0>} : vector<8x16xi32>
    %624 = tpu.iota {dimensions = array<i32: 1>} : vector<8x16xi32>
    %625 = tpu.iota {dimensions = array<i32: 0>} : vector<8x16xi32>
    %626 = tpu.iota {dimensions = array<i32: 1>} : vector<8x16xi32>
    %627 = arith.cmpi eq, %624, %623 : vector<8x16xi32>
    %628 = arith.extui %627 : vector<8x16xi1> to vector<8x16xi32>
    %629 = arith.sitofp %628 : vector<8x16xi32> to vector<8x16xf32>
    %c8_i32 = arith.constant 8 : i32
    %630 = vector.broadcast %c8_i32 : i32 to vector<8x16xi32>
    %631 = arith.addi %625, %630 : vector<8x16xi32>
    %632 = arith.cmpi eq, %626, %631 : vector<8x16xi32>
    %633 = arith.extui %632 : vector<8x16xi1> to vector<8x16xi32>
    %634 = arith.sitofp %633 : vector<8x16xi32> to vector<8x16xf32>
    %cst_326 = arith.constant dense<0.000000e+00> : vector<8x16xf32>
    %635 = tpu.matmul %622, %629, %cst_326 {dimension_numbers = #tpu.dot_dimension_numbers<[1], [0], [0], [1], [0, 0, 1, 1], [], []>} : vector<8x8xf32>, vector<8x16xf32>, vector<8x16xf32> -> vector<8x16xf32>
    %cst_327 = arith.constant dense<0.000000e+00> : vector<8x16xf32>
    %636 = tpu.matmul %274, %634, %cst_327 {dimension_numbers = #tpu.dot_dimension_numbers<[1], [0], [0], [1], [0, 0, 1, 1], [], []>} : vector<8x8xf32>, vector<8x16xf32>, vector<8x16xf32> -> vector<8x16xf32>
    %637 = arith.addf %635, %636 : vector<8x16xf32>
    %c0_328 = arith.constant 0 : index
    %c0_329 = arith.constant 0 : index
    %638 = vector.load %arg79[%c0_328, %c0_329] : memref<16x16xf32, #tpu.memory_space<vmem>>, vector<16x16xf32>
    %cst_330 = arith.constant dense<0.000000e+00> : vector<8x16xf32>
    %639 = tpu.matmul %637, %638, %cst_330 {dimension_numbers = #tpu.dot_dimension_numbers<[1], [0], [0], [1], [0, 0, 1, 1], [], []>} : vector<8x16xf32>, vector<16x16xf32>, vector<8x16xf32> -> vector<8x16xf32>
    %c0_331 = arith.constant 0 : index
    %c0_332 = arith.constant 0 : index
    %640 = vector.load %arg76[%c0_331, %c0_332] : memref<1x16xf32, #tpu.memory_space<vmem>>, vector<1x16xf32>
    %641 = vector.broadcast %640 : vector<1x16xf32> to vector<8x16xf32>
    %642 = arith.addf %639, %641 : vector<8x16xf32>
    %cst_333 = arith.constant 2.000000e+01 : f32
    %643 = vector.broadcast %cst_333 : f32 to vector<8x16xf32>
    %644 = arith.minimumf %642, %643 : vector<8x16xf32>
    %645 = math.exp %644 : vector<8x16xf32>
    %cst_334 = arith.constant 1.000000e+00 : f32
    %646 = vector.broadcast %cst_334 : f32 to vector<8x16xf32>
    %647 = arith.addf %646, %645 : vector<8x16xf32>
    %cst_335 = arith.constant 1.000000e+00 : f32
    %648 = vector.broadcast %cst_335 : f32 to vector<8x16xf32>
    %649 = arith.addf %648, %645 : vector<8x16xf32>
    %650 = arith.mulf %647, %649 : vector<8x16xf32>
    %cst_336 = arith.constant 1.000000e+00 : f32
    %651 = vector.broadcast %cst_336 : f32 to vector<8x16xf32>
    %652 = arith.subf %650, %651 : vector<8x16xf32>
    %cst_337 = arith.constant 1.000000e+00 : f32
    %653 = vector.broadcast %cst_337 : f32 to vector<8x16xf32>
    %654 = arith.addf %650, %653 : vector<8x16xf32>
    %655 = tpu.reciprocal %654 {approx = true} : vector<8x16xf32> -> vector<8x16xf32>
    %656 = arith.mulf %652, %655 : vector<8x16xf32>
    %cst_338 = arith.constant 2.000000e+01 : f32
    %657 = vector.broadcast %cst_338 : f32 to vector<8x16xf32>
    %658 = arith.cmpf ogt, %642, %657 : vector<8x16xf32>
    %659 = arith.mulf %642, %656 : vector<8x16xf32>
    %660 = arith.select %658, %642, %659 : vector<8x16xi1>, vector<8x16xf32>
    %c0_339 = arith.constant 0 : index
    %c0_340 = arith.constant 0 : index
    %661 = vector.load %arg81[%c0_339, %c0_340] : memref<32x16xf32, #tpu.memory_space<vmem>>, vector<32x16xf32>
    %cst_341 = arith.constant dense<0.000000e+00> : vector<8x16xf32>
    %662 = tpu.matmul %47, %661, %cst_341 {dimension_numbers = #tpu.dot_dimension_numbers<[1], [0], [0], [1], [0, 0, 1, 1], [], []>} : vector<8x32xf32>, vector<32x16xf32>, vector<8x16xf32> -> vector<8x16xf32>
    %c0_342 = arith.constant 0 : index
    %c0_343 = arith.constant 0 : index
    %663 = vector.load %arg78[%c0_342, %c0_343] : memref<1x16xf32, #tpu.memory_space<vmem>>, vector<1x16xf32>
    %664 = vector.broadcast %663 : vector<1x16xf32> to vector<8x16xf32>
    %665 = arith.addf %662, %664 : vector<8x16xf32>
    %666 = arith.addf %660, %665 : vector<8x16xf32>
    %c0_344 = arith.constant 0 : index
    %c0_345 = arith.constant 0 : index
    %667 = vector.load %arg80[%c0_344, %c0_345] : memref<16x16xf32, #tpu.memory_space<vmem>>, vector<16x16xf32>
    %cst_346 = arith.constant dense<0.000000e+00> : vector<8x16xf32>
    %668 = tpu.matmul %666, %667, %cst_346 {dimension_numbers = #tpu.dot_dimension_numbers<[1], [0], [0], [1], [0, 0, 1, 1], [], []>} : vector<8x16xf32>, vector<16x16xf32>, vector<8x16xf32> -> vector<8x16xf32>
    %c0_347 = arith.constant 0 : index
    %c0_348 = arith.constant 0 : index
    %669 = vector.load %arg77[%c0_347, %c0_348] : memref<1x16xf32, #tpu.memory_space<vmem>>, vector<1x16xf32>
    %670 = vector.broadcast %669 : vector<1x16xf32> to vector<8x16xf32>
    %671 = arith.addf %668, %670 : vector<8x16xf32>
    %cst_349 = arith.constant 2.000000e+01 : f32
    %672 = vector.broadcast %cst_349 : f32 to vector<8x16xf32>
    %673 = arith.minimumf %671, %672 : vector<8x16xf32>
    %674 = math.exp %673 : vector<8x16xf32>
    %cst_350 = arith.constant 1.000000e+00 : f32
    %675 = vector.broadcast %cst_350 : f32 to vector<8x16xf32>
    %676 = arith.addf %675, %674 : vector<8x16xf32>
    %cst_351 = arith.constant 1.000000e+00 : f32
    %677 = vector.broadcast %cst_351 : f32 to vector<8x16xf32>
    %678 = arith.addf %677, %674 : vector<8x16xf32>
    %679 = arith.mulf %676, %678 : vector<8x16xf32>
    %cst_352 = arith.constant 1.000000e+00 : f32
    %680 = vector.broadcast %cst_352 : f32 to vector<8x16xf32>
    %681 = arith.subf %679, %680 : vector<8x16xf32>
    %cst_353 = arith.constant 1.000000e+00 : f32
    %682 = vector.broadcast %cst_353 : f32 to vector<8x16xf32>
    %683 = arith.addf %679, %682 : vector<8x16xf32>
    %684 = tpu.reciprocal %683 {approx = true} : vector<8x16xf32> -> vector<8x16xf32>
    %685 = arith.mulf %681, %684 : vector<8x16xf32>
    %cst_354 = arith.constant 2.000000e+01 : f32
    %686 = vector.broadcast %cst_354 : f32 to vector<8x16xf32>
    %687 = arith.cmpf ogt, %671, %686 : vector<8x16xf32>
    %688 = arith.mulf %671, %685 : vector<8x16xf32>
    %689 = arith.select %687, %671, %688 : vector<8x16xi1>, vector<8x16xf32>
    %690 = arith.addf %689, %637 : vector<8x16xf32>
    %c0_355 = arith.constant 0 : index
    %c0_356 = arith.constant 0 : index
    %691 = vector.load %arg85[%c0_355, %c0_356] : memref<16x16xf32, #tpu.memory_space<vmem>>, vector<16x16xf32>
    %cst_357 = arith.constant dense<0.000000e+00> : vector<8x16xf32>
    %692 = tpu.matmul %690, %691, %cst_357 {dimension_numbers = #tpu.dot_dimension_numbers<[1], [0], [0], [1], [0, 0, 1, 1], [], []>} : vector<8x16xf32>, vector<16x16xf32>, vector<8x16xf32> -> vector<8x16xf32>
    %c0_358 = arith.constant 0 : index
    %c0_359 = arith.constant 0 : index
    %693 = vector.load %arg82[%c0_358, %c0_359] : memref<1x16xf32, #tpu.memory_space<vmem>>, vector<1x16xf32>
    %694 = vector.broadcast %693 : vector<1x16xf32> to vector<8x16xf32>
    %695 = arith.addf %692, %694 : vector<8x16xf32>
    %cst_360 = arith.constant 2.000000e+01 : f32
    %696 = vector.broadcast %cst_360 : f32 to vector<8x16xf32>
    %697 = arith.minimumf %695, %696 : vector<8x16xf32>
    %698 = math.exp %697 : vector<8x16xf32>
    %cst_361 = arith.constant 1.000000e+00 : f32
    %699 = vector.broadcast %cst_361 : f32 to vector<8x16xf32>
    %700 = arith.addf %699, %698 : vector<8x16xf32>
    %cst_362 = arith.constant 1.000000e+00 : f32
    %701 = vector.broadcast %cst_362 : f32 to vector<8x16xf32>
    %702 = arith.addf %701, %698 : vector<8x16xf32>
    %703 = arith.mulf %700, %702 : vector<8x16xf32>
    %cst_363 = arith.constant 1.000000e+00 : f32
    %704 = vector.broadcast %cst_363 : f32 to vector<8x16xf32>
    %705 = arith.subf %703, %704 : vector<8x16xf32>
    %cst_364 = arith.constant 1.000000e+00 : f32
    %706 = vector.broadcast %cst_364 : f32 to vector<8x16xf32>
    %707 = arith.addf %703, %706 : vector<8x16xf32>
    %708 = tpu.reciprocal %707 {approx = true} : vector<8x16xf32> -> vector<8x16xf32>
    %709 = arith.mulf %705, %708 : vector<8x16xf32>
    %cst_365 = arith.constant 2.000000e+01 : f32
    %710 = vector.broadcast %cst_365 : f32 to vector<8x16xf32>
    %711 = arith.cmpf ogt, %695, %710 : vector<8x16xf32>
    %712 = arith.mulf %695, %709 : vector<8x16xf32>
    %713 = arith.select %711, %695, %712 : vector<8x16xi1>, vector<8x16xf32>
    %c0_366 = arith.constant 0 : index
    %c0_367 = arith.constant 0 : index
    %714 = vector.load %arg87[%c0_366, %c0_367] : memref<32x16xf32, #tpu.memory_space<vmem>>, vector<32x16xf32>
    %cst_368 = arith.constant dense<0.000000e+00> : vector<8x16xf32>
    %715 = tpu.matmul %47, %714, %cst_368 {dimension_numbers = #tpu.dot_dimension_numbers<[1], [0], [0], [1], [0, 0, 1, 1], [], []>} : vector<8x32xf32>, vector<32x16xf32>, vector<8x16xf32> -> vector<8x16xf32>
    %c0_369 = arith.constant 0 : index
    %c0_370 = arith.constant 0 : index
    %716 = vector.load %arg84[%c0_369, %c0_370] : memref<1x16xf32, #tpu.memory_space<vmem>>, vector<1x16xf32>
    %717 = vector.broadcast %716 : vector<1x16xf32> to vector<8x16xf32>
    %718 = arith.addf %715, %717 : vector<8x16xf32>
    %719 = arith.addf %713, %718 : vector<8x16xf32>
    %c0_371 = arith.constant 0 : index
    %c0_372 = arith.constant 0 : index
    %720 = vector.load %arg86[%c0_371, %c0_372] : memref<16x16xf32, #tpu.memory_space<vmem>>, vector<16x16xf32>
    %cst_373 = arith.constant dense<0.000000e+00> : vector<8x16xf32>
    %721 = tpu.matmul %719, %720, %cst_373 {dimension_numbers = #tpu.dot_dimension_numbers<[1], [0], [0], [1], [0, 0, 1, 1], [], []>} : vector<8x16xf32>, vector<16x16xf32>, vector<8x16xf32> -> vector<8x16xf32>
    %c0_374 = arith.constant 0 : index
    %c0_375 = arith.constant 0 : index
    %722 = vector.load %arg83[%c0_374, %c0_375] : memref<1x16xf32, #tpu.memory_space<vmem>>, vector<1x16xf32>
    %723 = vector.broadcast %722 : vector<1x16xf32> to vector<8x16xf32>
    %724 = arith.addf %721, %723 : vector<8x16xf32>
    %cst_376 = arith.constant 2.000000e+01 : f32
    %725 = vector.broadcast %cst_376 : f32 to vector<8x16xf32>
    %726 = arith.minimumf %724, %725 : vector<8x16xf32>
    %727 = math.exp %726 : vector<8x16xf32>
    %cst_377 = arith.constant 1.000000e+00 : f32
    %728 = vector.broadcast %cst_377 : f32 to vector<8x16xf32>
    %729 = arith.addf %728, %727 : vector<8x16xf32>
    %cst_378 = arith.constant 1.000000e+00 : f32
    %730 = vector.broadcast %cst_378 : f32 to vector<8x16xf32>
    %731 = arith.addf %730, %727 : vector<8x16xf32>
    %732 = arith.mulf %729, %731 : vector<8x16xf32>
    %cst_379 = arith.constant 1.000000e+00 : f32
    %733 = vector.broadcast %cst_379 : f32 to vector<8x16xf32>
    %734 = arith.subf %732, %733 : vector<8x16xf32>
    %cst_380 = arith.constant 1.000000e+00 : f32
    %735 = vector.broadcast %cst_380 : f32 to vector<8x16xf32>
    %736 = arith.addf %732, %735 : vector<8x16xf32>
    %737 = tpu.reciprocal %736 {approx = true} : vector<8x16xf32> -> vector<8x16xf32>
    %738 = arith.mulf %734, %737 : vector<8x16xf32>
    %cst_381 = arith.constant 2.000000e+01 : f32
    %739 = vector.broadcast %cst_381 : f32 to vector<8x16xf32>
    %740 = arith.cmpf ogt, %724, %739 : vector<8x16xf32>
    %741 = arith.mulf %724, %738 : vector<8x16xf32>
    %742 = arith.select %740, %724, %741 : vector<8x16xi1>, vector<8x16xf32>
    %743 = arith.addf %742, %690 : vector<8x16xf32>
    %c0_382 = arith.constant 0 : index
    %c0_383 = arith.constant 0 : index
    %744 = vector.load %arg89[%c0_382, %c0_383] : memref<16x16xf32, #tpu.memory_space<vmem>>, vector<16x16xf32>
    %cst_384 = arith.constant dense<0.000000e+00> : vector<8x16xf32>
    %745 = tpu.matmul %743, %744, %cst_384 {dimension_numbers = #tpu.dot_dimension_numbers<[1], [0], [0], [1], [0, 0, 1, 1], [], []>} : vector<8x16xf32>, vector<16x16xf32>, vector<8x16xf32> -> vector<8x16xf32>
    %c0_385 = arith.constant 0 : index
    %c0_386 = arith.constant 0 : index
    %746 = vector.load %arg88[%c0_385, %c0_386] : memref<1x16xf32, #tpu.memory_space<vmem>>, vector<1x16xf32>
    %747 = vector.broadcast %746 : vector<1x16xf32> to vector<8x16xf32>
    %748 = arith.addf %745, %747 : vector<8x16xf32>
    %749 = tpu.iota {dimensions = array<i32: 0>} : vector<16x32xi32>
    %750 = tpu.iota {dimensions = array<i32: 1>} : vector<16x32xi32>
    %751 = tpu.iota {dimensions = array<i32: 0>} : vector<16x32xi32>
    %752 = tpu.iota {dimensions = array<i32: 1>} : vector<16x32xi32>
    %753 = arith.cmpi eq, %750, %749 : vector<16x32xi32>
    %754 = arith.extui %753 : vector<16x32xi1> to vector<16x32xi32>
    %755 = arith.sitofp %754 : vector<16x32xi32> to vector<16x32xf32>
    %c16_i32 = arith.constant 16 : i32
    %756 = vector.broadcast %c16_i32 : i32 to vector<16x32xi32>
    %757 = arith.addi %751, %756 : vector<16x32xi32>
    %758 = arith.cmpi eq, %752, %757 : vector<16x32xi32>
    %759 = arith.extui %758 : vector<16x32xi1> to vector<16x32xi32>
    %760 = arith.sitofp %759 : vector<16x32xi32> to vector<16x32xf32>
    %cst_387 = arith.constant dense<0.000000e+00> : vector<8x32xf32>
    %761 = tpu.matmul %748, %755, %cst_387 {dimension_numbers = #tpu.dot_dimension_numbers<[1], [0], [0], [1], [0, 0, 1, 1], [], []>} : vector<8x16xf32>, vector<16x32xf32>, vector<8x32xf32> -> vector<8x32xf32>
    %cst_388 = arith.constant dense<0.000000e+00> : vector<8x32xf32>
    %762 = tpu.matmul %158, %760, %cst_388 {dimension_numbers = #tpu.dot_dimension_numbers<[1], [0], [0], [1], [0, 0, 1, 1], [], []>} : vector<8x16xf32>, vector<16x32xf32>, vector<8x32xf32> -> vector<8x32xf32>
    %763 = arith.addf %761, %762 : vector<8x32xf32>
    %c0_389 = arith.constant 0 : index
    %c0_390 = arith.constant 0 : index
    %764 = vector.load %arg93[%c0_389, %c0_390] : memref<32x32xf32, #tpu.memory_space<vmem>>, vector<32x32xf32>
    %cst_391 = arith.constant dense<0.000000e+00> : vector<8x32xf32>
    %765 = tpu.matmul %763, %764, %cst_391 {dimension_numbers = #tpu.dot_dimension_numbers<[1], [0], [0], [1], [0, 0, 1, 1], [], []>} : vector<8x32xf32>, vector<32x32xf32>, vector<8x32xf32> -> vector<8x32xf32>
    %c0_392 = arith.constant 0 : index
    %c0_393 = arith.constant 0 : index
    %766 = vector.load %arg90[%c0_392, %c0_393] : memref<1x32xf32, #tpu.memory_space<vmem>>, vector<1x32xf32>
    %767 = vector.broadcast %766 : vector<1x32xf32> to vector<8x32xf32>
    %768 = arith.addf %765, %767 : vector<8x32xf32>
    %cst_394 = arith.constant 2.000000e+01 : f32
    %769 = vector.broadcast %cst_394 : f32 to vector<8x32xf32>
    %770 = arith.minimumf %768, %769 : vector<8x32xf32>
    %771 = math.exp %770 : vector<8x32xf32>
    %cst_395 = arith.constant 1.000000e+00 : f32
    %772 = vector.broadcast %cst_395 : f32 to vector<8x32xf32>
    %773 = arith.addf %772, %771 : vector<8x32xf32>
    %cst_396 = arith.constant 1.000000e+00 : f32
    %774 = vector.broadcast %cst_396 : f32 to vector<8x32xf32>
    %775 = arith.addf %774, %771 : vector<8x32xf32>
    %776 = arith.mulf %773, %775 : vector<8x32xf32>
    %cst_397 = arith.constant 1.000000e+00 : f32
    %777 = vector.broadcast %cst_397 : f32 to vector<8x32xf32>
    %778 = arith.subf %776, %777 : vector<8x32xf32>
    %cst_398 = arith.constant 1.000000e+00 : f32
    %779 = vector.broadcast %cst_398 : f32 to vector<8x32xf32>
    %780 = arith.addf %776, %779 : vector<8x32xf32>
    %781 = tpu.reciprocal %780 {approx = true} : vector<8x32xf32> -> vector<8x32xf32>
    %782 = arith.mulf %778, %781 : vector<8x32xf32>
    %cst_399 = arith.constant 2.000000e+01 : f32
    %783 = vector.broadcast %cst_399 : f32 to vector<8x32xf32>
    %784 = arith.cmpf ogt, %768, %783 : vector<8x32xf32>
    %785 = arith.mulf %768, %782 : vector<8x32xf32>
    %786 = arith.select %784, %768, %785 : vector<8x32xi1>, vector<8x32xf32>
    %c0_400 = arith.constant 0 : index
    %c0_401 = arith.constant 0 : index
    %787 = vector.load %arg95[%c0_400, %c0_401] : memref<32x32xf32, #tpu.memory_space<vmem>>, vector<32x32xf32>
    %cst_402 = arith.constant dense<0.000000e+00> : vector<8x32xf32>
    %788 = tpu.matmul %47, %787, %cst_402 {dimension_numbers = #tpu.dot_dimension_numbers<[1], [0], [0], [1], [0, 0, 1, 1], [], []>} : vector<8x32xf32>, vector<32x32xf32>, vector<8x32xf32> -> vector<8x32xf32>
    %c0_403 = arith.constant 0 : index
    %c0_404 = arith.constant 0 : index
    %789 = vector.load %arg92[%c0_403, %c0_404] : memref<1x32xf32, #tpu.memory_space<vmem>>, vector<1x32xf32>
    %790 = vector.broadcast %789 : vector<1x32xf32> to vector<8x32xf32>
    %791 = arith.addf %788, %790 : vector<8x32xf32>
    %792 = arith.addf %786, %791 : vector<8x32xf32>
    %c0_405 = arith.constant 0 : index
    %c0_406 = arith.constant 0 : index
    %793 = vector.load %arg94[%c0_405, %c0_406] : memref<32x32xf32, #tpu.memory_space<vmem>>, vector<32x32xf32>
    %cst_407 = arith.constant dense<0.000000e+00> : vector<8x32xf32>
    %794 = tpu.matmul %792, %793, %cst_407 {dimension_numbers = #tpu.dot_dimension_numbers<[1], [0], [0], [1], [0, 0, 1, 1], [], []>} : vector<8x32xf32>, vector<32x32xf32>, vector<8x32xf32> -> vector<8x32xf32>
    %c0_408 = arith.constant 0 : index
    %c0_409 = arith.constant 0 : index
    %795 = vector.load %arg91[%c0_408, %c0_409] : memref<1x32xf32, #tpu.memory_space<vmem>>, vector<1x32xf32>
    %796 = vector.broadcast %795 : vector<1x32xf32> to vector<8x32xf32>
    %797 = arith.addf %794, %796 : vector<8x32xf32>
    %cst_410 = arith.constant 2.000000e+01 : f32
    %798 = vector.broadcast %cst_410 : f32 to vector<8x32xf32>
    %799 = arith.minimumf %797, %798 : vector<8x32xf32>
    %800 = math.exp %799 : vector<8x32xf32>
    %cst_411 = arith.constant 1.000000e+00 : f32
    %801 = vector.broadcast %cst_411 : f32 to vector<8x32xf32>
    %802 = arith.addf %801, %800 : vector<8x32xf32>
    %cst_412 = arith.constant 1.000000e+00 : f32
    %803 = vector.broadcast %cst_412 : f32 to vector<8x32xf32>
    %804 = arith.addf %803, %800 : vector<8x32xf32>
    %805 = arith.mulf %802, %804 : vector<8x32xf32>
    %cst_413 = arith.constant 1.000000e+00 : f32
    %806 = vector.broadcast %cst_413 : f32 to vector<8x32xf32>
    %807 = arith.subf %805, %806 : vector<8x32xf32>
    %cst_414 = arith.constant 1.000000e+00 : f32
    %808 = vector.broadcast %cst_414 : f32 to vector<8x32xf32>
    %809 = arith.addf %805, %808 : vector<8x32xf32>
    %810 = tpu.reciprocal %809 {approx = true} : vector<8x32xf32> -> vector<8x32xf32>
    %811 = arith.mulf %807, %810 : vector<8x32xf32>
    %cst_415 = arith.constant 2.000000e+01 : f32
    %812 = vector.broadcast %cst_415 : f32 to vector<8x32xf32>
    %813 = arith.cmpf ogt, %797, %812 : vector<8x32xf32>
    %814 = arith.mulf %797, %811 : vector<8x32xf32>
    %815 = arith.select %813, %797, %814 : vector<8x32xi1>, vector<8x32xf32>
    %816 = arith.addf %815, %763 : vector<8x32xf32>
    %c0_416 = arith.constant 0 : index
    %c0_417 = arith.constant 0 : index
    %817 = vector.load %arg99[%c0_416, %c0_417] : memref<32x32xf32, #tpu.memory_space<vmem>>, vector<32x32xf32>
    %cst_418 = arith.constant dense<0.000000e+00> : vector<8x32xf32>
    %818 = tpu.matmul %816, %817, %cst_418 {dimension_numbers = #tpu.dot_dimension_numbers<[1], [0], [0], [1], [0, 0, 1, 1], [], []>} : vector<8x32xf32>, vector<32x32xf32>, vector<8x32xf32> -> vector<8x32xf32>
    %c0_419 = arith.constant 0 : index
    %c0_420 = arith.constant 0 : index
    %819 = vector.load %arg96[%c0_419, %c0_420] : memref<1x32xf32, #tpu.memory_space<vmem>>, vector<1x32xf32>
    %820 = vector.broadcast %819 : vector<1x32xf32> to vector<8x32xf32>
    %821 = arith.addf %818, %820 : vector<8x32xf32>
    %cst_421 = arith.constant 2.000000e+01 : f32
    %822 = vector.broadcast %cst_421 : f32 to vector<8x32xf32>
    %823 = arith.minimumf %821, %822 : vector<8x32xf32>
    %824 = math.exp %823 : vector<8x32xf32>
    %cst_422 = arith.constant 1.000000e+00 : f32
    %825 = vector.broadcast %cst_422 : f32 to vector<8x32xf32>
    %826 = arith.addf %825, %824 : vector<8x32xf32>
    %cst_423 = arith.constant 1.000000e+00 : f32
    %827 = vector.broadcast %cst_423 : f32 to vector<8x32xf32>
    %828 = arith.addf %827, %824 : vector<8x32xf32>
    %829 = arith.mulf %826, %828 : vector<8x32xf32>
    %cst_424 = arith.constant 1.000000e+00 : f32
    %830 = vector.broadcast %cst_424 : f32 to vector<8x32xf32>
    %831 = arith.subf %829, %830 : vector<8x32xf32>
    %cst_425 = arith.constant 1.000000e+00 : f32
    %832 = vector.broadcast %cst_425 : f32 to vector<8x32xf32>
    %833 = arith.addf %829, %832 : vector<8x32xf32>
    %834 = tpu.reciprocal %833 {approx = true} : vector<8x32xf32> -> vector<8x32xf32>
    %835 = arith.mulf %831, %834 : vector<8x32xf32>
    %cst_426 = arith.constant 2.000000e+01 : f32
    %836 = vector.broadcast %cst_426 : f32 to vector<8x32xf32>
    %837 = arith.cmpf ogt, %821, %836 : vector<8x32xf32>
    %838 = arith.mulf %821, %835 : vector<8x32xf32>
    %839 = arith.select %837, %821, %838 : vector<8x32xi1>, vector<8x32xf32>
    %c0_427 = arith.constant 0 : index
    %c0_428 = arith.constant 0 : index
    %840 = vector.load %arg101[%c0_427, %c0_428] : memref<32x32xf32, #tpu.memory_space<vmem>>, vector<32x32xf32>
    %cst_429 = arith.constant dense<0.000000e+00> : vector<8x32xf32>
    %841 = tpu.matmul %47, %840, %cst_429 {dimension_numbers = #tpu.dot_dimension_numbers<[1], [0], [0], [1], [0, 0, 1, 1], [], []>} : vector<8x32xf32>, vector<32x32xf32>, vector<8x32xf32> -> vector<8x32xf32>
    %c0_430 = arith.constant 0 : index
    %c0_431 = arith.constant 0 : index
    %842 = vector.load %arg98[%c0_430, %c0_431] : memref<1x32xf32, #tpu.memory_space<vmem>>, vector<1x32xf32>
    %843 = vector.broadcast %842 : vector<1x32xf32> to vector<8x32xf32>
    %844 = arith.addf %841, %843 : vector<8x32xf32>
    %845 = arith.addf %839, %844 : vector<8x32xf32>
    %c0_432 = arith.constant 0 : index
    %c0_433 = arith.constant 0 : index
    %846 = vector.load %arg100[%c0_432, %c0_433] : memref<32x32xf32, #tpu.memory_space<vmem>>, vector<32x32xf32>
    %cst_434 = arith.constant dense<0.000000e+00> : vector<8x32xf32>
    %847 = tpu.matmul %845, %846, %cst_434 {dimension_numbers = #tpu.dot_dimension_numbers<[1], [0], [0], [1], [0, 0, 1, 1], [], []>} : vector<8x32xf32>, vector<32x32xf32>, vector<8x32xf32> -> vector<8x32xf32>
    %c0_435 = arith.constant 0 : index
    %c0_436 = arith.constant 0 : index
    %848 = vector.load %arg97[%c0_435, %c0_436] : memref<1x32xf32, #tpu.memory_space<vmem>>, vector<1x32xf32>
    %849 = vector.broadcast %848 : vector<1x32xf32> to vector<8x32xf32>
    %850 = arith.addf %847, %849 : vector<8x32xf32>
    %cst_437 = arith.constant 2.000000e+01 : f32
    %851 = vector.broadcast %cst_437 : f32 to vector<8x32xf32>
    %852 = arith.minimumf %850, %851 : vector<8x32xf32>
    %853 = math.exp %852 : vector<8x32xf32>
    %cst_438 = arith.constant 1.000000e+00 : f32
    %854 = vector.broadcast %cst_438 : f32 to vector<8x32xf32>
    %855 = arith.addf %854, %853 : vector<8x32xf32>
    %cst_439 = arith.constant 1.000000e+00 : f32
    %856 = vector.broadcast %cst_439 : f32 to vector<8x32xf32>
    %857 = arith.addf %856, %853 : vector<8x32xf32>
    %858 = arith.mulf %855, %857 : vector<8x32xf32>
    %cst_440 = arith.constant 1.000000e+00 : f32
    %859 = vector.broadcast %cst_440 : f32 to vector<8x32xf32>
    %860 = arith.subf %858, %859 : vector<8x32xf32>
    %cst_441 = arith.constant 1.000000e+00 : f32
    %861 = vector.broadcast %cst_441 : f32 to vector<8x32xf32>
    %862 = arith.addf %858, %861 : vector<8x32xf32>
    %863 = tpu.reciprocal %862 {approx = true} : vector<8x32xf32> -> vector<8x32xf32>
    %864 = arith.mulf %860, %863 : vector<8x32xf32>
    %cst_442 = arith.constant 2.000000e+01 : f32
    %865 = vector.broadcast %cst_442 : f32 to vector<8x32xf32>
    %866 = arith.cmpf ogt, %850, %865 : vector<8x32xf32>
    %867 = arith.mulf %850, %864 : vector<8x32xf32>
    %868 = arith.select %866, %850, %867 : vector<8x32xi1>, vector<8x32xf32>
    %869 = arith.addf %868, %816 : vector<8x32xf32>
    %c0_443 = arith.constant 0 : index
    %c0_444 = arith.constant 0 : index
    %870 = vector.load %arg104[%c0_443, %c0_444] : memref<1x1xf32, #tpu.memory_space<vmem>>, vector<1x1xf32>
    %871 = vector.broadcast %870 : vector<1x1xf32> to vector<8x32xf32>
    %872 = arith.mulf %0, %871 : vector<8x32xf32>
    %873 = arith.subf %869, %872 : vector<8x32xf32>
    %c0_445 = arith.constant 0 : index
    %c0_446 = arith.constant 0 : index
    %874 = vector.load %arg105[%c0_445, %c0_446] : memref<8x32xf32, #tpu.memory_space<vmem>>, vector<8x32xf32>
    tpu.vector_store %arg105[%c0_445, %c0_446], %873 {strides = array<i32>} : memref<8x32xf32, #tpu.memory_space<vmem>>, vector<8x32xf32>,
    return
  }
}

</mosaic_0001>

<llo_original>
// kernel: unet_drift_forward.1
$region0: #{unet_drift_forward.1}
  #allocation0 [shape = 'u32[]', space=smem, size = 0x4, offset = 0x4, fixed_abs, tag = 'smem constant byte address 0x4 - core index']
  #allocation1 [shape = 'u32[144,128]{1,0:T(1,128)}', space=vmem, size = 0x12000, scoped, tag = 'internal scratch']
  #allocation2 [shape = 'f32[1,1]{1,0:T(1,128)S(1)}', space=vmem, size = 0x200, scoped, tag = 'scoped memory for unet_drift_forward.1']
  %s0 = inlined_call_operand.smem [shape: u32[106], index: -1, kind: input, shape index: {}]
  %s1 = sld [smem:[%s0]]
  %s2 = scalar_lea.smem %s0, 1
  %s3 = sld [smem:[%s2]]
  %s4 = scalar_lea.smem %s0, 2
  %s5 = sld [smem:[%s4]]
  %s6 = scalar_lea.smem %s0, 3
  %s7 = sld [smem:[%s6]]
  %s8 = scalar_lea.smem %s0, 4
  %s9 = sld [smem:[%s8]]
  %s10 = scalar_lea.smem %s0, 5
  %s11 = sld [smem:[%s10]]
  %s12 = scalar_lea.smem %s0, 6
  %s13 = sld [smem:[%s12]]
  %s14 = scalar_lea.smem %s0, 7
  %s15 = sld [smem:[%s14]]
  %s16 = scalar_lea.smem %s0, 8
  %s17 = sld [smem:[%s16]]
  %s18 = scalar_lea.smem %s0, 9
  %s19 = sld [smem:[%s18]]
  %s20 = scalar_lea.smem %s0, 10
  %s21 = sld [smem:[%s20]]
  %s22 = scalar_lea.smem %s0, 11
  %s23 = sld [smem:[%s22]]
  %s24 = scalar_lea.smem %s0, 12
  %s25 = sld [smem:[%s24]]
  %s26 = scalar_lea.smem %s0, 13
  %s27 = sld [smem:[%s26]]
  %s28 = scalar_lea.smem %s0, 14
  %s29 = sld [smem:[%s28]]
  %s30 = scalar_lea.smem %s0, 15
  %s31 = sld [smem:[%s30]]
  %s32 = scalar_lea.smem %s0, 16
  %s33 = sld [smem:[%s32]]
  %s34 = scalar_lea.smem %s0, 17
  %s35 = sld [smem:[%s34]]
  %s36 = scalar_lea.smem %s0, 18
  %s37 = sld [smem:[%s36]]
  %s38 = scalar_lea.smem %s0, 19
  %s39 = sld [smem:[%s38]]
  %s40 = scalar_lea.smem %s0, 20
  %s41 = sld [smem:[%s40]]
  %s42 = scalar_lea.smem %s0, 21
  %s43 = sld [smem:[%s42]]
  %s44 = scalar_lea.smem %s0, 22
  %s45 = sld [smem:[%s44]]
  %s46 = scalar_lea.smem %s0, 23
  %s47 = sld [smem:[%s46]]
  %s48 = scalar_lea.smem %s0, 24
  %s49 = sld [smem:[%s48]]
  %s50 = scalar_lea.smem %s0, 25
  %s51 = sld [smem:[%s50]]
  %s52 = scalar_lea.smem %s0, 26
  %s53 = sld [smem:[%s52]]
  %s54 = scalar_lea.smem %s0, 27
  %s55 = sld [smem:[%s54]]
  %s56 = scalar_lea.smem %s0, 28
  %s57 = sld [smem:[%s56]]
  %s58 = scalar_lea.smem %s0, 29
  %s59 = sld [smem:[%s58]]
  %s60 = scalar_lea.smem %s0, 30
  %s61 = sld [smem:[%s60]]
  %s62 = scalar_lea.smem %s0, 31
  %s63 = sld [smem:[%s62]]
  %s64 = scalar_lea.smem %s0, 32
  %s65 = sld [smem:[%s64]]
  %s66 = scalar_lea.smem %s0, 33
  %s67 = sld [smem:[%s66]]
  %s68 = scalar_lea.smem %s0, 34
  %s69 = sld [smem:[%s68]]
  %s70 = scalar_lea.smem %s0, 35
  %s71 = sld [smem:[%s70]]
  %s72 = scalar_lea.smem %s0, 36
  %s73 = sld [smem:[%s72]]
  %s74 = scalar_lea.smem %s0, 37
  %s75 = sld [smem:[%s74]]
  %s76 = scalar_lea.smem %s0, 38
  %s77 = sld [smem:[%s76]]
  %s78 = scalar_lea.smem %s0, 39
  %s79 = sld [smem:[%s78]]
  %s80 = scalar_lea.smem %s0, 40
  %s81 = sld [smem:[%s80]]
  %s82 = scalar_lea.smem %s0, 41
  %s83 = sld [smem:[%s82]]
  %s84 = scalar_lea.smem %s0, 42
  %s85 = sld [smem:[%s84]]
  %s86 = scalar_lea.smem %s0, 43
  %s87 = sld [smem:[%s86]]
  %s88 = scalar_lea.smem %s0, 44
  %s89 = sld [smem:[%s88]]
  %s90 = scalar_lea.smem %s0, 45
  %s91 = sld [smem:[%s90]]
  %s92 = scalar_lea.smem %s0, 46
  %s93 = sld [smem:[%s92]]
  %s94 = scalar_lea.smem %s0, 47
  %s95 = sld [smem:[%s94]]
  %s96 = scalar_lea.smem %s0, 48
  %s97 = sld [smem:[%s96]]
  %s98 = scalar_lea.smem %s0, 49
  %s99 = sld [smem:[%s98]]
  %s100 = scalar_lea.smem %s0, 50
  %s101 = sld [smem:[%s100]]
  %s102 = scalar_lea.smem %s0, 51
  %s103 = sld [smem:[%s102]]
  %s104 = scalar_lea.smem %s0, 52
  %s105 = sld [smem:[%s104]]
  %s106 = scalar_lea.smem %s0, 53
  %s107 = sld [smem:[%s106]]
  %s108 = scalar_lea.smem %s0, 54
  %s109 = sld [smem:[%s108]]
  %s110 = scalar_lea.smem %s0, 55
  %s111 = sld [smem:[%s110]]
  %s112 = scalar_lea.smem %s0, 56
  %s113 = sld [smem:[%s112]]
  %s114 = scalar_lea.smem %s0, 57
  %s115 = sld [smem:[%s114]]
  %s116 = scalar_lea.smem %s0, 58
  %s117 = sld [smem:[%s116]]
  %s118 = scalar_lea.smem %s0, 59
  %s119 = sld [smem:[%s118]]
  %s120 = scalar_lea.smem %s0, 60
  %s121 = sld [smem:[%s120]]
  %s122 = scalar_lea.smem %s0, 61
  %s123 = sld [smem:[%s122]]
  %s124 = scalar_lea.smem %s0, 62
  %s125 = sld [smem:[%s124]]
  %s126 = scalar_lea.smem %s0, 63
  %s127 = sld [smem:[%s126]]
  %s128 = scalar_lea.smem %s0, 64
  %s129 = sld [smem:[%s128]]
  %s130 = scalar_lea.smem %s0, 65
  %s131 = sld [smem:[%s130]]
  %s132 = scalar_lea.smem %s0, 66
  %s133 = sld [smem:[%s132]]
  %s134 = scalar_lea.smem %s0, 67
  %s135 = sld [smem:[%s134]]
  %s136 = scalar_lea.smem %s0, 68
  %s137 = sld [smem:[%s136]]
  %s138 = scalar_lea.smem %s0, 69
  %s139 = sld [smem:[%s138]]
  %s140 = scalar_lea.smem %s0, 70
  %s141 = sld [smem:[%s140]]
  %s142 = scalar_lea.smem %s0, 71
  %s143 = sld [smem:[%s142]]
  %s144 = scalar_lea.smem %s0, 72
  %s145 = sld [smem:[%s144]]
  %s146 = scalar_lea.smem %s0, 73
  %s147 = sld [smem:[%s146]]
  %s148 = scalar_lea.smem %s0, 74
  %s149 = sld [smem:[%s148]]
  %s150 = scalar_lea.smem %s0, 75
  %s151 = sld [smem:[%s150]]
  %s152 = scalar_lea.smem %s0, 76
  %s153 = sld [smem:[%s152]]
  %s154 = scalar_lea.smem %s0, 77
  %s155 = sld [smem:[%s154]]
  %s156 = scalar_lea.smem %s0, 78
  %s157 = sld [smem:[%s156]]
  %s158 = scalar_lea.smem %s0, 79
  %s159 = sld [smem:[%s158]]
  %s160 = scalar_lea.smem %s0, 80
  %s161 = sld [smem:[%s160]]
  %s162 = scalar_lea.smem %s0, 81
  %s163 = sld [smem:[%s162]]
  %s164 = scalar_lea.smem %s0, 82
  %s165 = sld [smem:[%s164]]
  %s166 = scalar_lea.smem %s0, 83
  %s167 = sld [smem:[%s166]]
  %s168 = scalar_lea.smem %s0, 84
  %s169 = sld [smem:[%s168]]
  %s170 = scalar_lea.smem %s0, 85
  %s171 = sld [smem:[%s170]]
  %s172 = scalar_lea.smem %s0, 86
  %s173 = sld [smem:[%s172]]
  %s174 = scalar_lea.smem %s0, 87
  %s175 = sld [smem:[%s174]]
  %s176 = scalar_lea.smem %s0, 88
  %s177 = sld [smem:[%s176]]
  %s178 = scalar_lea.smem %s0, 89
  %s179 = sld [smem:[%s178]]
  %s180 = scalar_lea.smem %s0, 90
  %s181 = sld [smem:[%s180]]
  %s182 = scalar_lea.smem %s0, 91
  %s183 = sld [smem:[%s182]]
  %s184 = scalar_lea.smem %s0, 92
  %s185 = sld [smem:[%s184]]
  %s186 = scalar_lea.smem %s0, 93
  %s187 = sld [smem:[%s186]]
  %s188 = scalar_lea.smem %s0, 94
  %s189 = sld [smem:[%s188]]
  %s190 = scalar_lea.smem %s0, 95
  %s191 = sld [smem:[%s190]]
  %s192 = scalar_lea.smem %s0, 96
  %s193 = sld [smem:[%s192]]
  %s194 = scalar_lea.smem %s0, 97
  %s195 = sld [smem:[%s194]]
  %s196 = scalar_lea.smem %s0, 98
  %s197 = sld [smem:[%s196]]
  %s198 = scalar_lea.smem %s0, 99
  %s199 = sld [smem:[%s198]]
  %s200 = scalar_lea.smem %s0, 100
  %s201 = sld [smem:[%s200]]
  %s202 = scalar_lea.smem %s0, 101
  %s203 = sld [smem:[%s202]]
  %s204 = scalar_lea.smem %s0, 102
  %s205 = sld [smem:[%s204]]
  %s206 = scalar_lea.smem %s0, 103
  %s207 = sld [smem:[%s206]]
  %s208 = scalar_lea.smem %s0, 104
  %s209 = sld [smem:[%s208]]
  %s210 = scalar_lea.smem %s0, 105
  %s211 = sld [smem:[%s210]]
  %s212 = sld [smem:[#allocation0]]
  $region638: #{unet_drift_forward.1} parent=0
    _
  %s214 = ssub.s32 1, %s212
  %s215 = scalar_select 0, %s214, %s212
  %v216 = vstv %s209
  %217 = vst [vmem:[#allocation2] sm:$0x1] %v216
  $region1: #{unet_drift_forward.1} parent=0
    #allocation3 [shape = 'u8[512]{0}', space=vmem, size = 0x400, scoped, tag = 'input window, operand 0, single buffered']
    #allocation4 [shape = 's32[1]{0}', space=sflag, size = 0x4, scoped, tag = 'scoped memory for unet_drift_forward.1']
    #allocation5 [shape = 's32[1]{0}', space=sflag, size = 0x4, scoped, tag = 'scoped memory for unet_drift_forward.1']
    #allocation6 [shape = 'u8[512]{0}', space=vmem, size = 0x400, scoped, tag = 'input window, operand 2, single buffered']
    #allocation7 [shape = 's32[1]{0}', space=sflag, size = 0x4, scoped, tag = 'scoped memory for unet_drift_forward.1']
    #allocation8 [shape = 'u8[512]{0}', space=vmem, size = 0x400, scoped, tag = 'input window, operand 3, single buffered']
    #allocation9 [shape = 'u8[512]{0}', space=vmem, size = 0x400, scoped, tag = 'input window, operand 4, single buffered']
    #allocation10 [shape = 's32[1]{0}', space=sflag, size = 0x4, scoped, tag = 'scoped memory for unet_drift_forward.1']
    #allocation11 [shape = 'u8[512]{0}', space=vmem, size = 0x400, scoped, tag = 'input window, operand 5, single buffered']
    #allocation12 [shape = 'u8[512]{0}', space=vmem, size = 0x400, scoped, tag = 'input window, operand 10, single buffered']
    #allocation13 [shape = 's32[1]{0}', space=sflag, size = 0x4, scoped, tag = 'scoped memory for unet_drift_forward.1']
    #allocation14 [shape = 'u8[512]{0}', space=vmem, size = 0x400, scoped, tag = 'input window, operand 11, single buffered']
    #allocation15 [shape = 'u8[512]{0}', space=vmem, size = 0x400, scoped, tag = 'input window, operand 12, single buffered']
    #allocation16 [shape = 's32[1]{0}', space=sflag, size = 0x4, scoped, tag = 'scoped memory for unet_drift_forward.1']
    #allocation17 [shape = 'u8[512]{0}', space=vmem, size = 0x400, scoped, tag = 'input window, operand 16, single buffered']
    #allocation18 [shape = 'u8[512]{0}', space=vmem, size = 0x400, scoped, tag = 'input window, operand 18, single buffered']
    #allocation19 [shape = 's32[1]{0}', space=sflag, size = 0x4, scoped, tag = 'scoped memory for unet_drift_forward.1']
    #allocation20 [shape = 'u8[512]{0}', space=vmem, size = 0x400, scoped, tag = 'input window, operand 19, single buffered']
    #allocation21 [shape = 'u8[512]{0}', space=vmem, size = 0x400, scoped, tag = 'input window, operand 20, single buffered']
    #allocation22 [shape = 's32[1]{0}', space=sflag, size = 0x4, scoped, tag = 'scoped memory for unet_drift_forward.1']
    #allocation23 [shape = 'u8[512]{0}', space=vmem, size = 0x400, scoped, tag = 'input window, operand 21, single buffered']
    #allocation24 [shape = 'u8[512]{0}', space=vmem, size = 0x400, scoped, tag = 'input window, operand 26, single buffered']
    #allocation25 [shape = 's32[1]{0}', space=sflag, size = 0x4, scoped, tag = 'scoped memory for unet_drift_forward.1']
    #allocation26 [shape = 'u8[512]{0}', space=vmem, size = 0x400, scoped, tag = 'input window, operand 27, single buffered']
    #allocation27 [shape = 'u8[512]{0}', space=vmem, size = 0x400, scoped, tag = 'input window, operand 28, single buffered']
    #allocation28 [shape = 's32[1]{0}', space=sflag, size = 0x4, scoped, tag = 'scoped memory for unet_drift_forward.1']
    #allocation29 [shape = 'u8[512]{0}', space=vmem, size = 0x400, scoped, tag = 'input window, operand 32, single buffered']
    #allocation30 [shape = 'u8[512]{0}', space=vmem, size = 0x400, scoped, tag = 'input window, operand 33, single buffered']
    #allocation31 [shape = 's32[1]{0}', space=sflag, size = 0x4, scoped, tag = 'scoped memory for unet_drift_forward.1']
    #allocation32 [shape = 'u8[512]{0}', space=vmem, size = 0x400, scoped, tag = 'input window, operand 34, single buffered']
    #allocation33 [shape = 'u8[512]{0}', space=vmem, size = 0x400, scoped, tag = 'input window, operand 35, single buffered']
    #allocation34 [shape = 's32[1]{0}', space=sflag, size = 0x4, scoped, tag = 'scoped memory for unet_drift_forward.1']
    #allocation35 [shape = 'u8[512]{0}', space=vmem, size = 0x400, scoped, tag = 'input window, operand 40, single buffered']
    #allocation36 [shape = 'u8[512]{0}', space=vmem, size = 0x400, scoped, tag = 'input window, operand 41, single buffered']
    #allocation37 [shape = 's32[1]{0}', space=sflag, size = 0x4, scoped, tag = 'scoped memory for unet_drift_forward.1']
    #allocation38 [shape = 'u8[512]{0}', space=vmem, size = 0x400, scoped, tag = 'input window, operand 42, single buffered']
    #allocation39 [shape = 'u8[512]{0}', space=vmem, size = 0x400, scoped, tag = 'input window, operand 46, single buffered']
    #allocation40 [shape = 's32[1]{0}', space=sflag, size = 0x4, scoped, tag = 'scoped memory for unet_drift_forward.1']
    #allocation41 [shape = 'u8[512]{0}', space=vmem, size = 0x400, scoped, tag = 'input window, operand 47, single buffered']
    #allocation42 [shape = 'u8[512]{0}', space=vmem, size = 0x400, scoped, tag = 'input window, operand 48, single buffered']
    #allocation43 [shape = 's32[1]{0}', space=sflag, size = 0x4, scoped, tag = 'scoped memory for unet_drift_forward.1']
    #allocation44 [shape = 'u8[512]{0}', space=vmem, size = 0x400, scoped, tag = 'input window, operand 52, single buffered']
    #allocation45 [shape = 'u8[512]{0}', space=vmem, size = 0x400, scoped, tag = 'input window, operand 53, single buffered']
    #allocation46 [shape = 's32[1]{0}', space=sflag, size = 0x4, scoped, tag = 'scoped memory for unet_drift_forward.1']
    #allocation47 [shape = 'u8[512]{0}', space=vmem, size = 0x400, scoped, tag = 'input window, operand 54, single buffered']
    #allocation48 [shape = 'u8[2048]{0}', space=vmem, size = 0x800, scoped, tag = 'input window, operand 56, single buffered']
    #allocation49 [shape = 's32[1]{0}', space=sflag, size = 0x4, scoped, tag = 'scoped memory for unet_drift_forward.1']
    #allocation50 [shape = 'u8[512]{0}', space=vmem, size = 0x400, scoped, tag = 'input window, operand 58, single buffered']
    #allocation51 [shape = 'u8[512]{0}', space=vmem, size = 0x400, scoped, tag = 'input window, operand 59, single buffered']
    #allocation52 [shape = 's32[1]{0}', space=sflag, size = 0x4, scoped, tag = 'scoped memory for unet_drift_forward.1']
    #allocation53 [shape = 'u8[512]{0}', space=vmem, size = 0x400, scoped, tag = 'input window, operand 62, single buffered']
    #allocation54 [shape = 'u8[512]{0}', space=vmem, size = 0x400, scoped, tag = 'input window, operand 63, single buffered']
    #allocation55 [shape = 's32[1]{0}', space=sflag, size = 0x4, scoped, tag = 'scoped memory for unet_drift_forward.1']
    #allocation56 [shape = 'u8[512]{0}', space=vmem, size = 0x400, scoped, tag = 'input window, operand 64, single buffered']
    #allocation57 [shape = 'u8[512]{0}', space=vmem, size = 0x400, scoped, tag = 'input window, operand 68, single buffered']
    #allocation58 [shape = 's32[1]{0}', space=sflag, size = 0x4, scoped, tag = 'scoped memory for unet_drift_forward.1']
    #allocation59 [shape = 'u8[512]{0}', space=vmem, size = 0x400, scoped, tag = 'input window, operand 69, single buffered']
    #allocation60 [shape = 'u8[512]{0}', space=vmem, size = 0x400, scoped, tag = 'input window, operand 70, single buffered']
    #allocation61 [shape = 's32[1]{0}', space=sflag, size = 0x4, scoped, tag = 'scoped memory for unet_drift_forward.1']
    #allocation62 [shape = 'u8[512]{0}', space=vmem, size = 0x400, scoped, tag = 'input window, operand 74, single buffered']
    #allocation63 [shape = 'u8[512]{0}', space=vmem, size = 0x400, scoped, tag = 'input window, operand 76, single buffered']
    #allocation64 [shape = 's32[1]{0}', space=sflag, size = 0x4, scoped, tag = 'scoped memory for unet_drift_forward.1']
    #allocation65 [shape = 'u8[512]{0}', space=vmem, size = 0x400, scoped, tag = 'input window, operand 77, single buffered']
    #allocation66 [shape = 'u8[512]{0}', space=vmem, size = 0x400, scoped, tag = 'input window, operand 78, single buffered']
    #allocation67 [shape = 's32[1]{0}', space=sflag, size = 0x4, scoped, tag = 'scoped memory for unet_drift_forward.1']
    #allocation68 [shape = 'u8[512]{0}', space=vmem, size = 0x400, scoped, tag = 'input window, operand 82, single buffered']
    #allocation69 [shape = 'u8[512]{0}', space=vmem, size = 0x400, scoped, tag = 'input window, operand 83, single buffered']
    #allocation70 [shape = 's32[1]{0}', space=sflag, size = 0x4, scoped, tag = 'scoped memory for unet_drift_forward.1']
    #allocation71 [shape = 'u8[512]{0}', space=vmem, size = 0x400, scoped, tag = 'input window, operand 84, single buffered']
    #allocation72 [shape = 'u8[512]{0}', space=vmem, size = 0x400, scoped, tag = 'input window, operand 88, single buffered']
    #allocation73 [shape = 's32[1]{0}', space=sflag, size = 0x4, scoped, tag = 'scoped memory for unet_drift_forward.1']
    #allocation74 [shape = 'u8[512]{0}', space=vmem, size = 0x400, scoped, tag = 'input window, operand 90, single buffered']
    #allocation75 [shape = 'u8[512]{0}', space=vmem, size = 0x400, scoped, tag = 'input window, operand 91, single buffered']
    #allocation76 [shape = 's32[1]{0}', space=sflag, size = 0x4, scoped, tag = 'scoped memory for unet_drift_forward.1']
    #allocation77 [shape = 'u8[512]{0}', space=vmem, size = 0x400, scoped, tag = 'input window, operand 92, single buffered']
    #allocation78 [shape = 'u8[512]{0}', space=vmem, size = 0x400, scoped, tag = 'input window, operand 96, single buffered']
    #allocation79 [shape = 's32[1]{0}', space=sflag, size = 0x4, scoped, tag = 'scoped memory for unet_drift_forward.1']
    #allocation80 [shape = 'u8[512]{0}', space=vmem, size = 0x400, scoped, tag = 'input window, operand 97, single buffered']
    #allocation81 [shape = 'u8[512]{0}', space=vmem, size = 0x400, scoped, tag = 'input window, operand 98, single buffered']
    #allocation82 [shape = 's32[1]{0}', space=sflag, size = 0x4, scoped, tag = 'scoped memory for unet_drift_forward.1']
    #allocation83 [shape = 'u8[4096]{0}', space=vmem, size = 0x1000, scoped, tag = 'output window, operand 0, single buffered']
    %218 = vsyncpa [#allocation4], 0
    %219 = vsyncpa [#allocation7], 0
    %220 = vsyncpa [#allocation10], 0
    %221 = vsyncpa [#allocation13], 0
    %222 = vsyncpa [#allocation16], 0
    %223 = vsyncpa [#allocation19], 0
    %224 = vsyncpa [#allocation22], 0
    %225 = vsyncpa [#allocation25], 0
    %226 = vsyncpa [#allocation28], 0
    %227 = vsyncpa [#allocation31], 0
    %228 = vsyncpa [#allocation34], 0
    %229 = vsyncpa [#allocation37], 0
    %230 = vsyncpa [#allocation40], 0
    %231 = vsyncpa [#allocation43], 0
    %232 = vsyncpa [#allocation46], 0
    %233 = vsyncpa [#allocation49], 0
    %234 = vsyncpa [#allocation52], 0
    %235 = vsyncpa [#allocation55], 0
    %236 = vsyncpa [#allocation58], 0
    %237 = vsyncpa [#allocation61], 0
    %238 = vsyncpa [#allocation64], 0
    %239 = vsyncpa [#allocation67], 0
    %240 = vsyncpa [#allocation70], 0
    %241 = vsyncpa [#allocation73], 0
    %242 = vsyncpa [#allocation76], 0
    %243 = vsyncpa [#allocation79], 0
    %244 = vsyncpa [#allocation82], 0
    %245 = vsyncpa [#allocation5], 0
    // Predicated region
    $region2: #{unet_drift_forward.1} parent=1 // pred_check
      _
    $region3: #{unet_drift_forward.1} parent=1 // pred_check_branch
      %247 = sbr.rel (0) target = $region5
    $region4: #{unet_drift_forward.1} parent=1 // pred_region
      %s249 = ssub.s32 16, 16
      %250 = vsyncadd [#allocation4], %s249
      %s252 = sshll.u32 [#allocation3], 4
      %s253 = int_to_ptr.vmem [resolvable:$true] %s252
      %255 = dma.hbm_to_vmem [thread:$0]  %s1, 16, %s253, [#allocation4]
    $region5: #{unet_drift_forward.1} parent=1 // pred_fallthru
      _
    // Predicated region
    $region6: #{unet_drift_forward.1} parent=1 // pred_check
      _
    $region7: #{unet_drift_forward.1} parent=1 // pred_check_branch
      %257 = sbr.rel (0) target = $region9
    $region8: #{unet_drift_forward.1} parent=1 // pred_region
      _
    $region9: #{unet_drift_forward.1} parent=1 // pred_fallthru
      _
    // Predicated region
    $region10: #{unet_drift_forward.1} parent=1 // pred_check
      _
    $region11: #{unet_drift_forward.1} parent=1 // pred_check_branch
      %259 = sbr.rel (0) target = $region13
    $region12: #{unet_drift_forward.1} parent=1 // pred_region
      %s261 = ssub.s32 16, 16
      %262 = vsyncadd [#allocation7], %s261
      %s264 = sshll.u32 [#allocation6], 4
      %s265 = int_to_ptr.vmem [resolvable:$true] %s264
      %267 = dma.hbm_to_vmem [thread:$0]  %s5, 16, %s265, [#allocation7]
    $region13: #{unet_drift_forward.1} parent=1 // pred_fallthru
      _
    // Predicated region
    $region14: #{unet_drift_forward.1} parent=1 // pred_check
      _
    $region15: #{unet_drift_forward.1} parent=1 // pred_check_branch
      %269 = sbr.rel (0) target = $region17
    $region16: #{unet_drift_forward.1} parent=1 // pred_region
      %s271 = ssub.s32 16, 16
      %272 = vsyncadd [#allocation7], %s271
      %s274 = sshll.u32 [#allocation8], 4
      %s275 = int_to_ptr.vmem [resolvable:$true] %s274
      %277 = dma.hbm_to_vmem [thread:$0]  %s7, 16, %s275, [#allocation7]
    $region17: #{unet_drift_forward.1} parent=1 // pred_fallthru
      _
    // Predicated region
    $region18: #{unet_drift_forward.1} parent=1 // pred_check
      _
    $region19: #{unet_drift_forward.1} parent=1 // pred_check_branch
      %279 = sbr.rel (0) target = $region21
    $region20: #{unet_drift_forward.1} parent=1 // pred_region
      %s281 = ssub.s32 16, 16
      %282 = vsyncadd [#allocation10], %s281
      %s284 = sshll.u32 [#allocation9], 4
      %s285 = int_to_ptr.vmem [resolvable:$true] %s284
      %287 = dma.hbm_to_vmem [thread:$0]  %s9, 16, %s285, [#allocation10]
    $region21: #{unet_drift_forward.1} parent=1 // pred_fallthru
      _
    // Predicated region
    $region22: #{unet_drift_forward.1} parent=1 // pred_check
      _
    $region23: #{unet_drift_forward.1} parent=1 // pred_check_branch
      %289 = sbr.rel (0) target = $region25
    $region24: #{unet_drift_forward.1} parent=1 // pred_region
      %s291 = ssub.s32 16, 16
      %292 = vsyncadd [#allocation10], %s291
      %s294 = sshll.u32 [#allocation11], 4
      %s295 = int_to_ptr.vmem [resolvable:$true] %s294
      %297 = dma.hbm_to_vmem [thread:$0]  %s11, 16, %s295, [#allocation10]
    $region25: #{unet_drift_forward.1} parent=1 // pred_fallthru
      _
    // Predicated region
    $region26: #{unet_drift_forward.1} parent=1 // pred_check
      _
    $region27: #{unet_drift_forward.1} parent=1 // pred_check_branch
      %299 = sbr.rel (0) target = $region29
    $region28: #{unet_drift_forward.1} parent=1 // pred_region
      _
    $region29: #{unet_drift_forward.1} parent=1 // pred_fallthru
      _
    // Predicated region
    $region30: #{unet_drift_forward.1} parent=1 // pred_check
      _
    $region31: #{unet_drift_forward.1} parent=1 // pred_check_branch
      %301 = sbr.rel (0) target = $region33
    $region32: #{unet_drift_forward.1} parent=1 // pred_region
      _
    $region33: #{unet_drift_forward.1} parent=1 // pred_fallthru
      _
    // Predicated region
    $region34: #{unet_drift_forward.1} parent=1 // pred_check
      _
    $region35: #{unet_drift_forward.1} parent=1 // pred_check_branch
      %303 = sbr.rel (0) target = $region37
    $region36: #{unet_drift_forward.1} parent=1 // pred_region
      _
    $region37: #{unet_drift_forward.1} parent=1 // pred_fallthru
      _
    // Predicated region
    $region38: #{unet_drift_forward.1} parent=1 // pred_check
      _
    $region39: #{unet_drift_forward.1} parent=1 // pred_check_branch
      %305 = sbr.rel (0) target = $region41
    $region40: #{unet_drift_forward.1} parent=1 // pred_region
      _
    $region41: #{unet_drift_forward.1} parent=1 // pred_fallthru
      _
    // Predicated region
    $region42: #{unet_drift_forward.1} parent=1 // pred_check
      _
    $region43: #{unet_drift_forward.1} parent=1 // pred_check_branch
      %307 = sbr.rel (0) target = $region45
    $region44: #{unet_drift_forward.1} parent=1 // pred_region
      %s309 = ssub.s32 16, 16
      %310 = vsyncadd [#allocation13], %s309
      %s312 = sshll.u32 [#allocation12], 4
      %s313 = int_to_ptr.vmem [resolvable:$true] %s312
      %315 = dma.hbm_to_vmem [thread:$0]  %s21, 16, %s313, [#allocation13]
    $region45: #{unet_drift_forward.1} parent=1 // pred_fallthru
      _
    // Predicated region
    $region46: #{unet_drift_forward.1} parent=1 // pred_check
      _
    $region47: #{unet_drift_forward.1} parent=1 // pred_check_branch
      %317 = sbr.rel (0) target = $region49
    $region48: #{unet_drift_forward.1} parent=1 // pred_region
      %s319 = ssub.s32 16, 16
      %320 = vsyncadd [#allocation13], %s319
      %s322 = sshll.u32 [#allocation14], 4
      %s323 = int_to_ptr.vmem [resolvable:$true] %s322
      %325 = dma.hbm_to_vmem [thread:$0]  %s23, 16, %s323, [#allocation13]
    $region49: #{unet_drift_forward.1} parent=1 // pred_fallthru
      _
    // Predicated region
    $region50: #{unet_drift_forward.1} parent=1 // pred_check
      _
    $region51: #{unet_drift_forward.1} parent=1 // pred_check_branch
      %327 = sbr.rel (0) target = $region53
    $region52: #{unet_drift_forward.1} parent=1 // pred_region
      %s329 = ssub.s32 16, 16
      %330 = vsyncadd [#allocation16], %s329
      %s332 = sshll.u32 [#allocation15], 4
      %s333 = int_to_ptr.vmem [resolvable:$true] %s332
      %335 = dma.hbm_to_vmem [thread:$0]  %s25, 16, %s333, [#allocation16]
    $region53: #{unet_drift_forward.1} parent=1 // pred_fallthru
      _
    // Predicated region
    $region54: #{unet_drift_forward.1} parent=1 // pred_check
      _
    $region55: #{unet_drift_forward.1} parent=1 // pred_check_branch
      %337 = sbr.rel (0) target = $region57
    $region56: #{unet_drift_forward.1} parent=1 // pred_region
      _
    $region57: #{unet_drift_forward.1} parent=1 // pred_fallthru
      _
    // Predicated region
    $region58: #{unet_drift_forward.1} parent=1 // pred_check
      _
    $region59: #{unet_drift_forward.1} parent=1 // pred_check_branch
      %339 = sbr.rel (0) target = $region61
    $region60: #{unet_drift_forward.1} parent=1 // pred_region
      _
    $region61: #{unet_drift_forward.1} parent=1 // pred_fallthru
      _
    // Predicated region
    $region62: #{unet_drift_forward.1} parent=1 // pred_check
      _
    $region63: #{unet_drift_forward.1} parent=1 // pred_check_branch
      %341 = sbr.rel (0) target = $region65
    $region64: #{unet_drift_forward.1} parent=1 // pred_region
      _
    $region65: #{unet_drift_forward.1} parent=1 // pred_fallthru
      _
    // Predicated region
    $region66: #{unet_drift_forward.1} parent=1 // pred_check
      _
    $region67: #{unet_drift_forward.1} parent=1 // pred_check_branch
      %343 = sbr.rel (0) target = $region69
    $region68: #{unet_drift_forward.1} parent=1 // pred_region
      %s345 = ssub.s32 16, 16
      %346 = vsyncadd [#allocation16], %s345
      %s348 = sshll.u32 [#allocation17], 4
      %s349 = int_to_ptr.vmem [resolvable:$true] %s348
      %351 = dma.hbm_to_vmem [thread:$0]  %s33, 16, %s349, [#allocation16]
    $region69: #{unet_drift_forward.1} parent=1 // pred_fallthru
      _
    // Predicated region
    $region70: #{unet_drift_forward.1} parent=1 // pred_check
      _
    $region71: #{unet_drift_forward.1} parent=1 // pred_check_branch
      %353 = sbr.rel (0) target = $region73
    $region72: #{unet_drift_forward.1} parent=1 // pred_region
      _
    $region73: #{unet_drift_forward.1} parent=1 // pred_fallthru
      _
    // Predicated region
    $region74: #{unet_drift_forward.1} parent=1 // pred_check
      _
    $region75: #{unet_drift_forward.1} parent=1 // pred_check_branch
      %355 = sbr.rel (0) target = $region77
    $region76: #{unet_drift_forward.1} parent=1 // pred_region
      %s357 = ssub.s32 16, 16
      %358 = vsyncadd [#allocation19], %s357
      %s360 = sshll.u32 [#allocation18], 4
      %s361 = int_to_ptr.vmem [resolvable:$true] %s360
      %363 = dma.hbm_to_vmem [thread:$0]  %s37, 16, %s361, [#allocation19]
    $region77: #{unet_drift_forward.1} parent=1 // pred_fallthru
      _
    // Predicated region
    $region78: #{unet_drift_forward.1} parent=1 // pred_check
      _
    $region79: #{unet_drift_forward.1} parent=1 // pred_check_branch
      %365 = sbr.rel (0) target = $region81
    $region80: #{unet_drift_forward.1} parent=1 // pred_region
      %s367 = ssub.s32 16, 16
      %368 = vsyncadd [#allocation19], %s367
      %s370 = sshll.u32 [#allocation20], 4
      %s371 = int_to_ptr.vmem [resolvable:$true] %s370
      %373 = dma.hbm_to_vmem [thread:$0]  %s39, 16, %s371, [#allocation19]
    $region81: #{unet_drift_forward.1} parent=1 // pred_fallthru
      _
    // Predicated region
    $region82: #{unet_drift_forward.1} parent=1 // pred_check
      _
    $region83: #{unet_drift_forward.1} parent=1 // pred_check_branch
      %375 = sbr.rel (0) target = $region85
    $region84: #{unet_drift_forward.1} parent=1 // pred_region
      %s377 = ssub.s32 16, 16
      %378 = vsyncadd [#allocation22], %s377
      %s380 = sshll.u32 [#allocation21], 4
      %s381 = int_to_ptr.vmem [resolvable:$true] %s380
      %383 = dma.hbm_to_vmem [thread:$0]  %s41, 16, %s381, [#allocation22]
    $region85: #{unet_drift_forward.1} parent=1 // pred_fallthru
      _
    // Predicated region
    $region86: #{unet_drift_forward.1} parent=1 // pred_check
      _
    $region87: #{unet_drift_forward.1} parent=1 // pred_check_branch
      %385 = sbr.rel (0) target = $region89
    $region88: #{unet_drift_forward.1} parent=1 // pred_region
      %s387 = ssub.s32 16, 16
      %388 = vsyncadd [#allocation22], %s387
      %s390 = sshll.u32 [#allocation23], 4
      %s391 = int_to_ptr.vmem [resolvable:$true] %s390
      %393 = dma.hbm_to_vmem [thread:$0]  %s43, 16, %s391, [#allocation22]
    $region89: #{unet_drift_forward.1} parent=1 // pred_fallthru
      _
    // Predicated region
    $region90: #{unet_drift_forward.1} parent=1 // pred_check
      _
    $region91: #{unet_drift_forward.1} parent=1 // pred_check_branch
      %395 = sbr.rel (0) target = $region93
    $region92: #{unet_drift_forward.1} parent=1 // pred_region
      _
    $region93: #{unet_drift_forward.1} parent=1 // pred_fallthru
      _
    // Predicated region
    $region94: #{unet_drift_forward.1} parent=1 // pred_check
      _
    $region95: #{unet_drift_forward.1} parent=1 // pred_check_branch
      %397 = sbr.rel (0) target = $region97
    $region96: #{unet_drift_forward.1} parent=1 // pred_region
      _
    $region97: #{unet_drift_forward.1} parent=1 // pred_fallthru
      _
    // Predicated region
    $region98: #{unet_drift_forward.1} parent=1 // pred_check
      _
    $region99: #{unet_drift_forward.1} parent=1 // pred_check_branch
      %399 = sbr.rel (0) target = $region101
    $region100: #{unet_drift_forward.1} parent=1 // pred_region
      _
    $region101: #{unet_drift_forward.1} parent=1 // pred_fallthru
      _
    // Predicated region
    $region102: #{unet_drift_forward.1} parent=1 // pred_check
      _
    $region103: #{unet_drift_forward.1} parent=1 // pred_check_branch
      %401 = sbr.rel (0) target = $region105
    $region104: #{unet_drift_forward.1} parent=1 // pred_region
      _
    $region105: #{unet_drift_forward.1} parent=1 // pred_fallthru
      _
    // Predicated region
    $region106: #{unet_drift_forward.1} parent=1 // pred_check
      _
    $region107: #{unet_drift_forward.1} parent=1 // pred_check_branch
      %403 = sbr.rel (0) target = $region109
    $region108: #{unet_drift_forward.1} parent=1 // pred_region
      %s405 = ssub.s32 16, 16
      %406 = vsyncadd [#allocation25], %s405
      %s408 = sshll.u32 [#allocation24], 4
      %s409 = int_to_ptr.vmem [resolvable:$true] %s408
      %411 = dma.hbm_to_vmem [thread:$0]  %s53, 16, %s409, [#allocation25]
    $region109: #{unet_drift_forward.1} parent=1 // pred_fallthru
      _
    // Predicated region
    $region110: #{unet_drift_forward.1} parent=1 // pred_check
      _
    $region111: #{unet_drift_forward.1} parent=1 // pred_check_branch
      %413 = sbr.rel (0) target = $region113
    $region112: #{unet_drift_forward.1} parent=1 // pred_region
      %s415 = ssub.s32 16, 16
      %416 = vsyncadd [#allocation25], %s415
      %s418 = sshll.u32 [#allocation26], 4
      %s419 = int_to_ptr.vmem [resolvable:$true] %s418
      %421 = dma.hbm_to_vmem [thread:$0]  %s55, 16, %s419, [#allocation25]
    $region113: #{unet_drift_forward.1} parent=1 // pred_fallthru
      _
    // Predicated region
    $region114: #{unet_drift_forward.1} parent=1 // pred_check
      _
    $region115: #{unet_drift_forward.1} parent=1 // pred_check_branch
      %423 = sbr.rel (0) target = $region117
    $region116: #{unet_drift_forward.1} parent=1 // pred_region
      %s425 = ssub.s32 16, 16
      %426 = vsyncadd [#allocation28], %s425
      %s428 = sshll.u32 [#allocation27], 4
      %s429 = int_to_ptr.vmem [resolvable:$true] %s428
      %431 = dma.hbm_to_vmem [thread:$0]  %s57, 16, %s429, [#allocation28]
    $region117: #{unet_drift_forward.1} parent=1 // pred_fallthru
      _
    // Predicated region
    $region118: #{unet_drift_forward.1} parent=1 // pred_check
      _
    $region119: #{unet_drift_forward.1} parent=1 // pred_check_branch
      %433 = sbr.rel (0) target = $region121
    $region120: #{unet_drift_forward.1} parent=1 // pred_region
      _
    $region121: #{unet_drift_forward.1} parent=1 // pred_fallthru
      _
    // Predicated region
    $region122: #{unet_drift_forward.1} parent=1 // pred_check
      _
    $region123: #{unet_drift_forward.1} parent=1 // pred_check_branch
      %435 = sbr.rel (0) target = $region125
    $region124: #{unet_drift_forward.1} parent=1 // pred_region
      _
    $region125: #{unet_drift_forward.1} parent=1 // pred_fallthru
      _
    // Predicated region
    $region126: #{unet_drift_forward.1} parent=1 // pred_check
      _
    $region127: #{unet_drift_forward.1} parent=1 // pred_check_branch
      %437 = sbr.rel (0) target = $region129
    $region128: #{unet_drift_forward.1} parent=1 // pred_region
      _
    $region129: #{unet_drift_forward.1} parent=1 // pred_fallthru
      _
    // Predicated region
    $region130: #{unet_drift_forward.1} parent=1 // pred_check
      _
    $region131: #{unet_drift_forward.1} parent=1 // pred_check_branch
      %439 = sbr.rel (0) target = $region133
    $region132: #{unet_drift_forward.1} parent=1 // pred_region
      %s441 = ssub.s32 16, 16
      %442 = vsyncadd [#allocation28], %s441
      %s444 = sshll.u32 [#allocation29], 4
      %s445 = int_to_ptr.vmem [resolvable:$true] %s444
      %447 = dma.hbm_to_vmem [thread:$0]  %s65, 16, %s445, [#allocation28]
    $region133: #{unet_drift_forward.1} parent=1 // pred_fallthru
      _
    // Predicated region
    $region134: #{unet_drift_forward.1} parent=1 // pred_check
      _
    $region135: #{unet_drift_forward.1} parent=1 // pred_check_branch
      %449 = sbr.rel (0) target = $region137
    $region136: #{unet_drift_forward.1} parent=1 // pred_region
      %s451 = ssub.s32 16, 16
      %452 = vsyncadd [#allocation31], %s451
      %s454 = sshll.u32 [#allocation30], 4
      %s455 = int_to_ptr.vmem [resolvable:$true] %s454
      %457 = dma.hbm_to_vmem [thread:$0]  %s67, 16, %s455, [#allocation31]
    $region137: #{unet_drift_forward.1} parent=1 // pred_fallthru
      _
    // Predicated region
    $region138: #{unet_drift_forward.1} parent=1 // pred_check
      _
    $region139: #{unet_drift_forward.1} parent=1 // pred_check_branch
      %459 = sbr.rel (0) target = $region141
    $region140: #{unet_drift_forward.1} parent=1 // pred_region
      %s461 = ssub.s32 16, 16
      %462 = vsyncadd [#allocation31], %s461
      %s464 = sshll.u32 [#allocation32], 4
      %s465 = int_to_ptr.vmem [resolvable:$true] %s464
      %467 = dma.hbm_to_vmem [thread:$0]  %s69, 16, %s465, [#allocation31]
    $region141: #{unet_drift_forward.1} parent=1 // pred_fallthru
      _
    // Predicated region
    $region142: #{unet_drift_forward.1} parent=1 // pred_check
      _
    $region143: #{unet_drift_forward.1} parent=1 // pred_check_branch
      %469 = sbr.rel (0) target = $region145
    $region144: #{unet_drift_forward.1} parent=1 // pred_region
      %s471 = ssub.s32 16, 16
      %472 = vsyncadd [#allocation34], %s471
      %s474 = sshll.u32 [#allocation33], 4
      %s475 = int_to_ptr.vmem [resolvable:$true] %s474
      %477 = dma.hbm_to_vmem [thread:$0]  %s71, 16, %s475, [#allocation34]
    $region145: #{unet_drift_forward.1} parent=1 // pred_fallthru
      _
    // Predicated region
    $region146: #{unet_drift_forward.1} parent=1 // pred_check
      _
    $region147: #{unet_drift_forward.1} parent=1 // pred_check_branch
      %479 = sbr.rel (0) target = $region149
    $region148: #{unet_drift_forward.1} parent=1 // pred_region
      _
    $region149: #{unet_drift_forward.1} parent=1 // pred_fallthru
      _
    // Predicated region
    $region150: #{unet_drift_forward.1} parent=1 // pred_check
      _
    $region151: #{unet_drift_forward.1} parent=1 // pred_check_branch
      %481 = sbr.rel (0) target = $region153
    $region152: #{unet_drift_forward.1} parent=1 // pred_region
      _
    $region153: #{unet_drift_forward.1} parent=1 // pred_fallthru
      _
    // Predicated region
    $region154: #{unet_drift_forward.1} parent=1 // pred_check
      _
    $region155: #{unet_drift_forward.1} parent=1 // pred_check_branch
      %483 = sbr.rel (0) target = $region157
    $region156: #{unet_drift_forward.1} parent=1 // pred_region
      _
    $region157: #{unet_drift_forward.1} parent=1 // pred_fallthru
      _
    // Predicated region
    $region158: #{unet_drift_forward.1} parent=1 // pred_check
      _
    $region159: #{unet_drift_forward.1} parent=1 // pred_check_branch
      %485 = sbr.rel (0) target = $region161
    $region160: #{unet_drift_forward.1} parent=1 // pred_region
      _
    $region161: #{unet_drift_forward.1} parent=1 // pred_fallthru
      _
    // Predicated region
    $region162: #{unet_drift_forward.1} parent=1 // pred_check
      _
    $region163: #{unet_drift_forward.1} parent=1 // pred_check_branch
      %487 = sbr.rel (0) target = $region165
    $region164: #{unet_drift_forward.1} parent=1 // pred_region
      %s489 = ssub.s32 16, 16
      %490 = vsyncadd [#allocation34], %s489
      %s492 = sshll.u32 [#allocation35], 4
      %s493 = int_to_ptr.vmem [resolvable:$true] %s492
      %495 = dma.hbm_to_vmem [thread:$0]  %s81, 16, %s493, [#allocation34]
    $region165: #{unet_drift_forward.1} parent=1 // pred_fallthru
      _
    // Predicated region
    $region166: #{unet_drift_forward.1} parent=1 // pred_check
      _
    $region167: #{unet_drift_forward.1} parent=1 // pred_check_branch
      %497 = sbr.rel (0) target = $region169
    $region168: #{unet_drift_forward.1} parent=1 // pred_region
      %s499 = ssub.s32 16, 16
      %500 = vsyncadd [#allocation37], %s499
      %s502 = sshll.u32 [#allocation36], 4
      %s503 = int_to_ptr.vmem [resolvable:$true] %s502
      %505 = dma.hbm_to_vmem [thread:$0]  %s83, 16, %s503, [#allocation37]
    $region169: #{unet_drift_forward.1} parent=1 // pred_fallthru
      _
    // Predicated region
    $region170: #{unet_drift_forward.1} parent=1 // pred_check
      _
    $region171: #{unet_drift_forward.1} parent=1 // pred_check_branch
      %507 = sbr.rel (0) target = $region173
    $region172: #{unet_drift_forward.1} parent=1 // pred_region
      %s509 = ssub.s32 16, 16
      %510 = vsyncadd [#allocation37], %s509
      %s512 = sshll.u32 [#allocation38], 4
      %s513 = int_to_ptr.vmem [resolvable:$true] %s512
      %515 = dma.hbm_to_vmem [thread:$0]  %s85, 16, %s513, [#allocation37]
    $region173: #{unet_drift_forward.1} parent=1 // pred_fallthru
      _
    // Predicated region
    $region174: #{unet_drift_forward.1} parent=1 // pred_check
      _
    $region175: #{unet_drift_forward.1} parent=1 // pred_check_branch
      %517 = sbr.rel (0) target = $region177
    $region176: #{unet_drift_forward.1} parent=1 // pred_region
      _
    $region177: #{unet_drift_forward.1} parent=1 // pred_fallthru
      _
    // Predicated region
    $region178: #{unet_drift_forward.1} parent=1 // pred_check
      _
    $region179: #{unet_drift_forward.1} parent=1 // pred_check_branch
      %519 = sbr.rel (0) target = $region181
    $region180: #{unet_drift_forward.1} parent=1 // pred_region
      _
    $region181: #{unet_drift_forward.1} parent=1 // pred_fallthru
      _
    // Predicated region
    $region182: #{unet_drift_forward.1} parent=1 // pred_check
      _
    $region183: #{unet_drift_forward.1} parent=1 // pred_check_branch
      %521 = sbr.rel (0) target = $region185
    $region184: #{unet_drift_forward.1} parent=1 // pred_region
      _
    $region185: #{unet_drift_forward.1} parent=1 // pred_fallthru
      _
    // Predicated region
    $region186: #{unet_drift_forward.1} parent=1 // pred_check
      _
    $region187: #{unet_drift_forward.1} parent=1 // pred_check_branch
      %523 = sbr.rel (0) target = $region189
    $region188: #{unet_drift_forward.1} parent=1 // pred_region
      %s525 = ssub.s32 16, 16
      %526 = vsyncadd [#allocation40], %s525
      %s528 = sshll.u32 [#allocation39], 4
      %s529 = int_to_ptr.vmem [resolvable:$true] %s528
      %531 = dma.hbm_to_vmem [thread:$0]  %s93, 16, %s529, [#allocation40]
    $region189: #{unet_drift_forward.1} parent=1 // pred_fallthru
      _
    // Predicated region
    $region190: #{unet_drift_forward.1} parent=1 // pred_check
      _
    $region191: #{unet_drift_forward.1} parent=1 // pred_check_branch
      %533 = sbr.rel (0) target = $region193
    $region192: #{unet_drift_forward.1} parent=1 // pred_region
      %s535 = ssub.s32 16, 16
      %536 = vsyncadd [#allocation40], %s535
      %s538 = sshll.u32 [#allocation41], 4
      %s539 = int_to_ptr.vmem [resolvable:$true] %s538
      %541 = dma.hbm_to_vmem [thread:$0]  %s95, 16, %s539, [#allocation40]
    $region193: #{unet_drift_forward.1} parent=1 // pred_fallthru
      _
    // Predicated region
    $region194: #{unet_drift_forward.1} parent=1 // pred_check
      _
    $region195: #{unet_drift_forward.1} parent=1 // pred_check_branch
      %543 = sbr.rel (0) target = $region197
    $region196: #{unet_drift_forward.1} parent=1 // pred_region
      %s545 = ssub.s32 16, 16
      %546 = vsyncadd [#allocation43], %s545
      %s548 = sshll.u32 [#allocation42], 4
      %s549 = int_to_ptr.vmem [resolvable:$true] %s548
      %551 = dma.hbm_to_vmem [thread:$0]  %s97, 16, %s549, [#allocation43]
    $region197: #{unet_drift_forward.1} parent=1 // pred_fallthru
      _
    // Predicated region
    $region198: #{unet_drift_forward.1} parent=1 // pred_check
      _
    $region199: #{unet_drift_forward.1} parent=1 // pred_check_branch
      %553 = sbr.rel (0) target = $region201
    $region200: #{unet_drift_forward.1} parent=1 // pred_region
      _
    $region201: #{unet_drift_forward.1} parent=1 // pred_fallthru
      _
    // Predicated region
    $region202: #{unet_drift_forward.1} parent=1 // pred_check
      _
    $region203: #{unet_drift_forward.1} parent=1 // pred_check_branch
      %555 = sbr.rel (0) target = $region205
    $region204: #{unet_drift_forward.1} parent=1 // pred_region
      _
    $region205: #{unet_drift_forward.1} parent=1 // pred_fallthru
      _
    // Predicated region
    $region206: #{unet_drift_forward.1} parent=1 // pred_check
      _
    $region207: #{unet_drift_forward.1} parent=1 // pred_check_branch
      %557 = sbr.rel (0) target = $region209
    $region208: #{unet_drift_forward.1} parent=1 // pred_region
      _
    $region209: #{unet_drift_forward.1} parent=1 // pred_fallthru
      _
    // Predicated region
    $region210: #{unet_drift_forward.1} parent=1 // pred_check
      _
    $region211: #{unet_drift_forward.1} parent=1 // pred_check_branch
      %559 = sbr.rel (0) target = $region213
    $region212: #{unet_drift_forward.1} parent=1 // pred_region
      %s561 = ssub.s32 16, 16
      %562 = vsyncadd [#allocation43], %s561
      %s564 = sshll.u32 [#allocation44], 4
      %s565 = int_to_ptr.vmem [resolvable:$true] %s564
      %567 = dma.hbm_to_vmem [thread:$0]  %s105, 16, %s565, [#allocation43]
    $region213: #{unet_drift_forward.1} parent=1 // pred_fallthru
      _
    // Predicated region
    $region214: #{unet_drift_forward.1} parent=1 // pred_check
      _
    $region215: #{unet_drift_forward.1} parent=1 // pred_check_branch
      %569 = sbr.rel (0) target = $region217
    $region216: #{unet_drift_forward.1} parent=1 // pred_region
      %s571 = ssub.s32 16, 16
      %572 = vsyncadd [#allocation46], %s571
      %s574 = sshll.u32 [#allocation45], 4
      %s575 = int_to_ptr.vmem [resolvable:$true] %s574
      %577 = dma.hbm_to_vmem [thread:$0]  %s107, 16, %s575, [#allocation46]
    $region217: #{unet_drift_forward.1} parent=1 // pred_fallthru
      _
    // Predicated region
    $region218: #{unet_drift_forward.1} parent=1 // pred_check
      _
    $region219: #{unet_drift_forward.1} parent=1 // pred_check_branch
      %579 = sbr.rel (0) target = $region221
    $region220: #{unet_drift_forward.1} parent=1 // pred_region
      %s581 = ssub.s32 16, 16
      %582 = vsyncadd [#allocation46], %s581
      %s584 = sshll.u32 [#allocation47], 4
      %s585 = int_to_ptr.vmem [resolvable:$true] %s584
      %587 = dma.hbm_to_vmem [thread:$0]  %s109, 16, %s585, [#allocation46]
    $region221: #{unet_drift_forward.1} parent=1 // pred_fallthru
      _
    // Predicated region
    $region222: #{unet_drift_forward.1} parent=1 // pred_check
      _
    $region223: #{unet_drift_forward.1} parent=1 // pred_check_branch
      %589 = sbr.rel (0) target = $region225
    $region224: #{unet_drift_forward.1} parent=1 // pred_region
      _
    $region225: #{unet_drift_forward.1} parent=1 // pred_fallthru
      _
    // Predicated region
    $region226: #{unet_drift_forward.1} parent=1 // pred_check
      _
    $region227: #{unet_drift_forward.1} parent=1 // pred_check_branch
      %591 = sbr.rel (0) target = $region229
    $region228: #{unet_drift_forward.1} parent=1 // pred_region
      %s593 = ssub.s32 64, 64
      %594 = vsyncadd [#allocation49], %s593
      %s596 = sshll.u32 [#allocation48], 4
      %s597 = int_to_ptr.vmem [resolvable:$true] %s596
      %599 = dma.hbm_to_vmem [thread:$0]  %s113, 64, %s597, [#allocation49]
    $region229: #{unet_drift_forward.1} parent=1 // pred_fallthru
      _
    // Predicated region
    $region230: #{unet_drift_forward.1} parent=1 // pred_check
      _
    $region231: #{unet_drift_forward.1} parent=1 // pred_check_branch
      %601 = sbr.rel (0) target = $region233
    $region232: #{unet_drift_forward.1} parent=1 // pred_region
      _
    $region233: #{unet_drift_forward.1} parent=1 // pred_fallthru
      _
    // Predicated region
    $region234: #{unet_drift_forward.1} parent=1 // pred_check
      _
    $region235: #{unet_drift_forward.1} parent=1 // pred_check_branch
      %603 = sbr.rel (0) target = $region237
    $region236: #{unet_drift_forward.1} parent=1 // pred_region
      %s605 = ssub.s32 16, 16
      %606 = vsyncadd [#allocation49], %s605
      %s608 = sshll.u32 [#allocation50], 4
      %s609 = int_to_ptr.vmem [resolvable:$true] %s608
      %611 = dma.hbm_to_vmem [thread:$0]  %s117, 16, %s609, [#allocation49]
    $region237: #{unet_drift_forward.1} parent=1 // pred_fallthru
      _
    // Predicated region
    $region238: #{unet_drift_forward.1} parent=1 // pred_check
      _
    $region239: #{unet_drift_forward.1} parent=1 // pred_check_branch
      %613 = sbr.rel (0) target = $region241
    $region240: #{unet_drift_forward.1} parent=1 // pred_region
      %s615 = ssub.s32 16, 16
      %616 = vsyncadd [#allocation52], %s615
      %s618 = sshll.u32 [#allocation51], 4
      %s619 = int_to_ptr.vmem [resolvable:$true] %s618
      %621 = dma.hbm_to_vmem [thread:$0]  %s119, 16, %s619, [#allocation52]
    $region241: #{unet_drift_forward.1} parent=1 // pred_fallthru
      _
    // Predicated region
    $region242: #{unet_drift_forward.1} parent=1 // pred_check
      _
    $region243: #{unet_drift_forward.1} parent=1 // pred_check_branch
      %623 = sbr.rel (0) target = $region245
    $region244: #{unet_drift_forward.1} parent=1 // pred_region
      _
    $region245: #{unet_drift_forward.1} parent=1 // pred_fallthru
      _
    // Predicated region
    $region246: #{unet_drift_forward.1} parent=1 // pred_check
      _
    $region247: #{unet_drift_forward.1} parent=1 // pred_check_branch
      %625 = sbr.rel (0) target = $region249
    $region248: #{unet_drift_forward.1} parent=1 // pred_region
      _
    $region249: #{unet_drift_forward.1} parent=1 // pred_fallthru
      _
    // Predicated region
    $region250: #{unet_drift_forward.1} parent=1 // pred_check
      _
    $region251: #{unet_drift_forward.1} parent=1 // pred_check_branch
      %627 = sbr.rel (0) target = $region253
    $region252: #{unet_drift_forward.1} parent=1 // pred_region
      %s629 = ssub.s32 16, 16
      %630 = vsyncadd [#allocation52], %s629
      %s632 = sshll.u32 [#allocation53], 4
      %s633 = int_to_ptr.vmem [resolvable:$true] %s632
      %635 = dma.hbm_to_vmem [thread:$0]  %s125, 16, %s633, [#allocation52]
    $region253: #{unet_drift_forward.1} parent=1 // pred_fallthru
      _
    // Predicated region
    $region254: #{unet_drift_forward.1} parent=1 // pred_check
      _
    $region255: #{unet_drift_forward.1} parent=1 // pred_check_branch
      %637 = sbr.rel (0) target = $region257
    $region256: #{unet_drift_forward.1} parent=1 // pred_region
      %s639 = ssub.s32 16, 16
      %640 = vsyncadd [#allocation55], %s639
      %s642 = sshll.u32 [#allocation54], 4
      %s643 = int_to_ptr.vmem [resolvable:$true] %s642
      %645 = dma.hbm_to_vmem [thread:$0]  %s127, 16, %s643, [#allocation55]
    $region257: #{unet_drift_forward.1} parent=1 // pred_fallthru
      _
    // Predicated region
    $region258: #{unet_drift_forward.1} parent=1 // pred_check
      _
    $region259: #{unet_drift_forward.1} parent=1 // pred_check_branch
      %647 = sbr.rel (0) target = $region261
    $region260: #{unet_drift_forward.1} parent=1 // pred_region
      %s649 = ssub.s32 16, 16
      %650 = vsyncadd [#allocation55], %s649
      %s652 = sshll.u32 [#allocation56], 4
      %s653 = int_to_ptr.vmem [resolvable:$true] %s652
      %655 = dma.hbm_to_vmem [thread:$0]  %s129, 16, %s653, [#allocation55]
    $region261: #{unet_drift_forward.1} parent=1 // pred_fallthru
      _
    // Predicated region
    $region262: #{unet_drift_forward.1} parent=1 // pred_check
      _
    $region263: #{unet_drift_forward.1} parent=1 // pred_check_branch
      %657 = sbr.rel (0) target = $region265
    $region264: #{unet_drift_forward.1} parent=1 // pred_region
      _
    $region265: #{unet_drift_forward.1} parent=1 // pred_fallthru
      _
    // Predicated region
    $region266: #{unet_drift_forward.1} parent=1 // pred_check
      _
    $region267: #{unet_drift_forward.1} parent=1 // pred_check_branch
      %659 = sbr.rel (0) target = $region269
    $region268: #{unet_drift_forward.1} parent=1 // pred_region
      _
    $region269: #{unet_drift_forward.1} parent=1 // pred_fallthru
      _
    // Predicated region
    $region270: #{unet_drift_forward.1} parent=1 // pred_check
      _
    $region271: #{unet_drift_forward.1} parent=1 // pred_check_branch
      %661 = sbr.rel (0) target = $region273
    $region272: #{unet_drift_forward.1} parent=1 // pred_region
      _
    $region273: #{unet_drift_forward.1} parent=1 // pred_fallthru
      _
    // Predicated region
    $region274: #{unet_drift_forward.1} parent=1 // pred_check
      _
    $region275: #{unet_drift_forward.1} parent=1 // pred_check_branch
      %663 = sbr.rel (0) target = $region277
    $region276: #{unet_drift_forward.1} parent=1 // pred_region
      %s665 = ssub.s32 16, 16
      %666 = vsyncadd [#allocation58], %s665
      %s668 = sshll.u32 [#allocation57], 4
      %s669 = int_to_ptr.vmem [resolvable:$true] %s668
      %671 = dma.hbm_to_vmem [thread:$0]  %s137, 16, %s669, [#allocation58]
    $region277: #{unet_drift_forward.1} parent=1 // pred_fallthru
      _
    // Predicated region
    $region278: #{unet_drift_forward.1} parent=1 // pred_check
      _
    $region279: #{unet_drift_forward.1} parent=1 // pred_check_branch
      %673 = sbr.rel (0) target = $region281
    $region280: #{unet_drift_forward.1} parent=1 // pred_region
      %s675 = ssub.s32 16, 16
      %676 = vsyncadd [#allocation58], %s675
      %s678 = sshll.u32 [#allocation59], 4
      %s679 = int_to_ptr.vmem [resolvable:$true] %s678
      %681 = dma.hbm_to_vmem [thread:$0]  %s139, 16, %s679, [#allocation58]
    $region281: #{unet_drift_forward.1} parent=1 // pred_fallthru
      _
    // Predicated region
    $region282: #{unet_drift_forward.1} parent=1 // pred_check
      _
    $region283: #{unet_drift_forward.1} parent=1 // pred_check_branch
      %683 = sbr.rel (0) target = $region285
    $region284: #{unet_drift_forward.1} parent=1 // pred_region
      %s685 = ssub.s32 16, 16
      %686 = vsyncadd [#allocation61], %s685
      %s688 = sshll.u32 [#allocation60], 4
      %s689 = int_to_ptr.vmem [resolvable:$true] %s688
      %691 = dma.hbm_to_vmem [thread:$0]  %s141, 16, %s689, [#allocation61]
    $region285: #{unet_drift_forward.1} parent=1 // pred_fallthru
      _
    // Predicated region
    $region286: #{unet_drift_forward.1} parent=1 // pred_check
      _
    $region287: #{unet_drift_forward.1} parent=1 // pred_check_branch
      %693 = sbr.rel (0) target = $region289
    $region288: #{unet_drift_forward.1} parent=1 // pred_region
      _
    $region289: #{unet_drift_forward.1} parent=1 // pred_fallthru
      _
    // Predicated region
    $region290: #{unet_drift_forward.1} parent=1 // pred_check
      _
    $region291: #{unet_drift_forward.1} parent=1 // pred_check_branch
      %695 = sbr.rel (0) target = $region293
    $region292: #{unet_drift_forward.1} parent=1 // pred_region
      _
    $region293: #{unet_drift_forward.1} parent=1 // pred_fallthru
      _
    // Predicated region
    $region294: #{unet_drift_forward.1} parent=1 // pred_check
      _
    $region295: #{unet_drift_forward.1} parent=1 // pred_check_branch
      %697 = sbr.rel (0) target = $region297
    $region296: #{unet_drift_forward.1} parent=1 // pred_region
      _
    $region297: #{unet_drift_forward.1} parent=1 // pred_fallthru
      _
    // Predicated region
    $region298: #{unet_drift_forward.1} parent=1 // pred_check
      _
    $region299: #{unet_drift_forward.1} parent=1 // pred_check_branch
      %699 = sbr.rel (0) target = $region301
    $region300: #{unet_drift_forward.1} parent=1 // pred_region
      %s701 = ssub.s32 16, 16
      %702 = vsyncadd [#allocation61], %s701
      %s704 = sshll.u32 [#allocation62], 4
      %s705 = int_to_ptr.vmem [resolvable:$true] %s704
      %707 = dma.hbm_to_vmem [thread:$0]  %s149, 16, %s705, [#allocation61]
    $region301: #{unet_drift_forward.1} parent=1 // pred_fallthru
      _
    // Predicated region
    $region302: #{unet_drift_forward.1} parent=1 // pred_check
      _
    $region303: #{unet_drift_forward.1} parent=1 // pred_check_branch
      %709 = sbr.rel (0) target = $region305
    $region304: #{unet_drift_forward.1} parent=1 // pred_region
      _
    $region305: #{unet_drift_forward.1} parent=1 // pred_fallthru
      _
    // Predicated region
    $region306: #{unet_drift_forward.1} parent=1 // pred_check
      _
    $region307: #{unet_drift_forward.1} parent=1 // pred_check_branch
      %711 = sbr.rel (0) target = $region309
    $region308: #{unet_drift_forward.1} parent=1 // pred_region
      %s713 = ssub.s32 16, 16
      %714 = vsyncadd [#allocation64], %s713
      %s716 = sshll.u32 [#allocation63], 4
      %s717 = int_to_ptr.vmem [resolvable:$true] %s716
      %719 = dma.hbm_to_vmem [thread:$0]  %s153, 16, %s717, [#allocation64]
    $region309: #{unet_drift_forward.1} parent=1 // pred_fallthru
      _
    // Predicated region
    $region310: #{unet_drift_forward.1} parent=1 // pred_check
      _
    $region311: #{unet_drift_forward.1} parent=1 // pred_check_branch
      %721 = sbr.rel (0) target = $region313
    $region312: #{unet_drift_forward.1} parent=1 // pred_region
      %s723 = ssub.s32 16, 16
      %724 = vsyncadd [#allocation64], %s723
      %s726 = sshll.u32 [#allocation65], 4
      %s727 = int_to_ptr.vmem [resolvable:$true] %s726
      %729 = dma.hbm_to_vmem [thread:$0]  %s155, 16, %s727, [#allocation64]
    $region313: #{unet_drift_forward.1} parent=1 // pred_fallthru
      _
    // Predicated region
    $region314: #{unet_drift_forward.1} parent=1 // pred_check
      _
    $region315: #{unet_drift_forward.1} parent=1 // pred_check_branch
      %731 = sbr.rel (0) target = $region317
    $region316: #{unet_drift_forward.1} parent=1 // pred_region
      %s733 = ssub.s32 16, 16
      %734 = vsyncadd [#allocation67], %s733
      %s736 = sshll.u32 [#allocation66], 4
      %s737 = int_to_ptr.vmem [resolvable:$true] %s736
      %739 = dma.hbm_to_vmem [thread:$0]  %s157, 16, %s737, [#allocation67]
    $region317: #{unet_drift_forward.1} parent=1 // pred_fallthru
      _
    // Predicated region
    $region318: #{unet_drift_forward.1} parent=1 // pred_check
      _
    $region319: #{unet_drift_forward.1} parent=1 // pred_check_branch
      %741 = sbr.rel (0) target = $region321
    $region320: #{unet_drift_forward.1} parent=1 // pred_region
      _
    $region321: #{unet_drift_forward.1} parent=1 // pred_fallthru
      _
    // Predicated region
    $region322: #{unet_drift_forward.1} parent=1 // pred_check
      _
    $region323: #{unet_drift_forward.1} parent=1 // pred_check_branch
      %743 = sbr.rel (0) target = $region325
    $region324: #{unet_drift_forward.1} parent=1 // pred_region
      _
    $region325: #{unet_drift_forward.1} parent=1 // pred_fallthru
      _
    // Predicated region
    $region326: #{unet_drift_forward.1} parent=1 // pred_check
      _
    $region327: #{unet_drift_forward.1} parent=1 // pred_check_branch
      %745 = sbr.rel (0) target = $region329
    $region328: #{unet_drift_forward.1} parent=1 // pred_region
      _
    $region329: #{unet_drift_forward.1} parent=1 // pred_fallthru
      _
    // Predicated region
    $region330: #{unet_drift_forward.1} parent=1 // pred_check
      _
    $region331: #{unet_drift_forward.1} parent=1 // pred_check_branch
      %747 = sbr.rel (0) target = $region333
    $region332: #{unet_drift_forward.1} parent=1 // pred_region
      %s749 = ssub.s32 16, 16
      %750 = vsyncadd [#allocation67], %s749
      %s752 = sshll.u32 [#allocation68], 4
      %s753 = int_to_ptr.vmem [resolvable:$true] %s752
      %755 = dma.hbm_to_vmem [thread:$0]  %s165, 16, %s753, [#allocation67]
    $region333: #{unet_drift_forward.1} parent=1 // pred_fallthru
      _
    // Predicated region
    $region334: #{unet_drift_forward.1} parent=1 // pred_check
      _
    $region335: #{unet_drift_forward.1} parent=1 // pred_check_branch
      %757 = sbr.rel (0) target = $region337
    $region336: #{unet_drift_forward.1} parent=1 // pred_region
      %s759 = ssub.s32 16, 16
      %760 = vsyncadd [#allocation70], %s759
      %s762 = sshll.u32 [#allocation69], 4
      %s763 = int_to_ptr.vmem [resolvable:$true] %s762
      %765 = dma.hbm_to_vmem [thread:$0]  %s167, 16, %s763, [#allocation70]
    $region337: #{unet_drift_forward.1} parent=1 // pred_fallthru
      _
    // Predicated region
    $region338: #{unet_drift_forward.1} parent=1 // pred_check
      _
    $region339: #{unet_drift_forward.1} parent=1 // pred_check_branch
      %767 = sbr.rel (0) target = $region341
    $region340: #{unet_drift_forward.1} parent=1 // pred_region
      %s769 = ssub.s32 16, 16
      %770 = vsyncadd [#allocation70], %s769
      %s772 = sshll.u32 [#allocation71], 4
      %s773 = int_to_ptr.vmem [resolvable:$true] %s772
      %775 = dma.hbm_to_vmem [thread:$0]  %s169, 16, %s773, [#allocation70]
    $region341: #{unet_drift_forward.1} parent=1 // pred_fallthru
      _
    // Predicated region
    $region342: #{unet_drift_forward.1} parent=1 // pred_check
      _
    $region343: #{unet_drift_forward.1} parent=1 // pred_check_branch
      %777 = sbr.rel (0) target = $region345
    $region344: #{unet_drift_forward.1} parent=1 // pred_region
      _
    $region345: #{unet_drift_forward.1} parent=1 // pred_fallthru
      _
    // Predicated region
    $region346: #{unet_drift_forward.1} parent=1 // pred_check
      _
    $region347: #{unet_drift_forward.1} parent=1 // pred_check_branch
      %779 = sbr.rel (0) target = $region349
    $region348: #{unet_drift_forward.1} parent=1 // pred_region
      _
    $region349: #{unet_drift_forward.1} parent=1 // pred_fallthru
      _
    // Predicated region
    $region350: #{unet_drift_forward.1} parent=1 // pred_check
      _
    $region351: #{unet_drift_forward.1} parent=1 // pred_check_branch
      %781 = sbr.rel (0) target = $region353
    $region352: #{unet_drift_forward.1} parent=1 // pred_region
      _
    $region353: #{unet_drift_forward.1} parent=1 // pred_fallthru
      _
    // Predicated region
    $region354: #{unet_drift_forward.1} parent=1 // pred_check
      _
    $region355: #{unet_drift_forward.1} parent=1 // pred_check_branch
      %783 = sbr.rel (0) target = $region357
    $region356: #{unet_drift_forward.1} parent=1 // pred_region
      %s785 = ssub.s32 16, 16
      %786 = vsyncadd [#allocation73], %s785
      %s788 = sshll.u32 [#allocation72], 4
      %s789 = int_to_ptr.vmem [resolvable:$true] %s788
      %791 = dma.hbm_to_vmem [thread:$0]  %s177, 16, %s789, [#allocation73]
    $region357: #{unet_drift_forward.1} parent=1 // pred_fallthru
      _
    // Predicated region
    $region358: #{unet_drift_forward.1} parent=1 // pred_check
      _
    $region359: #{unet_drift_forward.1} parent=1 // pred_check_branch
      %793 = sbr.rel (0) target = $region361
    $region360: #{unet_drift_forward.1} parent=1 // pred_region
      _
    $region361: #{unet_drift_forward.1} parent=1 // pred_fallthru
      _
    // Predicated region
    $region362: #{unet_drift_forward.1} parent=1 // pred_check
      _
    $region363: #{unet_drift_forward.1} parent=1 // pred_check_branch
      %795 = sbr.rel (0) target = $region365
    $region364: #{unet_drift_forward.1} parent=1 // pred_region
      %s797 = ssub.s32 16, 16
      %798 = vsyncadd [#allocation73], %s797
      %s800 = sshll.u32 [#allocation74], 4
      %s801 = int_to_ptr.vmem [resolvable:$true] %s800
      %803 = dma.hbm_to_vmem [thread:$0]  %s181, 16, %s801, [#allocation73]
    $region365: #{unet_drift_forward.1} parent=1 // pred_fallthru
      _
    // Predicated region
    $region366: #{unet_drift_forward.1} parent=1 // pred_check
      _
    $region367: #{unet_drift_forward.1} parent=1 // pred_check_branch
      %805 = sbr.rel (0) target = $region369
    $region368: #{unet_drift_forward.1} parent=1 // pred_region
      %s807 = ssub.s32 16, 16
      %808 = vsyncadd [#allocation76], %s807
      %s810 = sshll.u32 [#allocation75], 4
      %s811 = int_to_ptr.vmem [resolvable:$true] %s810
      %813 = dma.hbm_to_vmem [thread:$0]  %s183, 16, %s811, [#allocation76]
    $region369: #{unet_drift_forward.1} parent=1 // pred_fallthru
      _
    // Predicated region
    $region370: #{unet_drift_forward.1} parent=1 // pred_check
      _
    $region371: #{unet_drift_forward.1} parent=1 // pred_check_branch
      %815 = sbr.rel (0) target = $region373
    $region372: #{unet_drift_forward.1} parent=1 // pred_region
      %s817 = ssub.s32 16, 16
      %818 = vsyncadd [#allocation76], %s817
      %s820 = sshll.u32 [#allocation77], 4
      %s821 = int_to_ptr.vmem [resolvable:$true] %s820
      %823 = dma.hbm_to_vmem [thread:$0]  %s185, 16, %s821, [#allocation76]
    $region373: #{unet_drift_forward.1} parent=1 // pred_fallthru
      _
    // Predicated region
    $region374: #{unet_drift_forward.1} parent=1 // pred_check
      _
    $region375: #{unet_drift_forward.1} parent=1 // pred_check_branch
      %825 = sbr.rel (0) target = $region377
    $region376: #{unet_drift_forward.1} parent=1 // pred_region
      _
    $region377: #{unet_drift_forward.1} parent=1 // pred_fallthru
      _
    // Predicated region
    $region378: #{unet_drift_forward.1} parent=1 // pred_check
      _
    $region379: #{unet_drift_forward.1} parent=1 // pred_check_branch
      %827 = sbr.rel (0) target = $region381
    $region380: #{unet_drift_forward.1} parent=1 // pred_region
      _
    $region381: #{unet_drift_forward.1} parent=1 // pred_fallthru
      _
    // Predicated region
    $region382: #{unet_drift_forward.1} parent=1 // pred_check
      _
    $region383: #{unet_drift_forward.1} parent=1 // pred_check_branch
      %829 = sbr.rel (0) target = $region385
    $region384: #{unet_drift_forward.1} parent=1 // pred_region
      _
    $region385: #{unet_drift_forward.1} parent=1 // pred_fallthru
      _
    // Predicated region
    $region386: #{unet_drift_forward.1} parent=1 // pred_check
      _
    $region387: #{unet_drift_forward.1} parent=1 // pred_check_branch
      %831 = sbr.rel (0) target = $region389
    $region388: #{unet_drift_forward.1} parent=1 // pred_region
      %s833 = ssub.s32 16, 16
      %834 = vsyncadd [#allocation79], %s833
      %s836 = sshll.u32 [#allocation78], 4
      %s837 = int_to_ptr.vmem [resolvable:$true] %s836
      %839 = dma.hbm_to_vmem [thread:$0]  %s193, 16, %s837, [#allocation79]
    $region389: #{unet_drift_forward.1} parent=1 // pred_fallthru
      _
    // Predicated region
    $region390: #{unet_drift_forward.1} parent=1 // pred_check
      _
    $region391: #{unet_drift_forward.1} parent=1 // pred_check_branch
      %841 = sbr.rel (0) target = $region393
    $region392: #{unet_drift_forward.1} parent=1 // pred_region
      %s843 = ssub.s32 16, 16
      %844 = vsyncadd [#allocation79], %s843
      %s846 = sshll.u32 [#allocation80], 4
      %s847 = int_to_ptr.vmem [resolvable:$true] %s846
      %849 = dma.hbm_to_vmem [thread:$0]  %s195, 16, %s847, [#allocation79]
    $region393: #{unet_drift_forward.1} parent=1 // pred_fallthru
      _
    // Predicated region
    $region394: #{unet_drift_forward.1} parent=1 // pred_check
      _
    $region395: #{unet_drift_forward.1} parent=1 // pred_check_branch
      %851 = sbr.rel (0) target = $region397
    $region396: #{unet_drift_forward.1} parent=1 // pred_region
      %s853 = ssub.s32 16, 16
      %854 = vsyncadd [#allocation82], %s853
      %s856 = sshll.u32 [#allocation81], 4
      %s857 = int_to_ptr.vmem [resolvable:$true] %s856
      %859 = dma.hbm_to_vmem [thread:$0]  %s197, 16, %s857, [#allocation82]
    $region397: #{unet_drift_forward.1} parent=1 // pred_fallthru
      _
    // Predicated region
    $region398: #{unet_drift_forward.1} parent=1 // pred_check
      _
    $region399: #{unet_drift_forward.1} parent=1 // pred_check_branch
      %861 = sbr.rel (0) target = $region401
    $region400: #{unet_drift_forward.1} parent=1 // pred_region
      _
    $region401: #{unet_drift_forward.1} parent=1 // pred_fallthru
      _
    // Predicated region
    $region402: #{unet_drift_forward.1} parent=1 // pred_check
      _
    $region403: #{unet_drift_forward.1} parent=1 // pred_check_branch
      %863 = sbr.rel (0) target = $region405
    $region404: #{unet_drift_forward.1} parent=1 // pred_region
      _
    $region405: #{unet_drift_forward.1} parent=1 // pred_fallthru
      _
    // Predicated region
    $region406: #{unet_drift_forward.1} parent=1 // pred_check
      _
    $region407: #{unet_drift_forward.1} parent=1 // pred_check_branch
      %865 = sbr.rel (0) target = $region409
    $region408: #{unet_drift_forward.1} parent=1 // pred_region
      _
    $region409: #{unet_drift_forward.1} parent=1 // pred_fallthru
      _
    // Predicated region
    $region410: #{unet_drift_forward.1} parent=1 // pred_check
      _
    $region411: #{unet_drift_forward.1} parent=1 // pred_check_branch
      %867 = sbr.rel (0) target = $region413
    $region412: #{unet_drift_forward.1} parent=1 // pred_region
      _
    $region413: #{unet_drift_forward.1} parent=1 // pred_fallthru
      _
    // Predicated region
    $region414: #{unet_drift_forward.1} parent=1 // pred_check
      _
    $region415: #{unet_drift_forward.1} parent=1 // pred_check_branch
      %869 = sbr.rel (0) target = $region417
    $region416: #{unet_drift_forward.1} parent=1 // pred_region
      _
    $region417: #{unet_drift_forward.1} parent=1 // pred_fallthru
      _
    // Predicated region
    $region418: #{unet_drift_forward.1} parent=1 // pred_check
      _
    $region419: #{unet_drift_forward.1} parent=1 // pred_check_branch
      %871 = sbr.rel (0) target = $region421
    $region420: #{unet_drift_forward.1} parent=1 // pred_region
      _
    $region421: #{unet_drift_forward.1} parent=1 // pred_fallthru
      _
    // Predicated region
    $region422: #{unet_drift_forward.1} parent=1 // pred_check
      _
    $region423: #{unet_drift_forward.1} parent=1 // pred_check_branch
      %873 = sbr.rel (0) target = $region425
    $region424: #{unet_drift_forward.1} parent=1 // pred_region
      %874 = dma.done [#allocation4], 16
    $region425: #{unet_drift_forward.1} parent=1 // pred_fallthru
      _
    // Predicated region
    $region426: #{unet_drift_forward.1} parent=1 // pred_check
      _
    $region427: #{unet_drift_forward.1} parent=1 // pred_check_branch
      %876 = sbr.rel (0) target = $region429
    $region428: #{unet_drift_forward.1} parent=1 // pred_region
      %877 = dma.done [#allocation7], 16
    $region429: #{unet_drift_forward.1} parent=1 // pred_fallthru
      _
    // Predicated region
    $region430: #{unet_drift_forward.1} parent=1 // pred_check
      _
    $region431: #{unet_drift_forward.1} parent=1 // pred_check_branch
      %879 = sbr.rel (0) target = $region433
    $region432: #{unet_drift_forward.1} parent=1 // pred_region
      %880 = dma.done [#allocation7], 16
    $region433: #{unet_drift_forward.1} parent=1 // pred_fallthru
      _
    // Predicated region
    $region434: #{unet_drift_forward.1} parent=1 // pred_check
      _
    $region435: #{unet_drift_forward.1} parent=1 // pred_check_branch
      %882 = sbr.rel (0) target = $region437
    $region436: #{unet_drift_forward.1} parent=1 // pred_region
      %883 = dma.done [#allocation10], 16
    $region437: #{unet_drift_forward.1} parent=1 // pred_fallthru
      _
    // Predicated region
    $region438: #{unet_drift_forward.1} parent=1 // pred_check
      _
    $region439: #{unet_drift_forward.1} parent=1 // pred_check_branch
      %885 = sbr.rel (0) target = $region441
    $region440: #{unet_drift_forward.1} parent=1 // pred_region
      %886 = dma.done [#allocation10], 16
    $region441: #{unet_drift_forward.1} parent=1 // pred_fallthru
      _
    // Predicated region
    $region442: #{unet_drift_forward.1} parent=1 // pred_check
      _
    $region443: #{unet_drift_forward.1} parent=1 // pred_check_branch
      %888 = sbr.rel (0) target = $region445
    $region444: #{unet_drift_forward.1} parent=1 // pred_region
      %889 = dma.done [#allocation13], 16
    $region445: #{unet_drift_forward.1} parent=1 // pred_fallthru
      _
    // Predicated region
    $region446: #{unet_drift_forward.1} parent=1 // pred_check
      _
    $region447: #{unet_drift_forward.1} parent=1 // pred_check_branch
      %891 = sbr.rel (0) target = $region449
    $region448: #{unet_drift_forward.1} parent=1 // pred_region
      %892 = dma.done [#allocation13], 16
    $region449: #{unet_drift_forward.1} parent=1 // pred_fallthru
      _
    // Predicated region
    $region450: #{unet_drift_forward.1} parent=1 // pred_check
      _
    $region451: #{unet_drift_forward.1} parent=1 // pred_check_branch
      %894 = sbr.rel (0) target = $region453
    $region452: #{unet_drift_forward.1} parent=1 // pred_region
      %895 = dma.done [#allocation16], 16
    $region453: #{unet_drift_forward.1} parent=1 // pred_fallthru
      _
    // Predicated region
    $region454: #{unet_drift_forward.1} parent=1 // pred_check
      _
    $region455: #{unet_drift_forward.1} parent=1 // pred_check_branch
      %897 = sbr.rel (0) target = $region457
    $region456: #{unet_drift_forward.1} parent=1 // pred_region
      %898 = dma.done [#allocation16], 16
    $region457: #{unet_drift_forward.1} parent=1 // pred_fallthru
      _
    // Predicated region
    $region458: #{unet_drift_forward.1} parent=1 // pred_check
      _
    $region459: #{unet_drift_forward.1} parent=1 // pred_check_branch
      %900 = sbr.rel (0) target = $region461
    $region460: #{unet_drift_forward.1} parent=1 // pred_region
      %901 = dma.done [#allocation19], 16
    $region461: #{unet_drift_forward.1} parent=1 // pred_fallthru
      _
    // Predicated region
    $region462: #{unet_drift_forward.1} parent=1 // pred_check
      _
    $region463: #{unet_drift_forward.1} parent=1 // pred_check_branch
      %903 = sbr.rel (0) target = $region465
    $region464: #{unet_drift_forward.1} parent=1 // pred_region
      %904 = dma.done [#allocation19], 16
    $region465: #{unet_drift_forward.1} parent=1 // pred_fallthru
      _
    // Predicated region
    $region466: #{unet_drift_forward.1} parent=1 // pred_check
      _
    $region467: #{unet_drift_forward.1} parent=1 // pred_check_branch
      %906 = sbr.rel (0) target = $region469
    $region468: #{unet_drift_forward.1} parent=1 // pred_region
      %907 = dma.done [#allocation22], 16
    $region469: #{unet_drift_forward.1} parent=1 // pred_fallthru
      _
    // Predicated region
    $region470: #{unet_drift_forward.1} parent=1 // pred_check
      _
    $region471: #{unet_drift_forward.1} parent=1 // pred_check_branch
      %909 = sbr.rel (0) target = $region473
    $region472: #{unet_drift_forward.1} parent=1 // pred_region
      %910 = dma.done [#allocation22], 16
    $region473: #{unet_drift_forward.1} parent=1 // pred_fallthru
      _
    // Predicated region
    $region474: #{unet_drift_forward.1} parent=1 // pred_check
      _
    $region475: #{unet_drift_forward.1} parent=1 // pred_check_branch
      %912 = sbr.rel (0) target = $region477
    $region476: #{unet_drift_forward.1} parent=1 // pred_region
      %913 = dma.done [#allocation25], 16
    $region477: #{unet_drift_forward.1} parent=1 // pred_fallthru
      _
    // Predicated region
    $region478: #{unet_drift_forward.1} parent=1 // pred_check
      _
    $region479: #{unet_drift_forward.1} parent=1 // pred_check_branch
      %915 = sbr.rel (0) target = $region481
    $region480: #{unet_drift_forward.1} parent=1 // pred_region
      %916 = dma.done [#allocation25], 16
    $region481: #{unet_drift_forward.1} parent=1 // pred_fallthru
      _
    // Predicated region
    $region482: #{unet_drift_forward.1} parent=1 // pred_check
      _
    $region483: #{unet_drift_forward.1} parent=1 // pred_check_branch
      %918 = sbr.rel (0) target = $region485
    $region484: #{unet_drift_forward.1} parent=1 // pred_region
      %919 = dma.done [#allocation28], 16
    $region485: #{unet_drift_forward.1} parent=1 // pred_fallthru
      _
    // Predicated region
    $region486: #{unet_drift_forward.1} parent=1 // pred_check
      _
    $region487: #{unet_drift_forward.1} parent=1 // pred_check_branch
      %921 = sbr.rel (0) target = $region489
    $region488: #{unet_drift_forward.1} parent=1 // pred_region
      %922 = dma.done [#allocation28], 16
    $region489: #{unet_drift_forward.1} parent=1 // pred_fallthru
      _
    // Predicated region
    $region490: #{unet_drift_forward.1} parent=1 // pred_check
      _
    $region491: #{unet_drift_forward.1} parent=1 // pred_check_branch
      %924 = sbr.rel (0) target = $region493
    $region492: #{unet_drift_forward.1} parent=1 // pred_region
      %925 = dma.done [#allocation31], 16
    $region493: #{unet_drift_forward.1} parent=1 // pred_fallthru
      _
    // Predicated region
    $region494: #{unet_drift_forward.1} parent=1 // pred_check
      _
    $region495: #{unet_drift_forward.1} parent=1 // pred_check_branch
      %927 = sbr.rel (0) target = $region497
    $region496: #{unet_drift_forward.1} parent=1 // pred_region
      %928 = dma.done [#allocation31], 16
    $region497: #{unet_drift_forward.1} parent=1 // pred_fallthru
      _
    // Predicated region
    $region498: #{unet_drift_forward.1} parent=1 // pred_check
      _
    $region499: #{unet_drift_forward.1} parent=1 // pred_check_branch
      %930 = sbr.rel (0) target = $region501
    $region500: #{unet_drift_forward.1} parent=1 // pred_region
      %931 = dma.done [#allocation34], 16
    $region501: #{unet_drift_forward.1} parent=1 // pred_fallthru
      _
    // Predicated region
    $region502: #{unet_drift_forward.1} parent=1 // pred_check
      _
    $region503: #{unet_drift_forward.1} parent=1 // pred_check_branch
      %933 = sbr.rel (0) target = $region505
    $region504: #{unet_drift_forward.1} parent=1 // pred_region
      %934 = dma.done [#allocation34], 16
    $region505: #{unet_drift_forward.1} parent=1 // pred_fallthru
      _
    // Predicated region
    $region506: #{unet_drift_forward.1} parent=1 // pred_check
      _
    $region507: #{unet_drift_forward.1} parent=1 // pred_check_branch
      %936 = sbr.rel (0) target = $region509
    $region508: #{unet_drift_forward.1} parent=1 // pred_region
      %937 = dma.done [#allocation37], 16
    $region509: #{unet_drift_forward.1} parent=1 // pred_fallthru
      _
    // Predicated region
    $region510: #{unet_drift_forward.1} parent=1 // pred_check
      _
    $region511: #{unet_drift_forward.1} parent=1 // pred_check_branch
      %939 = sbr.rel (0) target = $region513
    $region512: #{unet_drift_forward.1} parent=1 // pred_region
      %940 = dma.done [#allocation37], 16
    $region513: #{unet_drift_forward.1} parent=1 // pred_fallthru
      _
    // Predicated region
    $region514: #{unet_drift_forward.1} parent=1 // pred_check
      _
    $region515: #{unet_drift_forward.1} parent=1 // pred_check_branch
      %942 = sbr.rel (0) target = $region517
    $region516: #{unet_drift_forward.1} parent=1 // pred_region
      %943 = dma.done [#allocation40], 16
    $region517: #{unet_drift_forward.1} parent=1 // pred_fallthru
      _
    // Predicated region
    $region518: #{unet_drift_forward.1} parent=1 // pred_check
      _
    $region519: #{unet_drift_forward.1} parent=1 // pred_check_branch
      %945 = sbr.rel (0) target = $region521
    $region520: #{unet_drift_forward.1} parent=1 // pred_region
      %946 = dma.done [#allocation40], 16
    $region521: #{unet_drift_forward.1} parent=1 // pred_fallthru
      _
    // Predicated region
    $region522: #{unet_drift_forward.1} parent=1 // pred_check
      _
    $region523: #{unet_drift_forward.1} parent=1 // pred_check_branch
      %948 = sbr.rel (0) target = $region525
    $region524: #{unet_drift_forward.1} parent=1 // pred_region
      %949 = dma.done [#allocation43], 16
    $region525: #{unet_drift_forward.1} parent=1 // pred_fallthru
      _
    // Predicated region
    $region526: #{unet_drift_forward.1} parent=1 // pred_check
      _
    $region527: #{unet_drift_forward.1} parent=1 // pred_check_branch
      %951 = sbr.rel (0) target = $region529
    $region528: #{unet_drift_forward.1} parent=1 // pred_region
      %952 = dma.done [#allocation43], 16
    $region529: #{unet_drift_forward.1} parent=1 // pred_fallthru
      _
    // Predicated region
    $region530: #{unet_drift_forward.1} parent=1 // pred_check
      _
    $region531: #{unet_drift_forward.1} parent=1 // pred_check_branch
      %954 = sbr.rel (0) target = $region533
    $region532: #{unet_drift_forward.1} parent=1 // pred_region
      %955 = dma.done [#allocation46], 16
    $region533: #{unet_drift_forward.1} parent=1 // pred_fallthru
      _
    // Predicated region
    $region534: #{unet_drift_forward.1} parent=1 // pred_check
      _
    $region535: #{unet_drift_forward.1} parent=1 // pred_check_branch
      %957 = sbr.rel (0) target = $region537
    $region536: #{unet_drift_forward.1} parent=1 // pred_region
      %958 = dma.done [#allocation46], 16
    $region537: #{unet_drift_forward.1} parent=1 // pred_fallthru
      _
    // Predicated region
    $region538: #{unet_drift_forward.1} parent=1 // pred_check
      _
    $region539: #{unet_drift_forward.1} parent=1 // pred_check_branch
      %960 = sbr.rel (0) target = $region541
    $region540: #{unet_drift_forward.1} parent=1 // pred_region
      %961 = dma.done [#allocation49], 64
    $region541: #{unet_drift_forward.1} parent=1 // pred_fallthru
      _
    // Predicated region
    $region542: #{unet_drift_forward.1} parent=1 // pred_check
      _
    $region543: #{unet_drift_forward.1} parent=1 // pred_check_branch
      %963 = sbr.rel (0) target = $region545
    $region544: #{unet_drift_forward.1} parent=1 // pred_region
      %964 = dma.done [#allocation49], 16
    $region545: #{unet_drift_forward.1} parent=1 // pred_fallthru
      _
    // Predicated region
    $region546: #{unet_drift_forward.1} parent=1 // pred_check
      _
    $region547: #{unet_drift_forward.1} parent=1 // pred_check_branch
      %966 = sbr.rel (0) target = $region549
    $region548: #{unet_drift_forward.1} parent=1 // pred_region
      %967 = dma.done [#allocation52], 16
    $region549: #{unet_drift_forward.1} parent=1 // pred_fallthru
      _
    // Predicated region
    $region550: #{unet_drift_forward.1} parent=1 // pred_check
      _
    $region551: #{unet_drift_forward.1} parent=1 // pred_check_branch
      %969 = sbr.rel (0) target = $region553
    $region552: #{unet_drift_forward.1} parent=1 // pred_region
      %970 = dma.done [#allocation52], 16
    $region553: #{unet_drift_forward.1} parent=1 // pred_fallthru
      _
    // Predicated region
    $region554: #{unet_drift_forward.1} parent=1 // pred_check
      _
    $region555: #{unet_drift_forward.1} parent=1 // pred_check_branch
      %972 = sbr.rel (0) target = $region557
    $region556: #{unet_drift_forward.1} parent=1 // pred_region
      %973 = dma.done [#allocation55], 16
    $region557: #{unet_drift_forward.1} parent=1 // pred_fallthru
      _
    // Predicated region
    $region558: #{unet_drift_forward.1} parent=1 // pred_check
      _
    $region559: #{unet_drift_forward.1} parent=1 // pred_check_branch
      %975 = sbr.rel (0) target = $region561
    $region560: #{unet_drift_forward.1} parent=1 // pred_region
      %976 = dma.done [#allocation55], 16
    $region561: #{unet_drift_forward.1} parent=1 // pred_fallthru
      _
    // Predicated region
    $region562: #{unet_drift_forward.1} parent=1 // pred_check
      _
    $region563: #{unet_drift_forward.1} parent=1 // pred_check_branch
      %978 = sbr.rel (0) target = $region565
    $region564: #{unet_drift_forward.1} parent=1 // pred_region
      %979 = dma.done [#allocation58], 16
    $region565: #{unet_drift_forward.1} parent=1 // pred_fallthru
      _
    // Predicated region
    $region566: #{unet_drift_forward.1} parent=1 // pred_check
      _
    $region567: #{unet_drift_forward.1} parent=1 // pred_check_branch
      %981 = sbr.rel (0) target = $region569
    $region568: #{unet_drift_forward.1} parent=1 // pred_region
      %982 = dma.done [#allocation58], 16
    $region569: #{unet_drift_forward.1} parent=1 // pred_fallthru
      _
    // Predicated region
    $region570: #{unet_drift_forward.1} parent=1 // pred_check
      _
    $region571: #{unet_drift_forward.1} parent=1 // pred_check_branch
      %984 = sbr.rel (0) target = $region573
    $region572: #{unet_drift_forward.1} parent=1 // pred_region
      %985 = dma.done [#allocation61], 16
    $region573: #{unet_drift_forward.1} parent=1 // pred_fallthru
      _
    // Predicated region
    $region574: #{unet_drift_forward.1} parent=1 // pred_check
      _
    $region575: #{unet_drift_forward.1} parent=1 // pred_check_branch
      %987 = sbr.rel (0) target = $region577
    $region576: #{unet_drift_forward.1} parent=1 // pred_region
      %988 = dma.done [#allocation61], 16
    $region577: #{unet_drift_forward.1} parent=1 // pred_fallthru
      _
    // Predicated region
    $region578: #{unet_drift_forward.1} parent=1 // pred_check
      _
    $region579: #{unet_drift_forward.1} parent=1 // pred_check_branch
      %990 = sbr.rel (0) target = $region581
    $region580: #{unet_drift_forward.1} parent=1 // pred_region
      %991 = dma.done [#allocation64], 16
    $region581: #{unet_drift_forward.1} parent=1 // pred_fallthru
      _
    // Predicated region
    $region582: #{unet_drift_forward.1} parent=1 // pred_check
      _
    $region583: #{unet_drift_forward.1} parent=1 // pred_check_branch
      %993 = sbr.rel (0) target = $region585
    $region584: #{unet_drift_forward.1} parent=1 // pred_region
      %994 = dma.done [#allocation64], 16
    $region585: #{unet_drift_forward.1} parent=1 // pred_fallthru
      _
    // Predicated region
    $region586: #{unet_drift_forward.1} parent=1 // pred_check
      _
    $region587: #{unet_drift_forward.1} parent=1 // pred_check_branch
      %996 = sbr.rel (0) target = $region589
    $region588: #{unet_drift_forward.1} parent=1 // pred_region
      %997 = dma.done [#allocation67], 16
    $region589: #{unet_drift_forward.1} parent=1 // pred_fallthru
      _
    // Predicated region
    $region590: #{unet_drift_forward.1} parent=1 // pred_check
      _
    $region591: #{unet_drift_forward.1} parent=1 // pred_check_branch
      %999 = sbr.rel (0) target = $region593
    $region592: #{unet_drift_forward.1} parent=1 // pred_region
      %1000 = dma.done [#allocation67], 16
    $region593: #{unet_drift_forward.1} parent=1 // pred_fallthru
      _
    // Predicated region
    $region594: #{unet_drift_forward.1} parent=1 // pred_check
      _
    $region595: #{unet_drift_forward.1} parent=1 // pred_check_branch
      %1002 = sbr.rel (0) target = $region597
    $region596: #{unet_drift_forward.1} parent=1 // pred_region
      %1003 = dma.done [#allocation70], 16
    $region597: #{unet_drift_forward.1} parent=1 // pred_fallthru
      _
    // Predicated region
    $region598: #{unet_drift_forward.1} parent=1 // pred_check
      _
    $region599: #{unet_drift_forward.1} parent=1 // pred_check_branch
      %1005 = sbr.rel (0) target = $region601
    $region600: #{unet_drift_forward.1} parent=1 // pred_region
      %1006 = dma.done [#allocation70], 16
    $region601: #{unet_drift_forward.1} parent=1 // pred_fallthru
      _
    // Predicated region
    $region602: #{unet_drift_forward.1} parent=1 // pred_check
      _
    $region603: #{unet_drift_forward.1} parent=1 // pred_check_branch
      %1008 = sbr.rel (0) target = $region605
    $region604: #{unet_drift_forward.1} parent=1 // pred_region
      %1009 = dma.done [#allocation73], 16
    $region605: #{unet_drift_forward.1} parent=1 // pred_fallthru
      _
    // Predicated region
    $region606: #{unet_drift_forward.1} parent=1 // pred_check
      _
    $region607: #{unet_drift_forward.1} parent=1 // pred_check_branch
      %1011 = sbr.rel (0) target = $region609
    $region608: #{unet_drift_forward.1} parent=1 // pred_region
      %1012 = dma.done [#allocation73], 16
    $region609: #{unet_drift_forward.1} parent=1 // pred_fallthru
      _
    // Predicated region
    $region610: #{unet_drift_forward.1} parent=1 // pred_check
      _
    $region611: #{unet_drift_forward.1} parent=1 // pred_check_branch
      %1014 = sbr.rel (0) target = $region613
    $region612: #{unet_drift_forward.1} parent=1 // pred_region
      %1015 = dma.done [#allocation76], 16
    $region613: #{unet_drift_forward.1} parent=1 // pred_fallthru
      _
    // Predicated region
    $region614: #{unet_drift_forward.1} parent=1 // pred_check
      _
    $region615: #{unet_drift_forward.1} parent=1 // pred_check_branch
      %1017 = sbr.rel (0) target = $region617
    $region616: #{unet_drift_forward.1} parent=1 // pred_region
      %1018 = dma.done [#allocation76], 16
    $region617: #{unet_drift_forward.1} parent=1 // pred_fallthru
      _
    // Predicated region
    $region618: #{unet_drift_forward.1} parent=1 // pred_check
      _
    $region619: #{unet_drift_forward.1} parent=1 // pred_check_branch
      %1020 = sbr.rel (0) target = $region621
    $region620: #{unet_drift_forward.1} parent=1 // pred_region
      %1021 = dma.done [#allocation79], 16
    $region621: #{unet_drift_forward.1} parent=1 // pred_fallthru
      _
    // Predicated region
    $region622: #{unet_drift_forward.1} parent=1 // pred_check
      _
    $region623: #{unet_drift_forward.1} parent=1 // pred_check_branch
      %1023 = sbr.rel (0) target = $region625
    $region624: #{unet_drift_forward.1} parent=1 // pred_region
      %1024 = dma.done [#allocation79], 16
    $region625: #{unet_drift_forward.1} parent=1 // pred_fallthru
      _
    // Predicated region
    $region626: #{unet_drift_forward.1} parent=1 // pred_check
      _
    $region627: #{unet_drift_forward.1} parent=1 // pred_check_branch
      %1026 = sbr.rel (0) target = $region629
    $region628: #{unet_drift_forward.1} parent=1 // pred_region
      %1027 = dma.done [#allocation82], 16
    $region629: #{unet_drift_forward.1} parent=1 // pred_fallthru
      _
    %v1028 = vld [vmem:[%s205] sm:$0xff]
    %v1029 = vld [vmem:[%s207] sm:$0xff]
    %v1030 = vld [vmem:[%s121] sm:$0xff]
    %v1031 = vld [vmem:[%s121 + $0x8] sm:$0xff]
    %v1032 = vld [vmem:[%s121 + $0x10] sm:$0xff]
    %v1033 = vld [vmem:[%s121 + $0x18] sm:$0xff]
    %v1034 = vld [vmem:[#allocation50] sm:$0x1]
    %v1036 = vlaneseq
    %v1037 = vshrl.u32 %v1036, 7
    %v1038 = vsub.s32 0, %v1037
    %v1039 = vrot.slane %v1034, %v1038
    %vm1041 = vcmask 261120
    %v1043 = vsel %vm1041, %v1029, 0
    %1045 = vmatprep.subr.mxu0 0.0
    %1046 = vmatpush1.msra.mxu0 %v1030
    %1047 = vmatprep.subr.mxu0 0.0
    %1048 = vmatpush1.msra.mxu0 %v1031
    %1049 = vmatprep.subr.mxu0 0.0
    %1050 = vmatpush1.msra.mxu0 %v1032
    %1051 = vmatprep.subr.mxu0 0.0
    %1052 = vmatpush1.msra.mxu0 %v1033
    %1053 = vmatprep.subr.mxu0 0.0
    %1054 = vmatpush1.msra.mxu0 0.0
    %1055 = vmatprep.subr.mxu0 0.0
    %1056 = vmatpush1.msra.mxu0 0.0
    %1057 = vmatprep.subr.mxu0 0.0
    %1058 = vmatpush1.msra.mxu0 0.0
    %1059 = vmatprep.subr.mxu0 0.0
    %1060 = vmatpush1.msra.mxu0 0.0
    %1061 = vmatprep.subr.mxu0 0.0
    %1062 = vmatpush1.msra.mxu0 0.0
    %1063 = vmatprep.subr.mxu0 0.0
    %1064 = vmatpush1.msra.mxu0 0.0
    %1065 = vmatprep.subr.mxu0 0.0
    %1066 = vmatpush1.msra.mxu0 0.0
    %1067 = vmatprep.subr.mxu0 0.0
    %1068 = vmatpush1.msra.mxu0 0.0
    %1069 = vmatprep.subr.mxu0 0.0
    %1070 = vmatpush1.msra.mxu0 0.0
    %1071 = vmatprep.subr.mxu0 0.0
    %1072 = vmatpush1.msra.mxu0 0.0
    %1073 = vmatprep.subr.mxu0 0.0
    %1074 = vmatpush1.msra.mxu0 0.0
    %1075 = vmatprep.subr.mxu0 0.0
    %1076 = vmatpush1.msra.mxu0 0.0
    %1077 = vmatprep.subr.mxu0 0.0
    %1078 = vmatpush1.msra.mxu0 0.0
    %1079 = vmatprep.subr.mxu0 0.0
    %1080 = vmatpush1.msra.mxu0 0.0
    %1081 = vmatprep.subr.mxu0 0.0
    %1082 = vmatpush1.msra.mxu0 0.0
    %1083 = vmatprep.subr.mxu0 0.0
    %1084 = vmatpush1.msra.mxu0 0.0
    %1085 = vmatprep.subr.mxu0 0.0
    %1086 = vmatpush1.msra.mxu0 0.0
    %1087 = vmatprep.subr.mxu0 0.0
    %1088 = vmatpush1.msra.mxu0 0.0
    %1089 = vmatprep.subr.mxu0 0.0
    %1090 = vmatpush1.msra.mxu0 0.0
    %1091 = vmatprep.subr.mxu0 0.0
    %1092 = vmatpush1.msra.mxu0 0.0
    %1093 = vmatprep.subr.mxu0 0.0
    %1094 = vmatpush1.msra.mxu0 0.0
    %1095 = vmatprep.subr.mxu0 0.0
    %1096 = vmatpush1.msra.mxu0 0.0
    %1097 = vmatprep.subr.mxu0 0.0
    %1098 = vmatpush1.msra.mxu0 0.0
    %1099 = vmatprep.subr.mxu0 0.0
    %1100 = vmatpush1.msra.mxu0 0.0
    %1101 = vmatprep.subr.mxu0 0.0
    %1102 = vmatpush1.msra.mxu0 0.0
    %1103 = vmatprep.subr.mxu0 0.0
    %1104 = vmatpush1.msra.mxu0 0.0
    %1105 = vmatprep.subr.mxu0 0.0
    %1106 = vmatpush1.msra.mxu0 0.0
    %1107 = vmatprep.subr.mxu0 0.0
    %1108 = vmatpush1.msra.mxu0 0.0
    %1109 = vmatprep.mubr.f32.mxu0 0.0
    %1110 = vmatmul.mubr.f32.gmra.mrb[0].mxu0 %v1043
    %v1111 = vpop.f32.mrb[0].mxu0
    %v1112 = vadd.f32 %v1039, %v1111
    %v1113 = vpop.f32.mrb[0].mxu0
    %1114 = vdwg.mxu0
    %v1115 = vmin.f32 %v1112, 20.0
    %v1116 = vmul.f32 %v1115, 1.442695
    %v1117 = vpow.pop %v1116
    %v1118 = vadd.f32 %v1117, 1.0
    %v1119 = vmul.f32 %v1118, %v1118
    %v1120 = vsub.f32 %v1119, 1.0
    %v1121 = vadd.f32 %v1119, 1.0
    %v1122 = vrcp.pop %v1121
    %v1123 = vmul.f32 %v1120, %v1122
    %vm1124 = vcmp.gt.f32.partialorder %v1112, 20.0
    %v1125 = vmul.f32 %v1112, %v1123
    %v1126 = vsel %vm1124, %v1112, %v1125
    %v1127 = vld [vmem:[%s123] sm:$0xff]
    %v1128 = vld [vmem:[%s123 + $0x8] sm:$0xff]
    %v1129 = vld [vmem:[%s123 + $0x10] sm:$0xff]
    %v1130 = vld [vmem:[%s123 + $0x18] sm:$0xff]
    %v1131 = vld [vmem:[%s123 + $0x20] sm:$0xff]
    %v1132 = vld [vmem:[%s123 + $0x28] sm:$0xff]
    %v1133 = vld [vmem:[%s123 + $0x30] sm:$0xff]
    %v1134 = vld [vmem:[%s123 + $0x38] sm:$0xff]
    %v1135 = vld [vmem:[%s123 + $0x40] sm:$0xff]
    %v1136 = vld [vmem:[%s123 + $0x48] sm:$0xff]
    %v1137 = vld [vmem:[%s123 + $0x50] sm:$0xff]
    %v1138 = vld [vmem:[%s123 + $0x58] sm:$0xff]
    %v1139 = vld [vmem:[%s123 + $0x60] sm:$0xff]
    %v1140 = vld [vmem:[%s123 + $0x68] sm:$0xff]
    %v1141 = vld [vmem:[%s123 + $0x70] sm:$0xff]
    %v1142 = vld [vmem:[%s123 + $0x78] sm:$0xff]
    %v1143 = vld [vmem:[#allocation51] sm:$0x1]
    %v1145 = vlaneseq
    %v1146 = vshrl.u32 %v1145, 7
    %v1147 = vsub.s32 0, %v1146
    %v1148 = vrot.slane %v1143, %v1147
    %1150 = vmatprep.subr.mxu0 0.0
    %1151 = vmatpush1.msra.mxu0 %v1127
    %1152 = vmatprep.subr.mxu0 0.0
    %1153 = vmatpush1.msra.mxu0 %v1128
    %1154 = vmatprep.subr.mxu0 0.0
    %1155 = vmatpush1.msra.mxu0 %v1129
    %1156 = vmatprep.subr.mxu0 0.0
    %1157 = vmatpush1.msra.mxu0 %v1130
    %1158 = vmatprep.subr.mxu0 0.0
    %1159 = vmatpush1.msra.mxu0 %v1131
    %1160 = vmatprep.subr.mxu0 0.0
    %1161 = vmatpush1.msra.mxu0 %v1132
    %1162 = vmatprep.subr.mxu0 0.0
    %1163 = vmatpush1.msra.mxu0 %v1133
    %1164 = vmatprep.subr.mxu0 0.0
    %1165 = vmatpush1.msra.mxu0 %v1134
    %1166 = vmatprep.subr.mxu0 0.0
    %1167 = vmatpush1.msra.mxu0 %v1135
    %1168 = vmatprep.subr.mxu0 0.0
    %1169 = vmatpush1.msra.mxu0 %v1136
    %1170 = vmatprep.subr.mxu0 0.0
    %1171 = vmatpush1.msra.mxu0 %v1137
    %1172 = vmatprep.subr.mxu0 0.0
    %1173 = vmatpush1.msra.mxu0 %v1138
    %1174 = vmatprep.subr.mxu0 0.0
    %1175 = vmatpush1.msra.mxu0 %v1139
    %1176 = vmatprep.subr.mxu0 0.0
    %1177 = vmatpush1.msra.mxu0 %v1140
    %1178 = vmatprep.subr.mxu0 0.0
    %1179 = vmatpush1.msra.mxu0 %v1141
    %1180 = vmatprep.subr.mxu0 0.0
    %1181 = vmatpush1.msra.mxu0 %v1142
    %1182 = vmatprep.subr.mxu0 0.0
    %1183 = vmatpush1.msra.mxu0 0.0
    %1184 = vmatprep.subr.mxu0 0.0
    %1185 = vmatpush1.msra.mxu0 0.0
    %1186 = vmatprep.subr.mxu0 0.0
    %1187 = vmatpush1.msra.mxu0 0.0
    %1188 = vmatprep.subr.mxu0 0.0
    %1189 = vmatpush1.msra.mxu0 0.0
    %1190 = vmatprep.subr.mxu0 0.0
    %1191 = vmatpush1.msra.mxu0 0.0
    %1192 = vmatprep.subr.mxu0 0.0
    %1193 = vmatpush1.msra.mxu0 0.0
    %1194 = vmatprep.subr.mxu0 0.0
    %1195 = vmatpush1.msra.mxu0 0.0
    %1196 = vmatprep.subr.mxu0 0.0
    %1197 = vmatpush1.msra.mxu0 0.0
    %1198 = vmatprep.subr.mxu0 0.0
    %1199 = vmatpush1.msra.mxu0 0.0
    %1200 = vmatprep.subr.mxu0 0.0
    %1201 = vmatpush1.msra.mxu0 0.0
    %1202 = vmatprep.subr.mxu0 0.0
    %1203 = vmatpush1.msra.mxu0 0.0
    %1204 = vmatprep.subr.mxu0 0.0
    %1205 = vmatpush1.msra.mxu0 0.0
    %1206 = vmatprep.subr.mxu0 0.0
    %1207 = vmatpush1.msra.mxu0 0.0
    %1208 = vmatprep.subr.mxu0 0.0
    %1209 = vmatpush1.msra.mxu0 0.0
    %1210 = vmatprep.subr.mxu0 0.0
    %1211 = vmatpush1.msra.mxu0 0.0
    %1212 = vmatprep.subr.mxu0 0.0
    %1213 = vmatpush1.msra.mxu0 0.0
    %1214 = vmatprep.mubr.f32.mxu0 0.0
    %1215 = vmatmul.mubr.f32.gmra.mrb[0].mxu0 %v1126
    %v1216 = vpop.f32.mrb[0].mxu0
    %v1217 = vadd.f32 %v1148, %v1216
    %v1218 = vpop.f32.mrb[0].mxu0
    %1219 = vdwg.mxu0
    %v1220 = vmin.f32 %v1217, 20.0
    %v1221 = vmul.f32 %v1220, 1.442695
    %v1222 = vpow.pop %v1221
    %v1223 = vadd.f32 %v1222, 1.0
    %v1224 = vmul.f32 %v1223, %v1223
    %v1225 = vsub.f32 %v1224, 1.0
    %v1226 = vadd.f32 %v1224, 1.0
    %v1227 = vrcp.pop %v1226
    %v1228 = vmul.f32 %v1225, %v1227
    %vm1229 = vcmp.gt.f32.partialorder %v1217, 20.0
    %v1230 = vmul.f32 %v1217, %v1228
    %v1231 = vsel %vm1229, %v1217, %v1230
    %v1232 = vld [vmem:[%s13] sm:$0xff]
    %v1233 = vld [vmem:[%s13 + $0x8] sm:$0xff]
    %v1234 = vld [vmem:[%s13 + $0x10] sm:$0xff]
    %v1235 = vld [vmem:[%s13 + $0x18] sm:$0xff]
    %v1236 = vld [vmem:[#allocation6] sm:$0x1]
    %v1238 = vlaneseq
    %v1239 = vshrl.u32 %v1238, 7
    %v1240 = vsub.s32 0, %v1239
    %v1241 = vrot.slane %v1236, %v1240
    %v1244 = vsel %vm1041, %v1028, 0
    %1246 = vmatprep.subr.mxu0 0.0
    %1247 = vmatpush1.msra.mxu0 %v1232
    %1248 = vmatprep.subr.mxu0 0.0
    %1249 = vmatpush1.msra.mxu0 %v1233
    %1250 = vmatprep.subr.mxu0 0.0
    %1251 = vmatpush1.msra.mxu0 %v1234
    %1252 = vmatprep.subr.mxu0 0.0
    %1253 = vmatpush1.msra.mxu0 %v1235
    %1254 = vmatprep.subr.mxu0 0.0
    %1255 = vmatpush1.msra.mxu0 0.0
    %1256 = vmatprep.subr.mxu0 0.0
    %1257 = vmatpush1.msra.mxu0 0.0
    %1258 = vmatprep.subr.mxu0 0.0
    %1259 = vmatpush1.msra.mxu0 0.0
    %1260 = vmatprep.subr.mxu0 0.0
    %1261 = vmatpush1.msra.mxu0 0.0
    %1262 = vmatprep.subr.mxu0 0.0
    %1263 = vmatpush1.msra.mxu0 0.0
    %1264 = vmatprep.subr.mxu0 0.0
    %1265 = vmatpush1.msra.mxu0 0.0
    %1266 = vmatprep.subr.mxu0 0.0
    %1267 = vmatpush1.msra.mxu0 0.0
    %1268 = vmatprep.subr.mxu0 0.0
    %1269 = vmatpush1.msra.mxu0 0.0
    %1270 = vmatprep.subr.mxu0 0.0
    %1271 = vmatpush1.msra.mxu0 0.0
    %1272 = vmatprep.subr.mxu0 0.0
    %1273 = vmatpush1.msra.mxu0 0.0
    %1274 = vmatprep.subr.mxu0 0.0
    %1275 = vmatpush1.msra.mxu0 0.0
    %1276 = vmatprep.subr.mxu0 0.0
    %1277 = vmatpush1.msra.mxu0 0.0
    %1278 = vmatprep.subr.mxu0 0.0
    %1279 = vmatpush1.msra.mxu0 0.0
    %1280 = vmatprep.subr.mxu0 0.0
    %1281 = vmatpush1.msra.mxu0 0.0
    %1282 = vmatprep.subr.mxu0 0.0
    %1283 = vmatpush1.msra.mxu0 0.0
    %1284 = vmatprep.subr.mxu0 0.0
    %1285 = vmatpush1.msra.mxu0 0.0
    %1286 = vmatprep.subr.mxu0 0.0
    %1287 = vmatpush1.msra.mxu0 0.0
    %1288 = vmatprep.subr.mxu0 0.0
    %1289 = vmatpush1.msra.mxu0 0.0
    %1290 = vmatprep.subr.mxu0 0.0
    %1291 = vmatpush1.msra.mxu0 0.0
    %1292 = vmatprep.subr.mxu0 0.0
    %1293 = vmatpush1.msra.mxu0 0.0
    %1294 = vmatprep.subr.mxu0 0.0
    %1295 = vmatpush1.msra.mxu0 0.0
    %1296 = vmatprep.subr.mxu0 0.0
    %1297 = vmatpush1.msra.mxu0 0.0
    %1298 = vmatprep.subr.mxu0 0.0
    %1299 = vmatpush1.msra.mxu0 0.0
    %1300 = vmatprep.subr.mxu0 0.0
    %1301 = vmatpush1.msra.mxu0 0.0
    %1302 = vmatprep.subr.mxu0 0.0
    %1303 = vmatpush1.msra.mxu0 0.0
    %1304 = vmatprep.subr.mxu0 0.0
    %1305 = vmatpush1.msra.mxu0 0.0
    %1306 = vmatprep.subr.mxu0 0.0
    %1307 = vmatpush1.msra.mxu0 0.0
    %1308 = vmatprep.subr.mxu0 0.0
    %1309 = vmatpush1.msra.mxu0 0.0
    %1310 = vmatprep.mubr.f32.mxu0 0.0
    %1311 = vmatmul.mubr.f32.gmra.mrb[0].mxu0 %v1244
    %v1312 = vpop.f32.mrb[0].mxu0
    %v1313 = vadd.f32 %v1241, %v1312
    %v1314 = vpop.f32.mrb[0].mxu0
    %1315 = vdwg.mxu0
    %v1316 = vmin.f32 %v1313, 20.0
    %v1317 = vmul.f32 %v1316, 1.442695
    %v1318 = vpow.pop %v1317
    %v1319 = vadd.f32 %v1318, 1.0
    %v1320 = vmul.f32 %v1319, %v1319
    %v1321 = vsub.f32 %v1320, 1.0
    %v1322 = vadd.f32 %v1320, 1.0
    %v1323 = vrcp.pop %v1322
    %v1324 = vmul.f32 %v1321, %v1323
    %vm1325 = vcmp.gt.f32.partialorder %v1313, 20.0
    %v1326 = vmul.f32 %v1313, %v1324
    %v1327 = vsel %vm1325, %v1313, %v1326
    %v1328 = vld [vmem:[%s19] sm:$0xff]
    %v1329 = vld [vmem:[%s19 + $0x8] sm:$0xff]
    %v1330 = vld [vmem:[%s19 + $0x10] sm:$0xff]
    %v1331 = vld [vmem:[%s19 + $0x18] sm:$0xff]
    %v1332 = vld [vmem:[#allocation11] sm:$0x1]
    %v1334 = vlaneseq
    %v1335 = vshrl.u32 %v1334, 7
    %v1336 = vsub.s32 0, %v1335
    %v1337 = vrot.slane %v1332, %v1336
    %v1340 = vsel %vm1041, %v1231, 0
    %1342 = vmatprep.subr.mxu0 0.0
    %1343 = vmatpush1.msra.mxu0 %v1328
    %1344 = vmatprep.subr.mxu0 0.0
    %1345 = vmatpush1.msra.mxu0 %v1329
    %1346 = vmatprep.subr.mxu0 0.0
    %1347 = vmatpush1.msra.mxu0 %v1330
    %1348 = vmatprep.subr.mxu0 0.0
    %1349 = vmatpush1.msra.mxu0 %v1331
    %1350 = vmatprep.subr.mxu0 0.0
    %1351 = vmatpush1.msra.mxu0 0.0
    %1352 = vmatprep.subr.mxu0 0.0
    %1353 = vmatpush1.msra.mxu0 0.0
    %1354 = vmatprep.subr.mxu0 0.0
    %1355 = vmatpush1.msra.mxu0 0.0
    %1356 = vmatprep.subr.mxu0 0.0
    %1357 = vmatpush1.msra.mxu0 0.0
    %1358 = vmatprep.subr.mxu0 0.0
    %1359 = vmatpush1.msra.mxu0 0.0
    %1360 = vmatprep.subr.mxu0 0.0
    %1361 = vmatpush1.msra.mxu0 0.0
    %1362 = vmatprep.subr.mxu0 0.0
    %1363 = vmatpush1.msra.mxu0 0.0
    %1364 = vmatprep.subr.mxu0 0.0
    %1365 = vmatpush1.msra.mxu0 0.0
    %1366 = vmatprep.subr.mxu0 0.0
    %1367 = vmatpush1.msra.mxu0 0.0
    %1368 = vmatprep.subr.mxu0 0.0
    %1369 = vmatpush1.msra.mxu0 0.0
    %1370 = vmatprep.subr.mxu0 0.0
    %1371 = vmatpush1.msra.mxu0 0.0
    %1372 = vmatprep.subr.mxu0 0.0
    %1373 = vmatpush1.msra.mxu0 0.0
    %1374 = vmatprep.subr.mxu0 0.0
    %1375 = vmatpush1.msra.mxu0 0.0
    %1376 = vmatprep.subr.mxu0 0.0
    %1377 = vmatpush1.msra.mxu0 0.0
    %1378 = vmatprep.subr.mxu0 0.0
    %1379 = vmatpush1.msra.mxu0 0.0
    %1380 = vmatprep.subr.mxu0 0.0
    %1381 = vmatpush1.msra.mxu0 0.0
    %1382 = vmatprep.subr.mxu0 0.0
    %1383 = vmatpush1.msra.mxu0 0.0
    %1384 = vmatprep.subr.mxu0 0.0
    %1385 = vmatpush1.msra.mxu0 0.0
    %1386 = vmatprep.subr.mxu0 0.0
    %1387 = vmatpush1.msra.mxu0 0.0
    %1388 = vmatprep.subr.mxu0 0.0
    %1389 = vmatpush1.msra.mxu0 0.0
    %1390 = vmatprep.subr.mxu0 0.0
    %1391 = vmatpush1.msra.mxu0 0.0
    %1392 = vmatprep.subr.mxu0 0.0
    %1393 = vmatpush1.msra.mxu0 0.0
    %1394 = vmatprep.subr.mxu0 0.0
    %1395 = vmatpush1.msra.mxu0 0.0
    %1396 = vmatprep.subr.mxu0 0.0
    %1397 = vmatpush1.msra.mxu0 0.0
    %1398 = vmatprep.subr.mxu0 0.0
    %1399 = vmatpush1.msra.mxu0 0.0
    %1400 = vmatprep.subr.mxu0 0.0
    %1401 = vmatpush1.msra.mxu0 0.0
    %1402 = vmatprep.subr.mxu0 0.0
    %1403 = vmatpush1.msra.mxu0 0.0
    %1404 = vmatprep.subr.mxu0 0.0
    %1405 = vmatpush1.msra.mxu0 0.0
    %1406 = vmatprep.mubr.f32.mxu0 0.0
    %1407 = vmatmul.mubr.f32.gmra.mrb[0].mxu0 %v1340
    %v1408 = vpop.f32.mrb[0].mxu0
    %v1409 = vadd.f32 %v1337, %v1408
    %v1410 = vpop.f32.mrb[0].mxu0
    %1411 = vdwg.mxu0
    %v1412 = vadd.f32 %v1327, %v1409
    %v1413 = vld [vmem:[%s15] sm:$0xff]
    %v1414 = vld [vmem:[%s15 + $0x8] sm:$0xff]
    %v1415 = vld [vmem:[#allocation8] sm:$0x1]
    %v1417 = vlaneseq
    %v1418 = vshrl.u32 %v1417, 7
    %v1419 = vsub.s32 0, %v1418
    %v1420 = vrot.slane %v1415, %v1419
    %vm1422 = vcmask 130048
    %v1424 = vsel %vm1422, %v1412, 0
    %1426 = vmatprep.subr.mxu0 0.0
    %1427 = vmatpush1.msra.mxu0 %v1413
    %1428 = vmatprep.subr.mxu0 0.0
    %1429 = vmatpush1.msra.mxu0 %v1414
    %1430 = vmatprep.subr.mxu0 0.0
    %1431 = vmatpush1.msra.mxu0 0.0
    %1432 = vmatprep.subr.mxu0 0.0
    %1433 = vmatpush1.msra.mxu0 0.0
    %1434 = vmatprep.subr.mxu0 0.0
    %1435 = vmatpush1.msra.mxu0 0.0
    %1436 = vmatprep.subr.mxu0 0.0
    %1437 = vmatpush1.msra.mxu0 0.0
    %1438 = vmatprep.subr.mxu0 0.0
    %1439 = vmatpush1.msra.mxu0 0.0
    %1440 = vmatprep.subr.mxu0 0.0
    %1441 = vmatpush1.msra.mxu0 0.0
    %1442 = vmatprep.subr.mxu0 0.0
    %1443 = vmatpush1.msra.mxu0 0.0
    %1444 = vmatprep.subr.mxu0 0.0
    %1445 = vmatpush1.msra.mxu0 0.0
    %1446 = vmatprep.subr.mxu0 0.0
    %1447 = vmatpush1.msra.mxu0 0.0
    %1448 = vmatprep.subr.mxu0 0.0
    %1449 = vmatpush1.msra.mxu0 0.0
    %1450 = vmatprep.subr.mxu0 0.0
    %1451 = vmatpush1.msra.mxu0 0.0
    %1452 = vmatprep.subr.mxu0 0.0
    %1453 = vmatpush1.msra.mxu0 0.0
    %1454 = vmatprep.subr.mxu0 0.0
    %1455 = vmatpush1.msra.mxu0 0.0
    %1456 = vmatprep.subr.mxu0 0.0
    %1457 = vmatpush1.msra.mxu0 0.0
    %1458 = vmatprep.subr.mxu0 0.0
    %1459 = vmatpush1.msra.mxu0 0.0
    %1460 = vmatprep.subr.mxu0 0.0
    %1461 = vmatpush1.msra.mxu0 0.0
    %1462 = vmatprep.subr.mxu0 0.0
    %1463 = vmatpush1.msra.mxu0 0.0
    %1464 = vmatprep.subr.mxu0 0.0
    %1465 = vmatpush1.msra.mxu0 0.0
    %1466 = vmatprep.subr.mxu0 0.0
    %1467 = vmatpush1.msra.mxu0 0.0
    %1468 = vmatprep.subr.mxu0 0.0
    %1469 = vmatpush1.msra.mxu0 0.0
    %1470 = vmatprep.subr.mxu0 0.0
    %1471 = vmatpush1.msra.mxu0 0.0
    %1472 = vmatprep.subr.mxu0 0.0
    %1473 = vmatpush1.msra.mxu0 0.0
    %1474 = vmatprep.subr.mxu0 0.0
    %1475 = vmatpush1.msra.mxu0 0.0
    %1476 = vmatprep.subr.mxu0 0.0
    %1477 = vmatpush1.msra.mxu0 0.0
    %1478 = vmatprep.subr.mxu0 0.0
    %1479 = vmatpush1.msra.mxu0 0.0
    %1480 = vmatprep.subr.mxu0 0.0
    %1481 = vmatpush1.msra.mxu0 0.0
    %1482 = vmatprep.subr.mxu0 0.0
    %1483 = vmatpush1.msra.mxu0 0.0
    %1484 = vmatprep.subr.mxu0 0.0
    %1485 = vmatpush1.msra.mxu0 0.0
    %1486 = vmatprep.subr.mxu0 0.0
    %1487 = vmatpush1.msra.mxu0 0.0
    %1488 = vmatprep.subr.mxu0 0.0
    %1489 = vmatpush1.msra.mxu0 0.0
    %1490 = vmatprep.mubr.f32.mxu0 0.0
    %1491 = vmatmul.mubr.f32.gmra.mrb[0].mxu0 %v1424
    %v1492 = vpop.f32.mrb[0].mxu0
    %v1493 = vadd.f32 %v1420, %v1492
    %v1494 = vpop.f32.mrb[0].mxu0
    %1495 = vdwg.mxu0
    %v1496 = vmin.f32 %v1493, 20.0
    %v1497 = vmul.f32 %v1496, 1.442695
    %v1498 = vpow.pop %v1497
    %v1499 = vadd.f32 %v1498, 1.0
    %v1500 = vmul.f32 %v1499, %v1499
    %v1501 = vsub.f32 %v1500, 1.0
    %v1502 = vadd.f32 %v1500, 1.0
    %v1503 = vrcp.pop %v1502
    %v1504 = vmul.f32 %v1501, %v1503
    %vm1505 = vcmp.gt.f32.partialorder %v1493, 20.0
    %v1506 = vmul.f32 %v1493, %v1504
    %v1507 = vsel %vm1505, %v1493, %v1506
    %v1508 = vld [vmem:[%s17] sm:$0xff]
    %v1509 = vld [vmem:[%s17 + $0x8] sm:$0xff]
    %v1510 = vld [vmem:[%s17 + $0x10] sm:$0xff]
    %v1511 = vld [vmem:[%s17 + $0x18] sm:$0xff]
    %v1512 = vld [vmem:[#allocation9] sm:$0x1]
    %v1514 = vlaneseq
    %v1515 = vshrl.u32 %v1514, 7
    %v1516 = vsub.s32 0, %v1515
    %v1517 = vrot.slane %v1512, %v1516
    %1519 = vmatprep.subr.mxu0 0.0
    %1520 = vmatpush1.msra.mxu0 %v1508
    %1521 = vmatprep.subr.mxu0 0.0
    %1522 = vmatpush1.msra.mxu0 %v1509
    %1523 = vmatprep.subr.mxu0 0.0
    %1524 = vmatpush1.msra.mxu0 %v1510
    %1525 = vmatprep.subr.mxu0 0.0
    %1526 = vmatpush1.msra.mxu0 %v1511
    %1527 = vmatprep.subr.mxu0 0.0
    %1528 = vmatpush1.msra.mxu0 0.0
    %1529 = vmatprep.subr.mxu0 0.0
    %1530 = vmatpush1.msra.mxu0 0.0
    %1531 = vmatprep.subr.mxu0 0.0
    %1532 = vmatpush1.msra.mxu0 0.0
    %1533 = vmatprep.subr.mxu0 0.0
    %1534 = vmatpush1.msra.mxu0 0.0
    %1535 = vmatprep.subr.mxu0 0.0
    %1536 = vmatpush1.msra.mxu0 0.0
    %1537 = vmatprep.subr.mxu0 0.0
    %1538 = vmatpush1.msra.mxu0 0.0
    %1539 = vmatprep.subr.mxu0 0.0
    %1540 = vmatpush1.msra.mxu0 0.0
    %1541 = vmatprep.subr.mxu0 0.0
    %1542 = vmatpush1.msra.mxu0 0.0
    %1543 = vmatprep.subr.mxu0 0.0
    %1544 = vmatpush1.msra.mxu0 0.0
    %1545 = vmatprep.subr.mxu0 0.0
    %1546 = vmatpush1.msra.mxu0 0.0
    %1547 = vmatprep.subr.mxu0 0.0
    %1548 = vmatpush1.msra.mxu0 0.0
    %1549 = vmatprep.subr.mxu0 0.0
    %1550 = vmatpush1.msra.mxu0 0.0
    %1551 = vmatprep.subr.mxu0 0.0
    %1552 = vmatpush1.msra.mxu0 0.0
    %1553 = vmatprep.subr.mxu0 0.0
    %1554 = vmatpush1.msra.mxu0 0.0
    %1555 = vmatprep.subr.mxu0 0.0
    %1556 = vmatpush1.msra.mxu0 0.0
    %1557 = vmatprep.subr.mxu0 0.0
    %1558 = vmatpush1.msra.mxu0 0.0
    %1559 = vmatprep.subr.mxu0 0.0
    %1560 = vmatpush1.msra.mxu0 0.0
    %1561 = vmatprep.subr.mxu0 0.0
    %1562 = vmatpush1.msra.mxu0 0.0
    %1563 = vmatprep.subr.mxu0 0.0
    %1564 = vmatpush1.msra.mxu0 0.0
    %1565 = vmatprep.subr.mxu0 0.0
    %1566 = vmatpush1.msra.mxu0 0.0
    %1567 = vmatprep.subr.mxu0 0.0
    %1568 = vmatpush1.msra.mxu0 0.0
    %1569 = vmatprep.subr.mxu0 0.0
    %1570 = vmatpush1.msra.mxu0 0.0
    %1571 = vmatprep.subr.mxu0 0.0
    %1572 = vmatpush1.msra.mxu0 0.0
    %1573 = vmatprep.subr.mxu0 0.0
    %1574 = vmatpush1.msra.mxu0 0.0
    %1575 = vmatprep.subr.mxu0 0.0
    %1576 = vmatpush1.msra.mxu0 0.0
    %1577 = vmatprep.subr.mxu0 0.0
    %1578 = vmatpush1.msra.mxu0 0.0
    %1579 = vmatprep.subr.mxu0 0.0
    %1580 = vmatpush1.msra.mxu0 0.0
    %1581 = vmatprep.subr.mxu0 0.0
    %1582 = vmatpush1.msra.mxu0 0.0
    %1583 = vmatprep.mubr.f32.mxu0 0.0
    %1584 = vmatmul.mubr.f32.gmra.mrb[0].mxu0 %v1244
    %v1585 = vpop.f32.mrb[0].mxu0
    %v1586 = vadd.f32 %v1517, %v1585
    %v1587 = vpop.f32.mrb[0].mxu0
    %1588 = vdwg.mxu0
    %v1589 = vadd.f32 %v1507, %v1586
    %v1590 = vld [vmem:[%s27] sm:$0xff]
    %v1591 = vld [vmem:[%s27 + $0x8] sm:$0xff]
    %v1592 = vld [vmem:[#allocation12] sm:$0x1]
    %v1594 = vlaneseq
    %v1595 = vshrl.u32 %v1594, 7
    %v1596 = vsub.s32 0, %v1595
    %v1597 = vrot.slane %v1592, %v1596
    %v1600 = vsel %vm1422, %v1589, 0
    %1602 = vmatprep.subr.mxu0 0.0
    %1603 = vmatpush1.msra.mxu0 %v1590
    %1604 = vmatprep.subr.mxu0 0.0
    %1605 = vmatpush1.msra.mxu0 %v1591
    %1606 = vmatprep.subr.mxu0 0.0
    %1607 = vmatpush1.msra.mxu0 0.0
    %1608 = vmatprep.subr.mxu0 0.0
    %1609 = vmatpush1.msra.mxu0 0.0
    %1610 = vmatprep.subr.mxu0 0.0
    %1611 = vmatpush1.msra.mxu0 0.0
    %1612 = vmatprep.subr.mxu0 0.0
    %1613 = vmatpush1.msra.mxu0 0.0
    %1614 = vmatprep.subr.mxu0 0.0
    %1615 = vmatpush1.msra.mxu0 0.0
    %1616 = vmatprep.subr.mxu0 0.0
    %1617 = vmatpush1.msra.mxu0 0.0
    %1618 = vmatprep.subr.mxu0 0.0
    %1619 = vmatpush1.msra.mxu0 0.0
    %1620 = vmatprep.subr.mxu0 0.0
    %1621 = vmatpush1.msra.mxu0 0.0
    %1622 = vmatprep.subr.mxu0 0.0
    %1623 = vmatpush1.msra.mxu0 0.0
    %1624 = vmatprep.subr.mxu0 0.0
    %1625 = vmatpush1.msra.mxu0 0.0
    %1626 = vmatprep.subr.mxu0 0.0
    %1627 = vmatpush1.msra.mxu0 0.0
    %1628 = vmatprep.subr.mxu0 0.0
    %1629 = vmatpush1.msra.mxu0 0.0
    %1630 = vmatprep.subr.mxu0 0.0
    %1631 = vmatpush1.msra.mxu0 0.0
    %1632 = vmatprep.subr.mxu0 0.0
    %1633 = vmatpush1.msra.mxu0 0.0
    %1634 = vmatprep.subr.mxu0 0.0
    %1635 = vmatpush1.msra.mxu0 0.0
    %1636 = vmatprep.subr.mxu0 0.0
    %1637 = vmatpush1.msra.mxu0 0.0
    %1638 = vmatprep.subr.mxu0 0.0
    %1639 = vmatpush1.msra.mxu0 0.0
    %1640 = vmatprep.subr.mxu0 0.0
    %1641 = vmatpush1.msra.mxu0 0.0
    %1642 = vmatprep.subr.mxu0 0.0
    %1643 = vmatpush1.msra.mxu0 0.0
    %1644 = vmatprep.subr.mxu0 0.0
    %1645 = vmatpush1.msra.mxu0 0.0
    %1646 = vmatprep.subr.mxu0 0.0
    %1647 = vmatpush1.msra.mxu0 0.0
    %1648 = vmatprep.subr.mxu0 0.0
    %1649 = vmatpush1.msra.mxu0 0.0
    %1650 = vmatprep.subr.mxu0 0.0
    %1651 = vmatpush1.msra.mxu0 0.0
    %1652 = vmatprep.subr.mxu0 0.0
    %1653 = vmatpush1.msra.mxu0 0.0
    %1654 = vmatprep.subr.mxu0 0.0
    %1655 = vmatpush1.msra.mxu0 0.0
    %1656 = vmatprep.subr.mxu0 0.0
    %1657 = vmatpush1.msra.mxu0 0.0
    %1658 = vmatprep.subr.mxu0 0.0
    %1659 = vmatpush1.msra.mxu0 0.0
    %1660 = vmatprep.subr.mxu0 0.0
    %1661 = vmatpush1.msra.mxu0 0.0
    %1662 = vmatprep.subr.mxu0 0.0
    %1663 = vmatpush1.msra.mxu0 0.0
    %1664 = vmatprep.subr.mxu0 0.0
    %1665 = vmatpush1.msra.mxu0 0.0
    %1666 = vmatprep.mubr.f32.mxu0 0.0
    %1667 = vmatmul.mubr.f32.gmra.mrb[0].mxu0 %v1600
    %v1668 = vpop.f32.mrb[0].mxu0
    %v1669 = vadd.f32 %v1597, %v1668
    %v1670 = vpop.f32.mrb[0].mxu0
    %1671 = vdwg.mxu0
    %v1672 = vmin.f32 %v1669, 20.0
    %v1673 = vmul.f32 %v1672, 1.442695
    %v1674 = vpow.pop %v1673
    %v1675 = vadd.f32 %v1674, 1.0
    %v1676 = vmul.f32 %v1675, %v1675
    %v1677 = vsub.f32 %v1676, 1.0
    %v1678 = vadd.f32 %v1676, 1.0
    %v1679 = vrcp.pop %v1678
    %v1680 = vmul.f32 %v1677, %v1679
    %vm1681 = vcmp.gt.f32.partialorder %v1669, 20.0
    %v1682 = vmul.f32 %v1669, %v1680
    %v1683 = vsel %vm1681, %v1669, %v1682
    %v1684 = vld [vmem:[%s31] sm:$0xff]
    %v1685 = vld [vmem:[%s31 + $0x8] sm:$0xff]
    %v1686 = vld [vmem:[%s31 + $0x10] sm:$0xff]
    %v1687 = vld [vmem:[%s31 + $0x18] sm:$0xff]
    %v1688 = vld [vmem:[#allocation15] sm:$0x1]
    %v1690 = vlaneseq
    %v1691 = vshrl.u32 %v1690, 7
    %v1692 = vsub.s32 0, %v1691
    %v1693 = vrot.slane %v1688, %v1692
    %1695 = vmatprep.subr.mxu0 0.0
    %1696 = vmatpush1.msra.mxu0 %v1684
    %1697 = vmatprep.subr.mxu0 0.0
    %1698 = vmatpush1.msra.mxu0 %v1685
    %1699 = vmatprep.subr.mxu0 0.0
    %1700 = vmatpush1.msra.mxu0 %v1686
    %1701 = vmatprep.subr.mxu0 0.0
    %1702 = vmatpush1.msra.mxu0 %v1687
    %1703 = vmatprep.subr.mxu0 0.0
    %1704 = vmatpush1.msra.mxu0 0.0
    %1705 = vmatprep.subr.mxu0 0.0
    %1706 = vmatpush1.msra.mxu0 0.0
    %1707 = vmatprep.subr.mxu0 0.0
    %1708 = vmatpush1.msra.mxu0 0.0
    %1709 = vmatprep.subr.mxu0 0.0
    %1710 = vmatpush1.msra.mxu0 0.0
    %1711 = vmatprep.subr.mxu0 0.0
    %1712 = vmatpush1.msra.mxu0 0.0
    %1713 = vmatprep.subr.mxu0 0.0
    %1714 = vmatpush1.msra.mxu0 0.0
    %1715 = vmatprep.subr.mxu0 0.0
    %1716 = vmatpush1.msra.mxu0 0.0
    %1717 = vmatprep.subr.mxu0 0.0
    %1718 = vmatpush1.msra.mxu0 0.0
    %1719 = vmatprep.subr.mxu0 0.0
    %1720 = vmatpush1.msra.mxu0 0.0
    %1721 = vmatprep.subr.mxu0 0.0
    %1722 = vmatpush1.msra.mxu0 0.0
    %1723 = vmatprep.subr.mxu0 0.0
    %1724 = vmatpush1.msra.mxu0 0.0
    %1725 = vmatprep.subr.mxu0 0.0
    %1726 = vmatpush1.msra.mxu0 0.0
    %1727 = vmatprep.subr.mxu0 0.0
    %1728 = vmatpush1.msra.mxu0 0.0
    %1729 = vmatprep.subr.mxu0 0.0
    %1730 = vmatpush1.msra.mxu0 0.0
    %1731 = vmatprep.subr.mxu0 0.0
    %1732 = vmatpush1.msra.mxu0 0.0
    %1733 = vmatprep.subr.mxu0 0.0
    %1734 = vmatpush1.msra.mxu0 0.0
    %1735 = vmatprep.subr.mxu0 0.0
    %1736 = vmatpush1.msra.mxu0 0.0
    %1737 = vmatprep.subr.mxu0 0.0
    %1738 = vmatpush1.msra.mxu0 0.0
    %1739 = vmatprep.subr.mxu0 0.0
    %1740 = vmatpush1.msra.mxu0 0.0
    %1741 = vmatprep.subr.mxu0 0.0
    %1742 = vmatpush1.msra.mxu0 0.0
    %1743 = vmatprep.subr.mxu0 0.0
    %1744 = vmatpush1.msra.mxu0 0.0
    %1745 = vmatprep.subr.mxu0 0.0
    %1746 = vmatpush1.msra.mxu0 0.0
    %1747 = vmatprep.subr.mxu0 0.0
    %1748 = vmatpush1.msra.mxu0 0.0
    %1749 = vmatprep.subr.mxu0 0.0
    %1750 = vmatpush1.msra.mxu0 0.0
    %1751 = vmatprep.subr.mxu0 0.0
    %1752 = vmatpush1.msra.mxu0 0.0
    %1753 = vmatprep.subr.mxu0 0.0
    %1754 = vmatpush1.msra.mxu0 0.0
    %1755 = vmatprep.subr.mxu0 0.0
    %1756 = vmatpush1.msra.mxu0 0.0
    %1757 = vmatprep.subr.mxu0 0.0
    %1758 = vmatpush1.msra.mxu0 0.0
    %1759 = vmatprep.mubr.f32.mxu0 0.0
    %1760 = vmatmul.mubr.f32.gmra.mrb[0].mxu0 %v1340
    %v1761 = vpop.f32.mrb[0].mxu0
    %v1762 = vadd.f32 %v1693, %v1761
    %v1763 = vpop.f32.mrb[0].mxu0
    %1764 = vdwg.mxu0
    %v1765 = vadd.f32 %v1683, %v1762
    %v1766 = vld [vmem:[%s29] sm:$0xff]
    %v1767 = vld [vmem:[%s29 + $0x8] sm:$0xff]
    %v1768 = vld [vmem:[#allocation14] sm:$0x1]
    %v1770 = vlaneseq
    %v1771 = vshrl.u32 %v1770, 7
    %v1772 = vsub.s32 0, %v1771
    %v1773 = vrot.slane %v1768, %v1772
    %v1776 = vsel %vm1422, %v1765, 0
    %1778 = vmatprep.subr.mxu0 0.0
    %1779 = vmatpush1.msra.mxu0 %v1766
    %1780 = vmatprep.subr.mxu0 0.0
    %1781 = vmatpush1.msra.mxu0 %v1767
    %1782 = vmatprep.subr.mxu0 0.0
    %1783 = vmatpush1.msra.mxu0 0.0
    %1784 = vmatprep.subr.mxu0 0.0
    %1785 = vmatpush1.msra.mxu0 0.0
    %1786 = vmatprep.subr.mxu0 0.0
    %1787 = vmatpush1.msra.mxu0 0.0
    %1788 = vmatprep.subr.mxu0 0.0
    %1789 = vmatpush1.msra.mxu0 0.0
    %1790 = vmatprep.subr.mxu0 0.0
    %1791 = vmatpush1.msra.mxu0 0.0
    %1792 = vmatprep.subr.mxu0 0.0
    %1793 = vmatpush1.msra.mxu0 0.0
    %1794 = vmatprep.subr.mxu0 0.0
    %1795 = vmatpush1.msra.mxu0 0.0
    %1796 = vmatprep.subr.mxu0 0.0
    %1797 = vmatpush1.msra.mxu0 0.0
    %1798 = vmatprep.subr.mxu0 0.0
    %1799 = vmatpush1.msra.mxu0 0.0
    %1800 = vmatprep.subr.mxu0 0.0
    %1801 = vmatpush1.msra.mxu0 0.0
    %1802 = vmatprep.subr.mxu0 0.0
    %1803 = vmatpush1.msra.mxu0 0.0
    %1804 = vmatprep.subr.mxu0 0.0
    %1805 = vmatpush1.msra.mxu0 0.0
    %1806 = vmatprep.subr.mxu0 0.0
    %1807 = vmatpush1.msra.mxu0 0.0
    %1808 = vmatprep.subr.mxu0 0.0
    %1809 = vmatpush1.msra.mxu0 0.0
    %1810 = vmatprep.subr.mxu0 0.0
    %1811 = vmatpush1.msra.mxu0 0.0
    %1812 = vmatprep.subr.mxu0 0.0
    %1813 = vmatpush1.msra.mxu0 0.0
    %1814 = vmatprep.subr.mxu0 0.0
    %1815 = vmatpush1.msra.mxu0 0.0
    %1816 = vmatprep.subr.mxu0 0.0
    %1817 = vmatpush1.msra.mxu0 0.0
    %1818 = vmatprep.subr.mxu0 0.0
    %1819 = vmatpush1.msra.mxu0 0.0
    %1820 = vmatprep.subr.mxu0 0.0
    %1821 = vmatpush1.msra.mxu0 0.0
    %1822 = vmatprep.subr.mxu0 0.0
    %1823 = vmatpush1.msra.mxu0 0.0
    %1824 = vmatprep.subr.mxu0 0.0
    %1825 = vmatpush1.msra.mxu0 0.0
    %1826 = vmatprep.subr.mxu0 0.0
    %1827 = vmatpush1.msra.mxu0 0.0
    %1828 = vmatprep.subr.mxu0 0.0
    %1829 = vmatpush1.msra.mxu0 0.0
    %1830 = vmatprep.subr.mxu0 0.0
    %1831 = vmatpush1.msra.mxu0 0.0
    %1832 = vmatprep.subr.mxu0 0.0
    %1833 = vmatpush1.msra.mxu0 0.0
    %1834 = vmatprep.subr.mxu0 0.0
    %1835 = vmatpush1.msra.mxu0 0.0
    %1836 = vmatprep.subr.mxu0 0.0
    %1837 = vmatpush1.msra.mxu0 0.0
    %1838 = vmatprep.subr.mxu0 0.0
    %1839 = vmatpush1.msra.mxu0 0.0
    %1840 = vmatprep.subr.mxu0 0.0
    %1841 = vmatpush1.msra.mxu0 0.0
    %1842 = vmatprep.mubr.f32.mxu0 0.0
    %1843 = vmatmul.mubr.f32.gmra.mrb[0].mxu0 %v1776
    %v1844 = vpop.f32.mrb[0].mxu0
    %v1845 = vadd.f32 %v1773, %v1844
    %v1846 = vpop.f32.mrb[0].mxu0
    %1847 = vdwg.mxu0
    %v1848 = vmin.f32 %v1845, 20.0
    %v1849 = vmul.f32 %v1848, 1.442695
    %v1850 = vpow.pop %v1849
    %v1851 = vadd.f32 %v1850, 1.0
    %v1852 = vmul.f32 %v1851, %v1851
    %v1853 = vsub.f32 %v1852, 1.0
    %v1854 = vadd.f32 %v1852, 1.0
    %v1855 = vrcp.pop %v1854
    %v1856 = vmul.f32 %v1853, %v1855
    %vm1857 = vcmp.gt.f32.partialorder %v1845, 20.0
    %v1858 = vmul.f32 %v1845, %v1856
    %v1859 = vsel %vm1857, %v1845, %v1858
    %v1860 = vadd.f32 %v1859, %v1589
    %v1861 = vld [vmem:[%s3] sm:$0xff]
    %v1862 = vld [vmem:[%s3 + $0x8] sm:$0xff]
    %v1863 = vld [vmem:[#allocation3] sm:$0x1]
    %v1865 = vlaneseq
    %v1866 = vshrl.u32 %v1865, 7
    %v1867 = vsub.s32 0, %v1866
    %v1868 = vrot.slane %v1863, %v1867
    %v1871 = vsel %vm1422, %v1860, 0
    %1873 = vmatprep.subr.mxu0 0.0
    %1874 = vmatpush1.msra.mxu0 %v1861
    %1875 = vmatprep.subr.mxu0 0.0
    %1876 = vmatpush1.msra.mxu0 %v1862
    %1877 = vmatprep.subr.mxu0 0.0
    %1878 = vmatpush1.msra.mxu0 0.0
    %1879 = vmatprep.subr.mxu0 0.0
    %1880 = vmatpush1.msra.mxu0 0.0
    %1881 = vmatprep.subr.mxu0 0.0
    %1882 = vmatpush1.msra.mxu0 0.0
    %1883 = vmatprep.subr.mxu0 0.0
    %1884 = vmatpush1.msra.mxu0 0.0
    %1885 = vmatprep.subr.mxu0 0.0
    %1886 = vmatpush1.msra.mxu0 0.0
    %1887 = vmatprep.subr.mxu0 0.0
    %1888 = vmatpush1.msra.mxu0 0.0
    %1889 = vmatprep.subr.mxu0 0.0
    %1890 = vmatpush1.msra.mxu0 0.0
    %1891 = vmatprep.subr.mxu0 0.0
    %1892 = vmatpush1.msra.mxu0 0.0
    %1893 = vmatprep.subr.mxu0 0.0
    %1894 = vmatpush1.msra.mxu0 0.0
    %1895 = vmatprep.subr.mxu0 0.0
    %1896 = vmatpush1.msra.mxu0 0.0
    %1897 = vmatprep.subr.mxu0 0.0
    %1898 = vmatpush1.msra.mxu0 0.0
    %1899 = vmatprep.subr.mxu0 0.0
    %1900 = vmatpush1.msra.mxu0 0.0
    %1901 = vmatprep.subr.mxu0 0.0
    %1902 = vmatpush1.msra.mxu0 0.0
    %1903 = vmatprep.subr.mxu0 0.0
    %1904 = vmatpush1.msra.mxu0 0.0
    %1905 = vmatprep.subr.mxu0 0.0
    %1906 = vmatpush1.msra.mxu0 0.0
    %1907 = vmatprep.subr.mxu0 0.0
    %1908 = vmatpush1.msra.mxu0 0.0
    %1909 = vmatprep.subr.mxu0 0.0
    %1910 = vmatpush1.msra.mxu0 0.0
    %1911 = vmatprep.subr.mxu0 0.0
    %1912 = vmatpush1.msra.mxu0 0.0
    %1913 = vmatprep.subr.mxu0 0.0
    %1914 = vmatpush1.msra.mxu0 0.0
    %1915 = vmatprep.subr.mxu0 0.0
    %1916 = vmatpush1.msra.mxu0 0.0
    %1917 = vmatprep.subr.mxu0 0.0
    %1918 = vmatpush1.msra.mxu0 0.0
    %1919 = vmatprep.subr.mxu0 0.0
    %1920 = vmatpush1.msra.mxu0 0.0
    %1921 = vmatprep.subr.mxu0 0.0
    %1922 = vmatpush1.msra.mxu0 0.0
    %1923 = vmatprep.subr.mxu0 0.0
    %1924 = vmatpush1.msra.mxu0 0.0
    %1925 = vmatprep.subr.mxu0 0.0
    %1926 = vmatpush1.msra.mxu0 0.0
    %1927 = vmatprep.subr.mxu0 0.0
    %1928 = vmatpush1.msra.mxu0 0.0
    %1929 = vmatprep.subr.mxu0 0.0
    %1930 = vmatpush1.msra.mxu0 0.0
    %1931 = vmatprep.subr.mxu0 0.0
    %1932 = vmatpush1.msra.mxu0 0.0
    %1933 = vmatprep.subr.mxu0 0.0
    %1934 = vmatpush1.msra.mxu0 0.0
    %1935 = vmatprep.subr.mxu0 0.0
    %1936 = vmatpush1.msra.mxu0 0.0
    %1937 = vmatprep.mubr.f32.mxu0 0.0
    %1938 = vmatmul.mubr.f32.gmra.mrb[0].mxu0 %v1871
    %v1939 = vpop.f32.mrb[0].mxu0
    %v1940 = vadd.f32 %v1868, %v1939
    %v1941 = vpop.f32.mrb[0].mxu0
    %1942 = vdwg.mxu0
    %v1943 = vld [vmem:[%s45] sm:$0xff]
    %v1944 = vld [vmem:[%s45 + $0x8] sm:$0xff]
    %v1945 = vld [vmem:[#allocation18] sm:$0x1]
    %v1947 = vlaneseq
    %v1948 = vshrl.u32 %v1947, 7
    %v1949 = vsub.s32 0, %v1948
    %v1950 = vrot.slane %v1945, %v1949
    %v1953 = vsel %vm1422, %v1940, 0
    %1955 = vmatprep.subr.mxu0 0.0
    %1956 = vmatpush1.msra.mxu0 %v1943
    %1957 = vmatprep.subr.mxu0 0.0
    %1958 = vmatpush1.msra.mxu0 %v1944
    %1959 = vmatprep.subr.mxu0 0.0
    %1960 = vmatpush1.msra.mxu0 0.0
    %1961 = vmatprep.subr.mxu0 0.0
    %1962 = vmatpush1.msra.mxu0 0.0
    %1963 = vmatprep.subr.mxu0 0.0
    %1964 = vmatpush1.msra.mxu0 0.0
    %1965 = vmatprep.subr.mxu0 0.0
    %1966 = vmatpush1.msra.mxu0 0.0
    %1967 = vmatprep.subr.mxu0 0.0
    %1968 = vmatpush1.msra.mxu0 0.0
    %1969 = vmatprep.subr.mxu0 0.0
    %1970 = vmatpush1.msra.mxu0 0.0
    %1971 = vmatprep.subr.mxu0 0.0
    %1972 = vmatpush1.msra.mxu0 0.0
    %1973 = vmatprep.subr.mxu0 0.0
    %1974 = vmatpush1.msra.mxu0 0.0
    %1975 = vmatprep.subr.mxu0 0.0
    %1976 = vmatpush1.msra.mxu0 0.0
    %1977 = vmatprep.subr.mxu0 0.0
    %1978 = vmatpush1.msra.mxu0 0.0
    %1979 = vmatprep.subr.mxu0 0.0
    %1980 = vmatpush1.msra.mxu0 0.0
    %1981 = vmatprep.subr.mxu0 0.0
    %1982 = vmatpush1.msra.mxu0 0.0
    %1983 = vmatprep.subr.mxu0 0.0
    %1984 = vmatpush1.msra.mxu0 0.0
    %1985 = vmatprep.subr.mxu0 0.0
    %1986 = vmatpush1.msra.mxu0 0.0
    %1987 = vmatprep.subr.mxu0 0.0
    %1988 = vmatpush1.msra.mxu0 0.0
    %1989 = vmatprep.subr.mxu0 0.0
    %1990 = vmatpush1.msra.mxu0 0.0
    %1991 = vmatprep.subr.mxu0 0.0
    %1992 = vmatpush1.msra.mxu0 0.0
    %1993 = vmatprep.subr.mxu0 0.0
    %1994 = vmatpush1.msra.mxu0 0.0
    %1995 = vmatprep.subr.mxu0 0.0
    %1996 = vmatpush1.msra.mxu0 0.0
    %1997 = vmatprep.subr.mxu0 0.0
    %1998 = vmatpush1.msra.mxu0 0.0
    %1999 = vmatprep.subr.mxu0 0.0
    %2000 = vmatpush1.msra.mxu0 0.0
    %2001 = vmatprep.subr.mxu0 0.0
    %2002 = vmatpush1.msra.mxu0 0.0
    %2003 = vmatprep.subr.mxu0 0.0
    %2004 = vmatpush1.msra.mxu0 0.0
    %2005 = vmatprep.subr.mxu0 0.0
    %2006 = vmatpush1.msra.mxu0 0.0
    %2007 = vmatprep.subr.mxu0 0.0
    %2008 = vmatpush1.msra.mxu0 0.0
    %2009 = vmatprep.subr.mxu0 0.0
    %2010 = vmatpush1.msra.mxu0 0.0
    %2011 = vmatprep.subr.mxu0 0.0
    %2012 = vmatpush1.msra.mxu0 0.0
    %2013 = vmatprep.subr.mxu0 0.0
    %2014 = vmatpush1.msra.mxu0 0.0
    %2015 = vmatprep.subr.mxu0 0.0
    %2016 = vmatpush1.msra.mxu0 0.0
    %2017 = vmatprep.subr.mxu0 0.0
    %2018 = vmatpush1.msra.mxu0 0.0
    %2019 = vmatprep.mubr.f32.mxu0 0.0
    %2020 = vmatmul.mubr.f32.gmra.mrb[0].mxu0 %v1953
    %v2021 = vpop.f32.mrb[0].mxu0
    %v2022 = vadd.f32 %v1950, %v2021
    %v2023 = vpop.f32.mrb[0].mxu0
    %2024 = vdwg.mxu0
    %v2025 = vmin.f32 %v2022, 20.0
    %v2026 = vmul.f32 %v2025, 1.442695
    %v2027 = vpow.pop %v2026
    %v2028 = vadd.f32 %v2027, 1.0
    %v2029 = vmul.f32 %v2028, %v2028
    %v2030 = vsub.f32 %v2029, 1.0
    %v2031 = vadd.f32 %v2029, 1.0
    %v2032 = vrcp.pop %v2031
    %v2033 = vmul.f32 %v2030, %v2032
    %vm2034 = vcmp.gt.f32.partialorder %v2022, 20.0
    %v2035 = vmul.f32 %v2022, %v2033
    %v2036 = vsel %vm2034, %v2022, %v2035
    %v2037 = vld [vmem:[%s51] sm:$0xff]
    %v2038 = vld [vmem:[%s51 + $0x8] sm:$0xff]
    %v2039 = vld [vmem:[%s51 + $0x10] sm:$0xff]
    %v2040 = vld [vmem:[%s51 + $0x18] sm:$0xff]
    %v2041 = vld [vmem:[#allocation23] sm:$0x1]
    %v2043 = vlaneseq
    %v2044 = vshrl.u32 %v2043, 7
    %v2045 = vsub.s32 0, %v2044
    %v2046 = vrot.slane %v2041, %v2045
    %2048 = vmatprep.subr.mxu0 0.0
    %2049 = vmatpush1.msra.mxu0 %v2037
    %2050 = vmatprep.subr.mxu0 0.0
    %2051 = vmatpush1.msra.mxu0 %v2038
    %2052 = vmatprep.subr.mxu0 0.0
    %2053 = vmatpush1.msra.mxu0 %v2039
    %2054 = vmatprep.subr.mxu0 0.0
    %2055 = vmatpush1.msra.mxu0 %v2040
    %2056 = vmatprep.subr.mxu0 0.0
    %2057 = vmatpush1.msra.mxu0 0.0
    %2058 = vmatprep.subr.mxu0 0.0
    %2059 = vmatpush1.msra.mxu0 0.0
    %2060 = vmatprep.subr.mxu0 0.0
    %2061 = vmatpush1.msra.mxu0 0.0
    %2062 = vmatprep.subr.mxu0 0.0
    %2063 = vmatpush1.msra.mxu0 0.0
    %2064 = vmatprep.subr.mxu0 0.0
    %2065 = vmatpush1.msra.mxu0 0.0
    %2066 = vmatprep.subr.mxu0 0.0
    %2067 = vmatpush1.msra.mxu0 0.0
    %2068 = vmatprep.subr.mxu0 0.0
    %2069 = vmatpush1.msra.mxu0 0.0
    %2070 = vmatprep.subr.mxu0 0.0
    %2071 = vmatpush1.msra.mxu0 0.0
    %2072 = vmatprep.subr.mxu0 0.0
    %2073 = vmatpush1.msra.mxu0 0.0
    %2074 = vmatprep.subr.mxu0 0.0
    %2075 = vmatpush1.msra.mxu0 0.0
    %2076 = vmatprep.subr.mxu0 0.0
    %2077 = vmatpush1.msra.mxu0 0.0
    %2078 = vmatprep.subr.mxu0 0.0
    %2079 = vmatpush1.msra.mxu0 0.0
    %2080 = vmatprep.subr.mxu0 0.0
    %2081 = vmatpush1.msra.mxu0 0.0
    %2082 = vmatprep.subr.mxu0 0.0
    %2083 = vmatpush1.msra.mxu0 0.0
    %2084 = vmatprep.subr.mxu0 0.0
    %2085 = vmatpush1.msra.mxu0 0.0
    %2086 = vmatprep.subr.mxu0 0.0
    %2087 = vmatpush1.msra.mxu0 0.0
    %2088 = vmatprep.subr.mxu0 0.0
    %2089 = vmatpush1.msra.mxu0 0.0
    %2090 = vmatprep.subr.mxu0 0.0
    %2091 = vmatpush1.msra.mxu0 0.0
    %2092 = vmatprep.subr.mxu0 0.0
    %2093 = vmatpush1.msra.mxu0 0.0
    %2094 = vmatprep.subr.mxu0 0.0
    %2095 = vmatpush1.msra.mxu0 0.0
    %2096 = vmatprep.subr.mxu0 0.0
    %2097 = vmatpush1.msra.mxu0 0.0
    %2098 = vmatprep.subr.mxu0 0.0
    %2099 = vmatpush1.msra.mxu0 0.0
    %2100 = vmatprep.subr.mxu0 0.0
    %2101 = vmatpush1.msra.mxu0 0.0
    %2102 = vmatprep.subr.mxu0 0.0
    %2103 = vmatpush1.msra.mxu0 0.0
    %2104 = vmatprep.subr.mxu0 0.0
    %2105 = vmatpush1.msra.mxu0 0.0
    %2106 = vmatprep.subr.mxu0 0.0
    %2107 = vmatpush1.msra.mxu0 0.0
    %2108 = vmatprep.subr.mxu0 0.0
    %2109 = vmatpush1.msra.mxu0 0.0
    %2110 = vmatprep.subr.mxu0 0.0
    %2111 = vmatpush1.msra.mxu0 0.0
    %2112 = vmatprep.mubr.f32.mxu0 0.0
    %2113 = vmatmul.mubr.f32.gmra.mrb[0].mxu0 %v1340
    %v2114 = vpop.f32.mrb[0].mxu0
    %v2115 = vadd.f32 %v2046, %v2114
    %v2116 = vpop.f32.mrb[0].mxu0
    %2117 = vdwg.mxu0
    %v2118 = vadd.f32 %v2036, %v2115
    %v2119 = vld [vmem:[%s47] sm:$0xff]
    %v2120 = vld [vmem:[#allocation20] sm:$0x1]
    %v2122 = vlaneseq
    %v2123 = vshrl.u32 %v2122, 7
    %v2124 = vsub.s32 0, %v2123
    %v2125 = vrot.slane %v2120, %v2124
    %vm2127 = vcmask 64512
    %v2129 = vsel %vm2127, %v2118, 0
    %2131 = vmatprep.subr.mxu0 0.0
    %2132 = vmatpush1.msra.mxu0 %v2119
    %2133 = vmatprep.subr.mxu0 0.0
    %2134 = vmatpush1.msra.mxu0 0.0
    %2135 = vmatprep.subr.mxu0 0.0
    %2136 = vmatpush1.msra.mxu0 0.0
    %2137 = vmatprep.subr.mxu0 0.0
    %2138 = vmatpush1.msra.mxu0 0.0
    %2139 = vmatprep.subr.mxu0 0.0
    %2140 = vmatpush1.msra.mxu0 0.0
    %2141 = vmatprep.subr.mxu0 0.0
    %2142 = vmatpush1.msra.mxu0 0.0
    %2143 = vmatprep.subr.mxu0 0.0
    %2144 = vmatpush1.msra.mxu0 0.0
    %2145 = vmatprep.subr.mxu0 0.0
    %2146 = vmatpush1.msra.mxu0 0.0
    %2147 = vmatprep.subr.mxu0 0.0
    %2148 = vmatpush1.msra.mxu0 0.0
    %2149 = vmatprep.subr.mxu0 0.0
    %2150 = vmatpush1.msra.mxu0 0.0
    %2151 = vmatprep.subr.mxu0 0.0
    %2152 = vmatpush1.msra.mxu0 0.0
    %2153 = vmatprep.subr.mxu0 0.0
    %2154 = vmatpush1.msra.mxu0 0.0
    %2155 = vmatprep.subr.mxu0 0.0
    %2156 = vmatpush1.msra.mxu0 0.0
    %2157 = vmatprep.subr.mxu0 0.0
    %2158 = vmatpush1.msra.mxu0 0.0
    %2159 = vmatprep.subr.mxu0 0.0
    %2160 = vmatpush1.msra.mxu0 0.0
    %2161 = vmatprep.subr.mxu0 0.0
    %2162 = vmatpush1.msra.mxu0 0.0
    %2163 = vmatprep.subr.mxu0 0.0
    %2164 = vmatpush1.msra.mxu0 0.0
    %2165 = vmatprep.subr.mxu0 0.0
    %2166 = vmatpush1.msra.mxu0 0.0
    %2167 = vmatprep.subr.mxu0 0.0
    %2168 = vmatpush1.msra.mxu0 0.0
    %2169 = vmatprep.subr.mxu0 0.0
    %2170 = vmatpush1.msra.mxu0 0.0
    %2171 = vmatprep.subr.mxu0 0.0
    %2172 = vmatpush1.msra.mxu0 0.0
    %2173 = vmatprep.subr.mxu0 0.0
    %2174 = vmatpush1.msra.mxu0 0.0
    %2175 = vmatprep.subr.mxu0 0.0
    %2176 = vmatpush1.msra.mxu0 0.0
    %2177 = vmatprep.subr.mxu0 0.0
    %2178 = vmatpush1.msra.mxu0 0.0
    %2179 = vmatprep.subr.mxu0 0.0
    %2180 = vmatpush1.msra.mxu0 0.0
    %2181 = vmatprep.subr.mxu0 0.0
    %2182 = vmatpush1.msra.mxu0 0.0
    %2183 = vmatprep.subr.mxu0 0.0
    %2184 = vmatpush1.msra.mxu0 0.0
    %2185 = vmatprep.subr.mxu0 0.0
    %2186 = vmatpush1.msra.mxu0 0.0
    %2187 = vmatprep.subr.mxu0 0.0
    %2188 = vmatpush1.msra.mxu0 0.0
    %2189 = vmatprep.subr.mxu0 0.0
    %2190 = vmatpush1.msra.mxu0 0.0
    %2191 = vmatprep.subr.mxu0 0.0
    %2192 = vmatpush1.msra.mxu0 0.0
    %2193 = vmatprep.subr.mxu0 0.0
    %2194 = vmatpush1.msra.mxu0 0.0
    %2195 = vmatprep.mubr.f32.mxu0 0.0
    %2196 = vmatmul.mubr.f32.gmra.mrb[0].mxu0 %v2129
    %v2197 = vpop.f32.mrb[0].mxu0
    %v2198 = vadd.f32 %v2125, %v2197
    %v2199 = vpop.f32.mrb[0].mxu0
    %2200 = vdwg.mxu0
    %v2201 = vmin.f32 %v2198, 20.0
    %v2202 = vmul.f32 %v2201, 1.442695
    %v2203 = vpow.pop %v2202
    %v2204 = vadd.f32 %v2203, 1.0
    %v2205 = vmul.f32 %v2204, %v2204
    %v2206 = vsub.f32 %v2205, 1.0
    %v2207 = vadd.f32 %v2205, 1.0
    %v2208 = vrcp.pop %v2207
    %v2209 = vmul.f32 %v2206, %v2208
    %vm2210 = vcmp.gt.f32.partialorder %v2198, 20.0
    %v2211 = vmul.f32 %v2198, %v2209
    %v2212 = vsel %vm2210, %v2198, %v2211
    %v2213 = vld [vmem:[%s49] sm:$0xff]
    %v2214 = vld [vmem:[%s49 + $0x8] sm:$0xff]
    %v2215 = vld [vmem:[#allocation21] sm:$0x1]
    %v2217 = vlaneseq
    %v2218 = vshrl.u32 %v2217, 7
    %v2219 = vsub.s32 0, %v2218
    %v2220 = vrot.slane %v2215, %v2219
    %2222 = vmatprep.subr.mxu0 0.0
    %2223 = vmatpush1.msra.mxu0 %v2213
    %2224 = vmatprep.subr.mxu0 0.0
    %2225 = vmatpush1.msra.mxu0 %v2214
    %2226 = vmatprep.subr.mxu0 0.0
    %2227 = vmatpush1.msra.mxu0 0.0
    %2228 = vmatprep.subr.mxu0 0.0
    %2229 = vmatpush1.msra.mxu0 0.0
    %2230 = vmatprep.subr.mxu0 0.0
    %2231 = vmatpush1.msra.mxu0 0.0
    %2232 = vmatprep.subr.mxu0 0.0
    %2233 = vmatpush1.msra.mxu0 0.0
    %2234 = vmatprep.subr.mxu0 0.0
    %2235 = vmatpush1.msra.mxu0 0.0
    %2236 = vmatprep.subr.mxu0 0.0
    %2237 = vmatpush1.msra.mxu0 0.0
    %2238 = vmatprep.subr.mxu0 0.0
    %2239 = vmatpush1.msra.mxu0 0.0
    %2240 = vmatprep.subr.mxu0 0.0
    %2241 = vmatpush1.msra.mxu0 0.0
    %2242 = vmatprep.subr.mxu0 0.0
    %2243 = vmatpush1.msra.mxu0 0.0
    %2244 = vmatprep.subr.mxu0 0.0
    %2245 = vmatpush1.msra.mxu0 0.0
    %2246 = vmatprep.subr.mxu0 0.0
    %2247 = vmatpush1.msra.mxu0 0.0
    %2248 = vmatprep.subr.mxu0 0.0
    %2249 = vmatpush1.msra.mxu0 0.0
    %2250 = vmatprep.subr.mxu0 0.0
    %2251 = vmatpush1.msra.mxu0 0.0
    %2252 = vmatprep.subr.mxu0 0.0
    %2253 = vmatpush1.msra.mxu0 0.0
    %2254 = vmatprep.subr.mxu0 0.0
    %2255 = vmatpush1.msra.mxu0 0.0
    %2256 = vmatprep.subr.mxu0 0.0
    %2257 = vmatpush1.msra.mxu0 0.0
    %2258 = vmatprep.subr.mxu0 0.0
    %2259 = vmatpush1.msra.mxu0 0.0
    %2260 = vmatprep.subr.mxu0 0.0
    %2261 = vmatpush1.msra.mxu0 0.0
    %2262 = vmatprep.subr.mxu0 0.0
    %2263 = vmatpush1.msra.mxu0 0.0
    %2264 = vmatprep.subr.mxu0 0.0
    %2265 = vmatpush1.msra.mxu0 0.0
    %2266 = vmatprep.subr.mxu0 0.0
    %2267 = vmatpush1.msra.mxu0 0.0
    %2268 = vmatprep.subr.mxu0 0.0
    %2269 = vmatpush1.msra.mxu0 0.0
    %2270 = vmatprep.subr.mxu0 0.0
    %2271 = vmatpush1.msra.mxu0 0.0
    %2272 = vmatprep.subr.mxu0 0.0
    %2273 = vmatpush1.msra.mxu0 0.0
    %2274 = vmatprep.subr.mxu0 0.0
    %2275 = vmatpush1.msra.mxu0 0.0
    %2276 = vmatprep.subr.mxu0 0.0
    %2277 = vmatpush1.msra.mxu0 0.0
    %2278 = vmatprep.subr.mxu0 0.0
    %2279 = vmatpush1.msra.mxu0 0.0
    %2280 = vmatprep.subr.mxu0 0.0
    %2281 = vmatpush1.msra.mxu0 0.0
    %2282 = vmatprep.subr.mxu0 0.0
    %2283 = vmatpush1.msra.mxu0 0.0
    %2284 = vmatprep.subr.mxu0 0.0
    %2285 = vmatpush1.msra.mxu0 0.0
    %2286 = vmatprep.mubr.f32.mxu0 0.0
    %2287 = vmatmul.mubr.f32.gmra.mrb[0].mxu0 %v1953
    %v2288 = vpop.f32.mrb[0].mxu0
    %v2289 = vadd.f32 %v2220, %v2288
    %v2290 = vpop.f32.mrb[0].mxu0
    %2291 = vdwg.mxu0
    %v2292 = vadd.f32 %v2212, %v2289
    %v2293 = vld [vmem:[%s59] sm:$0xff]
    %v2294 = vld [vmem:[#allocation24] sm:$0x1]
    %v2296 = vlaneseq
    %v2297 = vshrl.u32 %v2296, 7
    %v2298 = vsub.s32 0, %v2297
    %v2299 = vrot.slane %v2294, %v2298
    %v2302 = vsel %vm2127, %v2292, 0
    %2304 = vmatprep.subr.mxu0 0.0
    %2305 = vmatpush1.msra.mxu0 %v2293
    %2306 = vmatprep.subr.mxu0 0.0
    %2307 = vmatpush1.msra.mxu0 0.0
    %2308 = vmatprep.subr.mxu0 0.0
    %2309 = vmatpush1.msra.mxu0 0.0
    %2310 = vmatprep.subr.mxu0 0.0
    %2311 = vmatpush1.msra.mxu0 0.0
    %2312 = vmatprep.subr.mxu0 0.0
    %2313 = vmatpush1.msra.mxu0 0.0
    %2314 = vmatprep.subr.mxu0 0.0
    %2315 = vmatpush1.msra.mxu0 0.0
    %2316 = vmatprep.subr.mxu0 0.0
    %2317 = vmatpush1.msra.mxu0 0.0
    %2318 = vmatprep.subr.mxu0 0.0
    %2319 = vmatpush1.msra.mxu0 0.0
    %2320 = vmatprep.subr.mxu0 0.0
    %2321 = vmatpush1.msra.mxu0 0.0
    %2322 = vmatprep.subr.mxu0 0.0
    %2323 = vmatpush1.msra.mxu0 0.0
    %2324 = vmatprep.subr.mxu0 0.0
    %2325 = vmatpush1.msra.mxu0 0.0
    %2326 = vmatprep.subr.mxu0 0.0
    %2327 = vmatpush1.msra.mxu0 0.0
    %2328 = vmatprep.subr.mxu0 0.0
    %2329 = vmatpush1.msra.mxu0 0.0
    %2330 = vmatprep.subr.mxu0 0.0
    %2331 = vmatpush1.msra.mxu0 0.0
    %2332 = vmatprep.subr.mxu0 0.0
    %2333 = vmatpush1.msra.mxu0 0.0
    %2334 = vmatprep.subr.mxu0 0.0
    %2335 = vmatpush1.msra.mxu0 0.0
    %2336 = vmatprep.subr.mxu0 0.0
    %2337 = vmatpush1.msra.mxu0 0.0
    %2338 = vmatprep.subr.mxu0 0.0
    %2339 = vmatpush1.msra.mxu0 0.0
    %2340 = vmatprep.subr.mxu0 0.0
    %2341 = vmatpush1.msra.mxu0 0.0
    %2342 = vmatprep.subr.mxu0 0.0
    %2343 = vmatpush1.msra.mxu0 0.0
    %2344 = vmatprep.subr.mxu0 0.0
    %2345 = vmatpush1.msra.mxu0 0.0
    %2346 = vmatprep.subr.mxu0 0.0
    %2347 = vmatpush1.msra.mxu0 0.0
    %2348 = vmatprep.subr.mxu0 0.0
    %2349 = vmatpush1.msra.mxu0 0.0
    %2350 = vmatprep.subr.mxu0 0.0
    %2351 = vmatpush1.msra.mxu0 0.0
    %2352 = vmatprep.subr.mxu0 0.0
    %2353 = vmatpush1.msra.mxu0 0.0
    %2354 = vmatprep.subr.mxu0 0.0
    %2355 = vmatpush1.msra.mxu0 0.0
    %2356 = vmatprep.subr.mxu0 0.0
    %2357 = vmatpush1.msra.mxu0 0.0
    %2358 = vmatprep.subr.mxu0 0.0
    %2359 = vmatpush1.msra.mxu0 0.0
    %2360 = vmatprep.subr.mxu0 0.0
    %2361 = vmatpush1.msra.mxu0 0.0
    %2362 = vmatprep.subr.mxu0 0.0
    %2363 = vmatpush1.msra.mxu0 0.0
    %2364 = vmatprep.subr.mxu0 0.0
    %2365 = vmatpush1.msra.mxu0 0.0
    %2366 = vmatprep.subr.mxu0 0.0
    %2367 = vmatpush1.msra.mxu0 0.0
    %2368 = vmatprep.mubr.f32.mxu0 0.0
    %2369 = vmatmul.mubr.f32.gmra.mrb[0].mxu0 %v2302
    %v2370 = vpop.f32.mrb[0].mxu0
    %v2371 = vadd.f32 %v2299, %v2370
    %v2372 = vpop.f32.mrb[0].mxu0
    %2373 = vdwg.mxu0
    %v2374 = vmin.f32 %v2371, 20.0
    %v2375 = vmul.f32 %v2374, 1.442695
    %v2376 = vpow.pop %v2375
    %v2377 = vadd.f32 %v2376, 1.0
    %v2378 = vmul.f32 %v2377, %v2377
    %v2379 = vsub.f32 %v2378, 1.0
    %v2380 = vadd.f32 %v2378, 1.0
    %v2381 = vrcp.pop %v2380
    %v2382 = vmul.f32 %v2379, %v2381
    %vm2383 = vcmp.gt.f32.partialorder %v2371, 20.0
    %v2384 = vmul.f32 %v2371, %v2382
    %v2385 = vsel %vm2383, %v2371, %v2384
    %v2386 = vld [vmem:[%s63] sm:$0xff]
    %v2387 = vld [vmem:[%s63 + $0x8] sm:$0xff]
    %v2388 = vld [vmem:[%s63 + $0x10] sm:$0xff]
    %v2389 = vld [vmem:[%s63 + $0x18] sm:$0xff]
    %v2390 = vld [vmem:[#allocation27] sm:$0x1]
    %v2392 = vlaneseq
    %v2393 = vshrl.u32 %v2392, 7
    %v2394 = vsub.s32 0, %v2393
    %v2395 = vrot.slane %v2390, %v2394
    %2397 = vmatprep.subr.mxu0 0.0
    %2398 = vmatpush1.msra.mxu0 %v2386
    %2399 = vmatprep.subr.mxu0 0.0
    %2400 = vmatpush1.msra.mxu0 %v2387
    %2401 = vmatprep.subr.mxu0 0.0
    %2402 = vmatpush1.msra.mxu0 %v2388
    %2403 = vmatprep.subr.mxu0 0.0
    %2404 = vmatpush1.msra.mxu0 %v2389
    %2405 = vmatprep.subr.mxu0 0.0
    %2406 = vmatpush1.msra.mxu0 0.0
    %2407 = vmatprep.subr.mxu0 0.0
    %2408 = vmatpush1.msra.mxu0 0.0
    %2409 = vmatprep.subr.mxu0 0.0
    %2410 = vmatpush1.msra.mxu0 0.0
    %2411 = vmatprep.subr.mxu0 0.0
    %2412 = vmatpush1.msra.mxu0 0.0
    %2413 = vmatprep.subr.mxu0 0.0
    %2414 = vmatpush1.msra.mxu0 0.0
    %2415 = vmatprep.subr.mxu0 0.0
    %2416 = vmatpush1.msra.mxu0 0.0
    %2417 = vmatprep.subr.mxu0 0.0
    %2418 = vmatpush1.msra.mxu0 0.0
    %2419 = vmatprep.subr.mxu0 0.0
    %2420 = vmatpush1.msra.mxu0 0.0
    %2421 = vmatprep.subr.mxu0 0.0
    %2422 = vmatpush1.msra.mxu0 0.0
    %2423 = vmatprep.subr.mxu0 0.0
    %2424 = vmatpush1.msra.mxu0 0.0
    %2425 = vmatprep.subr.mxu0 0.0
    %2426 = vmatpush1.msra.mxu0 0.0
    %2427 = vmatprep.subr.mxu0 0.0
    %2428 = vmatpush1.msra.mxu0 0.0
    %2429 = vmatprep.subr.mxu0 0.0
    %2430 = vmatpush1.msra.mxu0 0.0
    %2431 = vmatprep.subr.mxu0 0.0
    %2432 = vmatpush1.msra.mxu0 0.0
    %2433 = vmatprep.subr.mxu0 0.0
    %2434 = vmatpush1.msra.mxu0 0.0
    %2435 = vmatprep.subr.mxu0 0.0
    %2436 = vmatpush1.msra.mxu0 0.0
    %2437 = vmatprep.subr.mxu0 0.0
    %2438 = vmatpush1.msra.mxu0 0.0
    %2439 = vmatprep.subr.mxu0 0.0
    %2440 = vmatpush1.msra.mxu0 0.0
    %2441 = vmatprep.subr.mxu0 0.0
    %2442 = vmatpush1.msra.mxu0 0.0
    %2443 = vmatprep.subr.mxu0 0.0
    %2444 = vmatpush1.msra.mxu0 0.0
    %2445 = vmatprep.subr.mxu0 0.0
    %2446 = vmatpush1.msra.mxu0 0.0
    %2447 = vmatprep.subr.mxu0 0.0
    %2448 = vmatpush1.msra.mxu0 0.0
    %2449 = vmatprep.subr.mxu0 0.0
    %2450 = vmatpush1.msra.mxu0 0.0
    %2451 = vmatprep.subr.mxu0 0.0
    %2452 = vmatpush1.msra.mxu0 0.0
    %2453 = vmatprep.subr.mxu0 0.0
    %2454 = vmatpush1.msra.mxu0 0.0
    %2455 = vmatprep.subr.mxu0 0.0
    %2456 = vmatpush1.msra.mxu0 0.0
    %2457 = vmatprep.subr.mxu0 0.0
    %2458 = vmatpush1.msra.mxu0 0.0
    %2459 = vmatprep.subr.mxu0 0.0
    %2460 = vmatpush1.msra.mxu0 0.0
    %2461 = vmatprep.mubr.f32.mxu0 0.0
    %2462 = vmatmul.mubr.f32.gmra.mrb[0].mxu0 %v1340
    %v2463 = vpop.f32.mrb[0].mxu0
    %v2464 = vadd.f32 %v2395, %v2463
    %v2465 = vpop.f32.mrb[0].mxu0
    %2466 = vdwg.mxu0
    %v2467 = vadd.f32 %v2385, %v2464
    %v2468 = vld [vmem:[%s61] sm:$0xff]
    %v2469 = vld [vmem:[#allocation26] sm:$0x1]
    %v2471 = vlaneseq
    %v2472 = vshrl.u32 %v2471, 7
    %v2473 = vsub.s32 0, %v2472
    %v2474 = vrot.slane %v2469, %v2473
    %v2477 = vsel %vm2127, %v2467, 0
    %2479 = vmatprep.subr.mxu0 0.0
    %2480 = vmatpush1.msra.mxu0 %v2468
    %2481 = vmatprep.subr.mxu0 0.0
    %2482 = vmatpush1.msra.mxu0 0.0
    %2483 = vmatprep.subr.mxu0 0.0
    %2484 = vmatpush1.msra.mxu0 0.0
    %2485 = vmatprep.subr.mxu0 0.0
    %2486 = vmatpush1.msra.mxu0 0.0
    %2487 = vmatprep.subr.mxu0 0.0
    %2488 = vmatpush1.msra.mxu0 0.0
    %2489 = vmatprep.subr.mxu0 0.0
    %2490 = vmatpush1.msra.mxu0 0.0
    %2491 = vmatprep.subr.mxu0 0.0
    %2492 = vmatpush1.msra.mxu0 0.0
    %2493 = vmatprep.subr.mxu0 0.0
    %2494 = vmatpush1.msra.mxu0 0.0
    %2495 = vmatprep.subr.mxu0 0.0
    %2496 = vmatpush1.msra.mxu0 0.0
    %2497 = vmatprep.subr.mxu0 0.0
    %2498 = vmatpush1.msra.mxu0 0.0
    %2499 = vmatprep.subr.mxu0 0.0
    %2500 = vmatpush1.msra.mxu0 0.0
    %2501 = vmatprep.subr.mxu0 0.0
    %2502 = vmatpush1.msra.mxu0 0.0
    %2503 = vmatprep.subr.mxu0 0.0
    %2504 = vmatpush1.msra.mxu0 0.0
    %2505 = vmatprep.subr.mxu0 0.0
    %2506 = vmatpush1.msra.mxu0 0.0
    %2507 = vmatprep.subr.mxu0 0.0
    %2508 = vmatpush1.msra.mxu0 0.0
    %2509 = vmatprep.subr.mxu0 0.0
    %2510 = vmatpush1.msra.mxu0 0.0
    %2511 = vmatprep.subr.mxu0 0.0
    %2512 = vmatpush1.msra.mxu0 0.0
    %2513 = vmatprep.subr.mxu0 0.0
    %2514 = vmatpush1.msra.mxu0 0.0
    %2515 = vmatprep.subr.mxu0 0.0
    %2516 = vmatpush1.msra.mxu0 0.0
    %2517 = vmatprep.subr.mxu0 0.0
    %2518 = vmatpush1.msra.mxu0 0.0
    %2519 = vmatprep.subr.mxu0 0.0
    %2520 = vmatpush1.msra.mxu0 0.0
    %2521 = vmatprep.subr.mxu0 0.0
    %2522 = vmatpush1.msra.mxu0 0.0
    %2523 = vmatprep.subr.mxu0 0.0
    %2524 = vmatpush1.msra.mxu0 0.0
    %2525 = vmatprep.subr.mxu0 0.0
    %2526 = vmatpush1.msra.mxu0 0.0
    %2527 = vmatprep.subr.mxu0 0.0
    %2528 = vmatpush1.msra.mxu0 0.0
    %2529 = vmatprep.subr.mxu0 0.0
    %2530 = vmatpush1.msra.mxu0 0.0
    %2531 = vmatprep.subr.mxu0 0.0
    %2532 = vmatpush1.msra.mxu0 0.0
    %2533 = vmatprep.subr.mxu0 0.0
    %2534 = vmatpush1.msra.mxu0 0.0
    %2535 = vmatprep.subr.mxu0 0.0
    %2536 = vmatpush1.msra.mxu0 0.0
    %2537 = vmatprep.subr.mxu0 0.0
    %2538 = vmatpush1.msra.mxu0 0.0
    %2539 = vmatprep.subr.mxu0 0.0
    %2540 = vmatpush1.msra.mxu0 0.0
    %2541 = vmatprep.subr.mxu0 0.0
    %2542 = vmatpush1.msra.mxu0 0.0
    %2543 = vmatprep.mubr.f32.mxu0 0.0
    %2544 = vmatmul.mubr.f32.gmra.mrb[0].mxu0 %v2477
    %v2545 = vpop.f32.mrb[0].mxu0
    %v2546 = vadd.f32 %v2474, %v2545
    %v2547 = vpop.f32.mrb[0].mxu0
    %2548 = vdwg.mxu0
    %v2549 = vmin.f32 %v2546, 20.0
    %v2550 = vmul.f32 %v2549, 1.442695
    %v2551 = vpow.pop %v2550
    %v2552 = vadd.f32 %v2551, 1.0
    %v2553 = vmul.f32 %v2552, %v2552
    %v2554 = vsub.f32 %v2553, 1.0
    %v2555 = vadd.f32 %v2553, 1.0
    %v2556 = vrcp.pop %v2555
    %v2557 = vmul.f32 %v2554, %v2556
    %vm2558 = vcmp.gt.f32.partialorder %v2546, 20.0
    %v2559 = vmul.f32 %v2546, %v2557
    %v2560 = vsel %vm2558, %v2546, %v2559
    %v2561 = vadd.f32 %v2560, %v2292
    %v2562 = vld [vmem:[%s35] sm:$0xff]
    %v2563 = vld [vmem:[#allocation17] sm:$0x1]
    %v2565 = vlaneseq
    %v2566 = vshrl.u32 %v2565, 7
    %v2567 = vsub.s32 0, %v2566
    %v2568 = vrot.slane %v2563, %v2567
    %v2571 = vsel %vm2127, %v2561, 0
    %2573 = vmatprep.subr.mxu0 0.0
    %2574 = vmatpush1.msra.mxu0 %v2562
    %2575 = vmatprep.subr.mxu0 0.0
    %2576 = vmatpush1.msra.mxu0 0.0
    %2577 = vmatprep.subr.mxu0 0.0
    %2578 = vmatpush1.msra.mxu0 0.0
    %2579 = vmatprep.subr.mxu0 0.0
    %2580 = vmatpush1.msra.mxu0 0.0
    %2581 = vmatprep.subr.mxu0 0.0
    %2582 = vmatpush1.msra.mxu0 0.0
    %2583 = vmatprep.subr.mxu0 0.0
    %2584 = vmatpush1.msra.mxu0 0.0
    %2585 = vmatprep.subr.mxu0 0.0
    %2586 = vmatpush1.msra.mxu0 0.0
    %2587 = vmatprep.subr.mxu0 0.0
    %2588 = vmatpush1.msra.mxu0 0.0
    %2589 = vmatprep.subr.mxu0 0.0
    %2590 = vmatpush1.msra.mxu0 0.0
    %2591 = vmatprep.subr.mxu0 0.0
    %2592 = vmatpush1.msra.mxu0 0.0
    %2593 = vmatprep.subr.mxu0 0.0
    %2594 = vmatpush1.msra.mxu0 0.0
    %2595 = vmatprep.subr.mxu0 0.0
    %2596 = vmatpush1.msra.mxu0 0.0
    %2597 = vmatprep.subr.mxu0 0.0
    %2598 = vmatpush1.msra.mxu0 0.0
    %2599 = vmatprep.subr.mxu0 0.0
    %2600 = vmatpush1.msra.mxu0 0.0
    %2601 = vmatprep.subr.mxu0 0.0
    %2602 = vmatpush1.msra.mxu0 0.0
    %2603 = vmatprep.subr.mxu0 0.0
    %2604 = vmatpush1.msra.mxu0 0.0
    %2605 = vmatprep.subr.mxu0 0.0
    %2606 = vmatpush1.msra.mxu0 0.0
    %2607 = vmatprep.subr.mxu0 0.0
    %2608 = vmatpush1.msra.mxu0 0.0
    %2609 = vmatprep.subr.mxu0 0.0
    %2610 = vmatpush1.msra.mxu0 0.0
    %2611 = vmatprep.subr.mxu0 0.0
    %2612 = vmatpush1.msra.mxu0 0.0
    %2613 = vmatprep.subr.mxu0 0.0
    %2614 = vmatpush1.msra.mxu0 0.0
    %2615 = vmatprep.subr.mxu0 0.0
    %2616 = vmatpush1.msra.mxu0 0.0
    %2617 = vmatprep.subr.mxu0 0.0
    %2618 = vmatpush1.msra.mxu0 0.0
    %2619 = vmatprep.subr.mxu0 0.0
    %2620 = vmatpush1.msra.mxu0 0.0
    %2621 = vmatprep.subr.mxu0 0.0
    %2622 = vmatpush1.msra.mxu0 0.0
    %2623 = vmatprep.subr.mxu0 0.0
    %2624 = vmatpush1.msra.mxu0 0.0
    %2625 = vmatprep.subr.mxu0 0.0
    %2626 = vmatpush1.msra.mxu0 0.0
    %2627 = vmatprep.subr.mxu0 0.0
    %2628 = vmatpush1.msra.mxu0 0.0
    %2629 = vmatprep.subr.mxu0 0.0
    %2630 = vmatpush1.msra.mxu0 0.0
    %2631 = vmatprep.subr.mxu0 0.0
    %2632 = vmatpush1.msra.mxu0 0.0
    %2633 = vmatprep.subr.mxu0 0.0
    %2634 = vmatpush1.msra.mxu0 0.0
    %2635 = vmatprep.subr.mxu0 0.0
    %2636 = vmatpush1.msra.mxu0 0.0
    %2637 = vmatprep.mubr.f32.mxu0 0.0
    %2638 = vmatmul.mubr.f32.gmra.mrb[0].mxu0 %v2571
    %v2639 = vpop.f32.mrb[0].mxu0
    %v2640 = vadd.f32 %v2568, %v2639
    %v2641 = vpop.f32.mrb[0].mxu0
    %2642 = vdwg.mxu0
    %v2643 = vld [vmem:[%s73] sm:$0xff]
    %v2644 = vld [vmem:[#allocation29] sm:$0x1]
    %v2646 = vlaneseq
    %v2647 = vshrl.u32 %v2646, 7
    %v2648 = vsub.s32 0, %v2647
    %v2649 = vrot.slane %v2644, %v2648
    %v2652 = vsel %vm2127, %v2640, 0
    %2654 = vmatprep.subr.mxu0 0.0
    %2655 = vmatpush1.msra.mxu0 %v2643
    %2656 = vmatprep.subr.mxu0 0.0
    %2657 = vmatpush1.msra.mxu0 0.0
    %2658 = vmatprep.subr.mxu0 0.0
    %2659 = vmatpush1.msra.mxu0 0.0
    %2660 = vmatprep.subr.mxu0 0.0
    %2661 = vmatpush1.msra.mxu0 0.0
    %2662 = vmatprep.subr.mxu0 0.0
    %2663 = vmatpush1.msra.mxu0 0.0
    %2664 = vmatprep.subr.mxu0 0.0
    %2665 = vmatpush1.msra.mxu0 0.0
    %2666 = vmatprep.subr.mxu0 0.0
    %2667 = vmatpush1.msra.mxu0 0.0
    %2668 = vmatprep.subr.mxu0 0.0
    %2669 = vmatpush1.msra.mxu0 0.0
    %2670 = vmatprep.subr.mxu0 0.0
    %2671 = vmatpush1.msra.mxu0 0.0
    %2672 = vmatprep.subr.mxu0 0.0
    %2673 = vmatpush1.msra.mxu0 0.0
    %2674 = vmatprep.subr.mxu0 0.0
    %2675 = vmatpush1.msra.mxu0 0.0
    %2676 = vmatprep.subr.mxu0 0.0
    %2677 = vmatpush1.msra.mxu0 0.0
    %2678 = vmatprep.subr.mxu0 0.0
    %2679 = vmatpush1.msra.mxu0 0.0
    %2680 = vmatprep.subr.mxu0 0.0
    %2681 = vmatpush1.msra.mxu0 0.0
    %2682 = vmatprep.subr.mxu0 0.0
    %2683 = vmatpush1.msra.mxu0 0.0
    %2684 = vmatprep.subr.mxu0 0.0
    %2685 = vmatpush1.msra.mxu0 0.0
    %2686 = vmatprep.subr.mxu0 0.0
    %2687 = vmatpush1.msra.mxu0 0.0
    %2688 = vmatprep.subr.mxu0 0.0
    %2689 = vmatpush1.msra.mxu0 0.0
    %2690 = vmatprep.subr.mxu0 0.0
    %2691 = vmatpush1.msra.mxu0 0.0
    %2692 = vmatprep.subr.mxu0 0.0
    %2693 = vmatpush1.msra.mxu0 0.0
    %2694 = vmatprep.subr.mxu0 0.0
    %2695 = vmatpush1.msra.mxu0 0.0
    %2696 = vmatprep.subr.mxu0 0.0
    %2697 = vmatpush1.msra.mxu0 0.0
    %2698 = vmatprep.subr.mxu0 0.0
    %2699 = vmatpush1.msra.mxu0 0.0
    %2700 = vmatprep.subr.mxu0 0.0
    %2701 = vmatpush1.msra.mxu0 0.0
    %2702 = vmatprep.subr.mxu0 0.0
    %2703 = vmatpush1.msra.mxu0 0.0
    %2704 = vmatprep.subr.mxu0 0.0
    %2705 = vmatpush1.msra.mxu0 0.0
    %2706 = vmatprep.subr.mxu0 0.0
    %2707 = vmatpush1.msra.mxu0 0.0
    %2708 = vmatprep.subr.mxu0 0.0
    %2709 = vmatpush1.msra.mxu0 0.0
    %2710 = vmatprep.subr.mxu0 0.0
    %2711 = vmatpush1.msra.mxu0 0.0
    %2712 = vmatprep.subr.mxu0 0.0
    %2713 = vmatpush1.msra.mxu0 0.0
    %2714 = vmatprep.subr.mxu0 0.0
    %2715 = vmatpush1.msra.mxu0 0.0
    %2716 = vmatprep.subr.mxu0 0.0
    %2717 = vmatpush1.msra.mxu0 0.0
    %2718 = vmatprep.mubr.f32.mxu0 0.0
    %2719 = vmatmul.mubr.f32.gmra.mrb[0].mxu0 %v2652
    %v2720 = vpop.f32.mrb[0].mxu0
    %v2721 = vadd.f32 %v2649, %v2720
    %v2722 = vpop.f32.mrb[0].mxu0
    %2723 = vdwg.mxu0
    %v2724 = vmin.f32 %v2721, 20.0
    %v2725 = vmul.f32 %v2724, 1.442695
    %v2726 = vpow.pop %v2725
    %v2727 = vadd.f32 %v2726, 1.0
    %v2728 = vmul.f32 %v2727, %v2727
    %v2729 = vsub.f32 %v2728, 1.0
    %v2730 = vadd.f32 %v2728, 1.0
    %v2731 = vrcp.pop %v2730
    %v2732 = vmul.f32 %v2729, %v2731
    %vm2733 = vcmp.gt.f32.partialorder %v2721, 20.0
    %v2734 = vmul.f32 %v2721, %v2732
    %v2735 = vsel %vm2733, %v2721, %v2734
    %v2736 = vld [vmem:[%s79] sm:$0xff]
    %v2737 = vld [vmem:[%s79 + $0x8] sm:$0xff]
    %v2738 = vld [vmem:[%s79 + $0x10] sm:$0xff]
    %v2739 = vld [vmem:[%s79 + $0x18] sm:$0xff]
    %v2740 = vld [vmem:[#allocation33] sm:$0x1]
    %v2742 = vlaneseq
    %v2743 = vshrl.u32 %v2742, 7
    %v2744 = vsub.s32 0, %v2743
    %v2745 = vrot.slane %v2740, %v2744
    %2747 = vmatprep.subr.mxu0 0.0
    %2748 = vmatpush1.msra.mxu0 %v2736
    %2749 = vmatprep.subr.mxu0 0.0
    %2750 = vmatpush1.msra.mxu0 %v2737
    %2751 = vmatprep.subr.mxu0 0.0
    %2752 = vmatpush1.msra.mxu0 %v2738
    %2753 = vmatprep.subr.mxu0 0.0
    %2754 = vmatpush1.msra.mxu0 %v2739
    %2755 = vmatprep.subr.mxu0 0.0
    %2756 = vmatpush1.msra.mxu0 0.0
    %2757 = vmatprep.subr.mxu0 0.0
    %2758 = vmatpush1.msra.mxu0 0.0
    %2759 = vmatprep.subr.mxu0 0.0
    %2760 = vmatpush1.msra.mxu0 0.0
    %2761 = vmatprep.subr.mxu0 0.0
    %2762 = vmatpush1.msra.mxu0 0.0
    %2763 = vmatprep.subr.mxu0 0.0
    %2764 = vmatpush1.msra.mxu0 0.0
    %2765 = vmatprep.subr.mxu0 0.0
    %2766 = vmatpush1.msra.mxu0 0.0
    %2767 = vmatprep.subr.mxu0 0.0
    %2768 = vmatpush1.msra.mxu0 0.0
    %2769 = vmatprep.subr.mxu0 0.0
    %2770 = vmatpush1.msra.mxu0 0.0
    %2771 = vmatprep.subr.mxu0 0.0
    %2772 = vmatpush1.msra.mxu0 0.0
    %2773 = vmatprep.subr.mxu0 0.0
    %2774 = vmatpush1.msra.mxu0 0.0
    %2775 = vmatprep.subr.mxu0 0.0
    %2776 = vmatpush1.msra.mxu0 0.0
    %2777 = vmatprep.subr.mxu0 0.0
    %2778 = vmatpush1.msra.mxu0 0.0
    %2779 = vmatprep.subr.mxu0 0.0
    %2780 = vmatpush1.msra.mxu0 0.0
    %2781 = vmatprep.subr.mxu0 0.0
    %2782 = vmatpush1.msra.mxu0 0.0
    %2783 = vmatprep.subr.mxu0 0.0
    %2784 = vmatpush1.msra.mxu0 0.0
    %2785 = vmatprep.subr.mxu0 0.0
    %2786 = vmatpush1.msra.mxu0 0.0
    %2787 = vmatprep.subr.mxu0 0.0
    %2788 = vmatpush1.msra.mxu0 0.0
    %2789 = vmatprep.subr.mxu0 0.0
    %2790 = vmatpush1.msra.mxu0 0.0
    %2791 = vmatprep.subr.mxu0 0.0
    %2792 = vmatpush1.msra.mxu0 0.0
    %2793 = vmatprep.subr.mxu0 0.0
    %2794 = vmatpush1.msra.mxu0 0.0
    %2795 = vmatprep.subr.mxu0 0.0
    %2796 = vmatpush1.msra.mxu0 0.0
    %2797 = vmatprep.subr.mxu0 0.0
    %2798 = vmatpush1.msra.mxu0 0.0
    %2799 = vmatprep.subr.mxu0 0.0
    %2800 = vmatpush1.msra.mxu0 0.0
    %2801 = vmatprep.subr.mxu0 0.0
    %2802 = vmatpush1.msra.mxu0 0.0
    %2803 = vmatprep.subr.mxu0 0.0
    %2804 = vmatpush1.msra.mxu0 0.0
    %2805 = vmatprep.subr.mxu0 0.0
    %2806 = vmatpush1.msra.mxu0 0.0
    %2807 = vmatprep.subr.mxu0 0.0
    %2808 = vmatpush1.msra.mxu0 0.0
    %2809 = vmatprep.subr.mxu0 0.0
    %2810 = vmatpush1.msra.mxu0 0.0
    %2811 = vmatprep.mubr.f32.mxu0 0.0
    %2812 = vmatmul.mubr.f32.gmra.mrb[0].mxu0 %v1340
    %v2813 = vpop.f32.mrb[0].mxu0
    %v2814 = vadd.f32 %v2745, %v2813
    %v2815 = vpop.f32.mrb[0].mxu0
    %2816 = vdwg.mxu0
    %v2817 = vadd.f32 %v2735, %v2814
    %v2818 = vld [vmem:[%s75] sm:$0xf]
    %v2819 = vld [vmem:[#allocation30] sm:$0x1]
    %v2821 = vlaneseq
    %v2822 = vshrl.u32 %v2821, 7
    %v2823 = vsub.s32 0, %v2822
    %v2824 = vrot.slane %v2819, %v2823
    %vm2826 = vcmask 31744
    %v2828 = vsel %vm2826, %v2817, 0
    %vm2830 = vcmask 1043456
    %v2832 = vsel %vm2830, %v2818, 0
    %2834 = vmatprep.subr.mxu0 0.0
    %2835 = vmatpush1.msra.mxu0 %v2832
    %2836 = vmatprep.subr.mxu0 0.0
    %2837 = vmatpush1.msra.mxu0 0.0
    %2838 = vmatprep.subr.mxu0 0.0
    %2839 = vmatpush1.msra.mxu0 0.0
    %2840 = vmatprep.subr.mxu0 0.0
    %2841 = vmatpush1.msra.mxu0 0.0
    %2842 = vmatprep.subr.mxu0 0.0
    %2843 = vmatpush1.msra.mxu0 0.0
    %2844 = vmatprep.subr.mxu0 0.0
    %2845 = vmatpush1.msra.mxu0 0.0
    %2846 = vmatprep.subr.mxu0 0.0
    %2847 = vmatpush1.msra.mxu0 0.0
    %2848 = vmatprep.subr.mxu0 0.0
    %2849 = vmatpush1.msra.mxu0 0.0
    %2850 = vmatprep.subr.mxu0 0.0
    %2851 = vmatpush1.msra.mxu0 0.0
    %2852 = vmatprep.subr.mxu0 0.0
    %2853 = vmatpush1.msra.mxu0 0.0
    %2854 = vmatprep.subr.mxu0 0.0
    %2855 = vmatpush1.msra.mxu0 0.0
    %2856 = vmatprep.subr.mxu0 0.0
    %2857 = vmatpush1.msra.mxu0 0.0
    %2858 = vmatprep.subr.mxu0 0.0
    %2859 = vmatpush1.msra.mxu0 0.0
    %2860 = vmatprep.subr.mxu0 0.0
    %2861 = vmatpush1.msra.mxu0 0.0
    %2862 = vmatprep.subr.mxu0 0.0
    %2863 = vmatpush1.msra.mxu0 0.0
    %2864 = vmatprep.subr.mxu0 0.0
    %2865 = vmatpush1.msra.mxu0 0.0
    %2866 = vmatprep.subr.mxu0 0.0
    %2867 = vmatpush1.msra.mxu0 0.0
    %2868 = vmatprep.subr.mxu0 0.0
    %2869 = vmatpush1.msra.mxu0 0.0
    %2870 = vmatprep.subr.mxu0 0.0
    %2871 = vmatpush1.msra.mxu0 0.0
    %2872 = vmatprep.subr.mxu0 0.0
    %2873 = vmatpush1.msra.mxu0 0.0
    %2874 = vmatprep.subr.mxu0 0.0
    %2875 = vmatpush1.msra.mxu0 0.0
    %2876 = vmatprep.subr.mxu0 0.0
    %2877 = vmatpush1.msra.mxu0 0.0
    %2878 = vmatprep.subr.mxu0 0.0
    %2879 = vmatpush1.msra.mxu0 0.0
    %2880 = vmatprep.subr.mxu0 0.0
    %2881 = vmatpush1.msra.mxu0 0.0
    %2882 = vmatprep.subr.mxu0 0.0
    %2883 = vmatpush1.msra.mxu0 0.0
    %2884 = vmatprep.subr.mxu0 0.0
    %2885 = vmatpush1.msra.mxu0 0.0
    %2886 = vmatprep.subr.mxu0 0.0
    %2887 = vmatpush1.msra.mxu0 0.0
    %2888 = vmatprep.subr.mxu0 0.0
    %2889 = vmatpush1.msra.mxu0 0.0
    %2890 = vmatprep.subr.mxu0 0.0
    %2891 = vmatpush1.msra.mxu0 0.0
    %2892 = vmatprep.subr.mxu0 0.0
    %2893 = vmatpush1.msra.mxu0 0.0
    %2894 = vmatprep.subr.mxu0 0.0
    %2895 = vmatpush1.msra.mxu0 0.0
    %2896 = vmatprep.subr.mxu0 0.0
    %2897 = vmatpush1.msra.mxu0 0.0
    %2898 = vmatprep.mubr.f32.mxu0 0.0
    %2899 = vmatmul.mubr.f32.gmra.mrb[0].mxu0 %v2828
    %v2900 = vpop.f32.mrb[0].mxu0
    %v2901 = vadd.f32 %v2824, %v2900
    %v2902 = vpop.f32.mrb[0].mxu0
    %2903 = vdwg.mxu0
    %v2904 = vmin.f32 %v2901, 20.0
    %v2905 = vmul.f32 %v2904, 1.442695
    %v2906 = vpow.pop %v2905
    %v2907 = vadd.f32 %v2906, 1.0
    %v2908 = vmul.f32 %v2907, %v2907
    %v2909 = vsub.f32 %v2908, 1.0
    %v2910 = vadd.f32 %v2908, 1.0
    %v2911 = vrcp.pop %v2910
    %v2912 = vmul.f32 %v2909, %v2911
    %vm2913 = vcmp.gt.f32.partialorder %v2901, 20.0
    %v2914 = vmul.f32 %v2901, %v2912
    %v2915 = vsel %vm2913, %v2901, %v2914
    %v2916 = vld [vmem:[%s77] sm:$0xff]
    %v2917 = vld [vmem:[#allocation32] sm:$0x1]
    %v2919 = vlaneseq
    %v2920 = vshrl.u32 %v2919, 7
    %v2921 = vsub.s32 0, %v2920
    %v2922 = vrot.slane %v2917, %v2921
    %2924 = vmatprep.subr.mxu0 0.0
    %2925 = vmatpush1.msra.mxu0 %v2916
    %2926 = vmatprep.subr.mxu0 0.0
    %2927 = vmatpush1.msra.mxu0 0.0
    %2928 = vmatprep.subr.mxu0 0.0
    %2929 = vmatpush1.msra.mxu0 0.0
    %2930 = vmatprep.subr.mxu0 0.0
    %2931 = vmatpush1.msra.mxu0 0.0
    %2932 = vmatprep.subr.mxu0 0.0
    %2933 = vmatpush1.msra.mxu0 0.0
    %2934 = vmatprep.subr.mxu0 0.0
    %2935 = vmatpush1.msra.mxu0 0.0
    %2936 = vmatprep.subr.mxu0 0.0
    %2937 = vmatpush1.msra.mxu0 0.0
    %2938 = vmatprep.subr.mxu0 0.0
    %2939 = vmatpush1.msra.mxu0 0.0
    %2940 = vmatprep.subr.mxu0 0.0
    %2941 = vmatpush1.msra.mxu0 0.0
    %2942 = vmatprep.subr.mxu0 0.0
    %2943 = vmatpush1.msra.mxu0 0.0
    %2944 = vmatprep.subr.mxu0 0.0
    %2945 = vmatpush1.msra.mxu0 0.0
    %2946 = vmatprep.subr.mxu0 0.0
    %2947 = vmatpush1.msra.mxu0 0.0
    %2948 = vmatprep.subr.mxu0 0.0
    %2949 = vmatpush1.msra.mxu0 0.0
    %2950 = vmatprep.subr.mxu0 0.0
    %2951 = vmatpush1.msra.mxu0 0.0
    %2952 = vmatprep.subr.mxu0 0.0
    %2953 = vmatpush1.msra.mxu0 0.0
    %2954 = vmatprep.subr.mxu0 0.0
    %2955 = vmatpush1.msra.mxu0 0.0
    %2956 = vmatprep.subr.mxu0 0.0
    %2957 = vmatpush1.msra.mxu0 0.0
    %2958 = vmatprep.subr.mxu0 0.0
    %2959 = vmatpush1.msra.mxu0 0.0
    %2960 = vmatprep.subr.mxu0 0.0
    %2961 = vmatpush1.msra.mxu0 0.0
    %2962 = vmatprep.subr.mxu0 0.0
    %2963 = vmatpush1.msra.mxu0 0.0
    %2964 = vmatprep.subr.mxu0 0.0
    %2965 = vmatpush1.msra.mxu0 0.0
    %2966 = vmatprep.subr.mxu0 0.0
    %2967 = vmatpush1.msra.mxu0 0.0
    %2968 = vmatprep.subr.mxu0 0.0
    %2969 = vmatpush1.msra.mxu0 0.0
    %2970 = vmatprep.subr.mxu0 0.0
    %2971 = vmatpush1.msra.mxu0 0.0
    %2972 = vmatprep.subr.mxu0 0.0
    %2973 = vmatpush1.msra.mxu0 0.0
    %2974 = vmatprep.subr.mxu0 0.0
    %2975 = vmatpush1.msra.mxu0 0.0
    %2976 = vmatprep.subr.mxu0 0.0
    %2977 = vmatpush1.msra.mxu0 0.0
    %2978 = vmatprep.subr.mxu0 0.0
    %2979 = vmatpush1.msra.mxu0 0.0
    %2980 = vmatprep.subr.mxu0 0.0
    %2981 = vmatpush1.msra.mxu0 0.0
    %2982 = vmatprep.subr.mxu0 0.0
    %2983 = vmatpush1.msra.mxu0 0.0
    %2984 = vmatprep.subr.mxu0 0.0
    %2985 = vmatpush1.msra.mxu0 0.0
    %2986 = vmatprep.subr.mxu0 0.0
    %2987 = vmatpush1.msra.mxu0 0.0
    %2988 = vmatprep.mubr.f32.mxu0 0.0
    %2989 = vmatmul.mubr.f32.gmra.mrb[0].mxu0 %v2652
    %v2990 = vpop.f32.mrb[0].mxu0
    %v2991 = vadd.f32 %v2922, %v2990
    %v2992 = vpop.f32.mrb[0].mxu0
    %2993 = vdwg.mxu0
    %v2994 = vadd.f32 %v2915, %v2991
    %v2995 = vld [vmem:[%s87] sm:$0xf]
    %v2996 = vld [vmem:[#allocation35] sm:$0x1]
    %v2998 = vlaneseq
    %v2999 = vshrl.u32 %v2998, 7
    %v3000 = vsub.s32 0, %v2999
    %v3001 = vrot.slane %v2996, %v3000
    %v3004 = vsel %vm2826, %v2994, 0
    %v3007 = vsel %vm2830, %v2995, 0
    %3009 = vmatprep.subr.mxu0 0.0
    %3010 = vmatpush1.msra.mxu0 %v3007
    %3011 = vmatprep.subr.mxu0 0.0
    %3012 = vmatpush1.msra.mxu0 0.0
    %3013 = vmatprep.subr.mxu0 0.0
    %3014 = vmatpush1.msra.mxu0 0.0
    %3015 = vmatprep.subr.mxu0 0.0
    %3016 = vmatpush1.msra.mxu0 0.0
    %3017 = vmatprep.subr.mxu0 0.0
    %3018 = vmatpush1.msra.mxu0 0.0
    %3019 = vmatprep.subr.mxu0 0.0
    %3020 = vmatpush1.msra.mxu0 0.0
    %3021 = vmatprep.subr.mxu0 0.0
    %3022 = vmatpush1.msra.mxu0 0.0
    %3023 = vmatprep.subr.mxu0 0.0
    %3024 = vmatpush1.msra.mxu0 0.0
    %3025 = vmatprep.subr.mxu0 0.0
    %3026 = vmatpush1.msra.mxu0 0.0
    %3027 = vmatprep.subr.mxu0 0.0
    %3028 = vmatpush1.msra.mxu0 0.0
    %3029 = vmatprep.subr.mxu0 0.0
    %3030 = vmatpush1.msra.mxu0 0.0
    %3031 = vmatprep.subr.mxu0 0.0
    %3032 = vmatpush1.msra.mxu0 0.0
    %3033 = vmatprep.subr.mxu0 0.0
    %3034 = vmatpush1.msra.mxu0 0.0
    %3035 = vmatprep.subr.mxu0 0.0
    %3036 = vmatpush1.msra.mxu0 0.0
    %3037 = vmatprep.subr.mxu0 0.0
    %3038 = vmatpush1.msra.mxu0 0.0
    %3039 = vmatprep.subr.mxu0 0.0
    %3040 = vmatpush1.msra.mxu0 0.0
    %3041 = vmatprep.subr.mxu0 0.0
    %3042 = vmatpush1.msra.mxu0 0.0
    %3043 = vmatprep.subr.mxu0 0.0
    %3044 = vmatpush1.msra.mxu0 0.0
    %3045 = vmatprep.subr.mxu0 0.0
    %3046 = vmatpush1.msra.mxu0 0.0
    %3047 = vmatprep.subr.mxu0 0.0
    %3048 = vmatpush1.msra.mxu0 0.0
    %3049 = vmatprep.subr.mxu0 0.0
    %3050 = vmatpush1.msra.mxu0 0.0
    %3051 = vmatprep.subr.mxu0 0.0
    %3052 = vmatpush1.msra.mxu0 0.0
    %3053 = vmatprep.subr.mxu0 0.0
    %3054 = vmatpush1.msra.mxu0 0.0
    %3055 = vmatprep.subr.mxu0 0.0
    %3056 = vmatpush1.msra.mxu0 0.0
    %3057 = vmatprep.subr.mxu0 0.0
    %3058 = vmatpush1.msra.mxu0 0.0
    %3059 = vmatprep.subr.mxu0 0.0
    %3060 = vmatpush1.msra.mxu0 0.0
    %3061 = vmatprep.subr.mxu0 0.0
    %3062 = vmatpush1.msra.mxu0 0.0
    %3063 = vmatprep.subr.mxu0 0.0
    %3064 = vmatpush1.msra.mxu0 0.0
    %3065 = vmatprep.subr.mxu0 0.0
    %3066 = vmatpush1.msra.mxu0 0.0
    %3067 = vmatprep.subr.mxu0 0.0
    %3068 = vmatpush1.msra.mxu0 0.0
    %3069 = vmatprep.subr.mxu0 0.0
    %3070 = vmatpush1.msra.mxu0 0.0
    %3071 = vmatprep.subr.mxu0 0.0
    %3072 = vmatpush1.msra.mxu0 0.0
    %3073 = vmatprep.mubr.f32.mxu0 0.0
    %3074 = vmatmul.mubr.f32.gmra.mrb[0].mxu0 %v3004
    %v3075 = vpop.f32.mrb[0].mxu0
    %v3076 = vadd.f32 %v3001, %v3075
    %v3077 = vpop.f32.mrb[0].mxu0
    %3078 = vdwg.mxu0
    %v3079 = vmin.f32 %v3076, 20.0
    %v3080 = vmul.f32 %v3079, 1.442695
    %v3081 = vpow.pop %v3080
    %v3082 = vadd.f32 %v3081, 1.0
    %v3083 = vmul.f32 %v3082, %v3082
    %v3084 = vsub.f32 %v3083, 1.0
    %v3085 = vadd.f32 %v3083, 1.0
    %v3086 = vrcp.pop %v3085
    %v3087 = vmul.f32 %v3084, %v3086
    %vm3088 = vcmp.gt.f32.partialorder %v3076, 20.0
    %v3089 = vmul.f32 %v3076, %v3087
    %v3090 = vsel %vm3088, %v3076, %v3089
    %v3091 = vld [vmem:[%s91] sm:$0xff]
    %v3092 = vld [vmem:[%s91 + $0x8] sm:$0xff]
    %v3093 = vld [vmem:[%s91 + $0x10] sm:$0xff]
    %v3094 = vld [vmem:[%s91 + $0x18] sm:$0xff]
    %v3095 = vld [vmem:[#allocation38] sm:$0x1]
    %v3097 = vlaneseq
    %v3098 = vshrl.u32 %v3097, 7
    %v3099 = vsub.s32 0, %v3098
    %v3100 = vrot.slane %v3095, %v3099
    %3102 = vmatprep.subr.mxu0 0.0
    %3103 = vmatpush1.msra.mxu0 %v3091
    %3104 = vmatprep.subr.mxu0 0.0
    %3105 = vmatpush1.msra.mxu0 %v3092
    %3106 = vmatprep.subr.mxu0 0.0
    %3107 = vmatpush1.msra.mxu0 %v3093
    %3108 = vmatprep.subr.mxu0 0.0
    %3109 = vmatpush1.msra.mxu0 %v3094
    %3110 = vmatprep.subr.mxu0 0.0
    %3111 = vmatpush1.msra.mxu0 0.0
    %3112 = vmatprep.subr.mxu0 0.0
    %3113 = vmatpush1.msra.mxu0 0.0
    %3114 = vmatprep.subr.mxu0 0.0
    %3115 = vmatpush1.msra.mxu0 0.0
    %3116 = vmatprep.subr.mxu0 0.0
    %3117 = vmatpush1.msra.mxu0 0.0
    %3118 = vmatprep.subr.mxu0 0.0
    %3119 = vmatpush1.msra.mxu0 0.0
    %3120 = vmatprep.subr.mxu0 0.0
    %3121 = vmatpush1.msra.mxu0 0.0
    %3122 = vmatprep.subr.mxu0 0.0
    %3123 = vmatpush1.msra.mxu0 0.0
    %3124 = vmatprep.subr.mxu0 0.0
    %3125 = vmatpush1.msra.mxu0 0.0
    %3126 = vmatprep.subr.mxu0 0.0
    %3127 = vmatpush1.msra.mxu0 0.0
    %3128 = vmatprep.subr.mxu0 0.0
    %3129 = vmatpush1.msra.mxu0 0.0
    %3130 = vmatprep.subr.mxu0 0.0
    %3131 = vmatpush1.msra.mxu0 0.0
    %3132 = vmatprep.subr.mxu0 0.0
    %3133 = vmatpush1.msra.mxu0 0.0
    %3134 = vmatprep.subr.mxu0 0.0
    %3135 = vmatpush1.msra.mxu0 0.0
    %3136 = vmatprep.subr.mxu0 0.0
    %3137 = vmatpush1.msra.mxu0 0.0
    %3138 = vmatprep.subr.mxu0 0.0
    %3139 = vmatpush1.msra.mxu0 0.0
    %3140 = vmatprep.subr.mxu0 0.0
    %3141 = vmatpush1.msra.mxu0 0.0
    %3142 = vmatprep.subr.mxu0 0.0
    %3143 = vmatpush1.msra.mxu0 0.0
    %3144 = vmatprep.subr.mxu0 0.0
    %3145 = vmatpush1.msra.mxu0 0.0
    %3146 = vmatprep.subr.mxu0 0.0
    %3147 = vmatpush1.msra.mxu0 0.0
    %3148 = vmatprep.subr.mxu0 0.0
    %3149 = vmatpush1.msra.mxu0 0.0
    %3150 = vmatprep.subr.mxu0 0.0
    %3151 = vmatpush1.msra.mxu0 0.0
    %3152 = vmatprep.subr.mxu0 0.0
    %3153 = vmatpush1.msra.mxu0 0.0
    %3154 = vmatprep.subr.mxu0 0.0
    %3155 = vmatpush1.msra.mxu0 0.0
    %3156 = vmatprep.subr.mxu0 0.0
    %3157 = vmatpush1.msra.mxu0 0.0
    %3158 = vmatprep.subr.mxu0 0.0
    %3159 = vmatpush1.msra.mxu0 0.0
    %3160 = vmatprep.subr.mxu0 0.0
    %3161 = vmatpush1.msra.mxu0 0.0
    %3162 = vmatprep.subr.mxu0 0.0
    %3163 = vmatpush1.msra.mxu0 0.0
    %3164 = vmatprep.subr.mxu0 0.0
    %3165 = vmatpush1.msra.mxu0 0.0
    %3166 = vmatprep.mubr.f32.mxu0 0.0
    %3167 = vmatmul.mubr.f32.gmra.mrb[0].mxu0 %v1340
    %v3168 = vpop.f32.mrb[0].mxu0
    %v3169 = vadd.f32 %v3100, %v3168
    %v3170 = vpop.f32.mrb[0].mxu0
    %3171 = vdwg.mxu0
    %v3172 = vadd.f32 %v3090, %v3169
    %v3173 = vld [vmem:[%s89] sm:$0xf]
    %v3174 = vld [vmem:[#allocation36] sm:$0x1]
    %v3176 = vlaneseq
    %v3177 = vshrl.u32 %v3176, 7
    %v3178 = vsub.s32 0, %v3177
    %v3179 = vrot.slane %v3174, %v3178
    %v3182 = vsel %vm2826, %v3172, 0
    %v3185 = vsel %vm2830, %v3173, 0
    %3187 = vmatprep.subr.mxu0 0.0
    %3188 = vmatpush1.msra.mxu0 %v3185
    %3189 = vmatprep.subr.mxu0 0.0
    %3190 = vmatpush1.msra.mxu0 0.0
    %3191 = vmatprep.subr.mxu0 0.0
    %3192 = vmatpush1.msra.mxu0 0.0
    %3193 = vmatprep.subr.mxu0 0.0
    %3194 = vmatpush1.msra.mxu0 0.0
    %3195 = vmatprep.subr.mxu0 0.0
    %3196 = vmatpush1.msra.mxu0 0.0
    %3197 = vmatprep.subr.mxu0 0.0
    %3198 = vmatpush1.msra.mxu0 0.0
    %3199 = vmatprep.subr.mxu0 0.0
    %3200 = vmatpush1.msra.mxu0 0.0
    %3201 = vmatprep.subr.mxu0 0.0
    %3202 = vmatpush1.msra.mxu0 0.0
    %3203 = vmatprep.subr.mxu0 0.0
    %3204 = vmatpush1.msra.mxu0 0.0
    %3205 = vmatprep.subr.mxu0 0.0
    %3206 = vmatpush1.msra.mxu0 0.0
    %3207 = vmatprep.subr.mxu0 0.0
    %3208 = vmatpush1.msra.mxu0 0.0
    %3209 = vmatprep.subr.mxu0 0.0
    %3210 = vmatpush1.msra.mxu0 0.0
    %3211 = vmatprep.subr.mxu0 0.0
    %3212 = vmatpush1.msra.mxu0 0.0
    %3213 = vmatprep.subr.mxu0 0.0
    %3214 = vmatpush1.msra.mxu0 0.0
    %3215 = vmatprep.subr.mxu0 0.0
    %3216 = vmatpush1.msra.mxu0 0.0
    %3217 = vmatprep.subr.mxu0 0.0
    %3218 = vmatpush1.msra.mxu0 0.0
    %3219 = vmatprep.subr.mxu0 0.0
    %3220 = vmatpush1.msra.mxu0 0.0
    %3221 = vmatprep.subr.mxu0 0.0
    %3222 = vmatpush1.msra.mxu0 0.0
    %3223 = vmatprep.subr.mxu0 0.0
    %3224 = vmatpush1.msra.mxu0 0.0
    %3225 = vmatprep.subr.mxu0 0.0
    %3226 = vmatpush1.msra.mxu0 0.0
    %3227 = vmatprep.subr.mxu0 0.0
    %3228 = vmatpush1.msra.mxu0 0.0
    %3229 = vmatprep.subr.mxu0 0.0
    %3230 = vmatpush1.msra.mxu0 0.0
    %3231 = vmatprep.subr.mxu0 0.0
    %3232 = vmatpush1.msra.mxu0 0.0
    %3233 = vmatprep.subr.mxu0 0.0
    %3234 = vmatpush1.msra.mxu0 0.0
    %3235 = vmatprep.subr.mxu0 0.0
    %3236 = vmatpush1.msra.mxu0 0.0
    %3237 = vmatprep.subr.mxu0 0.0
    %3238 = vmatpush1.msra.mxu0 0.0
    %3239 = vmatprep.subr.mxu0 0.0
    %3240 = vmatpush1.msra.mxu0 0.0
    %3241 = vmatprep.subr.mxu0 0.0
    %3242 = vmatpush1.msra.mxu0 0.0
    %3243 = vmatprep.subr.mxu0 0.0
    %3244 = vmatpush1.msra.mxu0 0.0
    %3245 = vmatprep.subr.mxu0 0.0
    %3246 = vmatpush1.msra.mxu0 0.0
    %3247 = vmatprep.subr.mxu0 0.0
    %3248 = vmatpush1.msra.mxu0 0.0
    %3249 = vmatprep.subr.mxu0 0.0
    %3250 = vmatpush1.msra.mxu0 0.0
    %3251 = vmatprep.mubr.f32.mxu0 0.0
    %3252 = vmatmul.mubr.f32.gmra.mrb[0].mxu0 %v3182
    %v3253 = vpop.f32.mrb[0].mxu0
    %v3254 = vadd.f32 %v3179, %v3253
    %v3255 = vpop.f32.mrb[0].mxu0
    %3256 = vdwg.mxu0
    %v3257 = vmin.f32 %v3254, 20.0
    %v3258 = vmul.f32 %v3257, 1.442695
    %v3259 = vpow.pop %v3258
    %v3260 = vadd.f32 %v3259, 1.0
    %v3261 = vmul.f32 %v3260, %v3260
    %v3262 = vsub.f32 %v3261, 1.0
    %v3263 = vadd.f32 %v3261, 1.0
    %v3264 = vrcp.pop %v3263
    %v3265 = vmul.f32 %v3262, %v3264
    %vm3266 = vcmp.gt.f32.partialorder %v3254, 20.0
    %v3267 = vmul.f32 %v3254, %v3265
    %v3268 = vsel %vm3266, %v3254, %v3267
    %v3269 = vadd.f32 %v3268, %v2994
    %v3270 = vld [vmem:[%s99] sm:$0xf]
    %v3271 = vld [vmem:[#allocation39] sm:$0x1]
    %v3273 = vlaneseq
    %v3274 = vshrl.u32 %v3273, 7
    %v3275 = vsub.s32 0, %v3274
    %v3276 = vrot.slane %v3271, %v3275
    %v3279 = vsel %vm2826, %v3269, 0
    %v3282 = vsel %vm2830, %v3270, 0
    %3284 = vmatprep.subr.mxu0 0.0
    %3285 = vmatpush1.msra.mxu0 %v3282
    %3286 = vmatprep.subr.mxu0 0.0
    %3287 = vmatpush1.msra.mxu0 0.0
    %3288 = vmatprep.subr.mxu0 0.0
    %3289 = vmatpush1.msra.mxu0 0.0
    %3290 = vmatprep.subr.mxu0 0.0
    %3291 = vmatpush1.msra.mxu0 0.0
    %3292 = vmatprep.subr.mxu0 0.0
    %3293 = vmatpush1.msra.mxu0 0.0
    %3294 = vmatprep.subr.mxu0 0.0
    %3295 = vmatpush1.msra.mxu0 0.0
    %3296 = vmatprep.subr.mxu0 0.0
    %3297 = vmatpush1.msra.mxu0 0.0
    %3298 = vmatprep.subr.mxu0 0.0
    %3299 = vmatpush1.msra.mxu0 0.0
    %3300 = vmatprep.subr.mxu0 0.0
    %3301 = vmatpush1.msra.mxu0 0.0
    %3302 = vmatprep.subr.mxu0 0.0
    %3303 = vmatpush1.msra.mxu0 0.0
    %3304 = vmatprep.subr.mxu0 0.0
    %3305 = vmatpush1.msra.mxu0 0.0
    %3306 = vmatprep.subr.mxu0 0.0
    %3307 = vmatpush1.msra.mxu0 0.0
    %3308 = vmatprep.subr.mxu0 0.0
    %3309 = vmatpush1.msra.mxu0 0.0
    %3310 = vmatprep.subr.mxu0 0.0
    %3311 = vmatpush1.msra.mxu0 0.0
    %3312 = vmatprep.subr.mxu0 0.0
    %3313 = vmatpush1.msra.mxu0 0.0
    %3314 = vmatprep.subr.mxu0 0.0
    %3315 = vmatpush1.msra.mxu0 0.0
    %3316 = vmatprep.subr.mxu0 0.0
    %3317 = vmatpush1.msra.mxu0 0.0
    %3318 = vmatprep.subr.mxu0 0.0
    %3319 = vmatpush1.msra.mxu0 0.0
    %3320 = vmatprep.subr.mxu0 0.0
    %3321 = vmatpush1.msra.mxu0 0.0
    %3322 = vmatprep.subr.mxu0 0.0
    %3323 = vmatpush1.msra.mxu0 0.0
    %3324 = vmatprep.subr.mxu0 0.0
    %3325 = vmatpush1.msra.mxu0 0.0
    %3326 = vmatprep.subr.mxu0 0.0
    %3327 = vmatpush1.msra.mxu0 0.0
    %3328 = vmatprep.subr.mxu0 0.0
    %3329 = vmatpush1.msra.mxu0 0.0
    %3330 = vmatprep.subr.mxu0 0.0
    %3331 = vmatpush1.msra.mxu0 0.0
    %3332 = vmatprep.subr.mxu0 0.0
    %3333 = vmatpush1.msra.mxu0 0.0
    %3334 = vmatprep.subr.mxu0 0.0
    %3335 = vmatpush1.msra.mxu0 0.0
    %3336 = vmatprep.subr.mxu0 0.0
    %3337 = vmatpush1.msra.mxu0 0.0
    %3338 = vmatprep.subr.mxu0 0.0
    %3339 = vmatpush1.msra.mxu0 0.0
    %3340 = vmatprep.subr.mxu0 0.0
    %3341 = vmatpush1.msra.mxu0 0.0
    %3342 = vmatprep.subr.mxu0 0.0
    %3343 = vmatpush1.msra.mxu0 0.0
    %3344 = vmatprep.subr.mxu0 0.0
    %3345 = vmatpush1.msra.mxu0 0.0
    %3346 = vmatprep.subr.mxu0 0.0
    %3347 = vmatpush1.msra.mxu0 0.0
    %3348 = vmatprep.mubr.f32.mxu0 0.0
    %3349 = vmatmul.mubr.f32.gmra.mrb[0].mxu0 %v3279
    %v3350 = vpop.f32.mrb[0].mxu0
    %v3351 = vadd.f32 %v3276, %v3350
    %v3352 = vpop.f32.mrb[0].mxu0
    %3353 = vdwg.mxu0
    %v3354 = vmin.f32 %v3351, 20.0
    %v3355 = vmul.f32 %v3354, 1.442695
    %v3356 = vpow.pop %v3355
    %v3357 = vadd.f32 %v3356, 1.0
    %v3358 = vmul.f32 %v3357, %v3357
    %v3359 = vsub.f32 %v3358, 1.0
    %v3360 = vadd.f32 %v3358, 1.0
    %v3361 = vrcp.pop %v3360
    %v3362 = vmul.f32 %v3359, %v3361
    %vm3363 = vcmp.gt.f32.partialorder %v3351, 20.0
    %v3364 = vmul.f32 %v3351, %v3362
    %v3365 = vsel %vm3363, %v3351, %v3364
    %v3366 = vld [vmem:[%s103] sm:$0xff]
    %v3367 = vld [vmem:[%s103 + $0x8] sm:$0xff]
    %v3368 = vld [vmem:[%s103 + $0x10] sm:$0xff]
    %v3369 = vld [vmem:[%s103 + $0x18] sm:$0xff]
    %v3370 = vld [vmem:[#allocation42] sm:$0x1]
    %v3372 = vlaneseq
    %v3373 = vshrl.u32 %v3372, 7
    %v3374 = vsub.s32 0, %v3373
    %v3375 = vrot.slane %v3370, %v3374
    %3377 = vmatprep.subr.mxu0 0.0
    %3378 = vmatpush1.msra.mxu0 %v3366
    %3379 = vmatprep.subr.mxu0 0.0
    %3380 = vmatpush1.msra.mxu0 %v3367
    %3381 = vmatprep.subr.mxu0 0.0
    %3382 = vmatpush1.msra.mxu0 %v3368
    %3383 = vmatprep.subr.mxu0 0.0
    %3384 = vmatpush1.msra.mxu0 %v3369
    %3385 = vmatprep.subr.mxu0 0.0
    %3386 = vmatpush1.msra.mxu0 0.0
    %3387 = vmatprep.subr.mxu0 0.0
    %3388 = vmatpush1.msra.mxu0 0.0
    %3389 = vmatprep.subr.mxu0 0.0
    %3390 = vmatpush1.msra.mxu0 0.0
    %3391 = vmatprep.subr.mxu0 0.0
    %3392 = vmatpush1.msra.mxu0 0.0
    %3393 = vmatprep.subr.mxu0 0.0
    %3394 = vmatpush1.msra.mxu0 0.0
    %3395 = vmatprep.subr.mxu0 0.0
    %3396 = vmatpush1.msra.mxu0 0.0
    %3397 = vmatprep.subr.mxu0 0.0
    %3398 = vmatpush1.msra.mxu0 0.0
    %3399 = vmatprep.subr.mxu0 0.0
    %3400 = vmatpush1.msra.mxu0 0.0
    %3401 = vmatprep.subr.mxu0 0.0
    %3402 = vmatpush1.msra.mxu0 0.0
    %3403 = vmatprep.subr.mxu0 0.0
    %3404 = vmatpush1.msra.mxu0 0.0
    %3405 = vmatprep.subr.mxu0 0.0
    %3406 = vmatpush1.msra.mxu0 0.0
    %3407 = vmatprep.subr.mxu0 0.0
    %3408 = vmatpush1.msra.mxu0 0.0
    %3409 = vmatprep.subr.mxu0 0.0
    %3410 = vmatpush1.msra.mxu0 0.0
    %3411 = vmatprep.subr.mxu0 0.0
    %3412 = vmatpush1.msra.mxu0 0.0
    %3413 = vmatprep.subr.mxu0 0.0
    %3414 = vmatpush1.msra.mxu0 0.0
    %3415 = vmatprep.subr.mxu0 0.0
    %3416 = vmatpush1.msra.mxu0 0.0
    %3417 = vmatprep.subr.mxu0 0.0
    %3418 = vmatpush1.msra.mxu0 0.0
    %3419 = vmatprep.subr.mxu0 0.0
    %3420 = vmatpush1.msra.mxu0 0.0
    %3421 = vmatprep.subr.mxu0 0.0
    %3422 = vmatpush1.msra.mxu0 0.0
    %3423 = vmatprep.subr.mxu0 0.0
    %3424 = vmatpush1.msra.mxu0 0.0
    %3425 = vmatprep.subr.mxu0 0.0
    %3426 = vmatpush1.msra.mxu0 0.0
    %3427 = vmatprep.subr.mxu0 0.0
    %3428 = vmatpush1.msra.mxu0 0.0
    %3429 = vmatprep.subr.mxu0 0.0
    %3430 = vmatpush1.msra.mxu0 0.0
    %3431 = vmatprep.subr.mxu0 0.0
    %3432 = vmatpush1.msra.mxu0 0.0
    %3433 = vmatprep.subr.mxu0 0.0
    %3434 = vmatpush1.msra.mxu0 0.0
    %3435 = vmatprep.subr.mxu0 0.0
    %3436 = vmatpush1.msra.mxu0 0.0
    %3437 = vmatprep.subr.mxu0 0.0
    %3438 = vmatpush1.msra.mxu0 0.0
    %3439 = vmatprep.subr.mxu0 0.0
    %3440 = vmatpush1.msra.mxu0 0.0
    %3441 = vmatprep.mubr.f32.mxu0 0.0
    %3442 = vmatmul.mubr.f32.gmra.mrb[0].mxu0 %v1340
    %v3443 = vpop.f32.mrb[0].mxu0
    %v3444 = vadd.f32 %v3375, %v3443
    %v3445 = vpop.f32.mrb[0].mxu0
    %3446 = vdwg.mxu0
    %v3447 = vadd.f32 %v3365, %v3444
    %v3448 = vld [vmem:[%s101] sm:$0xf]
    %v3449 = vld [vmem:[#allocation41] sm:$0x1]
    %v3451 = vlaneseq
    %v3452 = vshrl.u32 %v3451, 7
    %v3453 = vsub.s32 0, %v3452
    %v3454 = vrot.slane %v3449, %v3453
    %v3457 = vsel %vm2826, %v3447, 0
    %v3460 = vsel %vm2830, %v3448, 0
    %3462 = vmatprep.subr.mxu0 0.0
    %3463 = vmatpush1.msra.mxu0 %v3460
    %3464 = vmatprep.subr.mxu0 0.0
    %3465 = vmatpush1.msra.mxu0 0.0
    %3466 = vmatprep.subr.mxu0 0.0
    %3467 = vmatpush1.msra.mxu0 0.0
    %3468 = vmatprep.subr.mxu0 0.0
    %3469 = vmatpush1.msra.mxu0 0.0
    %3470 = vmatprep.subr.mxu0 0.0
    %3471 = vmatpush1.msra.mxu0 0.0
    %3472 = vmatprep.subr.mxu0 0.0
    %3473 = vmatpush1.msra.mxu0 0.0
    %3474 = vmatprep.subr.mxu0 0.0
    %3475 = vmatpush1.msra.mxu0 0.0
    %3476 = vmatprep.subr.mxu0 0.0
    %3477 = vmatpush1.msra.mxu0 0.0
    %3478 = vmatprep.subr.mxu0 0.0
    %3479 = vmatpush1.msra.mxu0 0.0
    %3480 = vmatprep.subr.mxu0 0.0
    %3481 = vmatpush1.msra.mxu0 0.0
    %3482 = vmatprep.subr.mxu0 0.0
    %3483 = vmatpush1.msra.mxu0 0.0
    %3484 = vmatprep.subr.mxu0 0.0
    %3485 = vmatpush1.msra.mxu0 0.0
    %3486 = vmatprep.subr.mxu0 0.0
    %3487 = vmatpush1.msra.mxu0 0.0
    %3488 = vmatprep.subr.mxu0 0.0
    %3489 = vmatpush1.msra.mxu0 0.0
    %3490 = vmatprep.subr.mxu0 0.0
    %3491 = vmatpush1.msra.mxu0 0.0
    %3492 = vmatprep.subr.mxu0 0.0
    %3493 = vmatpush1.msra.mxu0 0.0
    %3494 = vmatprep.subr.mxu0 0.0
    %3495 = vmatpush1.msra.mxu0 0.0
    %3496 = vmatprep.subr.mxu0 0.0
    %3497 = vmatpush1.msra.mxu0 0.0
    %3498 = vmatprep.subr.mxu0 0.0
    %3499 = vmatpush1.msra.mxu0 0.0
    %3500 = vmatprep.subr.mxu0 0.0
    %3501 = vmatpush1.msra.mxu0 0.0
    %3502 = vmatprep.subr.mxu0 0.0
    %3503 = vmatpush1.msra.mxu0 0.0
    %3504 = vmatprep.subr.mxu0 0.0
    %3505 = vmatpush1.msra.mxu0 0.0
    %3506 = vmatprep.subr.mxu0 0.0
    %3507 = vmatpush1.msra.mxu0 0.0
    %3508 = vmatprep.subr.mxu0 0.0
    %3509 = vmatpush1.msra.mxu0 0.0
    %3510 = vmatprep.subr.mxu0 0.0
    %3511 = vmatpush1.msra.mxu0 0.0
    %3512 = vmatprep.subr.mxu0 0.0
    %3513 = vmatpush1.msra.mxu0 0.0
    %3514 = vmatprep.subr.mxu0 0.0
    %3515 = vmatpush1.msra.mxu0 0.0
    %3516 = vmatprep.subr.mxu0 0.0
    %3517 = vmatpush1.msra.mxu0 0.0
    %3518 = vmatprep.subr.mxu0 0.0
    %3519 = vmatpush1.msra.mxu0 0.0
    %3520 = vmatprep.subr.mxu0 0.0
    %3521 = vmatpush1.msra.mxu0 0.0
    %3522 = vmatprep.subr.mxu0 0.0
    %3523 = vmatpush1.msra.mxu0 0.0
    %3524 = vmatprep.subr.mxu0 0.0
    %3525 = vmatpush1.msra.mxu0 0.0
    %3526 = vmatprep.mubr.f32.mxu0 0.0
    %3527 = vmatmul.mubr.f32.gmra.mrb[0].mxu0 %v3457
    %v3528 = vpop.f32.mrb[0].mxu0
    %v3529 = vadd.f32 %v3454, %v3528
    %v3530 = vpop.f32.mrb[0].mxu0
    %3531 = vdwg.mxu0
    %v3532 = vmin.f32 %v3529, 20.0
    %v3533 = vmul.f32 %v3532, 1.442695
    %v3534 = vpow.pop %v3533
    %v3535 = vadd.f32 %v3534, 1.0
    %v3536 = vmul.f32 %v3535, %v3535
    %v3537 = vsub.f32 %v3536, 1.0
    %v3538 = vadd.f32 %v3536, 1.0
    %v3539 = vrcp.pop %v3538
    %v3540 = vmul.f32 %v3537, %v3539
    %vm3541 = vcmp.gt.f32.partialorder %v3529, 20.0
    %v3542 = vmul.f32 %v3529, %v3540
    %v3543 = vsel %vm3541, %v3529, %v3542
    %v3544 = vadd.f32 %v3543, %v3269
    %v3545 = vld [vmem:[%s111] sm:$0xf]
    %v3546 = vld [vmem:[#allocation44] sm:$0x1]
    %v3548 = vlaneseq
    %v3549 = vshrl.u32 %v3548, 7
    %v3550 = vsub.s32 0, %v3549
    %v3551 = vrot.slane %v3546, %v3550
    %v3554 = vsel %vm2826, %v3544, 0
    %v3557 = vsel %vm2830, %v3545, 0
    %3559 = vmatprep.subr.mxu0 0.0
    %3560 = vmatpush1.msra.mxu0 %v3557
    %3561 = vmatprep.subr.mxu0 0.0
    %3562 = vmatpush1.msra.mxu0 0.0
    %3563 = vmatprep.subr.mxu0 0.0
    %3564 = vmatpush1.msra.mxu0 0.0
    %3565 = vmatprep.subr.mxu0 0.0
    %3566 = vmatpush1.msra.mxu0 0.0
    %3567 = vmatprep.subr.mxu0 0.0
    %3568 = vmatpush1.msra.mxu0 0.0
    %3569 = vmatprep.subr.mxu0 0.0
    %3570 = vmatpush1.msra.mxu0 0.0
    %3571 = vmatprep.subr.mxu0 0.0
    %3572 = vmatpush1.msra.mxu0 0.0
    %3573 = vmatprep.subr.mxu0 0.0
    %3574 = vmatpush1.msra.mxu0 0.0
    %3575 = vmatprep.subr.mxu0 0.0
    %3576 = vmatpush1.msra.mxu0 0.0
    %3577 = vmatprep.subr.mxu0 0.0
    %3578 = vmatpush1.msra.mxu0 0.0
    %3579 = vmatprep.subr.mxu0 0.0
    %3580 = vmatpush1.msra.mxu0 0.0
    %3581 = vmatprep.subr.mxu0 0.0
    %3582 = vmatpush1.msra.mxu0 0.0
    %3583 = vmatprep.subr.mxu0 0.0
    %3584 = vmatpush1.msra.mxu0 0.0
    %3585 = vmatprep.subr.mxu0 0.0
    %3586 = vmatpush1.msra.mxu0 0.0
    %3587 = vmatprep.subr.mxu0 0.0
    %3588 = vmatpush1.msra.mxu0 0.0
    %3589 = vmatprep.subr.mxu0 0.0
    %3590 = vmatpush1.msra.mxu0 0.0
    %3591 = vmatprep.subr.mxu0 0.0
    %3592 = vmatpush1.msra.mxu0 0.0
    %3593 = vmatprep.subr.mxu0 0.0
    %3594 = vmatpush1.msra.mxu0 0.0
    %3595 = vmatprep.subr.mxu0 0.0
    %3596 = vmatpush1.msra.mxu0 0.0
    %3597 = vmatprep.subr.mxu0 0.0
    %3598 = vmatpush1.msra.mxu0 0.0
    %3599 = vmatprep.subr.mxu0 0.0
    %3600 = vmatpush1.msra.mxu0 0.0
    %3601 = vmatprep.subr.mxu0 0.0
    %3602 = vmatpush1.msra.mxu0 0.0
    %3603 = vmatprep.subr.mxu0 0.0
    %3604 = vmatpush1.msra.mxu0 0.0
    %3605 = vmatprep.subr.mxu0 0.0
    %3606 = vmatpush1.msra.mxu0 0.0
    %3607 = vmatprep.subr.mxu0 0.0
    %3608 = vmatpush1.msra.mxu0 0.0
    %3609 = vmatprep.subr.mxu0 0.0
    %3610 = vmatpush1.msra.mxu0 0.0
    %3611 = vmatprep.subr.mxu0 0.0
    %3612 = vmatpush1.msra.mxu0 0.0
    %3613 = vmatprep.subr.mxu0 0.0
    %3614 = vmatpush1.msra.mxu0 0.0
    %3615 = vmatprep.subr.mxu0 0.0
    %3616 = vmatpush1.msra.mxu0 0.0
    %3617 = vmatprep.subr.mxu0 0.0
    %3618 = vmatpush1.msra.mxu0 0.0
    %3619 = vmatprep.subr.mxu0 0.0
    %3620 = vmatpush1.msra.mxu0 0.0
    %3621 = vmatprep.subr.mxu0 0.0
    %3622 = vmatpush1.msra.mxu0 0.0
    %3623 = vmatprep.mubr.f32.mxu0 0.0
    %3624 = vmatmul.mubr.f32.gmra.mrb[0].mxu0 %v3554
    %v3625 = vpop.f32.mrb[0].mxu0
    %v3626 = vadd.f32 %v3551, %v3625
    %v3627 = vpop.f32.mrb[0].mxu0
    %3628 = vdwg.mxu0
    %v3629 = vmin.f32 %v3626, 20.0
    %v3630 = vmul.f32 %v3629, 1.442695
    %v3631 = vpow.pop %v3630
    %v3632 = vadd.f32 %v3631, 1.0
    %v3633 = vmul.f32 %v3632, %v3632
    %v3634 = vsub.f32 %v3633, 1.0
    %v3635 = vadd.f32 %v3633, 1.0
    %v3636 = vrcp.pop %v3635
    %v3637 = vmul.f32 %v3634, %v3636
    %vm3638 = vcmp.gt.f32.partialorder %v3626, 20.0
    %v3639 = vmul.f32 %v3626, %v3637
    %v3640 = vsel %vm3638, %v3626, %v3639
    %v3641 = vld [vmem:[%s115] sm:$0xff]
    %v3642 = vld [vmem:[%s115 + $0x8] sm:$0xff]
    %v3643 = vld [vmem:[%s115 + $0x10] sm:$0xff]
    %v3644 = vld [vmem:[%s115 + $0x18] sm:$0xff]
    %v3645 = vld [vmem:[#allocation47] sm:$0x1]
    %v3647 = vlaneseq
    %v3648 = vshrl.u32 %v3647, 7
    %v3649 = vsub.s32 0, %v3648
    %v3650 = vrot.slane %v3645, %v3649
    %3652 = vmatprep.subr.mxu0 0.0
    %3653 = vmatpush1.msra.mxu0 %v3641
    %3654 = vmatprep.subr.mxu0 0.0
    %3655 = vmatpush1.msra.mxu0 %v3642
    %3656 = vmatprep.subr.mxu0 0.0
    %3657 = vmatpush1.msra.mxu0 %v3643
    %3658 = vmatprep.subr.mxu0 0.0
    %3659 = vmatpush1.msra.mxu0 %v3644
    %3660 = vmatprep.subr.mxu0 0.0
    %3661 = vmatpush1.msra.mxu0 0.0
    %3662 = vmatprep.subr.mxu0 0.0
    %3663 = vmatpush1.msra.mxu0 0.0
    %3664 = vmatprep.subr.mxu0 0.0
    %3665 = vmatpush1.msra.mxu0 0.0
    %3666 = vmatprep.subr.mxu0 0.0
    %3667 = vmatpush1.msra.mxu0 0.0
    %3668 = vmatprep.subr.mxu0 0.0
    %3669 = vmatpush1.msra.mxu0 0.0
    %3670 = vmatprep.subr.mxu0 0.0
    %3671 = vmatpush1.msra.mxu0 0.0
    %3672 = vmatprep.subr.mxu0 0.0
    %3673 = vmatpush1.msra.mxu0 0.0
    %3674 = vmatprep.subr.mxu0 0.0
    %3675 = vmatpush1.msra.mxu0 0.0
    %3676 = vmatprep.subr.mxu0 0.0
    %3677 = vmatpush1.msra.mxu0 0.0
    %3678 = vmatprep.subr.mxu0 0.0
    %3679 = vmatpush1.msra.mxu0 0.0
    %3680 = vmatprep.subr.mxu0 0.0
    %3681 = vmatpush1.msra.mxu0 0.0
    %3682 = vmatprep.subr.mxu0 0.0
    %3683 = vmatpush1.msra.mxu0 0.0
    %3684 = vmatprep.subr.mxu0 0.0
    %3685 = vmatpush1.msra.mxu0 0.0
    %3686 = vmatprep.subr.mxu0 0.0
    %3687 = vmatpush1.msra.mxu0 0.0
    %3688 = vmatprep.subr.mxu0 0.0
    %3689 = vmatpush1.msra.mxu0 0.0
    %3690 = vmatprep.subr.mxu0 0.0
    %3691 = vmatpush1.msra.mxu0 0.0
    %3692 = vmatprep.subr.mxu0 0.0
    %3693 = vmatpush1.msra.mxu0 0.0
    %3694 = vmatprep.subr.mxu0 0.0
    %3695 = vmatpush1.msra.mxu0 0.0
    %3696 = vmatprep.subr.mxu0 0.0
    %3697 = vmatpush1.msra.mxu0 0.0
    %3698 = vmatprep.subr.mxu0 0.0
    %3699 = vmatpush1.msra.mxu0 0.0
    %3700 = vmatprep.subr.mxu0 0.0
    %3701 = vmatpush1.msra.mxu0 0.0
    %3702 = vmatprep.subr.mxu0 0.0
    %3703 = vmatpush1.msra.mxu0 0.0
    %3704 = vmatprep.subr.mxu0 0.0
    %3705 = vmatpush1.msra.mxu0 0.0
    %3706 = vmatprep.subr.mxu0 0.0
    %3707 = vmatpush1.msra.mxu0 0.0
    %3708 = vmatprep.subr.mxu0 0.0
    %3709 = vmatpush1.msra.mxu0 0.0
    %3710 = vmatprep.subr.mxu0 0.0
    %3711 = vmatpush1.msra.mxu0 0.0
    %3712 = vmatprep.subr.mxu0 0.0
    %3713 = vmatpush1.msra.mxu0 0.0
    %3714 = vmatprep.subr.mxu0 0.0
    %3715 = vmatpush1.msra.mxu0 0.0
    %3716 = vmatprep.mubr.f32.mxu0 0.0
    %3717 = vmatmul.mubr.f32.gmra.mrb[0].mxu0 %v1340
    %v3718 = vpop.f32.mrb[0].mxu0
    %v3719 = vadd.f32 %v3650, %v3718
    %v3720 = vpop.f32.mrb[0].mxu0
    %3721 = vdwg.mxu0
    %v3722 = vadd.f32 %v3640, %v3719
    %v3723 = vld [vmem:[#allocation48] sm:$0xf]
    %v3724 = vld [vmem:[#allocation45] sm:$0x1]
    %v3726 = vlaneseq
    %v3727 = vshrl.u32 %v3726, 7
    %v3728 = vsub.s32 0, %v3727
    %v3729 = vrot.slane %v3724, %v3728
    %v3732 = vsel %vm2826, %v3722, 0
    %v3735 = vsel %vm2830, %v3723, 0
    %3737 = vmatprep.subr.mxu0 0.0
    %3738 = vmatpush1.msra.mxu0 %v3735
    %3739 = vmatprep.subr.mxu0 0.0
    %3740 = vmatpush1.msra.mxu0 0.0
    %3741 = vmatprep.subr.mxu0 0.0
    %3742 = vmatpush1.msra.mxu0 0.0
    %3743 = vmatprep.subr.mxu0 0.0
    %3744 = vmatpush1.msra.mxu0 0.0
    %3745 = vmatprep.subr.mxu0 0.0
    %3746 = vmatpush1.msra.mxu0 0.0
    %3747 = vmatprep.subr.mxu0 0.0
    %3748 = vmatpush1.msra.mxu0 0.0
    %3749 = vmatprep.subr.mxu0 0.0
    %3750 = vmatpush1.msra.mxu0 0.0
    %3751 = vmatprep.subr.mxu0 0.0
    %3752 = vmatpush1.msra.mxu0 0.0
    %3753 = vmatprep.subr.mxu0 0.0
    %3754 = vmatpush1.msra.mxu0 0.0
    %3755 = vmatprep.subr.mxu0 0.0
    %3756 = vmatpush1.msra.mxu0 0.0
    %3757 = vmatprep.subr.mxu0 0.0
    %3758 = vmatpush1.msra.mxu0 0.0
    %3759 = vmatprep.subr.mxu0 0.0
    %3760 = vmatpush1.msra.mxu0 0.0
    %3761 = vmatprep.subr.mxu0 0.0
    %3762 = vmatpush1.msra.mxu0 0.0
    %3763 = vmatprep.subr.mxu0 0.0
    %3764 = vmatpush1.msra.mxu0 0.0
    %3765 = vmatprep.subr.mxu0 0.0
    %3766 = vmatpush1.msra.mxu0 0.0
    %3767 = vmatprep.subr.mxu0 0.0
    %3768 = vmatpush1.msra.mxu0 0.0
    %3769 = vmatprep.subr.mxu0 0.0
    %3770 = vmatpush1.msra.mxu0 0.0
    %3771 = vmatprep.subr.mxu0 0.0
    %3772 = vmatpush1.msra.mxu0 0.0
    %3773 = vmatprep.subr.mxu0 0.0
    %3774 = vmatpush1.msra.mxu0 0.0
    %3775 = vmatprep.subr.mxu0 0.0
    %3776 = vmatpush1.msra.mxu0 0.0
    %3777 = vmatprep.subr.mxu0 0.0
    %3778 = vmatpush1.msra.mxu0 0.0
    %3779 = vmatprep.subr.mxu0 0.0
    %3780 = vmatpush1.msra.mxu0 0.0
    %3781 = vmatprep.subr.mxu0 0.0
    %3782 = vmatpush1.msra.mxu0 0.0
    %3783 = vmatprep.subr.mxu0 0.0
    %3784 = vmatpush1.msra.mxu0 0.0
    %3785 = vmatprep.subr.mxu0 0.0
    %3786 = vmatpush1.msra.mxu0 0.0
    %3787 = vmatprep.subr.mxu0 0.0
    %3788 = vmatpush1.msra.mxu0 0.0
    %3789 = vmatprep.subr.mxu0 0.0
    %3790 = vmatpush1.msra.mxu0 0.0
    %3791 = vmatprep.subr.mxu0 0.0
    %3792 = vmatpush1.msra.mxu0 0.0
    %3793 = vmatprep.subr.mxu0 0.0
    %3794 = vmatpush1.msra.mxu0 0.0
    %3795 = vmatprep.subr.mxu0 0.0
    %3796 = vmatpush1.msra.mxu0 0.0
    %3797 = vmatprep.subr.mxu0 0.0
    %3798 = vmatpush1.msra.mxu0 0.0
    %3799 = vmatprep.subr.mxu0 0.0
    %3800 = vmatpush1.msra.mxu0 0.0
    %3801 = vmatprep.mubr.f32.mxu0 0.0
    %3802 = vmatmul.mubr.f32.gmra.mrb[0].mxu0 %v3732
    %v3803 = vpop.f32.mrb[0].mxu0
    %v3804 = vadd.f32 %v3729, %v3803
    %v3805 = vpop.f32.mrb[0].mxu0
    %3806 = vdwg.mxu0
    %v3807 = vmin.f32 %v3804, 20.0
    %v3808 = vmul.f32 %v3807, 1.442695
    %v3809 = vpow.pop %v3808
    %v3810 = vadd.f32 %v3809, 1.0
    %v3811 = vmul.f32 %v3810, %v3810
    %v3812 = vsub.f32 %v3811, 1.0
    %v3813 = vadd.f32 %v3811, 1.0
    %v3814 = vrcp.pop %v3813
    %v3815 = vmul.f32 %v3812, %v3814
    %vm3816 = vcmp.gt.f32.partialorder %v3804, 20.0
    %v3817 = vmul.f32 %v3804, %v3815
    %v3818 = vsel %vm3816, %v3804, %v3817
    %v3819 = vadd.f32 %v3818, %v3544
    %v3820 = vlaneseq
    %v3821 = vshrl.u32 %v3820, 7
    %v3822 = vlaneseq
    %v3823 = vand.u32 %v3822, 127
    %vm3824 = vcmp.eq.s32.totalorder %v3823, %v3821
    %v3825 = vsel %vm3824, 1, 0
    %v3826 = vcvt.s32.f32 %v3825
    %v3827 = vadd.s32 %v3821, 4
    %vm3828 = vcmp.eq.s32.totalorder %v3823, %v3827
    %v3829 = vsel %vm3828, 1, 0
    %v3830 = vcvt.s32.f32 %v3829
    %v3832 = vsel %vm2830, %v3830, 0
    %3834 = vmatprep.subr.mxu0 0.0
    %3835 = vmatpush1.msra.mxu0 %v3832
    %3836 = vmatprep.subr.mxu0 0.0
    %3837 = vmatpush1.msra.mxu0 0.0
    %3838 = vmatprep.subr.mxu0 0.0
    %3839 = vmatpush1.msra.mxu0 0.0
    %3840 = vmatprep.subr.mxu0 0.0
    %3841 = vmatpush1.msra.mxu0 0.0
    %3842 = vmatprep.subr.mxu0 0.0
    %3843 = vmatpush1.msra.mxu0 0.0
    %3844 = vmatprep.subr.mxu0 0.0
    %3845 = vmatpush1.msra.mxu0 0.0
    %3846 = vmatprep.subr.mxu0 0.0
    %3847 = vmatpush1.msra.mxu0 0.0
    %3848 = vmatprep.subr.mxu0 0.0
    %3849 = vmatpush1.msra.mxu0 0.0
    %3850 = vmatprep.subr.mxu0 0.0
    %3851 = vmatpush1.msra.mxu0 0.0
    %3852 = vmatprep.subr.mxu0 0.0
    %3853 = vmatpush1.msra.mxu0 0.0
    %3854 = vmatprep.subr.mxu0 0.0
    %3855 = vmatpush1.msra.mxu0 0.0
    %3856 = vmatprep.subr.mxu0 0.0
    %3857 = vmatpush1.msra.mxu0 0.0
    %3858 = vmatprep.subr.mxu0 0.0
    %3859 = vmatpush1.msra.mxu0 0.0
    %3860 = vmatprep.subr.mxu0 0.0
    %3861 = vmatpush1.msra.mxu0 0.0
    %3862 = vmatprep.subr.mxu0 0.0
    %3863 = vmatpush1.msra.mxu0 0.0
    %3864 = vmatprep.subr.mxu0 0.0
    %3865 = vmatpush1.msra.mxu0 0.0
    %3866 = vmatprep.subr.mxu0 0.0
    %3867 = vmatpush1.msra.mxu0 0.0
    %3868 = vmatprep.subr.mxu0 0.0
    %3869 = vmatpush1.msra.mxu0 0.0
    %3870 = vmatprep.subr.mxu0 0.0
    %3871 = vmatpush1.msra.mxu0 0.0
    %3872 = vmatprep.subr.mxu0 0.0
    %3873 = vmatpush1.msra.mxu0 0.0
    %3874 = vmatprep.subr.mxu0 0.0
    %3875 = vmatpush1.msra.mxu0 0.0
    %3876 = vmatprep.subr.mxu0 0.0
    %3877 = vmatpush1.msra.mxu0 0.0
    %3878 = vmatprep.subr.mxu0 0.0
    %3879 = vmatpush1.msra.mxu0 0.0
    %3880 = vmatprep.subr.mxu0 0.0
    %3881 = vmatpush1.msra.mxu0 0.0
    %3882 = vmatprep.subr.mxu0 0.0
    %3883 = vmatpush1.msra.mxu0 0.0
    %3884 = vmatprep.subr.mxu0 0.0
    %3885 = vmatpush1.msra.mxu0 0.0
    %3886 = vmatprep.subr.mxu0 0.0
    %3887 = vmatpush1.msra.mxu0 0.0
    %3888 = vmatprep.subr.mxu0 0.0
    %3889 = vmatpush1.msra.mxu0 0.0
    %3890 = vmatprep.subr.mxu0 0.0
    %3891 = vmatpush1.msra.mxu0 0.0
    %3892 = vmatprep.subr.mxu0 0.0
    %3893 = vmatpush1.msra.mxu0 0.0
    %3894 = vmatprep.subr.mxu0 0.0
    %3895 = vmatpush1.msra.mxu0 0.0
    %3896 = vmatprep.subr.mxu0 0.0
    %3897 = vmatpush1.msra.mxu0 0.0
    %3898 = vmatprep.mubr.f32.mxu0 0.0
    %3899 = vmatmul.mubr.f32.gmra.mrb[0].mxu0 %v3279
    %v3900 = vpop.f32.mrb[0].mxu0
    %v3901 = vadd.f32 0.0, %v3900
    %v3902 = vpop.f32.mrb[0].mxu0
    %3903 = vdwg.mxu0
    %v3905 = vsel %vm2826, %v3819, 0
    %v3908 = vsel %vm2830, %v3826, 0
    %3910 = vmatprep.subr.mxu0 0.0
    %3911 = vmatpush1.msra.mxu0 %v3908
    %3912 = vmatprep.subr.mxu0 0.0
    %3913 = vmatpush1.msra.mxu0 0.0
    %3914 = vmatprep.subr.mxu0 0.0
    %3915 = vmatpush1.msra.mxu0 0.0
    %3916 = vmatprep.subr.mxu0 0.0
    %3917 = vmatpush1.msra.mxu0 0.0
    %3918 = vmatprep.subr.mxu0 0.0
    %3919 = vmatpush1.msra.mxu0 0.0
    %3920 = vmatprep.subr.mxu0 0.0
    %3921 = vmatpush1.msra.mxu0 0.0
    %3922 = vmatprep.subr.mxu0 0.0
    %3923 = vmatpush1.msra.mxu0 0.0
    %3924 = vmatprep.subr.mxu0 0.0
    %3925 = vmatpush1.msra.mxu0 0.0
    %3926 = vmatprep.subr.mxu0 0.0
    %3927 = vmatpush1.msra.mxu0 0.0
    %3928 = vmatprep.subr.mxu0 0.0
    %3929 = vmatpush1.msra.mxu0 0.0
    %3930 = vmatprep.subr.mxu0 0.0
    %3931 = vmatpush1.msra.mxu0 0.0
    %3932 = vmatprep.subr.mxu0 0.0
    %3933 = vmatpush1.msra.mxu0 0.0
    %3934 = vmatprep.subr.mxu0 0.0
    %3935 = vmatpush1.msra.mxu0 0.0
    %3936 = vmatprep.subr.mxu0 0.0
    %3937 = vmatpush1.msra.mxu0 0.0
    %3938 = vmatprep.subr.mxu0 0.0
    %3939 = vmatpush1.msra.mxu0 0.0
    %3940 = vmatprep.subr.mxu0 0.0
    %3941 = vmatpush1.msra.mxu0 0.0
    %3942 = vmatprep.subr.mxu0 0.0
    %3943 = vmatpush1.msra.mxu0 0.0
    %3944 = vmatprep.subr.mxu0 0.0
    %3945 = vmatpush1.msra.mxu0 0.0
    %3946 = vmatprep.subr.mxu0 0.0
    %3947 = vmatpush1.msra.mxu0 0.0
    %3948 = vmatprep.subr.mxu0 0.0
    %3949 = vmatpush1.msra.mxu0 0.0
    %3950 = vmatprep.subr.mxu0 0.0
    %3951 = vmatpush1.msra.mxu0 0.0
    %3952 = vmatprep.subr.mxu0 0.0
    %3953 = vmatpush1.msra.mxu0 0.0
    %3954 = vmatprep.subr.mxu0 0.0
    %3955 = vmatpush1.msra.mxu0 0.0
    %3956 = vmatprep.subr.mxu0 0.0
    %3957 = vmatpush1.msra.mxu0 0.0
    %3958 = vmatprep.subr.mxu0 0.0
    %3959 = vmatpush1.msra.mxu0 0.0
    %3960 = vmatprep.subr.mxu0 0.0
    %3961 = vmatpush1.msra.mxu0 0.0
    %3962 = vmatprep.subr.mxu0 0.0
    %3963 = vmatpush1.msra.mxu0 0.0
    %3964 = vmatprep.subr.mxu0 0.0
    %3965 = vmatpush1.msra.mxu0 0.0
    %3966 = vmatprep.subr.mxu0 0.0
    %3967 = vmatpush1.msra.mxu0 0.0
    %3968 = vmatprep.subr.mxu0 0.0
    %3969 = vmatpush1.msra.mxu0 0.0
    %3970 = vmatprep.subr.mxu0 0.0
    %3971 = vmatpush1.msra.mxu0 0.0
    %3972 = vmatprep.subr.mxu0 0.0
    %3973 = vmatpush1.msra.mxu0 0.0
    %3974 = vmatprep.mubr.f32.mxu0 0.0
    %3975 = vmatmul.mubr.f32.gmra.mrb[0].mxu0 %v3905
    %v3976 = vpop.f32.mrb[0].mxu0
    %v3977 = vadd.f32 %v3901, %v3976
    %v3978 = vpop.f32.mrb[0].mxu0
    %3979 = vdwg.mxu0
    %v3980 = vld [vmem:[%s131] sm:$0xff]
    %v3981 = vld [vmem:[#allocation53] sm:$0x1]
    %v3983 = vlaneseq
    %v3984 = vshrl.u32 %v3983, 7
    %v3985 = vsub.s32 0, %v3984
    %v3986 = vrot.slane %v3981, %v3985
    %v3989 = vsel %vm2127, %v3977, 0
    %3991 = vmatprep.subr.mxu0 0.0
    %3992 = vmatpush1.msra.mxu0 %v3980
    %3993 = vmatprep.subr.mxu0 0.0
    %3994 = vmatpush1.msra.mxu0 0.0
    %3995 = vmatprep.subr.mxu0 0.0
    %3996 = vmatpush1.msra.mxu0 0.0
    %3997 = vmatprep.subr.mxu0 0.0
    %3998 = vmatpush1.msra.mxu0 0.0
    %3999 = vmatprep.subr.mxu0 0.0
    %4000 = vmatpush1.msra.mxu0 0.0
    %4001 = vmatprep.subr.mxu0 0.0
    %4002 = vmatpush1.msra.mxu0 0.0
    %4003 = vmatprep.subr.mxu0 0.0
    %4004 = vmatpush1.msra.mxu0 0.0
    %4005 = vmatprep.subr.mxu0 0.0
    %4006 = vmatpush1.msra.mxu0 0.0
    %4007 = vmatprep.subr.mxu0 0.0
    %4008 = vmatpush1.msra.mxu0 0.0
    %4009 = vmatprep.subr.mxu0 0.0
    %4010 = vmatpush1.msra.mxu0 0.0
    %4011 = vmatprep.subr.mxu0 0.0
    %4012 = vmatpush1.msra.mxu0 0.0
    %4013 = vmatprep.subr.mxu0 0.0
    %4014 = vmatpush1.msra.mxu0 0.0
    %4015 = vmatprep.subr.mxu0 0.0
    %4016 = vmatpush1.msra.mxu0 0.0
    %4017 = vmatprep.subr.mxu0 0.0
    %4018 = vmatpush1.msra.mxu0 0.0
    %4019 = vmatprep.subr.mxu0 0.0
    %4020 = vmatpush1.msra.mxu0 0.0
    %4021 = vmatprep.subr.mxu0 0.0
    %4022 = vmatpush1.msra.mxu0 0.0
    %4023 = vmatprep.subr.mxu0 0.0
    %4024 = vmatpush1.msra.mxu0 0.0
    %4025 = vmatprep.subr.mxu0 0.0
    %4026 = vmatpush1.msra.mxu0 0.0
    %4027 = vmatprep.subr.mxu0 0.0
    %4028 = vmatpush1.msra.mxu0 0.0
    %4029 = vmatprep.subr.mxu0 0.0
    %4030 = vmatpush1.msra.mxu0 0.0
    %4031 = vmatprep.subr.mxu0 0.0
    %4032 = vmatpush1.msra.mxu0 0.0
    %4033 = vmatprep.subr.mxu0 0.0
    %4034 = vmatpush1.msra.mxu0 0.0
    %4035 = vmatprep.subr.mxu0 0.0
    %4036 = vmatpush1.msra.mxu0 0.0
    %4037 = vmatprep.subr.mxu0 0.0
    %4038 = vmatpush1.msra.mxu0 0.0
    %4039 = vmatprep.subr.mxu0 0.0
    %4040 = vmatpush1.msra.mxu0 0.0
    %4041 = vmatprep.subr.mxu0 0.0
    %4042 = vmatpush1.msra.mxu0 0.0
    %4043 = vmatprep.subr.mxu0 0.0
    %4044 = vmatpush1.msra.mxu0 0.0
    %4045 = vmatprep.subr.mxu0 0.0
    %4046 = vmatpush1.msra.mxu0 0.0
    %4047 = vmatprep.subr.mxu0 0.0
    %4048 = vmatpush1.msra.mxu0 0.0
    %4049 = vmatprep.subr.mxu0 0.0
    %4050 = vmatpush1.msra.mxu0 0.0
    %4051 = vmatprep.subr.mxu0 0.0
    %4052 = vmatpush1.msra.mxu0 0.0
    %4053 = vmatprep.subr.mxu0 0.0
    %4054 = vmatpush1.msra.mxu0 0.0
    %4055 = vmatprep.mubr.f32.mxu0 0.0
    %4056 = vmatmul.mubr.f32.gmra.mrb[0].mxu0 %v3989
    %v4057 = vpop.f32.mrb[0].mxu0
    %v4058 = vadd.f32 %v3986, %v4057
    %v4059 = vpop.f32.mrb[0].mxu0
    %4060 = vdwg.mxu0
    %v4061 = vmin.f32 %v4058, 20.0
    %v4062 = vmul.f32 %v4061, 1.442695
    %v4063 = vpow.pop %v4062
    %v4064 = vadd.f32 %v4063, 1.0
    %v4065 = vmul.f32 %v4064, %v4064
    %v4066 = vsub.f32 %v4065, 1.0
    %v4067 = vadd.f32 %v4065, 1.0
    %v4068 = vrcp.pop %v4067
    %v4069 = vmul.f32 %v4066, %v4068
    %vm4070 = vcmp.gt.f32.partialorder %v4058, 20.0
    %v4071 = vmul.f32 %v4058, %v4069
    %v4072 = vsel %vm4070, %v4058, %v4071
    %v4073 = vld [vmem:[%s135] sm:$0xff]
    %v4074 = vld [vmem:[%s135 + $0x8] sm:$0xff]
    %v4075 = vld [vmem:[%s135 + $0x10] sm:$0xff]
    %v4076 = vld [vmem:[%s135 + $0x18] sm:$0xff]
    %v4077 = vld [vmem:[#allocation56] sm:$0x1]
    %v4079 = vlaneseq
    %v4080 = vshrl.u32 %v4079, 7
    %v4081 = vsub.s32 0, %v4080
    %v4082 = vrot.slane %v4077, %v4081
    %4084 = vmatprep.subr.mxu0 0.0
    %4085 = vmatpush1.msra.mxu0 %v4073
    %4086 = vmatprep.subr.mxu0 0.0
    %4087 = vmatpush1.msra.mxu0 %v4074
    %4088 = vmatprep.subr.mxu0 0.0
    %4089 = vmatpush1.msra.mxu0 %v4075
    %4090 = vmatprep.subr.mxu0 0.0
    %4091 = vmatpush1.msra.mxu0 %v4076
    %4092 = vmatprep.subr.mxu0 0.0
    %4093 = vmatpush1.msra.mxu0 0.0
    %4094 = vmatprep.subr.mxu0 0.0
    %4095 = vmatpush1.msra.mxu0 0.0
    %4096 = vmatprep.subr.mxu0 0.0
    %4097 = vmatpush1.msra.mxu0 0.0
    %4098 = vmatprep.subr.mxu0 0.0
    %4099 = vmatpush1.msra.mxu0 0.0
    %4100 = vmatprep.subr.mxu0 0.0
    %4101 = vmatpush1.msra.mxu0 0.0
    %4102 = vmatprep.subr.mxu0 0.0
    %4103 = vmatpush1.msra.mxu0 0.0
    %4104 = vmatprep.subr.mxu0 0.0
    %4105 = vmatpush1.msra.mxu0 0.0
    %4106 = vmatprep.subr.mxu0 0.0
    %4107 = vmatpush1.msra.mxu0 0.0
    %4108 = vmatprep.subr.mxu0 0.0
    %4109 = vmatpush1.msra.mxu0 0.0
    %4110 = vmatprep.subr.mxu0 0.0
    %4111 = vmatpush1.msra.mxu0 0.0
    %4112 = vmatprep.subr.mxu0 0.0
    %4113 = vmatpush1.msra.mxu0 0.0
    %4114 = vmatprep.subr.mxu0 0.0
    %4115 = vmatpush1.msra.mxu0 0.0
    %4116 = vmatprep.subr.mxu0 0.0
    %4117 = vmatpush1.msra.mxu0 0.0
    %4118 = vmatprep.subr.mxu0 0.0
    %4119 = vmatpush1.msra.mxu0 0.0
    %4120 = vmatprep.subr.mxu0 0.0
    %4121 = vmatpush1.msra.mxu0 0.0
    %4122 = vmatprep.subr.mxu0 0.0
    %4123 = vmatpush1.msra.mxu0 0.0
    %4124 = vmatprep.subr.mxu0 0.0
    %4125 = vmatpush1.msra.mxu0 0.0
    %4126 = vmatprep.subr.mxu0 0.0
    %4127 = vmatpush1.msra.mxu0 0.0
    %4128 = vmatprep.subr.mxu0 0.0
    %4129 = vmatpush1.msra.mxu0 0.0
    %4130 = vmatprep.subr.mxu0 0.0
    %4131 = vmatpush1.msra.mxu0 0.0
    %4132 = vmatprep.subr.mxu0 0.0
    %4133 = vmatpush1.msra.mxu0 0.0
    %4134 = vmatprep.subr.mxu0 0.0
    %4135 = vmatpush1.msra.mxu0 0.0
    %4136 = vmatprep.subr.mxu0 0.0
    %4137 = vmatpush1.msra.mxu0 0.0
    %4138 = vmatprep.subr.mxu0 0.0
    %4139 = vmatpush1.msra.mxu0 0.0
    %4140 = vmatprep.subr.mxu0 0.0
    %4141 = vmatpush1.msra.mxu0 0.0
    %4142 = vmatprep.subr.mxu0 0.0
    %4143 = vmatpush1.msra.mxu0 0.0
    %4144 = vmatprep.subr.mxu0 0.0
    %4145 = vmatpush1.msra.mxu0 0.0
    %4146 = vmatprep.subr.mxu0 0.0
    %4147 = vmatpush1.msra.mxu0 0.0
    %4148 = vmatprep.mubr.f32.mxu0 0.0
    %4149 = vmatmul.mubr.f32.gmra.mrb[0].mxu0 %v1340
    %v4150 = vpop.f32.mrb[0].mxu0
    %v4151 = vadd.f32 %v4082, %v4150
    %v4152 = vpop.f32.mrb[0].mxu0
    %4153 = vdwg.mxu0
    %v4154 = vadd.f32 %v4072, %v4151
    %v4155 = vld [vmem:[%s133] sm:$0xff]
    %v4156 = vld [vmem:[#allocation54] sm:$0x1]
    %v4158 = vlaneseq
    %v4159 = vshrl.u32 %v4158, 7
    %v4160 = vsub.s32 0, %v4159
    %v4161 = vrot.slane %v4156, %v4160
    %v4164 = vsel %vm2127, %v4154, 0
    %4166 = vmatprep.subr.mxu0 0.0
    %4167 = vmatpush1.msra.mxu0 %v4155
    %4168 = vmatprep.subr.mxu0 0.0
    %4169 = vmatpush1.msra.mxu0 0.0
    %4170 = vmatprep.subr.mxu0 0.0
    %4171 = vmatpush1.msra.mxu0 0.0
    %4172 = vmatprep.subr.mxu0 0.0
    %4173 = vmatpush1.msra.mxu0 0.0
    %4174 = vmatprep.subr.mxu0 0.0
    %4175 = vmatpush1.msra.mxu0 0.0
    %4176 = vmatprep.subr.mxu0 0.0
    %4177 = vmatpush1.msra.mxu0 0.0
    %4178 = vmatprep.subr.mxu0 0.0
    %4179 = vmatpush1.msra.mxu0 0.0
    %4180 = vmatprep.subr.mxu0 0.0
    %4181 = vmatpush1.msra.mxu0 0.0
    %4182 = vmatprep.subr.mxu0 0.0
    %4183 = vmatpush1.msra.mxu0 0.0
    %4184 = vmatprep.subr.mxu0 0.0
    %4185 = vmatpush1.msra.mxu0 0.0
    %4186 = vmatprep.subr.mxu0 0.0
    %4187 = vmatpush1.msra.mxu0 0.0
    %4188 = vmatprep.subr.mxu0 0.0
    %4189 = vmatpush1.msra.mxu0 0.0
    %4190 = vmatprep.subr.mxu0 0.0
    %4191 = vmatpush1.msra.mxu0 0.0
    %4192 = vmatprep.subr.mxu0 0.0
    %4193 = vmatpush1.msra.mxu0 0.0
    %4194 = vmatprep.subr.mxu0 0.0
    %4195 = vmatpush1.msra.mxu0 0.0
    %4196 = vmatprep.subr.mxu0 0.0
    %4197 = vmatpush1.msra.mxu0 0.0
    %4198 = vmatprep.subr.mxu0 0.0
    %4199 = vmatpush1.msra.mxu0 0.0
    %4200 = vmatprep.subr.mxu0 0.0
    %4201 = vmatpush1.msra.mxu0 0.0
    %4202 = vmatprep.subr.mxu0 0.0
    %4203 = vmatpush1.msra.mxu0 0.0
    %4204 = vmatprep.subr.mxu0 0.0
    %4205 = vmatpush1.msra.mxu0 0.0
    %4206 = vmatprep.subr.mxu0 0.0
    %4207 = vmatpush1.msra.mxu0 0.0
    %4208 = vmatprep.subr.mxu0 0.0
    %4209 = vmatpush1.msra.mxu0 0.0
    %4210 = vmatprep.subr.mxu0 0.0
    %4211 = vmatpush1.msra.mxu0 0.0
    %4212 = vmatprep.subr.mxu0 0.0
    %4213 = vmatpush1.msra.mxu0 0.0
    %4214 = vmatprep.subr.mxu0 0.0
    %4215 = vmatpush1.msra.mxu0 0.0
    %4216 = vmatprep.subr.mxu0 0.0
    %4217 = vmatpush1.msra.mxu0 0.0
    %4218 = vmatprep.subr.mxu0 0.0
    %4219 = vmatpush1.msra.mxu0 0.0
    %4220 = vmatprep.subr.mxu0 0.0
    %4221 = vmatpush1.msra.mxu0 0.0
    %4222 = vmatprep.subr.mxu0 0.0
    %4223 = vmatpush1.msra.mxu0 0.0
    %4224 = vmatprep.subr.mxu0 0.0
    %4225 = vmatpush1.msra.mxu0 0.0
    %4226 = vmatprep.subr.mxu0 0.0
    %4227 = vmatpush1.msra.mxu0 0.0
    %4228 = vmatprep.subr.mxu0 0.0
    %4229 = vmatpush1.msra.mxu0 0.0
    %4230 = vmatprep.mubr.f32.mxu0 0.0
    %4231 = vmatmul.mubr.f32.gmra.mrb[0].mxu0 %v4164
    %v4232 = vpop.f32.mrb[0].mxu0
    %v4233 = vadd.f32 %v4161, %v4232
    %v4234 = vpop.f32.mrb[0].mxu0
    %4235 = vdwg.mxu0
    %v4236 = vmin.f32 %v4233, 20.0
    %v4237 = vmul.f32 %v4236, 1.442695
    %v4238 = vpow.pop %v4237
    %v4239 = vadd.f32 %v4238, 1.0
    %v4240 = vmul.f32 %v4239, %v4239
    %v4241 = vsub.f32 %v4240, 1.0
    %v4242 = vadd.f32 %v4240, 1.0
    %v4243 = vrcp.pop %v4242
    %v4244 = vmul.f32 %v4241, %v4243
    %vm4245 = vcmp.gt.f32.partialorder %v4233, 20.0
    %v4246 = vmul.f32 %v4233, %v4244
    %v4247 = vsel %vm4245, %v4233, %v4246
    %v4248 = vadd.f32 %v4247, %v3977
    %v4249 = vld [vmem:[%s143] sm:$0xff]
    %v4250 = vld [vmem:[#allocation57] sm:$0x1]
    %v4252 = vlaneseq
    %v4253 = vshrl.u32 %v4252, 7
    %v4254 = vsub.s32 0, %v4253
    %v4255 = vrot.slane %v4250, %v4254
    %v4258 = vsel %vm2127, %v4248, 0
    %4260 = vmatprep.subr.mxu0 0.0
    %4261 = vmatpush1.msra.mxu0 %v4249
    %4262 = vmatprep.subr.mxu0 0.0
    %4263 = vmatpush1.msra.mxu0 0.0
    %4264 = vmatprep.subr.mxu0 0.0
    %4265 = vmatpush1.msra.mxu0 0.0
    %4266 = vmatprep.subr.mxu0 0.0
    %4267 = vmatpush1.msra.mxu0 0.0
    %4268 = vmatprep.subr.mxu0 0.0
    %4269 = vmatpush1.msra.mxu0 0.0
    %4270 = vmatprep.subr.mxu0 0.0
    %4271 = vmatpush1.msra.mxu0 0.0
    %4272 = vmatprep.subr.mxu0 0.0
    %4273 = vmatpush1.msra.mxu0 0.0
    %4274 = vmatprep.subr.mxu0 0.0
    %4275 = vmatpush1.msra.mxu0 0.0
    %4276 = vmatprep.subr.mxu0 0.0
    %4277 = vmatpush1.msra.mxu0 0.0
    %4278 = vmatprep.subr.mxu0 0.0
    %4279 = vmatpush1.msra.mxu0 0.0
    %4280 = vmatprep.subr.mxu0 0.0
    %4281 = vmatpush1.msra.mxu0 0.0
    %4282 = vmatprep.subr.mxu0 0.0
    %4283 = vmatpush1.msra.mxu0 0.0
    %4284 = vmatprep.subr.mxu0 0.0
    %4285 = vmatpush1.msra.mxu0 0.0
    %4286 = vmatprep.subr.mxu0 0.0
    %4287 = vmatpush1.msra.mxu0 0.0
    %4288 = vmatprep.subr.mxu0 0.0
    %4289 = vmatpush1.msra.mxu0 0.0
    %4290 = vmatprep.subr.mxu0 0.0
    %4291 = vmatpush1.msra.mxu0 0.0
    %4292 = vmatprep.subr.mxu0 0.0
    %4293 = vmatpush1.msra.mxu0 0.0
    %4294 = vmatprep.subr.mxu0 0.0
    %4295 = vmatpush1.msra.mxu0 0.0
    %4296 = vmatprep.subr.mxu0 0.0
    %4297 = vmatpush1.msra.mxu0 0.0
    %4298 = vmatprep.subr.mxu0 0.0
    %4299 = vmatpush1.msra.mxu0 0.0
    %4300 = vmatprep.subr.mxu0 0.0
    %4301 = vmatpush1.msra.mxu0 0.0
    %4302 = vmatprep.subr.mxu0 0.0
    %4303 = vmatpush1.msra.mxu0 0.0
    %4304 = vmatprep.subr.mxu0 0.0
    %4305 = vmatpush1.msra.mxu0 0.0
    %4306 = vmatprep.subr.mxu0 0.0
    %4307 = vmatpush1.msra.mxu0 0.0
    %4308 = vmatprep.subr.mxu0 0.0
    %4309 = vmatpush1.msra.mxu0 0.0
    %4310 = vmatprep.subr.mxu0 0.0
    %4311 = vmatpush1.msra.mxu0 0.0
    %4312 = vmatprep.subr.mxu0 0.0
    %4313 = vmatpush1.msra.mxu0 0.0
    %4314 = vmatprep.subr.mxu0 0.0
    %4315 = vmatpush1.msra.mxu0 0.0
    %4316 = vmatprep.subr.mxu0 0.0
    %4317 = vmatpush1.msra.mxu0 0.0
    %4318 = vmatprep.subr.mxu0 0.0
    %4319 = vmatpush1.msra.mxu0 0.0
    %4320 = vmatprep.subr.mxu0 0.0
    %4321 = vmatpush1.msra.mxu0 0.0
    %4322 = vmatprep.subr.mxu0 0.0
    %4323 = vmatpush1.msra.mxu0 0.0
    %4324 = vmatprep.mubr.f32.mxu0 0.0
    %4325 = vmatmul.mubr.f32.gmra.mrb[0].mxu0 %v4258
    %v4326 = vpop.f32.mrb[0].mxu0
    %v4327 = vadd.f32 %v4255, %v4326
    %v4328 = vpop.f32.mrb[0].mxu0
    %4329 = vdwg.mxu0
    %v4330 = vmin.f32 %v4327, 20.0
    %v4331 = vmul.f32 %v4330, 1.442695
    %v4332 = vpow.pop %v4331
    %v4333 = vadd.f32 %v4332, 1.0
    %v4334 = vmul.f32 %v4333, %v4333
    %v4335 = vsub.f32 %v4334, 1.0
    %v4336 = vadd.f32 %v4334, 1.0
    %v4337 = vrcp.pop %v4336
    %v4338 = vmul.f32 %v4335, %v4337
    %vm4339 = vcmp.gt.f32.partialorder %v4327, 20.0
    %v4340 = vmul.f32 %v4327, %v4338
    %v4341 = vsel %vm4339, %v4327, %v4340
    %v4342 = vld [vmem:[%s147] sm:$0xff]
    %v4343 = vld [vmem:[%s147 + $0x8] sm:$0xff]
    %v4344 = vld [vmem:[%s147 + $0x10] sm:$0xff]
    %v4345 = vld [vmem:[%s147 + $0x18] sm:$0xff]
    %v4346 = vld [vmem:[#allocation60] sm:$0x1]
    %v4348 = vlaneseq
    %v4349 = vshrl.u32 %v4348, 7
    %v4350 = vsub.s32 0, %v4349
    %v4351 = vrot.slane %v4346, %v4350
    %4353 = vmatprep.subr.mxu0 0.0
    %4354 = vmatpush1.msra.mxu0 %v4342
    %4355 = vmatprep.subr.mxu0 0.0
    %4356 = vmatpush1.msra.mxu0 %v4343
    %4357 = vmatprep.subr.mxu0 0.0
    %4358 = vmatpush1.msra.mxu0 %v4344
    %4359 = vmatprep.subr.mxu0 0.0
    %4360 = vmatpush1.msra.mxu0 %v4345
    %4361 = vmatprep.subr.mxu0 0.0
    %4362 = vmatpush1.msra.mxu0 0.0
    %4363 = vmatprep.subr.mxu0 0.0
    %4364 = vmatpush1.msra.mxu0 0.0
    %4365 = vmatprep.subr.mxu0 0.0
    %4366 = vmatpush1.msra.mxu0 0.0
    %4367 = vmatprep.subr.mxu0 0.0
    %4368 = vmatpush1.msra.mxu0 0.0
    %4369 = vmatprep.subr.mxu0 0.0
    %4370 = vmatpush1.msra.mxu0 0.0
    %4371 = vmatprep.subr.mxu0 0.0
    %4372 = vmatpush1.msra.mxu0 0.0
    %4373 = vmatprep.subr.mxu0 0.0
    %4374 = vmatpush1.msra.mxu0 0.0
    %4375 = vmatprep.subr.mxu0 0.0
    %4376 = vmatpush1.msra.mxu0 0.0
    %4377 = vmatprep.subr.mxu0 0.0
    %4378 = vmatpush1.msra.mxu0 0.0
    %4379 = vmatprep.subr.mxu0 0.0
    %4380 = vmatpush1.msra.mxu0 0.0
    %4381 = vmatprep.subr.mxu0 0.0
    %4382 = vmatpush1.msra.mxu0 0.0
    %4383 = vmatprep.subr.mxu0 0.0
    %4384 = vmatpush1.msra.mxu0 0.0
    %4385 = vmatprep.subr.mxu0 0.0
    %4386 = vmatpush1.msra.mxu0 0.0
    %4387 = vmatprep.subr.mxu0 0.0
    %4388 = vmatpush1.msra.mxu0 0.0
    %4389 = vmatprep.subr.mxu0 0.0
    %4390 = vmatpush1.msra.mxu0 0.0
    %4391 = vmatprep.subr.mxu0 0.0
    %4392 = vmatpush1.msra.mxu0 0.0
    %4393 = vmatprep.subr.mxu0 0.0
    %4394 = vmatpush1.msra.mxu0 0.0
    %4395 = vmatprep.subr.mxu0 0.0
    %4396 = vmatpush1.msra.mxu0 0.0
    %4397 = vmatprep.subr.mxu0 0.0
    %4398 = vmatpush1.msra.mxu0 0.0
    %4399 = vmatprep.subr.mxu0 0.0
    %4400 = vmatpush1.msra.mxu0 0.0
    %4401 = vmatprep.subr.mxu0 0.0
    %4402 = vmatpush1.msra.mxu0 0.0
    %4403 = vmatprep.subr.mxu0 0.0
    %4404 = vmatpush1.msra.mxu0 0.0
    %4405 = vmatprep.subr.mxu0 0.0
    %4406 = vmatpush1.msra.mxu0 0.0
    %4407 = vmatprep.subr.mxu0 0.0
    %4408 = vmatpush1.msra.mxu0 0.0
    %4409 = vmatprep.subr.mxu0 0.0
    %4410 = vmatpush1.msra.mxu0 0.0
    %4411 = vmatprep.subr.mxu0 0.0
    %4412 = vmatpush1.msra.mxu0 0.0
    %4413 = vmatprep.subr.mxu0 0.0
    %4414 = vmatpush1.msra.mxu0 0.0
    %4415 = vmatprep.subr.mxu0 0.0
    %4416 = vmatpush1.msra.mxu0 0.0
    %4417 = vmatprep.mubr.f32.mxu0 0.0
    %4418 = vmatmul.mubr.f32.gmra.mrb[0].mxu0 %v1340
    %v4419 = vpop.f32.mrb[0].mxu0
    %v4420 = vadd.f32 %v4351, %v4419
    %v4421 = vpop.f32.mrb[0].mxu0
    %4422 = vdwg.mxu0
    %v4423 = vadd.f32 %v4341, %v4420
    %v4424 = vld [vmem:[%s145] sm:$0xff]
    %v4425 = vld [vmem:[#allocation59] sm:$0x1]
    %v4427 = vlaneseq
    %v4428 = vshrl.u32 %v4427, 7
    %v4429 = vsub.s32 0, %v4428
    %v4430 = vrot.slane %v4425, %v4429
    %v4433 = vsel %vm2127, %v4423, 0
    %4435 = vmatprep.subr.mxu0 0.0
    %4436 = vmatpush1.msra.mxu0 %v4424
    %4437 = vmatprep.subr.mxu0 0.0
    %4438 = vmatpush1.msra.mxu0 0.0
    %4439 = vmatprep.subr.mxu0 0.0
    %4440 = vmatpush1.msra.mxu0 0.0
    %4441 = vmatprep.subr.mxu0 0.0
    %4442 = vmatpush1.msra.mxu0 0.0
    %4443 = vmatprep.subr.mxu0 0.0
    %4444 = vmatpush1.msra.mxu0 0.0
    %4445 = vmatprep.subr.mxu0 0.0
    %4446 = vmatpush1.msra.mxu0 0.0
    %4447 = vmatprep.subr.mxu0 0.0
    %4448 = vmatpush1.msra.mxu0 0.0
    %4449 = vmatprep.subr.mxu0 0.0
    %4450 = vmatpush1.msra.mxu0 0.0
    %4451 = vmatprep.subr.mxu0 0.0
    %4452 = vmatpush1.msra.mxu0 0.0
    %4453 = vmatprep.subr.mxu0 0.0
    %4454 = vmatpush1.msra.mxu0 0.0
    %4455 = vmatprep.subr.mxu0 0.0
    %4456 = vmatpush1.msra.mxu0 0.0
    %4457 = vmatprep.subr.mxu0 0.0
    %4458 = vmatpush1.msra.mxu0 0.0
    %4459 = vmatprep.subr.mxu0 0.0
    %4460 = vmatpush1.msra.mxu0 0.0
    %4461 = vmatprep.subr.mxu0 0.0
    %4462 = vmatpush1.msra.mxu0 0.0
    %4463 = vmatprep.subr.mxu0 0.0
    %4464 = vmatpush1.msra.mxu0 0.0
    %4465 = vmatprep.subr.mxu0 0.0
    %4466 = vmatpush1.msra.mxu0 0.0
    %4467 = vmatprep.subr.mxu0 0.0
    %4468 = vmatpush1.msra.mxu0 0.0
    %4469 = vmatprep.subr.mxu0 0.0
    %4470 = vmatpush1.msra.mxu0 0.0
    %4471 = vmatprep.subr.mxu0 0.0
    %4472 = vmatpush1.msra.mxu0 0.0
    %4473 = vmatprep.subr.mxu0 0.0
    %4474 = vmatpush1.msra.mxu0 0.0
    %4475 = vmatprep.subr.mxu0 0.0
    %4476 = vmatpush1.msra.mxu0 0.0
    %4477 = vmatprep.subr.mxu0 0.0
    %4478 = vmatpush1.msra.mxu0 0.0
    %4479 = vmatprep.subr.mxu0 0.0
    %4480 = vmatpush1.msra.mxu0 0.0
    %4481 = vmatprep.subr.mxu0 0.0
    %4482 = vmatpush1.msra.mxu0 0.0
    %4483 = vmatprep.subr.mxu0 0.0
    %4484 = vmatpush1.msra.mxu0 0.0
    %4485 = vmatprep.subr.mxu0 0.0
    %4486 = vmatpush1.msra.mxu0 0.0
    %4487 = vmatprep.subr.mxu0 0.0
    %4488 = vmatpush1.msra.mxu0 0.0
    %4489 = vmatprep.subr.mxu0 0.0
    %4490 = vmatpush1.msra.mxu0 0.0
    %4491 = vmatprep.subr.mxu0 0.0
    %4492 = vmatpush1.msra.mxu0 0.0
    %4493 = vmatprep.subr.mxu0 0.0
    %4494 = vmatpush1.msra.mxu0 0.0
    %4495 = vmatprep.subr.mxu0 0.0
    %4496 = vmatpush1.msra.mxu0 0.0
    %4497 = vmatprep.subr.mxu0 0.0
    %4498 = vmatpush1.msra.mxu0 0.0
    %4499 = vmatprep.mubr.f32.mxu0 0.0
    %4500 = vmatmul.mubr.f32.gmra.mrb[0].mxu0 %v4433
    %v4501 = vpop.f32.mrb[0].mxu0
    %v4502 = vadd.f32 %v4430, %v4501
    %v4503 = vpop.f32.mrb[0].mxu0
    %4504 = vdwg.mxu0
    %v4505 = vmin.f32 %v4502, 20.0
    %v4506 = vmul.f32 %v4505, 1.442695
    %v4507 = vpow.pop %v4506
    %v4508 = vadd.f32 %v4507, 1.0
    %v4509 = vmul.f32 %v4508, %v4508
    %v4510 = vsub.f32 %v4509, 1.0
    %v4511 = vadd.f32 %v4509, 1.0
    %v4512 = vrcp.pop %v4511
    %v4513 = vmul.f32 %v4510, %v4512
    %vm4514 = vcmp.gt.f32.partialorder %v4502, 20.0
    %v4515 = vmul.f32 %v4502, %v4513
    %v4516 = vsel %vm4514, %v4502, %v4515
    %v4517 = vadd.f32 %v4516, %v4248
    %v4518 = vld [vmem:[%s151] sm:$0xff]
    %v4519 = vld [vmem:[#allocation62] sm:$0x1]
    %v4521 = vlaneseq
    %v4522 = vshrl.u32 %v4521, 7
    %v4523 = vsub.s32 0, %v4522
    %v4524 = vrot.slane %v4519, %v4523
    %v4527 = vsel %vm2127, %v4517, 0
    %4529 = vmatprep.subr.mxu0 0.0
    %4530 = vmatpush1.msra.mxu0 %v4518
    %4531 = vmatprep.subr.mxu0 0.0
    %4532 = vmatpush1.msra.mxu0 0.0
    %4533 = vmatprep.subr.mxu0 0.0
    %4534 = vmatpush1.msra.mxu0 0.0
    %4535 = vmatprep.subr.mxu0 0.0
    %4536 = vmatpush1.msra.mxu0 0.0
    %4537 = vmatprep.subr.mxu0 0.0
    %4538 = vmatpush1.msra.mxu0 0.0
    %4539 = vmatprep.subr.mxu0 0.0
    %4540 = vmatpush1.msra.mxu0 0.0
    %4541 = vmatprep.subr.mxu0 0.0
    %4542 = vmatpush1.msra.mxu0 0.0
    %4543 = vmatprep.subr.mxu0 0.0
    %4544 = vmatpush1.msra.mxu0 0.0
    %4545 = vmatprep.subr.mxu0 0.0
    %4546 = vmatpush1.msra.mxu0 0.0
    %4547 = vmatprep.subr.mxu0 0.0
    %4548 = vmatpush1.msra.mxu0 0.0
    %4549 = vmatprep.subr.mxu0 0.0
    %4550 = vmatpush1.msra.mxu0 0.0
    %4551 = vmatprep.subr.mxu0 0.0
    %4552 = vmatpush1.msra.mxu0 0.0
    %4553 = vmatprep.subr.mxu0 0.0
    %4554 = vmatpush1.msra.mxu0 0.0
    %4555 = vmatprep.subr.mxu0 0.0
    %4556 = vmatpush1.msra.mxu0 0.0
    %4557 = vmatprep.subr.mxu0 0.0
    %4558 = vmatpush1.msra.mxu0 0.0
    %4559 = vmatprep.subr.mxu0 0.0
    %4560 = vmatpush1.msra.mxu0 0.0
    %4561 = vmatprep.subr.mxu0 0.0
    %4562 = vmatpush1.msra.mxu0 0.0
    %4563 = vmatprep.subr.mxu0 0.0
    %4564 = vmatpush1.msra.mxu0 0.0
    %4565 = vmatprep.subr.mxu0 0.0
    %4566 = vmatpush1.msra.mxu0 0.0
    %4567 = vmatprep.subr.mxu0 0.0
    %4568 = vmatpush1.msra.mxu0 0.0
    %4569 = vmatprep.subr.mxu0 0.0
    %4570 = vmatpush1.msra.mxu0 0.0
    %4571 = vmatprep.subr.mxu0 0.0
    %4572 = vmatpush1.msra.mxu0 0.0
    %4573 = vmatprep.subr.mxu0 0.0
    %4574 = vmatpush1.msra.mxu0 0.0
    %4575 = vmatprep.subr.mxu0 0.0
    %4576 = vmatpush1.msra.mxu0 0.0
    %4577 = vmatprep.subr.mxu0 0.0
    %4578 = vmatpush1.msra.mxu0 0.0
    %4579 = vmatprep.subr.mxu0 0.0
    %4580 = vmatpush1.msra.mxu0 0.0
    %4581 = vmatprep.subr.mxu0 0.0
    %4582 = vmatpush1.msra.mxu0 0.0
    %4583 = vmatprep.subr.mxu0 0.0
    %4584 = vmatpush1.msra.mxu0 0.0
    %4585 = vmatprep.subr.mxu0 0.0
    %4586 = vmatpush1.msra.mxu0 0.0
    %4587 = vmatprep.subr.mxu0 0.0
    %4588 = vmatpush1.msra.mxu0 0.0
    %4589 = vmatprep.subr.mxu0 0.0
    %4590 = vmatpush1.msra.mxu0 0.0
    %4591 = vmatprep.subr.mxu0 0.0
    %4592 = vmatpush1.msra.mxu0 0.0
    %4593 = vmatprep.mubr.f32.mxu0 0.0
    %4594 = vmatmul.mubr.f32.gmra.mrb[0].mxu0 %v4527
    %v4595 = vpop.f32.mrb[0].mxu0
    %v4596 = vadd.f32 %v4524, %v4595
    %v4597 = vpop.f32.mrb[0].mxu0
    %4598 = vdwg.mxu0
    %v4599 = vadd.s32 %v3821, 8
    %vm4600 = vcmp.eq.s32.totalorder %v3823, %v4599
    %v4601 = vsel %vm4600, 1, 0
    %v4602 = vcvt.s32.f32 %v4601
    %4603 = vmatprep.subr.mxu0 0.0
    %4604 = vmatpush1.msra.mxu0 %v4602
    %4605 = vmatprep.subr.mxu0 0.0
    %4606 = vmatpush1.msra.mxu0 0.0
    %4607 = vmatprep.subr.mxu0 0.0
    %4608 = vmatpush1.msra.mxu0 0.0
    %4609 = vmatprep.subr.mxu0 0.0
    %4610 = vmatpush1.msra.mxu0 0.0
    %4611 = vmatprep.subr.mxu0 0.0
    %4612 = vmatpush1.msra.mxu0 0.0
    %4613 = vmatprep.subr.mxu0 0.0
    %4614 = vmatpush1.msra.mxu0 0.0
    %4615 = vmatprep.subr.mxu0 0.0
    %4616 = vmatpush1.msra.mxu0 0.0
    %4617 = vmatprep.subr.mxu0 0.0
    %4618 = vmatpush1.msra.mxu0 0.0
    %4619 = vmatprep.subr.mxu0 0.0
    %4620 = vmatpush1.msra.mxu0 0.0
    %4621 = vmatprep.subr.mxu0 0.0
    %4622 = vmatpush1.msra.mxu0 0.0
    %4623 = vmatprep.subr.mxu0 0.0
    %4624 = vmatpush1.msra.mxu0 0.0
    %4625 = vmatprep.subr.mxu0 0.0
    %4626 = vmatpush1.msra.mxu0 0.0
    %4627 = vmatprep.subr.mxu0 0.0
    %4628 = vmatpush1.msra.mxu0 0.0
    %4629 = vmatprep.subr.mxu0 0.0
    %4630 = vmatpush1.msra.mxu0 0.0
    %4631 = vmatprep.subr.mxu0 0.0
    %4632 = vmatpush1.msra.mxu0 0.0
    %4633 = vmatprep.subr.mxu0 0.0
    %4634 = vmatpush1.msra.mxu0 0.0
    %4635 = vmatprep.subr.mxu0 0.0
    %4636 = vmatpush1.msra.mxu0 0.0
    %4637 = vmatprep.subr.mxu0 0.0
    %4638 = vmatpush1.msra.mxu0 0.0
    %4639 = vmatprep.subr.mxu0 0.0
    %4640 = vmatpush1.msra.mxu0 0.0
    %4641 = vmatprep.subr.mxu0 0.0
    %4642 = vmatpush1.msra.mxu0 0.0
    %4643 = vmatprep.subr.mxu0 0.0
    %4644 = vmatpush1.msra.mxu0 0.0
    %4645 = vmatprep.subr.mxu0 0.0
    %4646 = vmatpush1.msra.mxu0 0.0
    %4647 = vmatprep.subr.mxu0 0.0
    %4648 = vmatpush1.msra.mxu0 0.0
    %4649 = vmatprep.subr.mxu0 0.0
    %4650 = vmatpush1.msra.mxu0 0.0
    %4651 = vmatprep.subr.mxu0 0.0
    %4652 = vmatpush1.msra.mxu0 0.0
    %4653 = vmatprep.subr.mxu0 0.0
    %4654 = vmatpush1.msra.mxu0 0.0
    %4655 = vmatprep.subr.mxu0 0.0
    %4656 = vmatpush1.msra.mxu0 0.0
    %4657 = vmatprep.subr.mxu0 0.0
    %4658 = vmatpush1.msra.mxu0 0.0
    %4659 = vmatprep.subr.mxu0 0.0
    %4660 = vmatpush1.msra.mxu0 0.0
    %4661 = vmatprep.subr.mxu0 0.0
    %4662 = vmatpush1.msra.mxu0 0.0
    %4663 = vmatprep.subr.mxu0 0.0
    %4664 = vmatpush1.msra.mxu0 0.0
    %4665 = vmatprep.subr.mxu0 0.0
    %4666 = vmatpush1.msra.mxu0 0.0
    %4667 = vmatprep.mubr.f32.mxu0 0.0
    %4668 = vmatmul.mubr.f32.gmra.mrb[0].mxu0 %v2571
    %v4669 = vpop.f32.mrb[0].mxu0
    %v4670 = vadd.f32 0.0, %v4669
    %v4671 = vpop.f32.mrb[0].mxu0
    %4672 = vdwg.mxu0
    %v4674 = vsel %vm2127, %v4596, 0
    %4676 = vmatprep.subr.mxu0 0.0
    %4677 = vmatpush1.msra.mxu0 %v3826
    %4678 = vmatprep.subr.mxu0 0.0
    %4679 = vmatpush1.msra.mxu0 0.0
    %4680 = vmatprep.subr.mxu0 0.0
    %4681 = vmatpush1.msra.mxu0 0.0
    %4682 = vmatprep.subr.mxu0 0.0
    %4683 = vmatpush1.msra.mxu0 0.0
    %4684 = vmatprep.subr.mxu0 0.0
    %4685 = vmatpush1.msra.mxu0 0.0
    %4686 = vmatprep.subr.mxu0 0.0
    %4687 = vmatpush1.msra.mxu0 0.0
    %4688 = vmatprep.subr.mxu0 0.0
    %4689 = vmatpush1.msra.mxu0 0.0
    %4690 = vmatprep.subr.mxu0 0.0
    %4691 = vmatpush1.msra.mxu0 0.0
    %4692 = vmatprep.subr.mxu0 0.0
    %4693 = vmatpush1.msra.mxu0 0.0
    %4694 = vmatprep.subr.mxu0 0.0
    %4695 = vmatpush1.msra.mxu0 0.0
    %4696 = vmatprep.subr.mxu0 0.0
    %4697 = vmatpush1.msra.mxu0 0.0
    %4698 = vmatprep.subr.mxu0 0.0
    %4699 = vmatpush1.msra.mxu0 0.0
    %4700 = vmatprep.subr.mxu0 0.0
    %4701 = vmatpush1.msra.mxu0 0.0
    %4702 = vmatprep.subr.mxu0 0.0
    %4703 = vmatpush1.msra.mxu0 0.0
    %4704 = vmatprep.subr.mxu0 0.0
    %4705 = vmatpush1.msra.mxu0 0.0
    %4706 = vmatprep.subr.mxu0 0.0
    %4707 = vmatpush1.msra.mxu0 0.0
    %4708 = vmatprep.subr.mxu0 0.0
    %4709 = vmatpush1.msra.mxu0 0.0
    %4710 = vmatprep.subr.mxu0 0.0
    %4711 = vmatpush1.msra.mxu0 0.0
    %4712 = vmatprep.subr.mxu0 0.0
    %4713 = vmatpush1.msra.mxu0 0.0
    %4714 = vmatprep.subr.mxu0 0.0
    %4715 = vmatpush1.msra.mxu0 0.0
    %4716 = vmatprep.subr.mxu0 0.0
    %4717 = vmatpush1.msra.mxu0 0.0
    %4718 = vmatprep.subr.mxu0 0.0
    %4719 = vmatpush1.msra.mxu0 0.0
    %4720 = vmatprep.subr.mxu0 0.0
    %4721 = vmatpush1.msra.mxu0 0.0
    %4722 = vmatprep.subr.mxu0 0.0
    %4723 = vmatpush1.msra.mxu0 0.0
    %4724 = vmatprep.subr.mxu0 0.0
    %4725 = vmatpush1.msra.mxu0 0.0
    %4726 = vmatprep.subr.mxu0 0.0
    %4727 = vmatpush1.msra.mxu0 0.0
    %4728 = vmatprep.subr.mxu0 0.0
    %4729 = vmatpush1.msra.mxu0 0.0
    %4730 = vmatprep.subr.mxu0 0.0
    %4731 = vmatpush1.msra.mxu0 0.0
    %4732 = vmatprep.subr.mxu0 0.0
    %4733 = vmatpush1.msra.mxu0 0.0
    %4734 = vmatprep.subr.mxu0 0.0
    %4735 = vmatpush1.msra.mxu0 0.0
    %4736 = vmatprep.subr.mxu0 0.0
    %4737 = vmatpush1.msra.mxu0 0.0
    %4738 = vmatprep.subr.mxu0 0.0
    %4739 = vmatpush1.msra.mxu0 0.0
    %4740 = vmatprep.mubr.f32.mxu0 0.0
    %4741 = vmatmul.mubr.f32.gmra.mrb[0].mxu0 %v4674
    %v4742 = vpop.f32.mrb[0].mxu0
    %v4743 = vadd.f32 %v4670, %v4742
    %v4744 = vpop.f32.mrb[0].mxu0
    %4745 = vdwg.mxu0
    %v4746 = vld [vmem:[%s159] sm:$0xff]
    %v4747 = vld [vmem:[%s159 + $0x8] sm:$0xff]
    %v4748 = vld [vmem:[#allocation63] sm:$0x1]
    %v4750 = vlaneseq
    %v4751 = vshrl.u32 %v4750, 7
    %v4752 = vsub.s32 0, %v4751
    %v4753 = vrot.slane %v4748, %v4752
    %v4756 = vsel %vm1422, %v4743, 0
    %4758 = vmatprep.subr.mxu0 0.0
    %4759 = vmatpush1.msra.mxu0 %v4746
    %4760 = vmatprep.subr.mxu0 0.0
    %4761 = vmatpush1.msra.mxu0 %v4747
    %4762 = vmatprep.subr.mxu0 0.0
    %4763 = vmatpush1.msra.mxu0 0.0
    %4764 = vmatprep.subr.mxu0 0.0
    %4765 = vmatpush1.msra.mxu0 0.0
    %4766 = vmatprep.subr.mxu0 0.0
    %4767 = vmatpush1.msra.mxu0 0.0
    %4768 = vmatprep.subr.mxu0 0.0
    %4769 = vmatpush1.msra.mxu0 0.0
    %4770 = vmatprep.subr.mxu0 0.0
    %4771 = vmatpush1.msra.mxu0 0.0
    %4772 = vmatprep.subr.mxu0 0.0
    %4773 = vmatpush1.msra.mxu0 0.0
    %4774 = vmatprep.subr.mxu0 0.0
    %4775 = vmatpush1.msra.mxu0 0.0
    %4776 = vmatprep.subr.mxu0 0.0
    %4777 = vmatpush1.msra.mxu0 0.0
    %4778 = vmatprep.subr.mxu0 0.0
    %4779 = vmatpush1.msra.mxu0 0.0
    %4780 = vmatprep.subr.mxu0 0.0
    %4781 = vmatpush1.msra.mxu0 0.0
    %4782 = vmatprep.subr.mxu0 0.0
    %4783 = vmatpush1.msra.mxu0 0.0
    %4784 = vmatprep.subr.mxu0 0.0
    %4785 = vmatpush1.msra.mxu0 0.0
    %4786 = vmatprep.subr.mxu0 0.0
    %4787 = vmatpush1.msra.mxu0 0.0
    %4788 = vmatprep.subr.mxu0 0.0
    %4789 = vmatpush1.msra.mxu0 0.0
    %4790 = vmatprep.subr.mxu0 0.0
    %4791 = vmatpush1.msra.mxu0 0.0
    %4792 = vmatprep.subr.mxu0 0.0
    %4793 = vmatpush1.msra.mxu0 0.0
    %4794 = vmatprep.subr.mxu0 0.0
    %4795 = vmatpush1.msra.mxu0 0.0
    %4796 = vmatprep.subr.mxu0 0.0
    %4797 = vmatpush1.msra.mxu0 0.0
    %4798 = vmatprep.subr.mxu0 0.0
    %4799 = vmatpush1.msra.mxu0 0.0
    %4800 = vmatprep.subr.mxu0 0.0
    %4801 = vmatpush1.msra.mxu0 0.0
    %4802 = vmatprep.subr.mxu0 0.0
    %4803 = vmatpush1.msra.mxu0 0.0
    %4804 = vmatprep.subr.mxu0 0.0
    %4805 = vmatpush1.msra.mxu0 0.0
    %4806 = vmatprep.subr.mxu0 0.0
    %4807 = vmatpush1.msra.mxu0 0.0
    %4808 = vmatprep.subr.mxu0 0.0
    %4809 = vmatpush1.msra.mxu0 0.0
    %4810 = vmatprep.subr.mxu0 0.0
    %4811 = vmatpush1.msra.mxu0 0.0
    %4812 = vmatprep.subr.mxu0 0.0
    %4813 = vmatpush1.msra.mxu0 0.0
    %4814 = vmatprep.subr.mxu0 0.0
    %4815 = vmatpush1.msra.mxu0 0.0
    %4816 = vmatprep.subr.mxu0 0.0
    %4817 = vmatpush1.msra.mxu0 0.0
    %4818 = vmatprep.subr.mxu0 0.0
    %4819 = vmatpush1.msra.mxu0 0.0
    %4820 = vmatprep.subr.mxu0 0.0
    %4821 = vmatpush1.msra.mxu0 0.0
    %4822 = vmatprep.mubr.f32.mxu0 0.0
    %4823 = vmatmul.mubr.f32.gmra.mrb[0].mxu0 %v4756
    %v4824 = vpop.f32.mrb[0].mxu0
    %v4825 = vadd.f32 %v4753, %v4824
    %v4826 = vpop.f32.mrb[0].mxu0
    %4827 = vdwg.mxu0
    %v4828 = vmin.f32 %v4825, 20.0
    %v4829 = vmul.f32 %v4828, 1.442695
    %v4830 = vpow.pop %v4829
    %v4831 = vadd.f32 %v4830, 1.0
    %v4832 = vmul.f32 %v4831, %v4831
    %v4833 = vsub.f32 %v4832, 1.0
    %v4834 = vadd.f32 %v4832, 1.0
    %v4835 = vrcp.pop %v4834
    %v4836 = vmul.f32 %v4833, %v4835
    %vm4837 = vcmp.gt.f32.partialorder %v4825, 20.0
    %v4838 = vmul.f32 %v4825, %v4836
    %v4839 = vsel %vm4837, %v4825, %v4838
    %v4840 = vld [vmem:[%s163] sm:$0xff]
    %v4841 = vld [vmem:[%s163 + $0x8] sm:$0xff]
    %v4842 = vld [vmem:[%s163 + $0x10] sm:$0xff]
    %v4843 = vld [vmem:[%s163 + $0x18] sm:$0xff]
    %v4844 = vld [vmem:[#allocation66] sm:$0x1]
    %v4846 = vlaneseq
    %v4847 = vshrl.u32 %v4846, 7
    %v4848 = vsub.s32 0, %v4847
    %v4849 = vrot.slane %v4844, %v4848
    %4851 = vmatprep.subr.mxu0 0.0
    %4852 = vmatpush1.msra.mxu0 %v4840
    %4853 = vmatprep.subr.mxu0 0.0
    %4854 = vmatpush1.msra.mxu0 %v4841
    %4855 = vmatprep.subr.mxu0 0.0
    %4856 = vmatpush1.msra.mxu0 %v4842
    %4857 = vmatprep.subr.mxu0 0.0
    %4858 = vmatpush1.msra.mxu0 %v4843
    %4859 = vmatprep.subr.mxu0 0.0
    %4860 = vmatpush1.msra.mxu0 0.0
    %4861 = vmatprep.subr.mxu0 0.0
    %4862 = vmatpush1.msra.mxu0 0.0
    %4863 = vmatprep.subr.mxu0 0.0
    %4864 = vmatpush1.msra.mxu0 0.0
    %4865 = vmatprep.subr.mxu0 0.0
    %4866 = vmatpush1.msra.mxu0 0.0
    %4867 = vmatprep.subr.mxu0 0.0
    %4868 = vmatpush1.msra.mxu0 0.0
    %4869 = vmatprep.subr.mxu0 0.0
    %4870 = vmatpush1.msra.mxu0 0.0
    %4871 = vmatprep.subr.mxu0 0.0
    %4872 = vmatpush1.msra.mxu0 0.0
    %4873 = vmatprep.subr.mxu0 0.0
    %4874 = vmatpush1.msra.mxu0 0.0
    %4875 = vmatprep.subr.mxu0 0.0
    %4876 = vmatpush1.msra.mxu0 0.0
    %4877 = vmatprep.subr.mxu0 0.0
    %4878 = vmatpush1.msra.mxu0 0.0
    %4879 = vmatprep.subr.mxu0 0.0
    %4880 = vmatpush1.msra.mxu0 0.0
    %4881 = vmatprep.subr.mxu0 0.0
    %4882 = vmatpush1.msra.mxu0 0.0
    %4883 = vmatprep.subr.mxu0 0.0
    %4884 = vmatpush1.msra.mxu0 0.0
    %4885 = vmatprep.subr.mxu0 0.0
    %4886 = vmatpush1.msra.mxu0 0.0
    %4887 = vmatprep.subr.mxu0 0.0
    %4888 = vmatpush1.msra.mxu0 0.0
    %4889 = vmatprep.subr.mxu0 0.0
    %4890 = vmatpush1.msra.mxu0 0.0
    %4891 = vmatprep.subr.mxu0 0.0
    %4892 = vmatpush1.msra.mxu0 0.0
    %4893 = vmatprep.subr.mxu0 0.0
    %4894 = vmatpush1.msra.mxu0 0.0
    %4895 = vmatprep.subr.mxu0 0.0
    %4896 = vmatpush1.msra.mxu0 0.0
    %4897 = vmatprep.subr.mxu0 0.0
    %4898 = vmatpush1.msra.mxu0 0.0
    %4899 = vmatprep.subr.mxu0 0.0
    %4900 = vmatpush1.msra.mxu0 0.0
    %4901 = vmatprep.subr.mxu0 0.0
    %4902 = vmatpush1.msra.mxu0 0.0
    %4903 = vmatprep.subr.mxu0 0.0
    %4904 = vmatpush1.msra.mxu0 0.0
    %4905 = vmatprep.subr.mxu0 0.0
    %4906 = vmatpush1.msra.mxu0 0.0
    %4907 = vmatprep.subr.mxu0 0.0
    %4908 = vmatpush1.msra.mxu0 0.0
    %4909 = vmatprep.subr.mxu0 0.0
    %4910 = vmatpush1.msra.mxu0 0.0
    %4911 = vmatprep.subr.mxu0 0.0
    %4912 = vmatpush1.msra.mxu0 0.0
    %4913 = vmatprep.subr.mxu0 0.0
    %4914 = vmatpush1.msra.mxu0 0.0
    %4915 = vmatprep.mubr.f32.mxu0 0.0
    %4916 = vmatmul.mubr.f32.gmra.mrb[0].mxu0 %v1340
    %v4917 = vpop.f32.mrb[0].mxu0
    %v4918 = vadd.f32 %v4849, %v4917
    %v4919 = vpop.f32.mrb[0].mxu0
    %4920 = vdwg.mxu0
    %v4921 = vadd.f32 %v4839, %v4918
    %v4922 = vld [vmem:[%s161] sm:$0xff]
    %v4923 = vld [vmem:[%s161 + $0x8] sm:$0xff]
    %v4924 = vld [vmem:[#allocation65] sm:$0x1]
    %v4926 = vlaneseq
    %v4927 = vshrl.u32 %v4926, 7
    %v4928 = vsub.s32 0, %v4927
    %v4929 = vrot.slane %v4924, %v4928
    %v4932 = vsel %vm1422, %v4921, 0
    %4934 = vmatprep.subr.mxu0 0.0
    %4935 = vmatpush1.msra.mxu0 %v4922
    %4936 = vmatprep.subr.mxu0 0.0
    %4937 = vmatpush1.msra.mxu0 %v4923
    %4938 = vmatprep.subr.mxu0 0.0
    %4939 = vmatpush1.msra.mxu0 0.0
    %4940 = vmatprep.subr.mxu0 0.0
    %4941 = vmatpush1.msra.mxu0 0.0
    %4942 = vmatprep.subr.mxu0 0.0
    %4943 = vmatpush1.msra.mxu0 0.0
    %4944 = vmatprep.subr.mxu0 0.0
    %4945 = vmatpush1.msra.mxu0 0.0
    %4946 = vmatprep.subr.mxu0 0.0
    %4947 = vmatpush1.msra.mxu0 0.0
    %4948 = vmatprep.subr.mxu0 0.0
    %4949 = vmatpush1.msra.mxu0 0.0
    %4950 = vmatprep.subr.mxu0 0.0
    %4951 = vmatpush1.msra.mxu0 0.0
    %4952 = vmatprep.subr.mxu0 0.0
    %4953 = vmatpush1.msra.mxu0 0.0
    %4954 = vmatprep.subr.mxu0 0.0
    %4955 = vmatpush1.msra.mxu0 0.0
    %4956 = vmatprep.subr.mxu0 0.0
    %4957 = vmatpush1.msra.mxu0 0.0
    %4958 = vmatprep.subr.mxu0 0.0
    %4959 = vmatpush1.msra.mxu0 0.0
    %4960 = vmatprep.subr.mxu0 0.0
    %4961 = vmatpush1.msra.mxu0 0.0
    %4962 = vmatprep.subr.mxu0 0.0
    %4963 = vmatpush1.msra.mxu0 0.0
    %4964 = vmatprep.subr.mxu0 0.0
    %4965 = vmatpush1.msra.mxu0 0.0
    %4966 = vmatprep.subr.mxu0 0.0
    %4967 = vmatpush1.msra.mxu0 0.0
    %4968 = vmatprep.subr.mxu0 0.0
    %4969 = vmatpush1.msra.mxu0 0.0
    %4970 = vmatprep.subr.mxu0 0.0
    %4971 = vmatpush1.msra.mxu0 0.0
    %4972 = vmatprep.subr.mxu0 0.0
    %4973 = vmatpush1.msra.mxu0 0.0
    %4974 = vmatprep.subr.mxu0 0.0
    %4975 = vmatpush1.msra.mxu0 0.0
    %4976 = vmatprep.subr.mxu0 0.0
    %4977 = vmatpush1.msra.mxu0 0.0
    %4978 = vmatprep.subr.mxu0 0.0
    %4979 = vmatpush1.msra.mxu0 0.0
    %4980 = vmatprep.subr.mxu0 0.0
    %4981 = vmatpush1.msra.mxu0 0.0
    %4982 = vmatprep.subr.mxu0 0.0
    %4983 = vmatpush1.msra.mxu0 0.0
    %4984 = vmatprep.subr.mxu0 0.0
    %4985 = vmatpush1.msra.mxu0 0.0
    %4986 = vmatprep.subr.mxu0 0.0
    %4987 = vmatpush1.msra.mxu0 0.0
    %4988 = vmatprep.subr.mxu0 0.0
    %4989 = vmatpush1.msra.mxu0 0.0
    %4990 = vmatprep.subr.mxu0 0.0
    %4991 = vmatpush1.msra.mxu0 0.0
    %4992 = vmatprep.subr.mxu0 0.0
    %4993 = vmatpush1.msra.mxu0 0.0
    %4994 = vmatprep.subr.mxu0 0.0
    %4995 = vmatpush1.msra.mxu0 0.0
    %4996 = vmatprep.subr.mxu0 0.0
    %4997 = vmatpush1.msra.mxu0 0.0
    %4998 = vmatprep.mubr.f32.mxu0 0.0
    %4999 = vmatmul.mubr.f32.gmra.mrb[0].mxu0 %v4932
    %v5000 = vpop.f32.mrb[0].mxu0
    %v5001 = vadd.f32 %v4929, %v5000
    %v5002 = vpop.f32.mrb[0].mxu0
    %5003 = vdwg.mxu0
    %v5004 = vmin.f32 %v5001, 20.0
    %v5005 = vmul.f32 %v5004, 1.442695
    %v5006 = vpow.pop %v5005
    %v5007 = vadd.f32 %v5006, 1.0
    %v5008 = vmul.f32 %v5007, %v5007
    %v5009 = vsub.f32 %v5008, 1.0
    %v5010 = vadd.f32 %v5008, 1.0
    %v5011 = vrcp.pop %v5010
    %v5012 = vmul.f32 %v5009, %v5011
    %vm5013 = vcmp.gt.f32.partialorder %v5001, 20.0
    %v5014 = vmul.f32 %v5001, %v5012
    %v5015 = vsel %vm5013, %v5001, %v5014
    %v5016 = vadd.f32 %v5015, %v4743
    %v5017 = vld [vmem:[%s171] sm:$0xff]
    %v5018 = vld [vmem:[%s171 + $0x8] sm:$0xff]
    %v5019 = vld [vmem:[#allocation68] sm:$0x1]
    %v5021 = vlaneseq
    %v5022 = vshrl.u32 %v5021, 7
    %v5023 = vsub.s32 0, %v5022
    %v5024 = vrot.slane %v5019, %v5023
    %v5027 = vsel %vm1422, %v5016, 0
    %5029 = vmatprep.subr.mxu0 0.0
    %5030 = vmatpush1.msra.mxu0 %v5017
    %5031 = vmatprep.subr.mxu0 0.0
    %5032 = vmatpush1.msra.mxu0 %v5018
    %5033 = vmatprep.subr.mxu0 0.0
    %5034 = vmatpush1.msra.mxu0 0.0
    %5035 = vmatprep.subr.mxu0 0.0
    %5036 = vmatpush1.msra.mxu0 0.0
    %5037 = vmatprep.subr.mxu0 0.0
    %5038 = vmatpush1.msra.mxu0 0.0
    %5039 = vmatprep.subr.mxu0 0.0
    %5040 = vmatpush1.msra.mxu0 0.0
    %5041 = vmatprep.subr.mxu0 0.0
    %5042 = vmatpush1.msra.mxu0 0.0
    %5043 = vmatprep.subr.mxu0 0.0
    %5044 = vmatpush1.msra.mxu0 0.0
    %5045 = vmatprep.subr.mxu0 0.0
    %5046 = vmatpush1.msra.mxu0 0.0
    %5047 = vmatprep.subr.mxu0 0.0
    %5048 = vmatpush1.msra.mxu0 0.0
    %5049 = vmatprep.subr.mxu0 0.0
    %5050 = vmatpush1.msra.mxu0 0.0
    %5051 = vmatprep.subr.mxu0 0.0
    %5052 = vmatpush1.msra.mxu0 0.0
    %5053 = vmatprep.subr.mxu0 0.0
    %5054 = vmatpush1.msra.mxu0 0.0
    %5055 = vmatprep.subr.mxu0 0.0
    %5056 = vmatpush1.msra.mxu0 0.0
    %5057 = vmatprep.subr.mxu0 0.0
    %5058 = vmatpush1.msra.mxu0 0.0
    %5059 = vmatprep.subr.mxu0 0.0
    %5060 = vmatpush1.msra.mxu0 0.0
    %5061 = vmatprep.subr.mxu0 0.0
    %5062 = vmatpush1.msra.mxu0 0.0
    %5063 = vmatprep.subr.mxu0 0.0
    %5064 = vmatpush1.msra.mxu0 0.0
    %5065 = vmatprep.subr.mxu0 0.0
    %5066 = vmatpush1.msra.mxu0 0.0
    %5067 = vmatprep.subr.mxu0 0.0
    %5068 = vmatpush1.msra.mxu0 0.0
    %5069 = vmatprep.subr.mxu0 0.0
    %5070 = vmatpush1.msra.mxu0 0.0
    %5071 = vmatprep.subr.mxu0 0.0
    %5072 = vmatpush1.msra.mxu0 0.0
    %5073 = vmatprep.subr.mxu0 0.0
    %5074 = vmatpush1.msra.mxu0 0.0
    %5075 = vmatprep.subr.mxu0 0.0
    %5076 = vmatpush1.msra.mxu0 0.0
    %5077 = vmatprep.subr.mxu0 0.0
    %5078 = vmatpush1.msra.mxu0 0.0
    %5079 = vmatprep.subr.mxu0 0.0
    %5080 = vmatpush1.msra.mxu0 0.0
    %5081 = vmatprep.subr.mxu0 0.0
    %5082 = vmatpush1.msra.mxu0 0.0
    %5083 = vmatprep.subr.mxu0 0.0
    %5084 = vmatpush1.msra.mxu0 0.0
    %5085 = vmatprep.subr.mxu0 0.0
    %5086 = vmatpush1.msra.mxu0 0.0
    %5087 = vmatprep.subr.mxu0 0.0
    %5088 = vmatpush1.msra.mxu0 0.0
    %5089 = vmatprep.subr.mxu0 0.0
    %5090 = vmatpush1.msra.mxu0 0.0
    %5091 = vmatprep.subr.mxu0 0.0
    %5092 = vmatpush1.msra.mxu0 0.0
    %5093 = vmatprep.mubr.f32.mxu0 0.0
    %5094 = vmatmul.mubr.f32.gmra.mrb[0].mxu0 %v5027
    %v5095 = vpop.f32.mrb[0].mxu0
    %v5096 = vadd.f32 %v5024, %v5095
    %v5097 = vpop.f32.mrb[0].mxu0
    %5098 = vdwg.mxu0
    %v5099 = vmin.f32 %v5096, 20.0
    %v5100 = vmul.f32 %v5099, 1.442695
    %v5101 = vpow.pop %v5100
    %v5102 = vadd.f32 %v5101, 1.0
    %v5103 = vmul.f32 %v5102, %v5102
    %v5104 = vsub.f32 %v5103, 1.0
    %v5105 = vadd.f32 %v5103, 1.0
    %v5106 = vrcp.pop %v5105
    %v5107 = vmul.f32 %v5104, %v5106
    %vm5108 = vcmp.gt.f32.partialorder %v5096, 20.0
    %v5109 = vmul.f32 %v5096, %v5107
    %v5110 = vsel %vm5108, %v5096, %v5109
    %v5111 = vld [vmem:[%s175] sm:$0xff]
    %v5112 = vld [vmem:[%s175 + $0x8] sm:$0xff]
    %v5113 = vld [vmem:[%s175 + $0x10] sm:$0xff]
    %v5114 = vld [vmem:[%s175 + $0x18] sm:$0xff]
    %v5115 = vld [vmem:[#allocation71] sm:$0x1]
    %v5117 = vlaneseq
    %v5118 = vshrl.u32 %v5117, 7
    %v5119 = vsub.s32 0, %v5118
    %v5120 = vrot.slane %v5115, %v5119
    %5122 = vmatprep.subr.mxu0 0.0
    %5123 = vmatpush1.msra.mxu0 %v5111
    %5124 = vmatprep.subr.mxu0 0.0
    %5125 = vmatpush1.msra.mxu0 %v5112
    %5126 = vmatprep.subr.mxu0 0.0
    %5127 = vmatpush1.msra.mxu0 %v5113
    %5128 = vmatprep.subr.mxu0 0.0
    %5129 = vmatpush1.msra.mxu0 %v5114
    %5130 = vmatprep.subr.mxu0 0.0
    %5131 = vmatpush1.msra.mxu0 0.0
    %5132 = vmatprep.subr.mxu0 0.0
    %5133 = vmatpush1.msra.mxu0 0.0
    %5134 = vmatprep.subr.mxu0 0.0
    %5135 = vmatpush1.msra.mxu0 0.0
    %5136 = vmatprep.subr.mxu0 0.0
    %5137 = vmatpush1.msra.mxu0 0.0
    %5138 = vmatprep.subr.mxu0 0.0
    %5139 = vmatpush1.msra.mxu0 0.0
    %5140 = vmatprep.subr.mxu0 0.0
    %5141 = vmatpush1.msra.mxu0 0.0
    %5142 = vmatprep.subr.mxu0 0.0
    %5143 = vmatpush1.msra.mxu0 0.0
    %5144 = vmatprep.subr.mxu0 0.0
    %5145 = vmatpush1.msra.mxu0 0.0
    %5146 = vmatprep.subr.mxu0 0.0
    %5147 = vmatpush1.msra.mxu0 0.0
    %5148 = vmatprep.subr.mxu0 0.0
    %5149 = vmatpush1.msra.mxu0 0.0
    %5150 = vmatprep.subr.mxu0 0.0
    %5151 = vmatpush1.msra.mxu0 0.0
    %5152 = vmatprep.subr.mxu0 0.0
    %5153 = vmatpush1.msra.mxu0 0.0
    %5154 = vmatprep.subr.mxu0 0.0
    %5155 = vmatpush1.msra.mxu0 0.0
    %5156 = vmatprep.subr.mxu0 0.0
    %5157 = vmatpush1.msra.mxu0 0.0
    %5158 = vmatprep.subr.mxu0 0.0
    %5159 = vmatpush1.msra.mxu0 0.0
    %5160 = vmatprep.subr.mxu0 0.0
    %5161 = vmatpush1.msra.mxu0 0.0
    %5162 = vmatprep.subr.mxu0 0.0
    %5163 = vmatpush1.msra.mxu0 0.0
    %5164 = vmatprep.subr.mxu0 0.0
    %5165 = vmatpush1.msra.mxu0 0.0
    %5166 = vmatprep.subr.mxu0 0.0
    %5167 = vmatpush1.msra.mxu0 0.0
    %5168 = vmatprep.subr.mxu0 0.0
    %5169 = vmatpush1.msra.mxu0 0.0
    %5170 = vmatprep.subr.mxu0 0.0
    %5171 = vmatpush1.msra.mxu0 0.0
    %5172 = vmatprep.subr.mxu0 0.0
    %5173 = vmatpush1.msra.mxu0 0.0
    %5174 = vmatprep.subr.mxu0 0.0
    %5175 = vmatpush1.msra.mxu0 0.0
    %5176 = vmatprep.subr.mxu0 0.0
    %5177 = vmatpush1.msra.mxu0 0.0
    %5178 = vmatprep.subr.mxu0 0.0
    %5179 = vmatpush1.msra.mxu0 0.0
    %5180 = vmatprep.subr.mxu0 0.0
    %5181 = vmatpush1.msra.mxu0 0.0
    %5182 = vmatprep.subr.mxu0 0.0
    %5183 = vmatpush1.msra.mxu0 0.0
    %5184 = vmatprep.subr.mxu0 0.0
    %5185 = vmatpush1.msra.mxu0 0.0
    %5186 = vmatprep.mubr.f32.mxu0 0.0
    %5187 = vmatmul.mubr.f32.gmra.mrb[0].mxu0 %v1340
    %v5188 = vpop.f32.mrb[0].mxu0
    %v5189 = vadd.f32 %v5120, %v5188
    %v5190 = vpop.f32.mrb[0].mxu0
    %5191 = vdwg.mxu0
    %v5192 = vadd.f32 %v5110, %v5189
    %v5193 = vld [vmem:[%s173] sm:$0xff]
    %v5194 = vld [vmem:[%s173 + $0x8] sm:$0xff]
    %v5195 = vld [vmem:[#allocation69] sm:$0x1]
    %v5197 = vlaneseq
    %v5198 = vshrl.u32 %v5197, 7
    %v5199 = vsub.s32 0, %v5198
    %v5200 = vrot.slane %v5195, %v5199
    %v5203 = vsel %vm1422, %v5192, 0
    %5205 = vmatprep.subr.mxu0 0.0
    %5206 = vmatpush1.msra.mxu0 %v5193
    %5207 = vmatprep.subr.mxu0 0.0
    %5208 = vmatpush1.msra.mxu0 %v5194
    %5209 = vmatprep.subr.mxu0 0.0
    %5210 = vmatpush1.msra.mxu0 0.0
    %5211 = vmatprep.subr.mxu0 0.0
    %5212 = vmatpush1.msra.mxu0 0.0
    %5213 = vmatprep.subr.mxu0 0.0
    %5214 = vmatpush1.msra.mxu0 0.0
    %5215 = vmatprep.subr.mxu0 0.0
    %5216 = vmatpush1.msra.mxu0 0.0
    %5217 = vmatprep.subr.mxu0 0.0
    %5218 = vmatpush1.msra.mxu0 0.0
    %5219 = vmatprep.subr.mxu0 0.0
    %5220 = vmatpush1.msra.mxu0 0.0
    %5221 = vmatprep.subr.mxu0 0.0
    %5222 = vmatpush1.msra.mxu0 0.0
    %5223 = vmatprep.subr.mxu0 0.0
    %5224 = vmatpush1.msra.mxu0 0.0
    %5225 = vmatprep.subr.mxu0 0.0
    %5226 = vmatpush1.msra.mxu0 0.0
    %5227 = vmatprep.subr.mxu0 0.0
    %5228 = vmatpush1.msra.mxu0 0.0
    %5229 = vmatprep.subr.mxu0 0.0
    %5230 = vmatpush1.msra.mxu0 0.0
    %5231 = vmatprep.subr.mxu0 0.0
    %5232 = vmatpush1.msra.mxu0 0.0
    %5233 = vmatprep.subr.mxu0 0.0
    %5234 = vmatpush1.msra.mxu0 0.0
    %5235 = vmatprep.subr.mxu0 0.0
    %5236 = vmatpush1.msra.mxu0 0.0
    %5237 = vmatprep.subr.mxu0 0.0
    %5238 = vmatpush1.msra.mxu0 0.0
    %5239 = vmatprep.subr.mxu0 0.0
    %5240 = vmatpush1.msra.mxu0 0.0
    %5241 = vmatprep.subr.mxu0 0.0
    %5242 = vmatpush1.msra.mxu0 0.0
    %5243 = vmatprep.subr.mxu0 0.0
    %5244 = vmatpush1.msra.mxu0 0.0
    %5245 = vmatprep.subr.mxu0 0.0
    %5246 = vmatpush1.msra.mxu0 0.0
    %5247 = vmatprep.subr.mxu0 0.0
    %5248 = vmatpush1.msra.mxu0 0.0
    %5249 = vmatprep.subr.mxu0 0.0
    %5250 = vmatpush1.msra.mxu0 0.0
    %5251 = vmatprep.subr.mxu0 0.0
    %5252 = vmatpush1.msra.mxu0 0.0
    %5253 = vmatprep.subr.mxu0 0.0
    %5254 = vmatpush1.msra.mxu0 0.0
    %5255 = vmatprep.subr.mxu0 0.0
    %5256 = vmatpush1.msra.mxu0 0.0
    %5257 = vmatprep.subr.mxu0 0.0
    %5258 = vmatpush1.msra.mxu0 0.0
    %5259 = vmatprep.subr.mxu0 0.0
    %5260 = vmatpush1.msra.mxu0 0.0
    %5261 = vmatprep.subr.mxu0 0.0
    %5262 = vmatpush1.msra.mxu0 0.0
    %5263 = vmatprep.subr.mxu0 0.0
    %5264 = vmatpush1.msra.mxu0 0.0
    %5265 = vmatprep.subr.mxu0 0.0
    %5266 = vmatpush1.msra.mxu0 0.0
    %5267 = vmatprep.subr.mxu0 0.0
    %5268 = vmatpush1.msra.mxu0 0.0
    %5269 = vmatprep.mubr.f32.mxu0 0.0
    %5270 = vmatmul.mubr.f32.gmra.mrb[0].mxu0 %v5203
    %v5271 = vpop.f32.mrb[0].mxu0
    %v5272 = vadd.f32 %v5200, %v5271
    %v5273 = vpop.f32.mrb[0].mxu0
    %5274 = vdwg.mxu0
    %v5275 = vmin.f32 %v5272, 20.0
    %v5276 = vmul.f32 %v5275, 1.442695
    %v5277 = vpow.pop %v5276
    %v5278 = vadd.f32 %v5277, 1.0
    %v5279 = vmul.f32 %v5278, %v5278
    %v5280 = vsub.f32 %v5279, 1.0
    %v5281 = vadd.f32 %v5279, 1.0
    %v5282 = vrcp.pop %v5281
    %v5283 = vmul.f32 %v5280, %v5282
    %vm5284 = vcmp.gt.f32.partialorder %v5272, 20.0
    %v5285 = vmul.f32 %v5272, %v5283
    %v5286 = vsel %vm5284, %v5272, %v5285
    %v5287 = vadd.f32 %v5286, %v5016
    %v5288 = vld [vmem:[%s179] sm:$0xff]
    %v5289 = vld [vmem:[%s179 + $0x8] sm:$0xff]
    %v5290 = vld [vmem:[#allocation72] sm:$0x1]
    %v5292 = vlaneseq
    %v5293 = vshrl.u32 %v5292, 7
    %v5294 = vsub.s32 0, %v5293
    %v5295 = vrot.slane %v5290, %v5294
    %v5298 = vsel %vm1422, %v5287, 0
    %5300 = vmatprep.subr.mxu0 0.0
    %5301 = vmatpush1.msra.mxu0 %v5288
    %5302 = vmatprep.subr.mxu0 0.0
    %5303 = vmatpush1.msra.mxu0 %v5289
    %5304 = vmatprep.subr.mxu0 0.0
    %5305 = vmatpush1.msra.mxu0 0.0
    %5306 = vmatprep.subr.mxu0 0.0
    %5307 = vmatpush1.msra.mxu0 0.0
    %5308 = vmatprep.subr.mxu0 0.0
    %5309 = vmatpush1.msra.mxu0 0.0
    %5310 = vmatprep.subr.mxu0 0.0
    %5311 = vmatpush1.msra.mxu0 0.0
    %5312 = vmatprep.subr.mxu0 0.0
    %5313 = vmatpush1.msra.mxu0 0.0
    %5314 = vmatprep.subr.mxu0 0.0
    %5315 = vmatpush1.msra.mxu0 0.0
    %5316 = vmatprep.subr.mxu0 0.0
    %5317 = vmatpush1.msra.mxu0 0.0
    %5318 = vmatprep.subr.mxu0 0.0
    %5319 = vmatpush1.msra.mxu0 0.0
    %5320 = vmatprep.subr.mxu0 0.0
    %5321 = vmatpush1.msra.mxu0 0.0
    %5322 = vmatprep.subr.mxu0 0.0
    %5323 = vmatpush1.msra.mxu0 0.0
    %5324 = vmatprep.subr.mxu0 0.0
    %5325 = vmatpush1.msra.mxu0 0.0
    %5326 = vmatprep.subr.mxu0 0.0
    %5327 = vmatpush1.msra.mxu0 0.0
    %5328 = vmatprep.subr.mxu0 0.0
    %5329 = vmatpush1.msra.mxu0 0.0
    %5330 = vmatprep.subr.mxu0 0.0
    %5331 = vmatpush1.msra.mxu0 0.0
    %5332 = vmatprep.subr.mxu0 0.0
    %5333 = vmatpush1.msra.mxu0 0.0
    %5334 = vmatprep.subr.mxu0 0.0
    %5335 = vmatpush1.msra.mxu0 0.0
    %5336 = vmatprep.subr.mxu0 0.0
    %5337 = vmatpush1.msra.mxu0 0.0
    %5338 = vmatprep.subr.mxu0 0.0
    %5339 = vmatpush1.msra.mxu0 0.0
    %5340 = vmatprep.subr.mxu0 0.0
    %5341 = vmatpush1.msra.mxu0 0.0
    %5342 = vmatprep.subr.mxu0 0.0
    %5343 = vmatpush1.msra.mxu0 0.0
    %5344 = vmatprep.subr.mxu0 0.0
    %5345 = vmatpush1.msra.mxu0 0.0
    %5346 = vmatprep.subr.mxu0 0.0
    %5347 = vmatpush1.msra.mxu0 0.0
    %5348 = vmatprep.subr.mxu0 0.0
    %5349 = vmatpush1.msra.mxu0 0.0
    %5350 = vmatprep.subr.mxu0 0.0
    %5351 = vmatpush1.msra.mxu0 0.0
    %5352 = vmatprep.subr.mxu0 0.0
    %5353 = vmatpush1.msra.mxu0 0.0
    %5354 = vmatprep.subr.mxu0 0.0
    %5355 = vmatpush1.msra.mxu0 0.0
    %5356 = vmatprep.subr.mxu0 0.0
    %5357 = vmatpush1.msra.mxu0 0.0
    %5358 = vmatprep.subr.mxu0 0.0
    %5359 = vmatpush1.msra.mxu0 0.0
    %5360 = vmatprep.subr.mxu0 0.0
    %5361 = vmatpush1.msra.mxu0 0.0
    %5362 = vmatprep.subr.mxu0 0.0
    %5363 = vmatpush1.msra.mxu0 0.0
    %5364 = vmatprep.mubr.f32.mxu0 0.0
    %5365 = vmatmul.mubr.f32.gmra.mrb[0].mxu0 %v5298
    %v5366 = vpop.f32.mrb[0].mxu0
    %v5367 = vadd.f32 %v5295, %v5366
    %v5368 = vpop.f32.mrb[0].mxu0
    %5369 = vdwg.mxu0
    %v5370 = vadd.s32 %v3821, 16
    %v5371 = vadd.s32 %v4599, 16
    %vm5372 = vcmp.eq.s32.totalorder %v3823, %v5370
    %vm5373 = vcmp.eq.s32.totalorder %v3823, %v5371
    %v5374 = vsel %vm5372, 1, 0
    %v5375 = vsel %vm5373, 1, 0
    %v5376 = vcvt.s32.f32 %v5374
    %v5377 = vcvt.s32.f32 %v5375
    %5378 = vmatprep.subr.mxu0 0.0
    %5379 = vmatpush1.msra.mxu0 %v5376
    %5380 = vmatprep.subr.mxu0 0.0
    %5381 = vmatpush1.msra.mxu0 %v5377
    %5382 = vmatprep.subr.mxu0 0.0
    %5383 = vmatpush1.msra.mxu0 0.0
    %5384 = vmatprep.subr.mxu0 0.0
    %5385 = vmatpush1.msra.mxu0 0.0
    %5386 = vmatprep.subr.mxu0 0.0
    %5387 = vmatpush1.msra.mxu0 0.0
    %5388 = vmatprep.subr.mxu0 0.0
    %5389 = vmatpush1.msra.mxu0 0.0
    %5390 = vmatprep.subr.mxu0 0.0
    %5391 = vmatpush1.msra.mxu0 0.0
    %5392 = vmatprep.subr.mxu0 0.0
    %5393 = vmatpush1.msra.mxu0 0.0
    %5394 = vmatprep.subr.mxu0 0.0
    %5395 = vmatpush1.msra.mxu0 0.0
    %5396 = vmatprep.subr.mxu0 0.0
    %5397 = vmatpush1.msra.mxu0 0.0
    %5398 = vmatprep.subr.mxu0 0.0
    %5399 = vmatpush1.msra.mxu0 0.0
    %5400 = vmatprep.subr.mxu0 0.0
    %5401 = vmatpush1.msra.mxu0 0.0
    %5402 = vmatprep.subr.mxu0 0.0
    %5403 = vmatpush1.msra.mxu0 0.0
    %5404 = vmatprep.subr.mxu0 0.0
    %5405 = vmatpush1.msra.mxu0 0.0
    %5406 = vmatprep.subr.mxu0 0.0
    %5407 = vmatpush1.msra.mxu0 0.0
    %5408 = vmatprep.subr.mxu0 0.0
    %5409 = vmatpush1.msra.mxu0 0.0
    %5410 = vmatprep.subr.mxu0 0.0
    %5411 = vmatpush1.msra.mxu0 0.0
    %5412 = vmatprep.subr.mxu0 0.0
    %5413 = vmatpush1.msra.mxu0 0.0
    %5414 = vmatprep.subr.mxu0 0.0
    %5415 = vmatpush1.msra.mxu0 0.0
    %5416 = vmatprep.subr.mxu0 0.0
    %5417 = vmatpush1.msra.mxu0 0.0
    %5418 = vmatprep.subr.mxu0 0.0
    %5419 = vmatpush1.msra.mxu0 0.0
    %5420 = vmatprep.subr.mxu0 0.0
    %5421 = vmatpush1.msra.mxu0 0.0
    %5422 = vmatprep.subr.mxu0 0.0
    %5423 = vmatpush1.msra.mxu0 0.0
    %5424 = vmatprep.subr.mxu0 0.0
    %5425 = vmatpush1.msra.mxu0 0.0
    %5426 = vmatprep.subr.mxu0 0.0
    %5427 = vmatpush1.msra.mxu0 0.0
    %5428 = vmatprep.subr.mxu0 0.0
    %5429 = vmatpush1.msra.mxu0 0.0
    %5430 = vmatprep.subr.mxu0 0.0
    %5431 = vmatpush1.msra.mxu0 0.0
    %5432 = vmatprep.subr.mxu0 0.0
    %5433 = vmatpush1.msra.mxu0 0.0
    %5434 = vmatprep.subr.mxu0 0.0
    %5435 = vmatpush1.msra.mxu0 0.0
    %5436 = vmatprep.subr.mxu0 0.0
    %5437 = vmatpush1.msra.mxu0 0.0
    %5438 = vmatprep.subr.mxu0 0.0
    %5439 = vmatpush1.msra.mxu0 0.0
    %5440 = vmatprep.subr.mxu0 0.0
    %5441 = vmatpush1.msra.mxu0 0.0
    %5442 = vmatprep.mubr.f32.mxu0 0.0
    %5443 = vmatmul.mubr.f32.gmra.mrb[0].mxu0 %v1871
    %v5444 = vpop.f32.mrb[0].mxu0
    %v5445 = vadd.f32 0.0, %v5444
    %v5446 = vpop.f32.mrb[0].mxu0
    %5447 = vdwg.mxu0
    %v5449 = vsel %vm1422, %v5367, 0
    %5451 = vmatprep.subr.mxu0 0.0
    %5452 = vmatpush1.msra.mxu0 %v3826
    %5453 = vmatprep.subr.mxu0 0.0
    %5454 = vmatpush1.msra.mxu0 %v4602
    %5455 = vmatprep.subr.mxu0 0.0
    %5456 = vmatpush1.msra.mxu0 0.0
    %5457 = vmatprep.subr.mxu0 0.0
    %5458 = vmatpush1.msra.mxu0 0.0
    %5459 = vmatprep.subr.mxu0 0.0
    %5460 = vmatpush1.msra.mxu0 0.0
    %5461 = vmatprep.subr.mxu0 0.0
    %5462 = vmatpush1.msra.mxu0 0.0
    %5463 = vmatprep.subr.mxu0 0.0
    %5464 = vmatpush1.msra.mxu0 0.0
    %5465 = vmatprep.subr.mxu0 0.0
    %5466 = vmatpush1.msra.mxu0 0.0
    %5467 = vmatprep.subr.mxu0 0.0
    %5468 = vmatpush1.msra.mxu0 0.0
    %5469 = vmatprep.subr.mxu0 0.0
    %5470 = vmatpush1.msra.mxu0 0.0
    %5471 = vmatprep.subr.mxu0 0.0
    %5472 = vmatpush1.msra.mxu0 0.0
    %5473 = vmatprep.subr.mxu0 0.0
    %5474 = vmatpush1.msra.mxu0 0.0
    %5475 = vmatprep.subr.mxu0 0.0
    %5476 = vmatpush1.msra.mxu0 0.0
    %5477 = vmatprep.subr.mxu0 0.0
    %5478 = vmatpush1.msra.mxu0 0.0
    %5479 = vmatprep.subr.mxu0 0.0
    %5480 = vmatpush1.msra.mxu0 0.0
    %5481 = vmatprep.subr.mxu0 0.0
    %5482 = vmatpush1.msra.mxu0 0.0
    %5483 = vmatprep.subr.mxu0 0.0
    %5484 = vmatpush1.msra.mxu0 0.0
    %5485 = vmatprep.subr.mxu0 0.0
    %5486 = vmatpush1.msra.mxu0 0.0
    %5487 = vmatprep.subr.mxu0 0.0
    %5488 = vmatpush1.msra.mxu0 0.0
    %5489 = vmatprep.subr.mxu0 0.0
    %5490 = vmatpush1.msra.mxu0 0.0
    %5491 = vmatprep.subr.mxu0 0.0
    %5492 = vmatpush1.msra.mxu0 0.0
    %5493 = vmatprep.subr.mxu0 0.0
    %5494 = vmatpush1.msra.mxu0 0.0
    %5495 = vmatprep.subr.mxu0 0.0
    %5496 = vmatpush1.msra.mxu0 0.0
    %5497 = vmatprep.subr.mxu0 0.0
    %5498 = vmatpush1.msra.mxu0 0.0
    %5499 = vmatprep.subr.mxu0 0.0
    %5500 = vmatpush1.msra.mxu0 0.0
    %5501 = vmatprep.subr.mxu0 0.0
    %5502 = vmatpush1.msra.mxu0 0.0
    %5503 = vmatprep.subr.mxu0 0.0
    %5504 = vmatpush1.msra.mxu0 0.0
    %5505 = vmatprep.subr.mxu0 0.0
    %5506 = vmatpush1.msra.mxu0 0.0
    %5507 = vmatprep.subr.mxu0 0.0
    %5508 = vmatpush1.msra.mxu0 0.0
    %5509 = vmatprep.subr.mxu0 0.0
    %5510 = vmatpush1.msra.mxu0 0.0
    %5511 = vmatprep.subr.mxu0 0.0
    %5512 = vmatpush1.msra.mxu0 0.0
    %5513 = vmatprep.subr.mxu0 0.0
    %5514 = vmatpush1.msra.mxu0 0.0
    %5515 = vmatprep.mubr.f32.mxu0 0.0
    %5516 = vmatmul.mubr.f32.gmra.mrb[0].mxu0 %v5449
    %v5517 = vpop.f32.mrb[0].mxu0
    %v5518 = vadd.f32 %v5445, %v5517
    %v5519 = vpop.f32.mrb[0].mxu0
    %5520 = vdwg.mxu0
    %v5521 = vld [vmem:[%s187] sm:$0xff]
    %v5522 = vld [vmem:[%s187 + $0x8] sm:$0xff]
    %v5523 = vld [vmem:[%s187 + $0x10] sm:$0xff]
    %v5524 = vld [vmem:[%s187 + $0x18] sm:$0xff]
    %v5525 = vld [vmem:[#allocation74] sm:$0x1]
    %v5527 = vlaneseq
    %v5528 = vshrl.u32 %v5527, 7
    %v5529 = vsub.s32 0, %v5528
    %v5530 = vrot.slane %v5525, %v5529
    %v5533 = vsel %vm1041, %v5518, 0
    %5535 = vmatprep.subr.mxu0 0.0
    %5536 = vmatpush1.msra.mxu0 %v5521
    %5537 = vmatprep.subr.mxu0 0.0
    %5538 = vmatpush1.msra.mxu0 %v5522
    %5539 = vmatprep.subr.mxu0 0.0
    %5540 = vmatpush1.msra.mxu0 %v5523
    %5541 = vmatprep.subr.mxu0 0.0
    %5542 = vmatpush1.msra.mxu0 %v5524
    %5543 = vmatprep.subr.mxu0 0.0
    %5544 = vmatpush1.msra.mxu0 0.0
    %5545 = vmatprep.subr.mxu0 0.0
    %5546 = vmatpush1.msra.mxu0 0.0
    %5547 = vmatprep.subr.mxu0 0.0
    %5548 = vmatpush1.msra.mxu0 0.0
    %5549 = vmatprep.subr.mxu0 0.0
    %5550 = vmatpush1.msra.mxu0 0.0
    %5551 = vmatprep.subr.mxu0 0.0
    %5552 = vmatpush1.msra.mxu0 0.0
    %5553 = vmatprep.subr.mxu0 0.0
    %5554 = vmatpush1.msra.mxu0 0.0
    %5555 = vmatprep.subr.mxu0 0.0
    %5556 = vmatpush1.msra.mxu0 0.0
    %5557 = vmatprep.subr.mxu0 0.0
    %5558 = vmatpush1.msra.mxu0 0.0
    %5559 = vmatprep.subr.mxu0 0.0
    %5560 = vmatpush1.msra.mxu0 0.0
    %5561 = vmatprep.subr.mxu0 0.0
    %5562 = vmatpush1.msra.mxu0 0.0
    %5563 = vmatprep.subr.mxu0 0.0
    %5564 = vmatpush1.msra.mxu0 0.0
    %5565 = vmatprep.subr.mxu0 0.0
    %5566 = vmatpush1.msra.mxu0 0.0
    %5567 = vmatprep.subr.mxu0 0.0
    %5568 = vmatpush1.msra.mxu0 0.0
    %5569 = vmatprep.subr.mxu0 0.0
    %5570 = vmatpush1.msra.mxu0 0.0
    %5571 = vmatprep.subr.mxu0 0.0
    %5572 = vmatpush1.msra.mxu0 0.0
    %5573 = vmatprep.subr.mxu0 0.0
    %5574 = vmatpush1.msra.mxu0 0.0
    %5575 = vmatprep.subr.mxu0 0.0
    %5576 = vmatpush1.msra.mxu0 0.0
    %5577 = vmatprep.subr.mxu0 0.0
    %5578 = vmatpush1.msra.mxu0 0.0
    %5579 = vmatprep.subr.mxu0 0.0
    %5580 = vmatpush1.msra.mxu0 0.0
    %5581 = vmatprep.subr.mxu0 0.0
    %5582 = vmatpush1.msra.mxu0 0.0
    %5583 = vmatprep.subr.mxu0 0.0
    %5584 = vmatpush1.msra.mxu0 0.0
    %5585 = vmatprep.subr.mxu0 0.0
    %5586 = vmatpush1.msra.mxu0 0.0
    %5587 = vmatprep.subr.mxu0 0.0
    %5588 = vmatpush1.msra.mxu0 0.0
    %5589 = vmatprep.subr.mxu0 0.0
    %5590 = vmatpush1.msra.mxu0 0.0
    %5591 = vmatprep.subr.mxu0 0.0
    %5592 = vmatpush1.msra.mxu0 0.0
    %5593 = vmatprep.subr.mxu0 0.0
    %5594 = vmatpush1.msra.mxu0 0.0
    %5595 = vmatprep.subr.mxu0 0.0
    %5596 = vmatpush1.msra.mxu0 0.0
    %5597 = vmatprep.subr.mxu0 0.0
    %5598 = vmatpush1.msra.mxu0 0.0
    %5599 = vmatprep.mubr.f32.mxu0 0.0
    %5600 = vmatmul.mubr.f32.gmra.mrb[0].mxu0 %v5533
    %v5601 = vpop.f32.mrb[0].mxu0
    %v5602 = vadd.f32 %v5530, %v5601
    %v5603 = vpop.f32.mrb[0].mxu0
    %5604 = vdwg.mxu0
    %v5605 = vmin.f32 %v5602, 20.0
    %v5606 = vmul.f32 %v5605, 1.442695
    %v5607 = vpow.pop %v5606
    %v5608 = vadd.f32 %v5607, 1.0
    %v5609 = vmul.f32 %v5608, %v5608
    %v5610 = vsub.f32 %v5609, 1.0
    %v5611 = vadd.f32 %v5609, 1.0
    %v5612 = vrcp.pop %v5611
    %v5613 = vmul.f32 %v5610, %v5612
    %vm5614 = vcmp.gt.f32.partialorder %v5602, 20.0
    %v5615 = vmul.f32 %v5602, %v5613
    %v5616 = vsel %vm5614, %v5602, %v5615
    %v5617 = vld [vmem:[%s191] sm:$0xff]
    %v5618 = vld [vmem:[%s191 + $0x8] sm:$0xff]
    %v5619 = vld [vmem:[%s191 + $0x10] sm:$0xff]
    %v5620 = vld [vmem:[%s191 + $0x18] sm:$0xff]
    %v5621 = vld [vmem:[#allocation77] sm:$0x1]
    %v5623 = vlaneseq
    %v5624 = vshrl.u32 %v5623, 7
    %v5625 = vsub.s32 0, %v5624
    %v5626 = vrot.slane %v5621, %v5625
    %5628 = vmatprep.subr.mxu0 0.0
    %5629 = vmatpush1.msra.mxu0 %v5617
    %5630 = vmatprep.subr.mxu0 0.0
    %5631 = vmatpush1.msra.mxu0 %v5618
    %5632 = vmatprep.subr.mxu0 0.0
    %5633 = vmatpush1.msra.mxu0 %v5619
    %5634 = vmatprep.subr.mxu0 0.0
    %5635 = vmatpush1.msra.mxu0 %v5620
    %5636 = vmatprep.subr.mxu0 0.0
    %5637 = vmatpush1.msra.mxu0 0.0
    %5638 = vmatprep.subr.mxu0 0.0
    %5639 = vmatpush1.msra.mxu0 0.0
    %5640 = vmatprep.subr.mxu0 0.0
    %5641 = vmatpush1.msra.mxu0 0.0
    %5642 = vmatprep.subr.mxu0 0.0
    %5643 = vmatpush1.msra.mxu0 0.0
    %5644 = vmatprep.subr.mxu0 0.0
    %5645 = vmatpush1.msra.mxu0 0.0
    %5646 = vmatprep.subr.mxu0 0.0
    %5647 = vmatpush1.msra.mxu0 0.0
    %5648 = vmatprep.subr.mxu0 0.0
    %5649 = vmatpush1.msra.mxu0 0.0
    %5650 = vmatprep.subr.mxu0 0.0
    %5651 = vmatpush1.msra.mxu0 0.0
    %5652 = vmatprep.subr.mxu0 0.0
    %5653 = vmatpush1.msra.mxu0 0.0
    %5654 = vmatprep.subr.mxu0 0.0
    %5655 = vmatpush1.msra.mxu0 0.0
    %5656 = vmatprep.subr.mxu0 0.0
    %5657 = vmatpush1.msra.mxu0 0.0
    %5658 = vmatprep.subr.mxu0 0.0
    %5659 = vmatpush1.msra.mxu0 0.0
    %5660 = vmatprep.subr.mxu0 0.0
    %5661 = vmatpush1.msra.mxu0 0.0
    %5662 = vmatprep.subr.mxu0 0.0
    %5663 = vmatpush1.msra.mxu0 0.0
    %5664 = vmatprep.subr.mxu0 0.0
    %5665 = vmatpush1.msra.mxu0 0.0
    %5666 = vmatprep.subr.mxu0 0.0
    %5667 = vmatpush1.msra.mxu0 0.0
    %5668 = vmatprep.subr.mxu0 0.0
    %5669 = vmatpush1.msra.mxu0 0.0
    %5670 = vmatprep.subr.mxu0 0.0
    %5671 = vmatpush1.msra.mxu0 0.0
    %5672 = vmatprep.subr.mxu0 0.0
    %5673 = vmatpush1.msra.mxu0 0.0
    %5674 = vmatprep.subr.mxu0 0.0
    %5675 = vmatpush1.msra.mxu0 0.0
    %5676 = vmatprep.subr.mxu0 0.0
    %5677 = vmatpush1.msra.mxu0 0.0
    %5678 = vmatprep.subr.mxu0 0.0
    %5679 = vmatpush1.msra.mxu0 0.0
    %5680 = vmatprep.subr.mxu0 0.0
    %5681 = vmatpush1.msra.mxu0 0.0
    %5682 = vmatprep.subr.mxu0 0.0
    %5683 = vmatpush1.msra.mxu0 0.0
    %5684 = vmatprep.subr.mxu0 0.0
    %5685 = vmatpush1.msra.mxu0 0.0
    %5686 = vmatprep.subr.mxu0 0.0
    %5687 = vmatpush1.msra.mxu0 0.0
    %5688 = vmatprep.subr.mxu0 0.0
    %5689 = vmatpush1.msra.mxu0 0.0
    %5690 = vmatprep.subr.mxu0 0.0
    %5691 = vmatpush1.msra.mxu0 0.0
    %5692 = vmatprep.mubr.f32.mxu0 0.0
    %5693 = vmatmul.mubr.f32.gmra.mrb[0].mxu0 %v1340
    %v5694 = vpop.f32.mrb[0].mxu0
    %v5695 = vadd.f32 %v5626, %v5694
    %v5696 = vpop.f32.mrb[0].mxu0
    %5697 = vdwg.mxu0
    %v5698 = vadd.f32 %v5616, %v5695
    %v5699 = vld [vmem:[%s189] sm:$0xff]
    %v5700 = vld [vmem:[%s189 + $0x8] sm:$0xff]
    %v5701 = vld [vmem:[%s189 + $0x10] sm:$0xff]
    %v5702 = vld [vmem:[%s189 + $0x18] sm:$0xff]
    %v5703 = vld [vmem:[#allocation75] sm:$0x1]
    %v5705 = vlaneseq
    %v5706 = vshrl.u32 %v5705, 7
    %v5707 = vsub.s32 0, %v5706
    %v5708 = vrot.slane %v5703, %v5707
    %v5711 = vsel %vm1041, %v5698, 0
    %5713 = vmatprep.subr.mxu0 0.0
    %5714 = vmatpush1.msra.mxu0 %v5699
    %5715 = vmatprep.subr.mxu0 0.0
    %5716 = vmatpush1.msra.mxu0 %v5700
    %5717 = vmatprep.subr.mxu0 0.0
    %5718 = vmatpush1.msra.mxu0 %v5701
    %5719 = vmatprep.subr.mxu0 0.0
    %5720 = vmatpush1.msra.mxu0 %v5702
    %5721 = vmatprep.subr.mxu0 0.0
    %5722 = vmatpush1.msra.mxu0 0.0
    %5723 = vmatprep.subr.mxu0 0.0
    %5724 = vmatpush1.msra.mxu0 0.0
    %5725 = vmatprep.subr.mxu0 0.0
    %5726 = vmatpush1.msra.mxu0 0.0
    %5727 = vmatprep.subr.mxu0 0.0
    %5728 = vmatpush1.msra.mxu0 0.0
    %5729 = vmatprep.subr.mxu0 0.0
    %5730 = vmatpush1.msra.mxu0 0.0
    %5731 = vmatprep.subr.mxu0 0.0
    %5732 = vmatpush1.msra.mxu0 0.0
    %5733 = vmatprep.subr.mxu0 0.0
    %5734 = vmatpush1.msra.mxu0 0.0
    %5735 = vmatprep.subr.mxu0 0.0
    %5736 = vmatpush1.msra.mxu0 0.0
    %5737 = vmatprep.subr.mxu0 0.0
    %5738 = vmatpush1.msra.mxu0 0.0
    %5739 = vmatprep.subr.mxu0 0.0
    %5740 = vmatpush1.msra.mxu0 0.0
    %5741 = vmatprep.subr.mxu0 0.0
    %5742 = vmatpush1.msra.mxu0 0.0
    %5743 = vmatprep.subr.mxu0 0.0
    %5744 = vmatpush1.msra.mxu0 0.0
    %5745 = vmatprep.subr.mxu0 0.0
    %5746 = vmatpush1.msra.mxu0 0.0
    %5747 = vmatprep.subr.mxu0 0.0
    %5748 = vmatpush1.msra.mxu0 0.0
    %5749 = vmatprep.subr.mxu0 0.0
    %5750 = vmatpush1.msra.mxu0 0.0
    %5751 = vmatprep.subr.mxu0 0.0
    %5752 = vmatpush1.msra.mxu0 0.0
    %5753 = vmatprep.subr.mxu0 0.0
    %5754 = vmatpush1.msra.mxu0 0.0
    %5755 = vmatprep.subr.mxu0 0.0
    %5756 = vmatpush1.msra.mxu0 0.0
    %5757 = vmatprep.subr.mxu0 0.0
    %5758 = vmatpush1.msra.mxu0 0.0
    %5759 = vmatprep.subr.mxu0 0.0
    %5760 = vmatpush1.msra.mxu0 0.0
    %5761 = vmatprep.subr.mxu0 0.0
    %5762 = vmatpush1.msra.mxu0 0.0
    %5763 = vmatprep.subr.mxu0 0.0
    %5764 = vmatpush1.msra.mxu0 0.0
    %5765 = vmatprep.subr.mxu0 0.0
    %5766 = vmatpush1.msra.mxu0 0.0
    %5767 = vmatprep.subr.mxu0 0.0
    %5768 = vmatpush1.msra.mxu0 0.0
    %5769 = vmatprep.subr.mxu0 0.0
    %5770 = vmatpush1.msra.mxu0 0.0
    %5771 = vmatprep.subr.mxu0 0.0
    %5772 = vmatpush1.msra.mxu0 0.0
    %5773 = vmatprep.subr.mxu0 0.0
    %5774 = vmatpush1.msra.mxu0 0.0
    %5775 = vmatprep.subr.mxu0 0.0
    %5776 = vmatpush1.msra.mxu0 0.0
    %5777 = vmatprep.mubr.f32.mxu0 0.0
    %5778 = vmatmul.mubr.f32.gmra.mrb[0].mxu0 %v5711
    %v5779 = vpop.f32.mrb[0].mxu0
    %v5780 = vadd.f32 %v5708, %v5779
    %v5781 = vpop.f32.mrb[0].mxu0
    %5782 = vdwg.mxu0
    %v5783 = vmin.f32 %v5780, 20.0
    %v5784 = vmul.f32 %v5783, 1.442695
    %v5785 = vpow.pop %v5784
    %v5786 = vadd.f32 %v5785, 1.0
    %v5787 = vmul.f32 %v5786, %v5786
    %v5788 = vsub.f32 %v5787, 1.0
    %v5789 = vadd.f32 %v5787, 1.0
    %v5790 = vrcp.pop %v5789
    %v5791 = vmul.f32 %v5788, %v5790
    %vm5792 = vcmp.gt.f32.partialorder %v5780, 20.0
    %v5793 = vmul.f32 %v5780, %v5791
    %v5794 = vsel %vm5792, %v5780, %v5793
    %v5795 = vadd.f32 %v5794, %v5518
    %v5796 = vld [vmem:[%s199] sm:$0xff]
    %v5797 = vld [vmem:[%s199 + $0x8] sm:$0xff]
    %v5798 = vld [vmem:[%s199 + $0x10] sm:$0xff]
    %v5799 = vld [vmem:[%s199 + $0x18] sm:$0xff]
    %v5800 = vld [vmem:[#allocation78] sm:$0x1]
    %v5802 = vlaneseq
    %v5803 = vshrl.u32 %v5802, 7
    %v5804 = vsub.s32 0, %v5803
    %v5805 = vrot.slane %v5800, %v5804
    %v5808 = vsel %vm1041, %v5795, 0
    %5810 = vmatprep.subr.mxu0 0.0
    %5811 = vmatpush1.msra.mxu0 %v5796
    %5812 = vmatprep.subr.mxu0 0.0
    %5813 = vmatpush1.msra.mxu0 %v5797
    %5814 = vmatprep.subr.mxu0 0.0
    %5815 = vmatpush1.msra.mxu0 %v5798
    %5816 = vmatprep.subr.mxu0 0.0
    %5817 = vmatpush1.msra.mxu0 %v5799
    %5818 = vmatprep.subr.mxu0 0.0
    %5819 = vmatpush1.msra.mxu0 0.0
    %5820 = vmatprep.subr.mxu0 0.0
    %5821 = vmatpush1.msra.mxu0 0.0
    %5822 = vmatprep.subr.mxu0 0.0
    %5823 = vmatpush1.msra.mxu0 0.0
    %5824 = vmatprep.subr.mxu0 0.0
    %5825 = vmatpush1.msra.mxu0 0.0
    %5826 = vmatprep.subr.mxu0 0.0
    %5827 = vmatpush1.msra.mxu0 0.0
    %5828 = vmatprep.subr.mxu0 0.0
    %5829 = vmatpush1.msra.mxu0 0.0
    %5830 = vmatprep.subr.mxu0 0.0
    %5831 = vmatpush1.msra.mxu0 0.0
    %5832 = vmatprep.subr.mxu0 0.0
    %5833 = vmatpush1.msra.mxu0 0.0
    %5834 = vmatprep.subr.mxu0 0.0
    %5835 = vmatpush1.msra.mxu0 0.0
    %5836 = vmatprep.subr.mxu0 0.0
    %5837 = vmatpush1.msra.mxu0 0.0
    %5838 = vmatprep.subr.mxu0 0.0
    %5839 = vmatpush1.msra.mxu0 0.0
    %5840 = vmatprep.subr.mxu0 0.0
    %5841 = vmatpush1.msra.mxu0 0.0
    %5842 = vmatprep.subr.mxu0 0.0
    %5843 = vmatpush1.msra.mxu0 0.0
    %5844 = vmatprep.subr.mxu0 0.0
    %5845 = vmatpush1.msra.mxu0 0.0
    %5846 = vmatprep.subr.mxu0 0.0
    %5847 = vmatpush1.msra.mxu0 0.0
    %5848 = vmatprep.subr.mxu0 0.0
    %5849 = vmatpush1.msra.mxu0 0.0
    %5850 = vmatprep.subr.mxu0 0.0
    %5851 = vmatpush1.msra.mxu0 0.0
    %5852 = vmatprep.subr.mxu0 0.0
    %5853 = vmatpush1.msra.mxu0 0.0
    %5854 = vmatprep.subr.mxu0 0.0
    %5855 = vmatpush1.msra.mxu0 0.0
    %5856 = vmatprep.subr.mxu0 0.0
    %5857 = vmatpush1.msra.mxu0 0.0
    %5858 = vmatprep.subr.mxu0 0.0
    %5859 = vmatpush1.msra.mxu0 0.0
    %5860 = vmatprep.subr.mxu0 0.0
    %5861 = vmatpush1.msra.mxu0 0.0
    %5862 = vmatprep.subr.mxu0 0.0
    %5863 = vmatpush1.msra.mxu0 0.0
    %5864 = vmatprep.subr.mxu0 0.0
    %5865 = vmatpush1.msra.mxu0 0.0
    %5866 = vmatprep.subr.mxu0 0.0
    %5867 = vmatpush1.msra.mxu0 0.0
    %5868 = vmatprep.subr.mxu0 0.0
    %5869 = vmatpush1.msra.mxu0 0.0
    %5870 = vmatprep.subr.mxu0 0.0
    %5871 = vmatpush1.msra.mxu0 0.0
    %5872 = vmatprep.subr.mxu0 0.0
    %5873 = vmatpush1.msra.mxu0 0.0
    %5874 = vmatprep.mubr.f32.mxu0 0.0
    %5875 = vmatmul.mubr.f32.gmra.mrb[0].mxu0 %v5808
    %v5876 = vpop.f32.mrb[0].mxu0
    %v5877 = vadd.f32 %v5805, %v5876
    %v5878 = vpop.f32.mrb[0].mxu0
    %5879 = vdwg.mxu0
    %v5880 = vmin.f32 %v5877, 20.0
    %v5881 = vmul.f32 %v5880, 1.442695
    %v5882 = vpow.pop %v5881
    %v5883 = vadd.f32 %v5882, 1.0
    %v5884 = vmul.f32 %v5883, %v5883
    %v5885 = vsub.f32 %v5884, 1.0
    %v5886 = vadd.f32 %v5884, 1.0
    %v5887 = vrcp.pop %v5886
    %v5888 = vmul.f32 %v5885, %v5887
    %vm5889 = vcmp.gt.f32.partialorder %v5877, 20.0
    %v5890 = vmul.f32 %v5877, %v5888
    %v5891 = vsel %vm5889, %v5877, %v5890
    %v5892 = vld [vmem:[%s203] sm:$0xff]
    %v5893 = vld [vmem:[%s203 + $0x8] sm:$0xff]
    %v5894 = vld [vmem:[%s203 + $0x10] sm:$0xff]
    %v5895 = vld [vmem:[%s203 + $0x18] sm:$0xff]
    %v5896 = vld [vmem:[#allocation81] sm:$0x1]
    %v5898 = vlaneseq
    %v5899 = vshrl.u32 %v5898, 7
    %v5900 = vsub.s32 0, %v5899
    %v5901 = vrot.slane %v5896, %v5900
    %5903 = vmatprep.subr.mxu0 0.0
    %5904 = vmatpush1.msra.mxu0 %v5892
    %5905 = vmatprep.subr.mxu0 0.0
    %5906 = vmatpush1.msra.mxu0 %v5893
    %5907 = vmatprep.subr.mxu0 0.0
    %5908 = vmatpush1.msra.mxu0 %v5894
    %5909 = vmatprep.subr.mxu0 0.0
    %5910 = vmatpush1.msra.mxu0 %v5895
    %5911 = vmatprep.subr.mxu0 0.0
    %5912 = vmatpush1.msra.mxu0 0.0
    %5913 = vmatprep.subr.mxu0 0.0
    %5914 = vmatpush1.msra.mxu0 0.0
    %5915 = vmatprep.subr.mxu0 0.0
    %5916 = vmatpush1.msra.mxu0 0.0
    %5917 = vmatprep.subr.mxu0 0.0
    %5918 = vmatpush1.msra.mxu0 0.0
    %5919 = vmatprep.subr.mxu0 0.0
    %5920 = vmatpush1.msra.mxu0 0.0
    %5921 = vmatprep.subr.mxu0 0.0
    %5922 = vmatpush1.msra.mxu0 0.0
    %5923 = vmatprep.subr.mxu0 0.0
    %5924 = vmatpush1.msra.mxu0 0.0
    %5925 = vmatprep.subr.mxu0 0.0
    %5926 = vmatpush1.msra.mxu0 0.0
    %5927 = vmatprep.subr.mxu0 0.0
    %5928 = vmatpush1.msra.mxu0 0.0
    %5929 = vmatprep.subr.mxu0 0.0
    %5930 = vmatpush1.msra.mxu0 0.0
    %5931 = vmatprep.subr.mxu0 0.0
    %5932 = vmatpush1.msra.mxu0 0.0
    %5933 = vmatprep.subr.mxu0 0.0
    %5934 = vmatpush1.msra.mxu0 0.0
    %5935 = vmatprep.subr.mxu0 0.0
    %5936 = vmatpush1.msra.mxu0 0.0
    %5937 = vmatprep.subr.mxu0 0.0
    %5938 = vmatpush1.msra.mxu0 0.0
    %5939 = vmatprep.subr.mxu0 0.0
    %5940 = vmatpush1.msra.mxu0 0.0
    %5941 = vmatprep.subr.mxu0 0.0
    %5942 = vmatpush1.msra.mxu0 0.0
    %5943 = vmatprep.subr.mxu0 0.0
    %5944 = vmatpush1.msra.mxu0 0.0
    %5945 = vmatprep.subr.mxu0 0.0
    %5946 = vmatpush1.msra.mxu0 0.0
    %5947 = vmatprep.subr.mxu0 0.0
    %5948 = vmatpush1.msra.mxu0 0.0
    %5949 = vmatprep.subr.mxu0 0.0
    %5950 = vmatpush1.msra.mxu0 0.0
    %5951 = vmatprep.subr.mxu0 0.0
    %5952 = vmatpush1.msra.mxu0 0.0
    %5953 = vmatprep.subr.mxu0 0.0
    %5954 = vmatpush1.msra.mxu0 0.0
    %5955 = vmatprep.subr.mxu0 0.0
    %5956 = vmatpush1.msra.mxu0 0.0
    %5957 = vmatprep.subr.mxu0 0.0
    %5958 = vmatpush1.msra.mxu0 0.0
    %5959 = vmatprep.subr.mxu0 0.0
    %5960 = vmatpush1.msra.mxu0 0.0
    %5961 = vmatprep.subr.mxu0 0.0
    %5962 = vmatpush1.msra.mxu0 0.0
    %5963 = vmatprep.subr.mxu0 0.0
    %5964 = vmatpush1.msra.mxu0 0.0
    %5965 = vmatprep.subr.mxu0 0.0
    %5966 = vmatpush1.msra.mxu0 0.0
    %5967 = vmatprep.mubr.f32.mxu0 0.0
    %5968 = vmatmul.mubr.f32.gmra.mrb[0].mxu0 %v1340
    %v5969 = vpop.f32.mrb[0].mxu0
    %v5970 = vadd.f32 %v5901, %v5969
    %v5971 = vpop.f32.mrb[0].mxu0
    %5972 = vdwg.mxu0
    %v5973 = vadd.f32 %v5891, %v5970
    %v5974 = vld [vmem:[%s201] sm:$0xff]
    %v5975 = vld [vmem:[%s201 + $0x8] sm:$0xff]
    %v5976 = vld [vmem:[%s201 + $0x10] sm:$0xff]
    %v5977 = vld [vmem:[%s201 + $0x18] sm:$0xff]
    %v5978 = vld [vmem:[#allocation80] sm:$0x1]
    %v5980 = vlaneseq
    %v5981 = vshrl.u32 %v5980, 7
    %v5982 = vsub.s32 0, %v5981
    %v5983 = vrot.slane %v5978, %v5982
    %v5986 = vsel %vm1041, %v5973, 0
    %5988 = vmatprep.subr.mxu0 0.0
    %5989 = vmatpush1.msra.mxu0 %v5974
    %5990 = vmatprep.subr.mxu0 0.0
    %5991 = vmatpush1.msra.mxu0 %v5975
    %5992 = vmatprep.subr.mxu0 0.0
    %5993 = vmatpush1.msra.mxu0 %v5976
    %5994 = vmatprep.subr.mxu0 0.0
    %5995 = vmatpush1.msra.mxu0 %v5977
    %5996 = vmatprep.subr.mxu0 0.0
    %5997 = vmatpush1.msra.mxu0 0.0
    %5998 = vmatprep.subr.mxu0 0.0
    %5999 = vmatpush1.msra.mxu0 0.0
    %6000 = vmatprep.subr.mxu0 0.0
    %6001 = vmatpush1.msra.mxu0 0.0
    %6002 = vmatprep.subr.mxu0 0.0
    %6003 = vmatpush1.msra.mxu0 0.0
    %6004 = vmatprep.subr.mxu0 0.0
    %6005 = vmatpush1.msra.mxu0 0.0
    %6006 = vmatprep.subr.mxu0 0.0
    %6007 = vmatpush1.msra.mxu0 0.0
    %6008 = vmatprep.subr.mxu0 0.0
    %6009 = vmatpush1.msra.mxu0 0.0
    %6010 = vmatprep.subr.mxu0 0.0
    %6011 = vmatpush1.msra.mxu0 0.0
    %6012 = vmatprep.subr.mxu0 0.0
    %6013 = vmatpush1.msra.mxu0 0.0
    %6014 = vmatprep.subr.mxu0 0.0
    %6015 = vmatpush1.msra.mxu0 0.0
    %6016 = vmatprep.subr.mxu0 0.0
    %6017 = vmatpush1.msra.mxu0 0.0
    %6018 = vmatprep.subr.mxu0 0.0
    %6019 = vmatpush1.msra.mxu0 0.0
    %6020 = vmatprep.subr.mxu0 0.0
    %6021 = vmatpush1.msra.mxu0 0.0
    %6022 = vmatprep.subr.mxu0 0.0
    %6023 = vmatpush1.msra.mxu0 0.0
    %6024 = vmatprep.subr.mxu0 0.0
    %6025 = vmatpush1.msra.mxu0 0.0
    %6026 = vmatprep.subr.mxu0 0.0
    %6027 = vmatpush1.msra.mxu0 0.0
    %6028 = vmatprep.subr.mxu0 0.0
    %6029 = vmatpush1.msra.mxu0 0.0
    %6030 = vmatprep.subr.mxu0 0.0
    %6031 = vmatpush1.msra.mxu0 0.0
    %6032 = vmatprep.subr.mxu0 0.0
    %6033 = vmatpush1.msra.mxu0 0.0
    %6034 = vmatprep.subr.mxu0 0.0
    %6035 = vmatpush1.msra.mxu0 0.0
    %6036 = vmatprep.subr.mxu0 0.0
    %6037 = vmatpush1.msra.mxu0 0.0
    %6038 = vmatprep.subr.mxu0 0.0
    %6039 = vmatpush1.msra.mxu0 0.0
    %6040 = vmatprep.subr.mxu0 0.0
    %6041 = vmatpush1.msra.mxu0 0.0
    %6042 = vmatprep.subr.mxu0 0.0
    %6043 = vmatpush1.msra.mxu0 0.0
    %6044 = vmatprep.subr.mxu0 0.0
    %6045 = vmatpush1.msra.mxu0 0.0
    %6046 = vmatprep.subr.mxu0 0.0
    %6047 = vmatpush1.msra.mxu0 0.0
    %6048 = vmatprep.subr.mxu0 0.0
    %6049 = vmatpush1.msra.mxu0 0.0
    %6050 = vmatprep.subr.mxu0 0.0
    %6051 = vmatpush1.msra.mxu0 0.0
    %6052 = vmatprep.mubr.f32.mxu0 0.0
    %6053 = vmatmul.mubr.f32.gmra.mrb[0].mxu0 %v5986
    %v6054 = vpop.f32.mrb[0].mxu0
    %v6055 = vadd.f32 %v5983, %v6054
    %v6056 = vpop.f32.mrb[0].mxu0
    %6057 = vdwg.mxu0
    %v6058 = vmin.f32 %v6055, 20.0
    %v6059 = vmul.f32 %v6058, 1.442695
    %v6060 = vpow.pop %v6059
    %v6061 = vadd.f32 %v6060, 1.0
    %v6062 = vmul.f32 %v6061, %v6061
    %v6063 = vsub.f32 %v6062, 1.0
    %v6064 = vadd.f32 %v6062, 1.0
    %v6065 = vrcp.pop %v6064
    %v6066 = vmul.f32 %v6063, %v6065
    %vm6067 = vcmp.gt.f32.partialorder %v6055, 20.0
    %v6068 = vmul.f32 %v6055, %v6066
    %v6069 = vsel %vm6067, %v6055, %v6068
    %v6070 = vadd.f32 %v6069, %v5795
    %v6071 = vld [vmem:[#allocation2] sm:$0x1]
    %v6073 = vlaneseq
    %v6074 = vshrl.u32 %v6073, 7
    %v6075 = vsub.s32 0, %v6074
    %v6076 = vrot.slane %v6071, %v6075
    %6077 = vset.pattern.permute.xlu0 0
    %6078 = vperm.xlu0 %6077, %v6076
    %v6079 = vpop.permute.xlu0 %6078
    %v6081 = vmul.f32 %v1028, %v6079
    %v6082 = vsub.f32 %v6070, %v6081
    %6083 = vst.msk [vmem:[#allocation83] sm:$0xff] %vm1041, %v6082
    // Predicated region
    $region630: #{unet_drift_forward.1} parent=1 // pred_check
      _
    $region631: #{unet_drift_forward.1} parent=1 // pred_check_branch
      %6085 = sbr.rel (0) target = $region633
    $region632: #{unet_drift_forward.1} parent=1 // pred_region
      %s6087 = ssub.s32 128, 128
      %6088 = vsyncadd [#allocation5], %s6087
      %s6090 = sshll.u32 [#allocation83], 4
      %s6091 = int_to_ptr.vmem [resolvable:$true] %s6090
      %6093 = dma.vmem_to_hbm [thread:$0]  %s6091, 128, %s211, [#allocation5]
    $region633: #{unet_drift_forward.1} parent=1 // pred_fallthru
      _
    // Predicated region
    $region634: #{unet_drift_forward.1} parent=1 // pred_check
      _
    $region635: #{unet_drift_forward.1} parent=1 // pred_check_branch
      %6095 = sbr.rel (0) target = $region637
    $region636: #{unet_drift_forward.1} parent=1 // pred_region
      %6096 = dma.done [#allocation5], 128
    $region637: #{unet_drift_forward.1} parent=1 // pred_fallthru
      _
    %6097 = vsyncpa [#allocation4], 1
    %6098 = vsyncpa [#allocation7], 1
    %6099 = vsyncpa [#allocation10], 1
    %6100 = vsyncpa [#allocation13], 1
    %6101 = vsyncpa [#allocation16], 1
    %6102 = vsyncpa [#allocation19], 1
    %6103 = vsyncpa [#allocation22], 1
    %6104 = vsyncpa [#allocation25], 1
    %6105 = vsyncpa [#allocation28], 1
    %6106 = vsyncpa [#allocation31], 1
    %6107 = vsyncpa [#allocation34], 1
    %6108 = vsyncpa [#allocation37], 1
    %6109 = vsyncpa [#allocation40], 1
    %6110 = vsyncpa [#allocation43], 1
    %6111 = vsyncpa [#allocation46], 1
    %6112 = vsyncpa [#allocation49], 1
    %6113 = vsyncpa [#allocation52], 1
    %6114 = vsyncpa [#allocation55], 1
    %6115 = vsyncpa [#allocation58], 1
    %6116 = vsyncpa [#allocation61], 1
    %6117 = vsyncpa [#allocation64], 1
    %6118 = vsyncpa [#allocation67], 1
    %6119 = vsyncpa [#allocation70], 1
    %6120 = vsyncpa [#allocation73], 1
    %6121 = vsyncpa [#allocation76], 1
    %6122 = vsyncpa [#allocation79], 1
    %6123 = vsyncpa [#allocation82], 1
    %6124 = vsyncpa [#allocation5], 1

</llo_original>
